<compile_context>
chip_gen: v5e
topology: v5e:2x2
jax: 0.10.0
libtpu: 0.0.40
codegen_flags: <defaults>
</compile_context>

<pallas_src>
import functools

import jax
import jax.numpy as jnp
from jax.experimental import pallas as pl
from jax.experimental.pallas import tpu as pltpu


# ----------------------------- Pallas kernel --------------------------------

def res_head_kernel(x_ref,
                    w11_ref, s11_ref, w12_ref, s12_ref,
                    w21_ref, s21_ref, w22_ref, s22_ref,
                    wf1_ref, sf1_ref, wf2_ref, sf2_ref,
                    out_ref, pad_ref,
                    *, C, H, W, mxu_dtype):
    """One batch image per grid step. Activations are (C, H*W): lane-dense."""
    S = H * W

    def mm(w_ref_, rhs):
        # lane-dense matmul on the MXU: (Cout, S) = W @ rhs, f32 accumulate.
        return jnp.dot(w_ref_[...].astype(mxu_dtype), rhs.astype(mxu_dtype),
                       preferred_element_type=jnp.float32)

    def im2col3x3(act):                              # act: (C, H, W) f32
        # SAME-pad into the halo'd VMEM scratch (zero border), then stack the
        # 9 shifted windows along the contraction axis -> (9*C, S).
        # (Zero every call: each core has its own scratch under megacore.)
        pad_ref[...] = jnp.zeros_like(pad_ref)
        pad_ref[:, 1:1 + H, 1:1 + W] = act
        xp = pad_ref[...]
        taps = [xp[:, dy:dy + H, dx:dx + W].reshape(C, S)
                for dy in range(3) for dx in range(3)]
        return jnp.concatenate(taps, axis=0)         # (9*C, S)

    def res_block_3x3(act_s, w_a, s_a, w_b, s_b):    # act_s: (C, S) f32
        h = mm(w_a, im2col3x3(act_s.reshape(C, H, W))) + s_a[...]
        h = jnp.maximum(h, 0.0)
        y = mm(w_b, im2col3x3(h.reshape(C, H, W))) + s_b[...] + act_s
        return jnp.maximum(y, 0.0)

    x_s = x_ref[...].astype(jnp.float32).reshape(C, S)

    b1 = res_block_3x3(x_s, w11_ref, s11_ref, w12_ref, s12_ref)
    b2 = res_block_3x3(b1, w21_ref, s21_ref, w22_ref, s22_ref)

    # final 1x1 ResBlock: pure pointwise epilogue (no padding / im2col).
    h = jnp.maximum(mm(wf1_ref, b2) + sf1_ref[...], 0.0)
    y = jnp.maximum(mm(wf2_ref, h) + sf2_ref[...] + b2, 0.0)

    out_ref[...] = y.reshape(C, H, W).astype(out_ref.dtype)


# ------------------------------- wrapper -------------------------------------

def _fold_conv_bn(w_hwio, bias, gamma, beta, mean, var, eps=1e-5):
    """Fold conv bias + eval-mode BN into the conv weights and a shift.

    Returns (w_mm, shift) with w_mm: (Cout, kh*kw*Cin) — row order tap-major /
    channel-minor, matching the im2col stacking in the kernel — and shift:
    (Cout, 1) broadcast over the lane (spatial) axis.
    """
    kh, kw, cin, cout = w_hwio.shape
    assert kh == kw and kh % 2 == 1, "only odd square kernels supported"
    scale = gamma / jnp.sqrt(var + eps)                       # (cout,)
    shift = (bias - mean) * scale + beta                      # (cout,)
    w_mm = (jnp.transpose(w_hwio, (3, 0, 1, 2)).reshape(cout, kh * kw * cin)
            * scale[:, None])
    return w_mm.astype(jnp.float32), shift.reshape(cout, 1).astype(jnp.float32)


def res_head_apply(x_nchw, params, *, mxu_dtype=jnp.float32):
    """ResHead forward. Input/output are NCHW (no transposes anywhere)."""
    N, C, H, W = x_nchw.shape

    flat = []
    for name in ("block1", "block2", "block_final"):
        p = params[name]
        flat += list(_fold_conv_bn(p["w1"], p["b1"], p["g1"], p["be1"],
                                   p["m1"], p["v1"]))
        flat += list(_fold_conv_bn(p["w2"], p["b2"], p["g2"], p["be2"],
                                   p["m2"], p["v2"]))

    def const_spec(a):  # full array resident in VMEM, same block every step
        return pl.BlockSpec(a.shape, lambda n: (0,) * a.ndim)

    img_spec = pl.BlockSpec((None, C, H, W), lambda n: (n, 0, 0, 0))

    kern = functools.partial(res_head_kernel, C=C, H=H, W=W,
                             mxu_dtype=mxu_dtype)
    return pl.pallas_call(
        kern,
        grid=(N,),
        out_shape=jax.ShapeDtypeStruct((N, C, H, W), x_nchw.dtype),
        in_specs=[img_spec] + [const_spec(a) for a in flat],
        out_specs=img_spec,
        scratch_shapes=[pltpu.VMEM((C, H + 2, W + 2), jnp.float32)],
        compiler_params=pltpu.CompilerParams(
            dimension_semantics=("parallel",)),   # batch sharded on v7x's 2 TCs
    )(x_nchw, *flat)
    # TODO(synk): for full-resolution inputs, additionally tile H (halo rows in
    # the index_map) so per-image tiles fit v7x's 64 MiB VMEM.


# ---------------------------- pure-JAX reference -----------------------------

def _conv_ref(x, w, b):
    y = jax.lax.conv_general_dilated(
        x, w, window_strides=(1, 1), padding="SAME",
        dimension_numbers=("NCHW", "HWIO", "NCHW"))
    return y + b.reshape(1, -1, 1, 1)


def _bn_ref(x, g, be, m, v, eps=1e-5):
    g, be, m, v = (t.reshape(1, -1, 1, 1) for t in (g, be, m, v))
    return (x - m) / jnp.sqrt(v + eps) * g + be


def _res_block_ref(x, p):
    h = jax.nn.relu(_bn_ref(_conv_ref(x, p["w1"], p["b1"]),
                            p["g1"], p["be1"], p["m1"], p["v1"]))
    y = _bn_ref(_conv_ref(h, p["w2"], p["b2"]),
                p["g2"], p["be2"], p["m2"], p["v2"])
    return jax.nn.relu(y + x)


def res_head_ref(x_nchw, params):
    x = _res_block_ref(x_nchw, params["block1"])
    x = _res_block_ref(x, params["block2"])
    return _res_block_ref(x, params["block_final"])


# -------------------------------- init & main --------------------------------

def init_res_block(key, n_channels, kernel_size):
    ks = jax.random.split(key, 12)
    C, K = n_channels, kernel_size
    return {
        "w1": 0.1 * jax.random.normal(ks[0], (K, K, C, C), jnp.float32),
        "b1": 0.1 * jax.random.normal(ks[1], (C,), jnp.float32),
        "g1": 1.0 + 0.1 * jax.random.normal(ks[2], (C,), jnp.float32),
        "be1": 0.1 * jax.random.normal(ks[3], (C,), jnp.float32),
        "m1": 0.1 * jax.random.normal(ks[4], (C,), jnp.float32),
        "v1": 1.0 + 0.1 * jax.random.uniform(ks[5], (C,), jnp.float32),
        "w2": 0.1 * jax.random.normal(ks[6], (K, K, C, C), jnp.float32),
        "b2": 0.1 * jax.random.normal(ks[7], (C,), jnp.float32),
        "g2": 1.0 + 0.1 * jax.random.normal(ks[8], (C,), jnp.float32),
        "be2": 0.1 * jax.random.normal(ks[9], (C,), jnp.float32),
        "m2": 0.1 * jax.random.normal(ks[10], (C,), jnp.float32),
        "v2": 1.0 + 0.1 * jax.random.uniform(ks[11], (C,), jnp.float32),
    }


def init_res_head(key, n_channels):
    k1, k2, k3 = jax.random.split(key, 3)
    return {
        "block1": init_res_block(k1, n_channels, 3),
        "block2": init_res_block(k2, n_channels, 3),
        "block_final": init_res_block(k3, n_channels, 1),
    }


if __name__ == "__main__":
    key = jax.random.PRNGKey(0)
    kx, kp = jax.random.split(key)

    N, C, H, W = 2, 4, 16, 16                 # NCHW, like the PyTorch module
    x = jax.random.normal(kx, (N, C, H, W), jnp.float32)
    params = init_res_head(kp, C)

    out = jax.block_until_ready(jax.jit(res_head_apply)(x, params))
    ref = res_head_ref(x, params)
    assert out.shape == (N, C, H, W)
    assert jnp.allclose(out, ref, atol=1e-4, rtol=1e-4), float(
        jnp.max(jnp.abs(out - ref)))

    # bf16 MXU-operand variant (preferred on v6e/v7x); f32 accumulate + f32
    # epilogue, so only a loose tolerance applies.
    out_bf16 = jax.block_until_ready(
        jax.jit(functools.partial(res_head_apply,
                                  mxu_dtype=jnp.bfloat16))(x, params))
    assert float(jnp.max(jnp.abs(out_bf16 - ref))) < 0.3

    print("KERNEL_OK")
</pallas_src>

<mosaic_0001>
module attributes {stable_mosaic.version = 11 : i64} {
  func.func @res_head_kernel(%arg0: i32, %arg1: memref<1x4x16x16xf32, #tpu.memory_space<vmem>>, %arg2: memref<4x36xf32, #tpu.memory_space<vmem>>, %arg3: memref<4x1xf32, #tpu.memory_space<vmem>>, %arg4: memref<4x36xf32, #tpu.memory_space<vmem>>, %arg5: memref<4x1xf32, #tpu.memory_space<vmem>>, %arg6: memref<4x36xf32, #tpu.memory_space<vmem>>, %arg7: memref<4x1xf32, #tpu.memory_space<vmem>>, %arg8: memref<4x36xf32, #tpu.memory_space<vmem>>, %arg9: memref<4x1xf32, #tpu.memory_space<vmem>>, %arg10: memref<4x4xf32, #tpu.memory_space<vmem>>, %arg11: memref<4x1xf32, #tpu.memory_space<vmem>>, %arg12: memref<4x4xf32, #tpu.memory_space<vmem>>, %arg13: memref<4x1xf32, #tpu.memory_space<vmem>>, %arg14: memref<1x4x16x16xf32, #tpu.memory_space<vmem>>, %arg15: memref<4x18x18xf32, #tpu.memory_space<vmem>>) attributes {dimension_semantics = [#tpu.dimension_semantics<parallel>], iteration_bounds = array<i64: 2>, scalar_prefetch = 0 : i64, scratch_operands = 1 : i64, tpu.core_type = #tpu.core_type<tc>, window_params = [{transform_indices = @transform_0, window_bounds = array<i64: 1, 4, 16, 16>}, {pipeline_mode = #tpu.pipeline_mode<synchronous>, transform_indices = @transform_1, window_bounds = array<i64: 4, 36>}, {pipeline_mode = #tpu.pipeline_mode<synchronous>, transform_indices = @transform_2, window_bounds = array<i64: 4, 1>}, {pipeline_mode = #tpu.pipeline_mode<synchronous>, transform_indices = @transform_3, window_bounds = array<i64: 4, 36>}, {pipeline_mode = #tpu.pipeline_mode<synchronous>, transform_indices = @transform_4, window_bounds = array<i64: 4, 1>}, {pipeline_mode = #tpu.pipeline_mode<synchronous>, transform_indices = @transform_5, window_bounds = array<i64: 4, 36>}, {pipeline_mode = #tpu.pipeline_mode<synchronous>, transform_indices = @transform_6, window_bounds = array<i64: 4, 1>}, {pipeline_mode = #tpu.pipeline_mode<synchronous>, transform_indices = @transform_7, window_bounds = array<i64: 4, 36>}, {pipeline_mode = #tpu.pipeline_mode<synchronous>, transform_indices = @transform_8, window_bounds = array<i64: 4, 1>}, {pipeline_mode = #tpu.pipeline_mode<synchronous>, transform_indices = @transform_9, window_bounds = array<i64: 4, 4>}, {pipeline_mode = #tpu.pipeline_mode<synchronous>, transform_indices = @transform_10, window_bounds = array<i64: 4, 1>}, {pipeline_mode = #tpu.pipeline_mode<synchronous>, transform_indices = @transform_11, window_bounds = array<i64: 4, 4>}, {pipeline_mode = #tpu.pipeline_mode<synchronous>, transform_indices = @transform_12, window_bounds = array<i64: 4, 1>}, {transform_indices = @transform_13, window_bounds = array<i64: 1, 4, 16, 16>}]} {
    %c0 = arith.constant 0 : index
    %c0_0 = arith.constant 0 : index
    %c0_1 = arith.constant 0 : index
    %c0_2 = arith.constant 0 : index
    %0 = vector.load %arg1[%c0, %c0_0, %c0_1, %c0_2] : memref<1x4x16x16xf32, #tpu.memory_space<vmem>>, vector<1x4x16x16xf32>
    %1 = vector.shape_cast %0 : vector<1x4x16x16xf32> to vector<4x16x16xf32>
    %2 = vector.shape_cast %1 : vector<4x16x16xf32> to vector<4x256xf32>
    %3 = vector.shape_cast %2 : vector<4x256xf32> to vector<4x16x16xf32>
    %cst = arith.constant 0.000000e+00 : f32
    %4 = vector.broadcast %cst : f32 to vector<4x18x18xf32>
    %c0_3 = arith.constant 0 : index
    %c0_4 = arith.constant 0 : index
    %c0_5 = arith.constant 0 : index
    %5 = vector.load %arg15[%c0_3, %c0_4, %c0_5] : memref<4x18x18xf32, #tpu.memory_space<vmem>>, vector<4x18x18xf32>
    tpu.vector_store %arg15[%c0_3, %c0_4, %c0_5], %4 {strides = array<i32>} : memref<4x18x18xf32, #tpu.memory_space<vmem>>, vector<4x18x18xf32>,
    %c0_6 = arith.constant 0 : index
    %c1 = arith.constant 1 : index
    %c1_7 = arith.constant 1 : index
    %6 = vector.load %arg15[%c0_6, %c1, %c1_7] : memref<4x18x18xf32, #tpu.memory_space<vmem>>, vector<4x16x16xf32>
    tpu.vector_store %arg15[%c0_6, %c1, %c1_7], %3 {strides = array<i32>} : memref<4x18x18xf32, #tpu.memory_space<vmem>>, vector<4x16x16xf32>,
    %c0_8 = arith.constant 0 : index
    %c0_9 = arith.constant 0 : index
    %c0_10 = arith.constant 0 : index
    %7 = vector.load %arg15[%c0_8, %c0_9, %c0_10] : memref<4x18x18xf32, #tpu.memory_space<vmem>>, vector<4x18x18xf32>
    %8 = vector.extract_strided_slice %7 {offsets = [0, 0, 0], sizes = [4, 16, 16], strides = [1, 1, 1]} : vector<4x18x18xf32> to vector<4x16x16xf32>
    %9 = vector.shape_cast %8 : vector<4x16x16xf32> to vector<4x256xf32>
    %10 = vector.extract_strided_slice %7 {offsets = [0, 0, 1], sizes = [4, 16, 16], strides = [1, 1, 1]} : vector<4x18x18xf32> to vector<4x16x16xf32>
    %11 = vector.shape_cast %10 : vector<4x16x16xf32> to vector<4x256xf32>
    %12 = vector.extract_strided_slice %7 {offsets = [0, 0, 2], sizes = [4, 16, 16], strides = [1, 1, 1]} : vector<4x18x18xf32> to vector<4x16x16xf32>
    %13 = vector.shape_cast %12 : vector<4x16x16xf32> to vector<4x256xf32>
    %14 = vector.extract_strided_slice %7 {offsets = [0, 1, 0], sizes = [4, 16, 16], strides = [1, 1, 1]} : vector<4x18x18xf32> to vector<4x16x16xf32>
    %15 = vector.shape_cast %14 : vector<4x16x16xf32> to vector<4x256xf32>
    %16 = vector.extract_strided_slice %7 {offsets = [0, 1, 1], sizes = [4, 16, 16], strides = [1, 1, 1]} : vector<4x18x18xf32> to vector<4x16x16xf32>
    %17 = vector.shape_cast %16 : vector<4x16x16xf32> to vector<4x256xf32>
    %18 = vector.extract_strided_slice %7 {offsets = [0, 1, 2], sizes = [4, 16, 16], strides = [1, 1, 1]} : vector<4x18x18xf32> to vector<4x16x16xf32>
    %19 = vector.shape_cast %18 : vector<4x16x16xf32> to vector<4x256xf32>
    %20 = vector.extract_strided_slice %7 {offsets = [0, 2, 0], sizes = [4, 16, 16], strides = [1, 1, 1]} : vector<4x18x18xf32> to vector<4x16x16xf32>
    %21 = vector.shape_cast %20 : vector<4x16x16xf32> to vector<4x256xf32>
    %22 = vector.extract_strided_slice %7 {offsets = [0, 2, 1], sizes = [4, 16, 16], strides = [1, 1, 1]} : vector<4x18x18xf32> to vector<4x16x16xf32>
    %23 = vector.shape_cast %22 : vector<4x16x16xf32> to vector<4x256xf32>
    %24 = vector.extract_strided_slice %7 {offsets = [0, 2, 2], sizes = [4, 16, 16], strides = [1, 1, 1]} : vector<4x18x18xf32> to vector<4x16x16xf32>
    %25 = vector.shape_cast %24 : vector<4x16x16xf32> to vector<4x256xf32>
    %26 = tpu.concatenate %9, %11, %13, %15, %17, %19, %21, %23, %25 in 0 : vector<4x256xf32>, vector<4x256xf32>, vector<4x256xf32>, vector<4x256xf32>, vector<4x256xf32>, vector<4x256xf32>, vector<4x256xf32>, vector<4x256xf32>, vector<4x256xf32> -> vector<36x256xf32>
    %c0_11 = arith.constant 0 : index
    %c0_12 = arith.constant 0 : index
    %27 = vector.load %arg2[%c0_11, %c0_12] : memref<4x36xf32, #tpu.memory_space<vmem>>, vector<4x36xf32>
    %cst_13 = arith.constant dense<0.000000e+00> : vector<4x256xf32>
    %28 = tpu.matmul %27, %26, %cst_13 {dimension_numbers = #tpu.dot_dimension_numbers<[1], [0], [0], [1], [0, 0, 1, 1], [], []>} : vector<4x36xf32>, vector<36x256xf32>, vector<4x256xf32> -> vector<4x256xf32>
    %c0_14 = arith.constant 0 : index
    %c0_15 = arith.constant 0 : index
    %29 = vector.load %arg3[%c0_14, %c0_15] : memref<4x1xf32, #tpu.memory_space<vmem>>, vector<4x1xf32>
    %30 = vector.broadcast %29 : vector<4x1xf32> to vector<4x256xf32>
    %31 = arith.addf %28, %30 : vector<4x256xf32>
    %cst_16 = arith.constant 0.000000e+00 : f32
    %32 = vector.broadcast %cst_16 : f32 to vector<4x256xf32>
    %33 = arith.maximumf %31, %32 : vector<4x256xf32>
    %34 = vector.shape_cast %33 : vector<4x256xf32> to vector<4x16x16xf32>
    %cst_17 = arith.constant 0.000000e+00 : f32
    %35 = vector.broadcast %cst_17 : f32 to vector<4x18x18xf32>
    %c0_18 = arith.constant 0 : index
    %c0_19 = arith.constant 0 : index
    %c0_20 = arith.constant 0 : index
    %36 = vector.load %arg15[%c0_18, %c0_19, %c0_20] : memref<4x18x18xf32, #tpu.memory_space<vmem>>, vector<4x18x18xf32>
    tpu.vector_store %arg15[%c0_18, %c0_19, %c0_20], %35 {strides = array<i32>} : memref<4x18x18xf32, #tpu.memory_space<vmem>>, vector<4x18x18xf32>,
    %c0_21 = arith.constant 0 : index
    %c1_22 = arith.constant 1 : index
    %c1_23 = arith.constant 1 : index
    %37 = vector.load %arg15[%c0_21, %c1_22, %c1_23] : memref<4x18x18xf32, #tpu.memory_space<vmem>>, vector<4x16x16xf32>
    tpu.vector_store %arg15[%c0_21, %c1_22, %c1_23], %34 {strides = array<i32>} : memref<4x18x18xf32, #tpu.memory_space<vmem>>, vector<4x16x16xf32>,
    %c0_24 = arith.constant 0 : index
    %c0_25 = arith.constant 0 : index
    %c0_26 = arith.constant 0 : index
    %38 = vector.load %arg15[%c0_24, %c0_25, %c0_26] : memref<4x18x18xf32, #tpu.memory_space<vmem>>, vector<4x18x18xf32>
    %39 = vector.extract_strided_slice %38 {offsets = [0, 0, 0], sizes = [4, 16, 16], strides = [1, 1, 1]} : vector<4x18x18xf32> to vector<4x16x16xf32>
    %40 = vector.shape_cast %39 : vector<4x16x16xf32> to vector<4x256xf32>
    %41 = vector.extract_strided_slice %38 {offsets = [0, 0, 1], sizes = [4, 16, 16], strides = [1, 1, 1]} : vector<4x18x18xf32> to vector<4x16x16xf32>
    %42 = vector.shape_cast %41 : vector<4x16x16xf32> to vector<4x256xf32>
    %43 = vector.extract_strided_slice %38 {offsets = [0, 0, 2], sizes = [4, 16, 16], strides = [1, 1, 1]} : vector<4x18x18xf32> to vector<4x16x16xf32>
    %44 = vector.shape_cast %43 : vector<4x16x16xf32> to vector<4x256xf32>
    %45 = vector.extract_strided_slice %38 {offsets = [0, 1, 0], sizes = [4, 16, 16], strides = [1, 1, 1]} : vector<4x18x18xf32> to vector<4x16x16xf32>
    %46 = vector.shape_cast %45 : vector<4x16x16xf32> to vector<4x256xf32>
    %47 = vector.extract_strided_slice %38 {offsets = [0, 1, 1], sizes = [4, 16, 16], strides = [1, 1, 1]} : vector<4x18x18xf32> to vector<4x16x16xf32>
    %48 = vector.shape_cast %47 : vector<4x16x16xf32> to vector<4x256xf32>
    %49 = vector.extract_strided_slice %38 {offsets = [0, 1, 2], sizes = [4, 16, 16], strides = [1, 1, 1]} : vector<4x18x18xf32> to vector<4x16x16xf32>
    %50 = vector.shape_cast %49 : vector<4x16x16xf32> to vector<4x256xf32>
    %51 = vector.extract_strided_slice %38 {offsets = [0, 2, 0], sizes = [4, 16, 16], strides = [1, 1, 1]} : vector<4x18x18xf32> to vector<4x16x16xf32>
    %52 = vector.shape_cast %51 : vector<4x16x16xf32> to vector<4x256xf32>
    %53 = vector.extract_strided_slice %38 {offsets = [0, 2, 1], sizes = [4, 16, 16], strides = [1, 1, 1]} : vector<4x18x18xf32> to vector<4x16x16xf32>
    %54 = vector.shape_cast %53 : vector<4x16x16xf32> to vector<4x256xf32>
    %55 = vector.extract_strided_slice %38 {offsets = [0, 2, 2], sizes = [4, 16, 16], strides = [1, 1, 1]} : vector<4x18x18xf32> to vector<4x16x16xf32>
    %56 = vector.shape_cast %55 : vector<4x16x16xf32> to vector<4x256xf32>
    %57 = tpu.concatenate %40, %42, %44, %46, %48, %50, %52, %54, %56 in 0 : vector<4x256xf32>, vector<4x256xf32>, vector<4x256xf32>, vector<4x256xf32>, vector<4x256xf32>, vector<4x256xf32>, vector<4x256xf32>, vector<4x256xf32>, vector<4x256xf32> -> vector<36x256xf32>
    %c0_27 = arith.constant 0 : index
    %c0_28 = arith.constant 0 : index
    %58 = vector.load %arg4[%c0_27, %c0_28] : memref<4x36xf32, #tpu.memory_space<vmem>>, vector<4x36xf32>
    %cst_29 = arith.constant dense<0.000000e+00> : vector<4x256xf32>
    %59 = tpu.matmul %58, %57, %cst_29 {dimension_numbers = #tpu.dot_dimension_numbers<[1], [0], [0], [1], [0, 0, 1, 1], [], []>} : vector<4x36xf32>, vector<36x256xf32>, vector<4x256xf32> -> vector<4x256xf32>
    %c0_30 = arith.constant 0 : index
    %c0_31 = arith.constant 0 : index
    %60 = vector.load %arg5[%c0_30, %c0_31] : memref<4x1xf32, #tpu.memory_space<vmem>>, vector<4x1xf32>
    %61 = vector.broadcast %60 : vector<4x1xf32> to vector<4x256xf32>
    %62 = arith.addf %59, %61 : vector<4x256xf32>
    %63 = arith.addf %62, %2 : vector<4x256xf32>
    %cst_32 = arith.constant 0.000000e+00 : f32
    %64 = vector.broadcast %cst_32 : f32 to vector<4x256xf32>
    %65 = arith.maximumf %63, %64 : vector<4x256xf32>
    %66 = vector.shape_cast %65 : vector<4x256xf32> to vector<4x16x16xf32>
    %cst_33 = arith.constant 0.000000e+00 : f32
    %67 = vector.broadcast %cst_33 : f32 to vector<4x18x18xf32>
    %c0_34 = arith.constant 0 : index
    %c0_35 = arith.constant 0 : index
    %c0_36 = arith.constant 0 : index
    %68 = vector.load %arg15[%c0_34, %c0_35, %c0_36] : memref<4x18x18xf32, #tpu.memory_space<vmem>>, vector<4x18x18xf32>
    tpu.vector_store %arg15[%c0_34, %c0_35, %c0_36], %67 {strides = array<i32>} : memref<4x18x18xf32, #tpu.memory_space<vmem>>, vector<4x18x18xf32>,
    %c0_37 = arith.constant 0 : index
    %c1_38 = arith.constant 1 : index
    %c1_39 = arith.constant 1 : index
    %69 = vector.load %arg15[%c0_37, %c1_38, %c1_39] : memref<4x18x18xf32, #tpu.memory_space<vmem>>, vector<4x16x16xf32>
    tpu.vector_store %arg15[%c0_37, %c1_38, %c1_39], %66 {strides = array<i32>} : memref<4x18x18xf32, #tpu.memory_space<vmem>>, vector<4x16x16xf32>,
    %c0_40 = arith.constant 0 : index
    %c0_41 = arith.constant 0 : index
    %c0_42 = arith.constant 0 : index
    %70 = vector.load %arg15[%c0_40, %c0_41, %c0_42] : memref<4x18x18xf32, #tpu.memory_space<vmem>>, vector<4x18x18xf32>
    %71 = vector.extract_strided_slice %70 {offsets = [0, 0, 0], sizes = [4, 16, 16], strides = [1, 1, 1]} : vector<4x18x18xf32> to vector<4x16x16xf32>
    %72 = vector.shape_cast %71 : vector<4x16x16xf32> to vector<4x256xf32>
    %73 = vector.extract_strided_slice %70 {offsets = [0, 0, 1], sizes = [4, 16, 16], strides = [1, 1, 1]} : vector<4x18x18xf32> to vector<4x16x16xf32>
    %74 = vector.shape_cast %73 : vector<4x16x16xf32> to vector<4x256xf32>
    %75 = vector.extract_strided_slice %70 {offsets = [0, 0, 2], sizes = [4, 16, 16], strides = [1, 1, 1]} : vector<4x18x18xf32> to vector<4x16x16xf32>
    %76 = vector.shape_cast %75 : vector<4x16x16xf32> to vector<4x256xf32>
    %77 = vector.extract_strided_slice %70 {offsets = [0, 1, 0], sizes = [4, 16, 16], strides = [1, 1, 1]} : vector<4x18x18xf32> to vector<4x16x16xf32>
    %78 = vector.shape_cast %77 : vector<4x16x16xf32> to vector<4x256xf32>
    %79 = vector.extract_strided_slice %70 {offsets = [0, 1, 1], sizes = [4, 16, 16], strides = [1, 1, 1]} : vector<4x18x18xf32> to vector<4x16x16xf32>
    %80 = vector.shape_cast %79 : vector<4x16x16xf32> to vector<4x256xf32>
    %81 = vector.extract_strided_slice %70 {offsets = [0, 1, 2], sizes = [4, 16, 16], strides = [1, 1, 1]} : vector<4x18x18xf32> to vector<4x16x16xf32>
    %82 = vector.shape_cast %81 : vector<4x16x16xf32> to vector<4x256xf32>
    %83 = vector.extract_strided_slice %70 {offsets = [0, 2, 0], sizes = [4, 16, 16], strides = [1, 1, 1]} : vector<4x18x18xf32> to vector<4x16x16xf32>
    %84 = vector.shape_cast %83 : vector<4x16x16xf32> to vector<4x256xf32>
    %85 = vector.extract_strided_slice %70 {offsets = [0, 2, 1], sizes = [4, 16, 16], strides = [1, 1, 1]} : vector<4x18x18xf32> to vector<4x16x16xf32>
    %86 = vector.shape_cast %85 : vector<4x16x16xf32> to vector<4x256xf32>
    %87 = vector.extract_strided_slice %70 {offsets = [0, 2, 2], sizes = [4, 16, 16], strides = [1, 1, 1]} : vector<4x18x18xf32> to vector<4x16x16xf32>
    %88 = vector.shape_cast %87 : vector<4x16x16xf32> to vector<4x256xf32>
    %89 = tpu.concatenate %72, %74, %76, %78, %80, %82, %84, %86, %88 in 0 : vector<4x256xf32>, vector<4x256xf32>, vector<4x256xf32>, vector<4x256xf32>, vector<4x256xf32>, vector<4x256xf32>, vector<4x256xf32>, vector<4x256xf32>, vector<4x256xf32> -> vector<36x256xf32>
    %c0_43 = arith.constant 0 : index
    %c0_44 = arith.constant 0 : index
    %90 = vector.load %arg6[%c0_43, %c0_44] : memref<4x36xf32, #tpu.memory_space<vmem>>, vector<4x36xf32>
    %cst_45 = arith.constant dense<0.000000e+00> : vector<4x256xf32>
    %91 = tpu.matmul %90, %89, %cst_45 {dimension_numbers = #tpu.dot_dimension_numbers<[1], [0], [0], [1], [0, 0, 1, 1], [], []>} : vector<4x36xf32>, vector<36x256xf32>, vector<4x256xf32> -> vector<4x256xf32>
    %c0_46 = arith.constant 0 : index
    %c0_47 = arith.constant 0 : index
    %92 = vector.load %arg7[%c0_46, %c0_47] : memref<4x1xf32, #tpu.memory_space<vmem>>, vector<4x1xf32>
    %93 = vector.broadcast %92 : vector<4x1xf32> to vector<4x256xf32>
    %94 = arith.addf %91, %93 : vector<4x256xf32>
    %cst_48 = arith.constant 0.000000e+00 : f32
    %95 = vector.broadcast %cst_48 : f32 to vector<4x256xf32>
    %96 = arith.maximumf %94, %95 : vector<4x256xf32>
    %97 = vector.shape_cast %96 : vector<4x256xf32> to vector<4x16x16xf32>
    %cst_49 = arith.constant 0.000000e+00 : f32
    %98 = vector.broadcast %cst_49 : f32 to vector<4x18x18xf32>
    %c0_50 = arith.constant 0 : index
    %c0_51 = arith.constant 0 : index
    %c0_52 = arith.constant 0 : index
    %99 = vector.load %arg15[%c0_50, %c0_51, %c0_52] : memref<4x18x18xf32, #tpu.memory_space<vmem>>, vector<4x18x18xf32>
    tpu.vector_store %arg15[%c0_50, %c0_51, %c0_52], %98 {strides = array<i32>} : memref<4x18x18xf32, #tpu.memory_space<vmem>>, vector<4x18x18xf32>,
    %c0_53 = arith.constant 0 : index
    %c1_54 = arith.constant 1 : index
    %c1_55 = arith.constant 1 : index
    %100 = vector.load %arg15[%c0_53, %c1_54, %c1_55] : memref<4x18x18xf32, #tpu.memory_space<vmem>>, vector<4x16x16xf32>
    tpu.vector_store %arg15[%c0_53, %c1_54, %c1_55], %97 {strides = array<i32>} : memref<4x18x18xf32, #tpu.memory_space<vmem>>, vector<4x16x16xf32>,
    %c0_56 = arith.constant 0 : index
    %c0_57 = arith.constant 0 : index
    %c0_58 = arith.constant 0 : index
    %101 = vector.load %arg15[%c0_56, %c0_57, %c0_58] : memref<4x18x18xf32, #tpu.memory_space<vmem>>, vector<4x18x18xf32>
    %102 = vector.extract_strided_slice %101 {offsets = [0, 0, 0], sizes = [4, 16, 16], strides = [1, 1, 1]} : vector<4x18x18xf32> to vector<4x16x16xf32>
    %103 = vector.shape_cast %102 : vector<4x16x16xf32> to vector<4x256xf32>
    %104 = vector.extract_strided_slice %101 {offsets = [0, 0, 1], sizes = [4, 16, 16], strides = [1, 1, 1]} : vector<4x18x18xf32> to vector<4x16x16xf32>
    %105 = vector.shape_cast %104 : vector<4x16x16xf32> to vector<4x256xf32>
    %106 = vector.extract_strided_slice %101 {offsets = [0, 0, 2], sizes = [4, 16, 16], strides = [1, 1, 1]} : vector<4x18x18xf32> to vector<4x16x16xf32>
    %107 = vector.shape_cast %106 : vector<4x16x16xf32> to vector<4x256xf32>
    %108 = vector.extract_strided_slice %101 {offsets = [0, 1, 0], sizes = [4, 16, 16], strides = [1, 1, 1]} : vector<4x18x18xf32> to vector<4x16x16xf32>
    %109 = vector.shape_cast %108 : vector<4x16x16xf32> to vector<4x256xf32>
    %110 = vector.extract_strided_slice %101 {offsets = [0, 1, 1], sizes = [4, 16, 16], strides = [1, 1, 1]} : vector<4x18x18xf32> to vector<4x16x16xf32>
    %111 = vector.shape_cast %110 : vector<4x16x16xf32> to vector<4x256xf32>
    %112 = vector.extract_strided_slice %101 {offsets = [0, 1, 2], sizes = [4, 16, 16], strides = [1, 1, 1]} : vector<4x18x18xf32> to vector<4x16x16xf32>
    %113 = vector.shape_cast %112 : vector<4x16x16xf32> to vector<4x256xf32>
    %114 = vector.extract_strided_slice %101 {offsets = [0, 2, 0], sizes = [4, 16, 16], strides = [1, 1, 1]} : vector<4x18x18xf32> to vector<4x16x16xf32>
    %115 = vector.shape_cast %114 : vector<4x16x16xf32> to vector<4x256xf32>
    %116 = vector.extract_strided_slice %101 {offsets = [0, 2, 1], sizes = [4, 16, 16], strides = [1, 1, 1]} : vector<4x18x18xf32> to vector<4x16x16xf32>
    %117 = vector.shape_cast %116 : vector<4x16x16xf32> to vector<4x256xf32>
    %118 = vector.extract_strided_slice %101 {offsets = [0, 2, 2], sizes = [4, 16, 16], strides = [1, 1, 1]} : vector<4x18x18xf32> to vector<4x16x16xf32>
    %119 = vector.shape_cast %118 : vector<4x16x16xf32> to vector<4x256xf32>
    %120 = tpu.concatenate %103, %105, %107, %109, %111, %113, %115, %117, %119 in 0 : vector<4x256xf32>, vector<4x256xf32>, vector<4x256xf32>, vector<4x256xf32>, vector<4x256xf32>, vector<4x256xf32>, vector<4x256xf32>, vector<4x256xf32>, vector<4x256xf32> -> vector<36x256xf32>
    %c0_59 = arith.constant 0 : index
    %c0_60 = arith.constant 0 : index
    %121 = vector.load %arg8[%c0_59, %c0_60] : memref<4x36xf32, #tpu.memory_space<vmem>>, vector<4x36xf32>
    %cst_61 = arith.constant dense<0.000000e+00> : vector<4x256xf32>
    %122 = tpu.matmul %121, %120, %cst_61 {dimension_numbers = #tpu.dot_dimension_numbers<[1], [0], [0], [1], [0, 0, 1, 1], [], []>} : vector<4x36xf32>, vector<36x256xf32>, vector<4x256xf32> -> vector<4x256xf32>
    %c0_62 = arith.constant 0 : index
    %c0_63 = arith.constant 0 : index
    %123 = vector.load %arg9[%c0_62, %c0_63] : memref<4x1xf32, #tpu.memory_space<vmem>>, vector<4x1xf32>
    %124 = vector.broadcast %123 : vector<4x1xf32> to vector<4x256xf32>
    %125 = arith.addf %122, %124 : vector<4x256xf32>
    %126 = arith.addf %125, %65 : vector<4x256xf32>
    %cst_64 = arith.constant 0.000000e+00 : f32
    %127 = vector.broadcast %cst_64 : f32 to vector<4x256xf32>
    %128 = arith.maximumf %126, %127 : vector<4x256xf32>
    %c0_65 = arith.constant 0 : index
    %c0_66 = arith.constant 0 : index
    %129 = vector.load %arg10[%c0_65, %c0_66] : memref<4x4xf32, #tpu.memory_space<vmem>>, vector<4x4xf32>
    %cst_67 = arith.constant dense<0.000000e+00> : vector<4x256xf32>
    %130 = tpu.matmul %129, %128, %cst_67 {dimension_numbers = #tpu.dot_dimension_numbers<[1], [0], [0], [1], [0, 0, 1, 1], [], []>} : vector<4x4xf32>, vector<4x256xf32>, vector<4x256xf32> -> vector<4x256xf32>
    %c0_68 = arith.constant 0 : index
    %c0_69 = arith.constant 0 : index
    %131 = vector.load %arg11[%c0_68, %c0_69] : memref<4x1xf32, #tpu.memory_space<vmem>>, vector<4x1xf32>
    %132 = vector.broadcast %131 : vector<4x1xf32> to vector<4x256xf32>
    %133 = arith.addf %130, %132 : vector<4x256xf32>
    %cst_70 = arith.constant 0.000000e+00 : f32
    %134 = vector.broadcast %cst_70 : f32 to vector<4x256xf32>
    %135 = arith.maximumf %133, %134 : vector<4x256xf32>
    %c0_71 = arith.constant 0 : index
    %c0_72 = arith.constant 0 : index
    %136 = vector.load %arg12[%c0_71, %c0_72] : memref<4x4xf32, #tpu.memory_space<vmem>>, vector<4x4xf32>
    %cst_73 = arith.constant dense<0.000000e+00> : vector<4x256xf32>
    %137 = tpu.matmul %136, %135, %cst_73 {dimension_numbers = #tpu.dot_dimension_numbers<[1], [0], [0], [1], [0, 0, 1, 1], [], []>} : vector<4x4xf32>, vector<4x256xf32>, vector<4x256xf32> -> vector<4x256xf32>
    %c0_74 = arith.constant 0 : index
    %c0_75 = arith.constant 0 : index
    %138 = vector.load %arg13[%c0_74, %c0_75] : memref<4x1xf32, #tpu.memory_space<vmem>>, vector<4x1xf32>
    %139 = vector.broadcast %138 : vector<4x1xf32> to vector<4x256xf32>
    %140 = arith.addf %137, %139 : vector<4x256xf32>
    %141 = arith.addf %140, %128 : vector<4x256xf32>
    %cst_76 = arith.constant 0.000000e+00 : f32
    %142 = vector.broadcast %cst_76 : f32 to vector<4x256xf32>
    %143 = arith.maximumf %141, %142 : vector<4x256xf32>
    %144 = vector.shape_cast %143 : vector<4x256xf32> to vector<4x16x16xf32>
    %c0_77 = arith.constant 0 : index
    %c0_78 = arith.constant 0 : index
    %c0_79 = arith.constant 0 : index
    %c0_80 = arith.constant 0 : index
    %145 = vector.load %arg14[%c0_77, %c0_78, %c0_79, %c0_80] : memref<1x4x16x16xf32, #tpu.memory_space<vmem>>, vector<1x4x16x16xf32>
    %146 = vector.shape_cast %145 : vector<1x4x16x16xf32> to vector<4x16x16xf32>
    %147 = vector.shape_cast %144 : vector<4x16x16xf32> to vector<1x4x16x16xf32>
    tpu.vector_store %arg14[%c0_77, %c0_78, %c0_79, %c0_80], %147 {strides = array<i32>} : memref<1x4x16x16xf32, #tpu.memory_space<vmem>>, vector<1x4x16x16xf32>,
    return
  }
  func.func @transform_0(%arg0: i32) -> (i32, i32, i32, i32) {
    %c0_i32 = arith.constant 0 : i32
    %c0_i32_0 = arith.constant 0 : i32
    %c0_i32_1 = arith.constant 0 : i32
    %c0_i32_2 = arith.constant 0 : i32
    return %arg0, %c0_i32, %c0_i32_0, %c0_i32_1 : i32, i32, i32, i32
  }
  func.func @transform_1(%arg0: i32) -> (i32, i32) {
    %c0_i32 = arith.constant 0 : i32
    %c0_i32_0 = arith.constant 0 : i32
    %c0_i32_1 = arith.constant 0 : i32
    return %c0_i32, %c0_i32_0 : i32, i32
  }
  func.func @transform_2(%arg0: i32) -> (i32, i32) {
    %c0_i32 = arith.constant 0 : i32
    %c0_i32_0 = arith.constant 0 : i32
    %c0_i32_1 = arith.constant 0 : i32
    return %c0_i32, %c0_i32_0 : i32, i32
  }
  func.func @transform_3(%arg0: i32) -> (i32, i32) {
    %c0_i32 = arith.constant 0 : i32
    %c0_i32_0 = arith.constant 0 : i32
    %c0_i32_1 = arith.constant 0 : i32
    return %c0_i32, %c0_i32_0 : i32, i32
  }
  func.func @transform_4(%arg0: i32) -> (i32, i32) {
    %c0_i32 = arith.constant 0 : i32
    %c0_i32_0 = arith.constant 0 : i32
    %c0_i32_1 = arith.constant 0 : i32
    return %c0_i32, %c0_i32_0 : i32, i32
  }
  func.func @transform_5(%arg0: i32) -> (i32, i32) {
    %c0_i32 = arith.constant 0 : i32
    %c0_i32_0 = arith.constant 0 : i32
    %c0_i32_1 = arith.constant 0 : i32
    return %c0_i32, %c0_i32_0 : i32, i32
  }
  func.func @transform_6(%arg0: i32) -> (i32, i32) {
    %c0_i32 = arith.constant 0 : i32
    %c0_i32_0 = arith.constant 0 : i32
    %c0_i32_1 = arith.constant 0 : i32
    return %c0_i32, %c0_i32_0 : i32, i32
  }
  func.func @transform_7(%arg0: i32) -> (i32, i32) {
    %c0_i32 = arith.constant 0 : i32
    %c0_i32_0 = arith.constant 0 : i32
    %c0_i32_1 = arith.constant 0 : i32
    return %c0_i32, %c0_i32_0 : i32, i32
  }
  func.func @transform_8(%arg0: i32) -> (i32, i32) {
    %c0_i32 = arith.constant 0 : i32
    %c0_i32_0 = arith.constant 0 : i32
    %c0_i32_1 = arith.constant 0 : i32
    return %c0_i32, %c0_i32_0 : i32, i32
  }
  func.func @transform_9(%arg0: i32) -> (i32, i32) {
    %c0_i32 = arith.constant 0 : i32
    %c0_i32_0 = arith.constant 0 : i32
    %c0_i32_1 = arith.constant 0 : i32
    return %c0_i32, %c0_i32_0 : i32, i32
  }
  func.func @transform_10(%arg0: i32) -> (i32, i32) {
    %c0_i32 = arith.constant 0 : i32
    %c0_i32_0 = arith.constant 0 : i32
    %c0_i32_1 = arith.constant 0 : i32
    return %c0_i32, %c0_i32_0 : i32, i32
  }
  func.func @transform_11(%arg0: i32) -> (i32, i32) {
    %c0_i32 = arith.constant 0 : i32
    %c0_i32_0 = arith.constant 0 : i32
    %c0_i32_1 = arith.constant 0 : i32
    return %c0_i32, %c0_i32_0 : i32, i32
  }
  func.func @transform_12(%arg0: i32) -> (i32, i32) {
    %c0_i32 = arith.constant 0 : i32
    %c0_i32_0 = arith.constant 0 : i32
    %c0_i32_1 = arith.constant 0 : i32
    return %c0_i32, %c0_i32_0 : i32, i32
  }
  func.func @transform_13(%arg0: i32) -> (i32, i32, i32, i32) {
    %c0_i32 = arith.constant 0 : i32
    %c0_i32_0 = arith.constant 0 : i32
    %c0_i32_1 = arith.constant 0 : i32
    %c0_i32_2 = arith.constant 0 : i32
    return %arg0, %c0_i32, %c0_i32_0, %c0_i32_1 : i32, i32, i32, i32
  }
}

</mosaic_0001>

<llo_original>
// kernel: res_head_apply.1
$region0: #{res_head_apply.1}
  #allocation0 [shape = 'u32[]', space=smem, size = 0x4, offset = 0x4, fixed_abs, tag = 'smem constant byte address 0x4 - core index']
  #allocation1 [shape = 'u32[72,128]{1,0:T(1,128)}', space=vmem, size = 0x9000, scoped, tag = 'internal scratch']
  #allocation2 [shape = 'f32[4,18,18]{2,1,0:T(8,128)}', space=vmem, size = 0xc000, scoped, tag = 'scratch operand']
  %s0 = inlined_call_operand.vmem [shape: f32[2,4,16,16], index: 0, kind: input, shape index: {}]
  %s1 = inlined_call_operand.vmem [shape: f32[4,36], index: 1, kind: input, shape index: {}]
  %s2 = inlined_call_operand.vmem [shape: f32[4,1], index: 2, kind: input, shape index: {}]
  %s3 = inlined_call_operand.vmem [shape: f32[4,36], index: 3, kind: input, shape index: {}]
  %s4 = inlined_call_operand.vmem [shape: f32[4,1], index: 4, kind: input, shape index: {}]
  %s5 = inlined_call_operand.vmem [shape: f32[4,36], index: 5, kind: input, shape index: {}]
  %s6 = inlined_call_operand.vmem [shape: f32[4,1], index: 6, kind: input, shape index: {}]
  %s7 = inlined_call_operand.vmem [shape: f32[4,36], index: 7, kind: input, shape index: {}]
  %s8 = inlined_call_operand.vmem [shape: f32[4,1], index: 8, kind: input, shape index: {}]
  %s9 = inlined_call_operand.vmem [shape: f32[4,4], index: 9, kind: input, shape index: {}]
  %s10 = inlined_call_operand.vmem [shape: f32[4,1], index: 10, kind: input, shape index: {}]
  %s11 = inlined_call_operand.vmem [shape: f32[4,4], index: 11, kind: input, shape index: {}]
  %s12 = inlined_call_operand.vmem [shape: f32[4,1], index: 12, kind: input, shape index: {}]
  %s13 = inlined_call_operand.hbm [shape: f32[2,4,16,16], index: 13, kind: output, shape index: {}]
  %s14 = sld [smem:[#allocation0]]
  $region85: #{res_head_apply.1} parent=0
    _
  %s16 = ssub.s32 1, %s14
  %s17 = scalar_select 0, %s16, %s14
  $region1: #{res_head_apply.1} parent=0
    #allocation3 [shape = 'u8[65536]{0}', space=vmem, size = 0x10000, scoped, tag = 'output window, operand 0']
    #allocation4 [shape = 's32[2]{0}', space=sflag, size = 0x8, scoped, tag = 'scoped memory for res_head_apply.1']
    %18 = vsyncpa [#allocation4], 0
    %s19 = scalar_lea.sflag [#allocation4], 1
    %20 = vsyncpa %s19, 0
    loop: start=0, step=1, limit=4
    $region2: #{res_head_apply.1} parent=1 // loop_pre_header
      _
    $region3: #{res_head_apply.1} parent=1 // loop_header
      %s22 = sphi 0, %s26
      %p23 = scmp.ge.s32.totalorder %s22, 4
      %s32 = sphi 0, %s34
      %s35 = sphi 0, %s32
      %s36 = sphi 0, %s35
      %s52 = sphi 0, %s36
      %s56 = sphi 0, %s56
      %s58 = sphi 0, %s56
      %s59 = sphi 0, %s58
      %s73 = sphi 0, %s59
      %s77 = sphi 0, %s77
      %s79 = sphi 0, %s77
      %s80 = sphi 0, %s79
      %s94 = sphi 0, %s80
      %s98 = sphi 0, %s98
      %s100 = sphi 0, %s98
      %s101 = sphi 0, %s100
      %s115 = sphi 0, %s101
      %s119 = sphi 0, %s119
      %s121 = sphi 0, %s119
      %s122 = sphi 0, %s121
      %s136 = sphi 0, %s122
      %s140 = sphi 0, %s140
      %s142 = sphi 0, %s140
      %s143 = sphi 0, %s142
      %s157 = sphi 0, %s143
      %s161 = sphi 0, %s161
      %s163 = sphi 0, %s161
      %s164 = sphi 0, %s163
      %s178 = sphi 0, %s164
      %s182 = sphi 0, %s182
      %s184 = sphi 0, %s182
      %s185 = sphi 0, %s184
      %s199 = sphi 0, %s185
      %s203 = sphi 0, %s203
      %s205 = sphi 0, %s203
      %s206 = sphi 0, %s205
      %s220 = sphi 0, %s206
      %s224 = sphi 0, %s224
      %s226 = sphi 0, %s224
      %s227 = sphi 0, %s226
      %s241 = sphi 0, %s227
      %s245 = sphi 0, %s245
      %s247 = sphi 0, %s245
      %s248 = sphi 0, %s247
      %s262 = sphi 0, %s248
      %s266 = sphi 0, %s266
      %s268 = sphi 0, %s266
      %s269 = sphi 0, %s268
      %s283 = sphi 0, %s269
      %s287 = sphi 0, %s287
      %s289 = sphi 0, %s287
      %s290 = sphi 0, %s289
      %s304 = sphi 0, %s290
      %s310 = sphi 0, %s312
      %s313 = sphi 0, %s310
      %s314 = sphi 0, %s313
      %s330 = sphi 0, %s314
    $region4: #{res_head_apply.1} parent=1 // loop_header_branch
      %25 = sbr.rel (%p23) target = $region8
    $region5: #{res_head_apply.1} parent=1 // loop_body
      %s27 = ssub.s32 %s22, 1
      %s28 = ssub.s32 %s22, 2
      %s29 = sadd.s32 %s22, 1
      %s30 = ssub.s32 %s22, %s29
      %p31 = scmp.eq.s32.totalorder %s30, 0
      %s33 = sadd.s32 %s32, 1
      %s34 = scalar_select %p31, %s32, %s33
      %p37 = pneg %p31
      %p38 = scmp.eq.s32.totalorder %s22, 1
      %p39 = por %p37, %p38
      %p40 = scmp.ne.s32.totalorder %s32, %s35
      %p41 = scmp.eq.s32.totalorder %s22, 0
      %p42 = por %p40, %p41
      %p43 = scmp.ne.s32.totalorder %s32, %s35
      %p44 = scmp.eq.s32.totalorder %s27, 1
      %p45 = por %p43, %p44
      %p46 = scmp.ne.s32.totalorder %s35, %s36
      %p47 = scmp.eq.s32.totalorder %s27, 0
      %p48 = por %p46, %p47
      %p49 = scmp.ne.s32.totalorder %s35, %s36
      %p50 = scmp.eq.s32.totalorder %s28, 1
      %p51 = por %p49, %p50
      %p53 = scmp.ne.s32.totalorder %s36, %s52
      %p54 = scmp.eq.s32.totalorder %s28, 0
      %p55 = por %p53, %p54
      %s57 = sadd.s32 %s56, 1
      %p60 = scmp.eq.s32.totalorder %s22, 1
      %p61 = scmp.ne.s32.totalorder %s56, %s58
      %p62 = scmp.eq.s32.totalorder %s22, 0
      %p63 = por %p61, %p62
      %p64 = scmp.ne.s32.totalorder %s56, %s58
      %p65 = scmp.eq.s32.totalorder %s27, 1
      %p66 = por %p64, %p65
      %p67 = scmp.ne.s32.totalorder %s58, %s59
      %p68 = scmp.eq.s32.totalorder %s27, 0
      %p69 = por %p67, %p68
      %p70 = scmp.ne.s32.totalorder %s58, %s59
      %p71 = scmp.eq.s32.totalorder %s28, 1
      %p72 = por %p70, %p71
      %p74 = scmp.ne.s32.totalorder %s59, %s73
      %p75 = scmp.eq.s32.totalorder %s28, 0
      %p76 = por %p74, %p75
      %s78 = sadd.s32 %s77, 1
      %p81 = scmp.eq.s32.totalorder %s22, 1
      %p82 = scmp.ne.s32.totalorder %s77, %s79
      %p83 = scmp.eq.s32.totalorder %s22, 0
      %p84 = por %p82, %p83
      %p85 = scmp.ne.s32.totalorder %s77, %s79
      %p86 = scmp.eq.s32.totalorder %s27, 1
      %p87 = por %p85, %p86
      %p88 = scmp.ne.s32.totalorder %s79, %s80
      %p89 = scmp.eq.s32.totalorder %s27, 0
      %p90 = por %p88, %p89
      %p91 = scmp.ne.s32.totalorder %s79, %s80
      %p92 = scmp.eq.s32.totalorder %s28, 1
      %p93 = por %p91, %p92
      %p95 = scmp.ne.s32.totalorder %s80, %s94
      %p96 = scmp.eq.s32.totalorder %s28, 0
      %p97 = por %p95, %p96
      %s99 = sadd.s32 %s98, 1
      %p102 = scmp.eq.s32.totalorder %s22, 1
      %p103 = scmp.ne.s32.totalorder %s98, %s100
      %p104 = scmp.eq.s32.totalorder %s22, 0
      %p105 = por %p103, %p104
      %p106 = scmp.ne.s32.totalorder %s98, %s100
      %p107 = scmp.eq.s32.totalorder %s27, 1
      %p108 = por %p106, %p107
      %p109 = scmp.ne.s32.totalorder %s100, %s101
      %p110 = scmp.eq.s32.totalorder %s27, 0
      %p111 = por %p109, %p110
      %p112 = scmp.ne.s32.totalorder %s100, %s101
      %p113 = scmp.eq.s32.totalorder %s28, 1
      %p114 = por %p112, %p113
      %p116 = scmp.ne.s32.totalorder %s101, %s115
      %p117 = scmp.eq.s32.totalorder %s28, 0
      %p118 = por %p116, %p117
      %s120 = sadd.s32 %s119, 1
      %p123 = scmp.eq.s32.totalorder %s22, 1
      %p124 = scmp.ne.s32.totalorder %s119, %s121
      %p125 = scmp.eq.s32.totalorder %s22, 0
      %p126 = por %p124, %p125
      %p127 = scmp.ne.s32.totalorder %s119, %s121
      %p128 = scmp.eq.s32.totalorder %s27, 1
      %p129 = por %p127, %p128
      %p130 = scmp.ne.s32.totalorder %s121, %s122
      %p131 = scmp.eq.s32.totalorder %s27, 0
      %p132 = por %p130, %p131
      %p133 = scmp.ne.s32.totalorder %s121, %s122
      %p134 = scmp.eq.s32.totalorder %s28, 1
      %p135 = por %p133, %p134
      %p137 = scmp.ne.s32.totalorder %s122, %s136
      %p138 = scmp.eq.s32.totalorder %s28, 0
      %p139 = por %p137, %p138
      %s141 = sadd.s32 %s140, 1
      %p144 = scmp.eq.s32.totalorder %s22, 1
      %p145 = scmp.ne.s32.totalorder %s140, %s142
      %p146 = scmp.eq.s32.totalorder %s22, 0
      %p147 = por %p145, %p146
      %p148 = scmp.ne.s32.totalorder %s140, %s142
      %p149 = scmp.eq.s32.totalorder %s27, 1
      %p150 = por %p148, %p149
      %p151 = scmp.ne.s32.totalorder %s142, %s143
      %p152 = scmp.eq.s32.totalorder %s27, 0
      %p153 = por %p151, %p152
      %p154 = scmp.ne.s32.totalorder %s142, %s143
      %p155 = scmp.eq.s32.totalorder %s28, 1
      %p156 = por %p154, %p155
      %p158 = scmp.ne.s32.totalorder %s143, %s157
      %p159 = scmp.eq.s32.totalorder %s28, 0
      %p160 = por %p158, %p159
      %s162 = sadd.s32 %s161, 1
      %p165 = scmp.eq.s32.totalorder %s22, 1
      %p166 = scmp.ne.s32.totalorder %s161, %s163
      %p167 = scmp.eq.s32.totalorder %s22, 0
      %p168 = por %p166, %p167
      %p169 = scmp.ne.s32.totalorder %s161, %s163
      %p170 = scmp.eq.s32.totalorder %s27, 1
      %p171 = por %p169, %p170
      %p172 = scmp.ne.s32.totalorder %s163, %s164
      %p173 = scmp.eq.s32.totalorder %s27, 0
      %p174 = por %p172, %p173
      %p175 = scmp.ne.s32.totalorder %s163, %s164
      %p176 = scmp.eq.s32.totalorder %s28, 1
      %p177 = por %p175, %p176
      %p179 = scmp.ne.s32.totalorder %s164, %s178
      %p180 = scmp.eq.s32.totalorder %s28, 0
      %p181 = por %p179, %p180
      %s183 = sadd.s32 %s182, 1
      %p186 = scmp.eq.s32.totalorder %s22, 1
      %p187 = scmp.ne.s32.totalorder %s182, %s184
      %p188 = scmp.eq.s32.totalorder %s22, 0
      %p189 = por %p187, %p188
      %p190 = scmp.ne.s32.totalorder %s182, %s184
      %p191 = scmp.eq.s32.totalorder %s27, 1
      %p192 = por %p190, %p191
      %p193 = scmp.ne.s32.totalorder %s184, %s185
      %p194 = scmp.eq.s32.totalorder %s27, 0
      %p195 = por %p193, %p194
      %p196 = scmp.ne.s32.totalorder %s184, %s185
      %p197 = scmp.eq.s32.totalorder %s28, 1
      %p198 = por %p196, %p197
      %p200 = scmp.ne.s32.totalorder %s185, %s199
      %p201 = scmp.eq.s32.totalorder %s28, 0
      %p202 = por %p200, %p201
      %s204 = sadd.s32 %s203, 1
      %p207 = scmp.eq.s32.totalorder %s22, 1
      %p208 = scmp.ne.s32.totalorder %s203, %s205
      %p209 = scmp.eq.s32.totalorder %s22, 0
      %p210 = por %p208, %p209
      %p211 = scmp.ne.s32.totalorder %s203, %s205
      %p212 = scmp.eq.s32.totalorder %s27, 1
      %p213 = por %p211, %p212
      %p214 = scmp.ne.s32.totalorder %s205, %s206
      %p215 = scmp.eq.s32.totalorder %s27, 0
      %p216 = por %p214, %p215
      %p217 = scmp.ne.s32.totalorder %s205, %s206
      %p218 = scmp.eq.s32.totalorder %s28, 1
      %p219 = por %p217, %p218
      %p221 = scmp.ne.s32.totalorder %s206, %s220
      %p222 = scmp.eq.s32.totalorder %s28, 0
      %p223 = por %p221, %p222
      %s225 = sadd.s32 %s224, 1
      %p228 = scmp.eq.s32.totalorder %s22, 1
      %p229 = scmp.ne.s32.totalorder %s224, %s226
      %p230 = scmp.eq.s32.totalorder %s22, 0
      %p231 = por %p229, %p230
      %p232 = scmp.ne.s32.totalorder %s224, %s226
      %p233 = scmp.eq.s32.totalorder %s27, 1
      %p234 = por %p232, %p233
      %p235 = scmp.ne.s32.totalorder %s226, %s227
      %p236 = scmp.eq.s32.totalorder %s27, 0
      %p237 = por %p235, %p236
      %p238 = scmp.ne.s32.totalorder %s226, %s227
      %p239 = scmp.eq.s32.totalorder %s28, 1
      %p240 = por %p238, %p239
      %p242 = scmp.ne.s32.totalorder %s227, %s241
      %p243 = scmp.eq.s32.totalorder %s28, 0
      %p244 = por %p242, %p243
      %s246 = sadd.s32 %s245, 1
      %p249 = scmp.eq.s32.totalorder %s22, 1
      %p250 = scmp.ne.s32.totalorder %s245, %s247
      %p251 = scmp.eq.s32.totalorder %s22, 0
      %p252 = por %p250, %p251
      %p253 = scmp.ne.s32.totalorder %s245, %s247
      %p254 = scmp.eq.s32.totalorder %s27, 1
      %p255 = por %p253, %p254
      %p256 = scmp.ne.s32.totalorder %s247, %s248
      %p257 = scmp.eq.s32.totalorder %s27, 0
      %p258 = por %p256, %p257
      %p259 = scmp.ne.s32.totalorder %s247, %s248
      %p260 = scmp.eq.s32.totalorder %s28, 1
      %p261 = por %p259, %p260
      %p263 = scmp.ne.s32.totalorder %s248, %s262
      %p264 = scmp.eq.s32.totalorder %s28, 0
      %p265 = por %p263, %p264
      %s267 = sadd.s32 %s266, 1
      %p270 = scmp.eq.s32.totalorder %s22, 1
      %p271 = scmp.ne.s32.totalorder %s266, %s268
      %p272 = scmp.eq.s32.totalorder %s22, 0
      %p273 = por %p271, %p272
      %p274 = scmp.ne.s32.totalorder %s266, %s268
      %p275 = scmp.eq.s32.totalorder %s27, 1
      %p276 = por %p274, %p275
      %p277 = scmp.ne.s32.totalorder %s268, %s269
      %p278 = scmp.eq.s32.totalorder %s27, 0
      %p279 = por %p277, %p278
      %p280 = scmp.ne.s32.totalorder %s268, %s269
      %p281 = scmp.eq.s32.totalorder %s28, 1
      %p282 = por %p280, %p281
      %p284 = scmp.ne.s32.totalorder %s269, %s283
      %p285 = scmp.eq.s32.totalorder %s28, 0
      %p286 = por %p284, %p285
      %s288 = sadd.s32 %s287, 1
      %p291 = scmp.eq.s32.totalorder %s22, 1
      %p292 = scmp.ne.s32.totalorder %s287, %s289
      %p293 = scmp.eq.s32.totalorder %s22, 0
      %p294 = por %p292, %p293
      %p295 = scmp.ne.s32.totalorder %s287, %s289
      %p296 = scmp.eq.s32.totalorder %s27, 1
      %p297 = por %p295, %p296
      %p298 = scmp.ne.s32.totalorder %s289, %s290
      %p299 = scmp.eq.s32.totalorder %s27, 0
      %p300 = por %p298, %p299
      %p301 = scmp.ne.s32.totalorder %s289, %s290
      %p302 = scmp.eq.s32.totalorder %s28, 1
      %p303 = por %p301, %p302
      %p305 = scmp.ne.s32.totalorder %s290, %s304
      %p306 = scmp.eq.s32.totalorder %s28, 0
      %p307 = por %p305, %p306
      %s308 = ssub.s32 %s22, %s29
      %p309 = scmp.eq.s32.totalorder %s308, 0
      %s311 = sadd.s32 %s310, 1
      %s312 = scalar_select %p309, %s310, %s311
      %p315 = pneg %p309
      %p316 = scmp.eq.s32.totalorder %s22, 1
      %p317 = por %p315, %p316
      %p318 = scmp.ne.s32.totalorder %s310, %s313
      %p319 = scmp.eq.s32.totalorder %s22, 0
      %p320 = por %p318, %p319
      %p321 = scmp.ne.s32.totalorder %s310, %s313
      %p322 = scmp.eq.s32.totalorder %s27, 1
      %p323 = por %p321, %p322
      %p324 = scmp.ne.s32.totalorder %s313, %s314
      %p325 = scmp.eq.s32.totalorder %s27, 0
      %p326 = por %p324, %p325
      %p327 = scmp.ne.s32.totalorder %s313, %s314
      %p328 = scmp.eq.s32.totalorder %s28, 1
      %p329 = por %p327, %p328
      %p331 = scmp.ne.s32.totalorder %s314, %s330
      %p332 = scmp.eq.s32.totalorder %s28, 0
      %p333 = por %p331, %p332
      %p334 = scmp.le.s32.totalorder 1, %s22
      %p335 = scmp.lt.s32.totalorder %s22, 3
      %p336 = pnand %p334, %p335
      %p337 = pneg %p336
      // Predicated region
      $region9: #{res_head_apply.1} parent=5 // pred_check
        _
      $region10: #{res_head_apply.1} parent=5 // pred_check_branch
        %339 = sbr.rel (%p336) target = $region12
      $region11: #{res_head_apply.1} parent=5 // pred_region
        %s340 = ssub.s32 %s22, 1
        // Predicated region
        $region13: #{res_head_apply.1} parent=11 // pred_check
          %p341 = pneg %p69
        $region14: #{res_head_apply.1} parent=11 // pred_check_branch
          %343 = sbr.rel (%p341) target = $region16
        $region15: #{res_head_apply.1} parent=11 // pred_region
          _
        $region16: #{res_head_apply.1} parent=11 // pred_fallthru
          _
        // Predicated region
        $region17: #{res_head_apply.1} parent=11 // pred_check
          %p344 = pneg %p90
        $region18: #{res_head_apply.1} parent=11 // pred_check_branch
          %346 = sbr.rel (%p344) target = $region20
        $region19: #{res_head_apply.1} parent=11 // pred_region
          _
        $region20: #{res_head_apply.1} parent=11 // pred_fallthru
          _
        // Predicated region
        $region21: #{res_head_apply.1} parent=11 // pred_check
          %p347 = pneg %p111
        $region22: #{res_head_apply.1} parent=11 // pred_check_branch
          %349 = sbr.rel (%p347) target = $region24
        $region23: #{res_head_apply.1} parent=11 // pred_region
          _
        $region24: #{res_head_apply.1} parent=11 // pred_fallthru
          _
        // Predicated region
        $region25: #{res_head_apply.1} parent=11 // pred_check
          %p350 = pneg %p132
        $region26: #{res_head_apply.1} parent=11 // pred_check_branch
          %352 = sbr.rel (%p350) target = $region28
        $region27: #{res_head_apply.1} parent=11 // pred_region
          _
        $region28: #{res_head_apply.1} parent=11 // pred_fallthru
          _
        // Predicated region
        $region29: #{res_head_apply.1} parent=11 // pred_check
          %p353 = pneg %p153
        $region30: #{res_head_apply.1} parent=11 // pred_check_branch
          %355 = sbr.rel (%p353) target = $region32
        $region31: #{res_head_apply.1} parent=11 // pred_region
          _
        $region32: #{res_head_apply.1} parent=11 // pred_fallthru
          _
        // Predicated region
        $region33: #{res_head_apply.1} parent=11 // pred_check
          %p356 = pneg %p174
        $region34: #{res_head_apply.1} parent=11 // pred_check_branch
          %358 = sbr.rel (%p356) target = $region36
        $region35: #{res_head_apply.1} parent=11 // pred_region
          _
        $region36: #{res_head_apply.1} parent=11 // pred_fallthru
          _
        // Predicated region
        $region37: #{res_head_apply.1} parent=11 // pred_check
          %p359 = pneg %p195
        $region38: #{res_head_apply.1} parent=11 // pred_check_branch
          %361 = sbr.rel (%p359) target = $region40
        $region39: #{res_head_apply.1} parent=11 // pred_region
          _
        $region40: #{res_head_apply.1} parent=11 // pred_fallthru
          _
        // Predicated region
        $region41: #{res_head_apply.1} parent=11 // pred_check
          %p362 = pneg %p216
        $region42: #{res_head_apply.1} parent=11 // pred_check_branch
          %364 = sbr.rel (%p362) target = $region44
        $region43: #{res_head_apply.1} parent=11 // pred_region
          _
        $region44: #{res_head_apply.1} parent=11 // pred_fallthru
          _
        // Predicated region
        $region45: #{res_head_apply.1} parent=11 // pred_check
          %p365 = pneg %p237
        $region46: #{res_head_apply.1} parent=11 // pred_check_branch
          %367 = sbr.rel (%p365) target = $region48
        $region47: #{res_head_apply.1} parent=11 // pred_region
          _
        $region48: #{res_head_apply.1} parent=11 // pred_fallthru
          _
        // Predicated region
        $region49: #{res_head_apply.1} parent=11 // pred_check
          %p368 = pneg %p258
        $region50: #{res_head_apply.1} parent=11 // pred_check_branch
          %370 = sbr.rel (%p368) target = $region52
        $region51: #{res_head_apply.1} parent=11 // pred_region
          _
        $region52: #{res_head_apply.1} parent=11 // pred_fallthru
          _
        // Predicated region
        $region53: #{res_head_apply.1} parent=11 // pred_check
          %p371 = pneg %p279
        $region54: #{res_head_apply.1} parent=11 // pred_check_branch
          %373 = sbr.rel (%p371) target = $region56
        $region55: #{res_head_apply.1} parent=11 // pred_region
          _
        $region56: #{res_head_apply.1} parent=11 // pred_fallthru
          _
        // Predicated region
        $region57: #{res_head_apply.1} parent=11 // pred_check
          %p374 = pneg %p300
        $region58: #{res_head_apply.1} parent=11 // pred_check_branch
          %376 = sbr.rel (%p374) target = $region60
        $region59: #{res_head_apply.1} parent=11 // pred_region
          _
        $region60: #{res_head_apply.1} parent=11 // pred_fallthru
          _
      $region12: #{res_head_apply.1} parent=5 // pred_fallthru
        _
      %p377 = scmp.lt.s32.totalorder %s22, 2
      // Predicated region
      $region61: #{res_head_apply.1} parent=5 // pred_check
        %p378 = pneg %p377
      $region62: #{res_head_apply.1} parent=5 // pred_check_branch
        %380 = sbr.rel (%p378) target = $region64
      $region63: #{res_head_apply.1} parent=5 // pred_region
        // Predicated region
        $region65: #{res_head_apply.1} parent=63 // pred_check
          %p381 = pneg %p42
        $region66: #{res_head_apply.1} parent=63 // pred_check_branch
          %383 = sbr.rel (%p381) target = $region68
        $region67: #{res_head_apply.1} parent=63 // pred_region
          %p384 = scmp.lt.s32.totalorder %s22, 1
          %s385 = scalar_select %p384, %s22, 1
          %s386 = smul.addr %s385, 8
          %s387 = smul.addr %s386, 8
          %s388 = scalar_lea.vmem %s0, %s387
        $region68: #{res_head_apply.1} parent=63 // pred_fallthru
          _
      $region64: #{res_head_apply.1} parent=5 // pred_fallthru
        _
      %p389 = scmp.le.s32.totalorder 1, %s22
      %p390 = scmp.lt.s32.totalorder %s22, 3
      %p391 = pnand %p389, %p390
      %p392 = pneg %p391
      // Predicated region
      $region69: #{res_head_apply.1} parent=5 // pred_check
        _
      $region70: #{res_head_apply.1} parent=5 // pred_check_branch
        %394 = sbr.rel (%p391) target = $region72
      $region71: #{res_head_apply.1} parent=5 // pred_region
        %s395 = ssub.s32 %s22, 1
        %p396 = scmp.lt.s32.totalorder %s27, 1
        %s397 = scalar_select %p396, %s27, 1
        %s398 = smul.addr %s397, 8
        %s399 = smul.addr %s398, 8
        %s400 = scalar_lea.vmem %s0, %s399
        %p401 = pneg %p48
        %p402 = pneg %p45
        %p403 = pneg %p69
        %p404 = pneg %p66
        %p405 = pneg %p90
        %p406 = pneg %p87
        %p407 = pneg %p111
        %p408 = pneg %p108
        %p409 = pneg %p132
        %p410 = pneg %p129
        %p411 = pneg %p153
        %p412 = pneg %p150
        %p413 = pneg %p174
        %p414 = pneg %p171
        %p415 = pneg %p195
        %p416 = pneg %p192
        %p417 = pneg %p216
        %p418 = pneg %p213
        %p419 = pneg %p237
        %p420 = pneg %p234
        %p421 = pneg %p258
        %p422 = pneg %p255
        %p423 = pneg %p279
        %p424 = pneg %p276
        %p425 = pneg %p300
        %p426 = pneg %p297
        %p427 = pneg %p326
        %p428 = pneg %p323
        %s429 = sand.u32 %s313, 1
        %s430 = scalar_lea.sflag [#allocation4], %s429
        %s431 = sand.u32 %s313, 1
        %s432 = smul.addr %s431, 64
        %s433 = scalar_lea.vmem [#allocation3], %s432
        %p434 = scmp.lt.s32.totalorder %s27, 1
        %s435 = scalar_select %p434, %s27, 1
        %s436 = smul.addr %s435, 8
        %s437 = smul.addr %s436, 8
        %s438 = scalar_lea.vmem %s0, %s437
        %v439 = vld [vmem:[%s438] sm:$0xff]
        %v440 = vld [vmem:[%s438 + $0x8] sm:$0xff]
        %v441 = vld [vmem:[%s438 + $0x10] sm:$0xff]
        %v442 = vld [vmem:[%s438 + $0x18] sm:$0xff]
        %v443 = vld [vmem:[%s438 + $0x20] sm:$0xff]
        %v444 = vld [vmem:[%s438 + $0x28] sm:$0xff]
        %v445 = vld [vmem:[%s438 + $0x30] sm:$0xff]
        %v446 = vld [vmem:[%s438 + $0x38] sm:$0xff]
        %v447 = vrot.slane %v443, 4
        %vm448 = vcmask 1047556
        %v449 = vsel %vm448, %v447, %v439
        %v450 = vrot.slane %v439, 4
        %v451 = vsel %vm448, %v443, %v450
        %v453 = vunpack.c.l.s4 1983009808
        %v454 = vunpack.c.0.s8 %v453
        %v455 = vperm.slane %v449, %v454
        %v457 = vunpack.c.l.s4 1983009808
        %v458 = vunpack.c.0.s8 %v457
        %v459 = vperm.slane %v451, %v458
        %v460 = vrot.slane %v445, 4
        %v461 = vsel %vm448, %v460, %v441
        %v462 = vrot.slane %v441, 4
        %v463 = vsel %vm448, %v445, %v462
        %v465 = vunpack.c.l.s4 1983009808
        %v466 = vunpack.c.0.s8 %v465
        %v467 = vperm.slane %v461, %v466
        %v469 = vunpack.c.l.s4 1983009808
        %v470 = vunpack.c.0.s8 %v469
        %v471 = vperm.slane %v463, %v470
        %v472 = vrot.slane %v467, 4
        %v473 = vsel %vm448, %v472, %v455
        %v474 = vrot.slane %v455, 4
        %v475 = vsel %vm448, %v467, %v474
        %v477 = vunpack.c.l.s4 1934713408
        %v478 = vunpack.c.0.s8 %v477
        %v479 = vperm.slane %v473, %v478
        %v481 = vunpack.c.l.s4 1934713408
        %v482 = vunpack.c.0.s8 %v481
        %v483 = vperm.slane %v475, %v482
        %v484 = vrot.slane %v471, 4
        %v485 = vsel %vm448, %v484, %v459
        %v486 = vrot.slane %v459, 4
        %v487 = vsel %vm448, %v471, %v486
        %v489 = vunpack.c.l.s4 1934713408
        %v490 = vunpack.c.0.s8 %v489
        %v491 = vperm.slane %v485, %v490
        %v493 = vunpack.c.l.s4 1934713408
        %v494 = vunpack.c.0.s8 %v493
        %v495 = vperm.slane %v487, %v494
        %v496 = vrot.slane %v479, 4
        %v497 = vsel %vm448, 0.0, %v496
        %v498 = vrot.slane %v483, 4
        %v499 = vsel %vm448, 0.0, %v498
        %v500 = vrot.slane %v491, 4
        %v501 = vsel %vm448, 0.0, %v500
        %v502 = vrot.slane %v495, 4
        %v503 = vsel %vm448, 0.0, %v502
        %v504 = vrot.slane %v444, 4
        %v505 = vsel %vm448, %v504, %v440
        %v506 = vrot.slane %v440, 4
        %v507 = vsel %vm448, %v444, %v506
        %v509 = vunpack.c.l.s4 1983009808
        %v510 = vunpack.c.0.s8 %v509
        %v511 = vperm.slane %v505, %v510
        %v513 = vunpack.c.l.s4 1983009808
        %v514 = vunpack.c.0.s8 %v513
        %v515 = vperm.slane %v507, %v514
        %v516 = vrot.slane %v446, 4
        %v517 = vsel %vm448, %v516, %v442
        %v518 = vrot.slane %v442, 4
        %v519 = vsel %vm448, %v446, %v518
        %v521 = vunpack.c.l.s4 1983009808
        %v522 = vunpack.c.0.s8 %v521
        %v523 = vperm.slane %v517, %v522
        %v525 = vunpack.c.l.s4 1983009808
        %v526 = vunpack.c.0.s8 %v525
        %v527 = vperm.slane %v519, %v526
        %v528 = vrot.slane %v523, 4
        %v529 = vsel %vm448, %v528, %v511
        %v530 = vrot.slane %v511, 4
        %v531 = vsel %vm448, %v523, %v530
        %v533 = vunpack.c.l.s4 1934713408
        %v534 = vunpack.c.0.s8 %v533
        %v535 = vperm.slane %v529, %v534
        %v537 = vunpack.c.l.s4 1934713408
        %v538 = vunpack.c.0.s8 %v537
        %v539 = vperm.slane %v531, %v538
        %v540 = vrot.slane %v527, 4
        %v541 = vsel %vm448, %v540, %v515
        %v542 = vrot.slane %v515, 4
        %v543 = vsel %vm448, %v527, %v542
        %v545 = vunpack.c.l.s4 1934713408
        %v546 = vunpack.c.0.s8 %v545
        %v547 = vperm.slane %v541, %v546
        %v549 = vunpack.c.l.s4 1934713408
        %v550 = vunpack.c.0.s8 %v549
        %v551 = vperm.slane %v543, %v550
        %v552 = vrot.slane %v535, 4
        %v553 = vsel %vm448, 0.0, %v552
        %v554 = vrot.slane %v539, 4
        %v555 = vsel %vm448, 0.0, %v554
        %v556 = vrot.slane %v547, 4
        %v557 = vsel %vm448, 0.0, %v556
        %v558 = vrot.slane %v551, 4
        %v559 = vsel %vm448, 0.0, %v558
        %561 = vrot.lane.b32.xlu0 %v497, 16
        %v562 = vpop.permute.xlu0 %561
        %565 = vrot.lane.b32.xlu0 %v483, 32
        %v566 = vpop.permute.xlu0 %565
        %569 = vrot.lane.b32.xlu0 %v499, 48
        %v570 = vpop.permute.xlu0 %569
        %573 = vrot.lane.b32.xlu0 %v491, 64
        %v574 = vpop.permute.xlu0 %573
        %577 = vrot.lane.b32.xlu0 %v501, 80
        %v578 = vpop.permute.xlu0 %577
        %581 = vrot.lane.b32.xlu0 %v495, 96
        %v582 = vpop.permute.xlu0 %581
        %585 = vrot.lane.b32.xlu0 %v503, 112
        %v586 = vpop.permute.xlu0 %585
        %589 = vrot.lane.b32.xlu0 %v553, 16
        %v590 = vpop.permute.xlu0 %589
        %593 = vrot.lane.b32.xlu0 %v539, 32
        %v594 = vpop.permute.xlu0 %593
        %597 = vrot.lane.b32.xlu0 %v555, 48
        %v598 = vpop.permute.xlu0 %597
        %601 = vrot.lane.b32.xlu0 %v547, 64
        %v602 = vpop.permute.xlu0 %601
        %605 = vrot.lane.b32.xlu0 %v557, 80
        %v606 = vpop.permute.xlu0 %605
        %609 = vrot.lane.b32.xlu0 %v551, 96
        %v610 = vpop.permute.xlu0 %609
        %613 = vrot.lane.b32.xlu0 %v559, 112
        %v614 = vpop.permute.xlu0 %613
        %vm616 = vcmask 130048
        %v617 = vsel %vm616, %v479, %v562
        %vm618 = vcmask 261120
        %v619 = vsel %vm618, %v617, %v566
        %vm620 = vcmask 392192
        %v621 = vsel %vm620, %v619, %v570
        %vm622 = vcmask 523264
        %v623 = vsel %vm622, %v621, %v574
        %vm624 = vcmask 654336
        %v625 = vsel %vm624, %v623, %v578
        %vm626 = vcmask 785408
        %v627 = vsel %vm626, %v625, %v582
        %vm628 = vcmask 916480
        %v629 = vsel %vm628, %v627, %v586
        %v630 = vsel %vm616, %v535, %v590
        %v631 = vsel %vm618, %v630, %v594
        %v632 = vsel %vm620, %v631, %v598
        %v633 = vsel %vm622, %v632, %v602
        %v634 = vsel %vm624, %v633, %v606
        %v635 = vsel %vm626, %v634, %v610
        %v636 = vsel %vm628, %v635, %v614
        %vm637 = vcmask 146432
        %638 = vst.msk [vmem:[#allocation2] sm:$0xff] %vm637, 0.0
        %639 = vst.msk [vmem:[#allocation2 + $0x8] sm:$0xff] %vm637, 0.0
        %vm640 = vcmask 140288
        %641 = vst.msk [vmem:[#allocation2 + $0x10] sm:$0x3] %vm640, 0.0
        %642 = vst.msk [vmem:[#allocation2 + $0x18] sm:$0xff] %vm637, 0.0
        %643 = vst.msk [vmem:[#allocation2 + $0x20] sm:$0xff] %vm637, 0.0
        %644 = vst.msk [vmem:[#allocation2 + $0x28] sm:$0x3] %vm640, 0.0
        %645 = vst.msk [vmem:[#allocation2 + $0x30] sm:$0xff] %vm637, 0.0
        %646 = vst.msk [vmem:[#allocation2 + $0x38] sm:$0xff] %vm637, 0.0
        %647 = vst.msk [vmem:[#allocation2 + $0x40] sm:$0x3] %vm640, 0.0
        %648 = vst.msk [vmem:[#allocation2 + $0x48] sm:$0xff] %vm637, 0.0
        %649 = vst.msk [vmem:[#allocation2 + $0x50] sm:$0xff] %vm637, 0.0
        %650 = vst.msk [vmem:[#allocation2 + $0x58] sm:$0x3] %vm640, 0.0
        %659 = vrot.lane.b32.xlu0 %v439, 1
        %v660 = vpop.permute.xlu0 %659
        %661 = vrot.lane.b32.xlu0 %v440, 1
        %v662 = vpop.permute.xlu0 %661
        %663 = vrot.lane.b32.xlu0 %v441, 1
        %v664 = vpop.permute.xlu0 %663
        %665 = vrot.lane.b32.xlu0 %v442, 1
        %v666 = vpop.permute.xlu0 %665
        %667 = vrot.lane.b32.xlu0 %v443, 1
        %v668 = vpop.permute.xlu0 %667
        %669 = vrot.lane.b32.xlu0 %v444, 1
        %v670 = vpop.permute.xlu0 %669
        %671 = vrot.lane.b32.xlu0 %v445, 1
        %v672 = vpop.permute.xlu0 %671
        %673 = vrot.lane.b32.xlu0 %v446, 1
        %v674 = vpop.permute.xlu0 %673
        %vm683 = vcmask 138248
        %684 = vst.msk [vmem:[#allocation2 + $0x1] sm:$0xff] %vm683, %v660
        %685 = vst.msk [vmem:[#allocation2 + $0x9] sm:$0xff] %vm683, %v662
        %686 = vst.msk [vmem:[#allocation2 + $0x19] sm:$0xff] %vm683, %v664
        %687 = vst.msk [vmem:[#allocation2 + $0x21] sm:$0xff] %vm683, %v666
        %688 = vst.msk [vmem:[#allocation2 + $0x31] sm:$0xff] %vm683, %v668
        %689 = vst.msk [vmem:[#allocation2 + $0x39] sm:$0xff] %vm683, %v670
        %690 = vst.msk [vmem:[#allocation2 + $0x49] sm:$0xff] %vm683, %v672
        %691 = vst.msk [vmem:[#allocation2 + $0x51] sm:$0xff] %vm683, %v674
        %v692 = vld [vmem:[#allocation2] sm:$0xff]
        %v693 = vld [vmem:[#allocation2 + $0x8] sm:$0xff]
        %v694 = vld [vmem:[#allocation2 + $0x10] sm:$0x3]
        %v695 = vld [vmem:[#allocation2 + $0x18] sm:$0xff]
        %v696 = vld [vmem:[#allocation2 + $0x20] sm:$0xff]
        %v697 = vld [vmem:[#allocation2 + $0x28] sm:$0x3]
        %v698 = vld [vmem:[#allocation2 + $0x30] sm:$0xff]
        %v699 = vld [vmem:[#allocation2 + $0x38] sm:$0xff]
        %v700 = vld [vmem:[#allocation2 + $0x40] sm:$0x3]
        %v701 = vld [vmem:[#allocation2 + $0x48] sm:$0xff]
        %v702 = vld [vmem:[#allocation2 + $0x50] sm:$0xff]
        %v703 = vld [vmem:[#allocation2 + $0x58] sm:$0x3]
        %v704 = vrot.slane %v698, 4
        %v705 = vsel %vm448, %v704, %v692
        %v706 = vrot.slane %v692, 4
        %v707 = vsel %vm448, %v698, %v706
        %v709 = vunpack.c.l.s4 1983009808
        %v710 = vunpack.c.0.s8 %v709
        %v711 = vperm.slane %v705, %v710
        %v713 = vunpack.c.l.s4 1983009808
        %v714 = vunpack.c.0.s8 %v713
        %v715 = vperm.slane %v707, %v714
        %v716 = vrot.slane %v701, 4
        %v717 = vsel %vm448, %v716, %v695
        %v718 = vrot.slane %v695, 4
        %v719 = vsel %vm448, %v701, %v718
        %v721 = vunpack.c.l.s4 1983009808
        %v722 = vunpack.c.0.s8 %v721
        %v723 = vperm.slane %v717, %v722
        %v725 = vunpack.c.l.s4 1983009808
        %v726 = vunpack.c.0.s8 %v725
        %v727 = vperm.slane %v719, %v726
        %v728 = vrot.slane %v723, 4
        %v729 = vsel %vm448, %v728, %v711
        %v730 = vrot.slane %v711, 4
        %v731 = vsel %vm448, %v723, %v730
        %v733 = vunpack.c.l.s4 1934713408
        %v734 = vunpack.c.0.s8 %v733
        %v735 = vperm.slane %v729, %v734
        %v737 = vunpack.c.l.s4 1934713408
        %v738 = vunpack.c.0.s8 %v737
        %v739 = vperm.slane %v731, %v738
        %v740 = vrot.slane %v727, 4
        %v741 = vsel %vm448, %v740, %v715
        %v742 = vrot.slane %v715, 4
        %v743 = vsel %vm448, %v727, %v742
        %v745 = vunpack.c.l.s4 1934713408
        %v746 = vunpack.c.0.s8 %v745
        %v747 = vperm.slane %v741, %v746
        %v749 = vunpack.c.l.s4 1934713408
        %v750 = vunpack.c.0.s8 %v749
        %v751 = vperm.slane %v743, %v750
        %v752 = vrot.slane %v735, 4
        %v753 = vsel %vm448, 0.0, %v752
        %v754 = vrot.slane %v739, 4
        %v755 = vsel %vm448, 0.0, %v754
        %v756 = vrot.slane %v747, 4
        %v757 = vsel %vm448, 0.0, %v756
        %v758 = vrot.slane %v751, 4
        %v759 = vsel %vm448, 0.0, %v758
        %v760 = vrot.slane %v699, 4
        %v761 = vsel %vm448, %v760, %v693
        %v762 = vrot.slane %v693, 4
        %v763 = vsel %vm448, %v699, %v762
        %v765 = vunpack.c.l.s4 1983009808
        %v766 = vunpack.c.0.s8 %v765
        %v767 = vperm.slane %v761, %v766
        %v769 = vunpack.c.l.s4 1983009808
        %v770 = vunpack.c.0.s8 %v769
        %v771 = vperm.slane %v763, %v770
        %v772 = vrot.slane %v702, 4
        %v773 = vsel %vm448, %v772, %v696
        %v774 = vrot.slane %v696, 4
        %v775 = vsel %vm448, %v702, %v774
        %v777 = vunpack.c.l.s4 1983009808
        %v778 = vunpack.c.0.s8 %v777
        %v779 = vperm.slane %v773, %v778
        %v781 = vunpack.c.l.s4 1983009808
        %v782 = vunpack.c.0.s8 %v781
        %v783 = vperm.slane %v775, %v782
        %v784 = vrot.slane %v779, 4
        %v785 = vsel %vm448, %v784, %v767
        %v786 = vrot.slane %v767, 4
        %v787 = vsel %vm448, %v779, %v786
        %v789 = vunpack.c.l.s4 1934713408
        %v790 = vunpack.c.0.s8 %v789
        %v791 = vperm.slane %v785, %v790
        %v793 = vunpack.c.l.s4 1934713408
        %v794 = vunpack.c.0.s8 %v793
        %v795 = vperm.slane %v787, %v794
        %v796 = vrot.slane %v783, 4
        %v797 = vsel %vm448, %v796, %v771
        %v798 = vrot.slane %v771, 4
        %v799 = vsel %vm448, %v783, %v798
        %v801 = vunpack.c.l.s4 1934713408
        %v802 = vunpack.c.0.s8 %v801
        %v803 = vperm.slane %v797, %v802
        %v805 = vunpack.c.l.s4 1934713408
        %v806 = vunpack.c.0.s8 %v805
        %v807 = vperm.slane %v799, %v806
        %v808 = vrot.slane %v791, 4
        %v809 = vsel %vm448, 0.0, %v808
        %v810 = vrot.slane %v795, 4
        %v811 = vsel %vm448, 0.0, %v810
        %v812 = vrot.slane %v803, 4
        %v813 = vsel %vm448, 0.0, %v812
        %v814 = vrot.slane %v807, 4
        %v815 = vsel %vm448, 0.0, %v814
        %817 = vrot.lane.b32.xlu0 %v753, 16
        %v818 = vpop.permute.xlu0 %817
        %821 = vrot.lane.b32.xlu0 %v739, 32
        %v822 = vpop.permute.xlu0 %821
        %825 = vrot.lane.b32.xlu0 %v755, 48
        %v826 = vpop.permute.xlu0 %825
        %829 = vrot.lane.b32.xlu0 %v747, 64
        %v830 = vpop.permute.xlu0 %829
        %833 = vrot.lane.b32.xlu0 %v757, 80
        %v834 = vpop.permute.xlu0 %833
        %837 = vrot.lane.b32.xlu0 %v751, 96
        %v838 = vpop.permute.xlu0 %837
        %841 = vrot.lane.b32.xlu0 %v759, 112
        %v842 = vpop.permute.xlu0 %841
        %845 = vrot.lane.b32.xlu0 %v809, 16
        %v846 = vpop.permute.xlu0 %845
        %849 = vrot.lane.b32.xlu0 %v795, 32
        %v850 = vpop.permute.xlu0 %849
        %853 = vrot.lane.b32.xlu0 %v811, 48
        %v854 = vpop.permute.xlu0 %853
        %857 = vrot.lane.b32.xlu0 %v803, 64
        %v858 = vpop.permute.xlu0 %857
        %861 = vrot.lane.b32.xlu0 %v813, 80
        %v862 = vpop.permute.xlu0 %861
        %865 = vrot.lane.b32.xlu0 %v807, 96
        %v866 = vpop.permute.xlu0 %865
        %869 = vrot.lane.b32.xlu0 %v815, 112
        %v870 = vpop.permute.xlu0 %869
        %v872 = vsel %vm616, %v735, %v818
        %v873 = vsel %vm618, %v872, %v822
        %v874 = vsel %vm620, %v873, %v826
        %v875 = vsel %vm622, %v874, %v830
        %v876 = vsel %vm624, %v875, %v834
        %v877 = vsel %vm626, %v876, %v838
        %v878 = vsel %vm628, %v877, %v842
        %v879 = vsel %vm616, %v791, %v846
        %v880 = vsel %vm618, %v879, %v850
        %v881 = vsel %vm620, %v880, %v854
        %v882 = vsel %vm622, %v881, %v858
        %v883 = vsel %vm624, %v882, %v862
        %v884 = vsel %vm626, %v883, %v866
        %v885 = vsel %vm628, %v884, %v870
        %894 = vrot.lane.b32.xlu0 %v692, 127
        %v895 = vpop.permute.xlu0 %894
        %896 = vrot.lane.b32.xlu0 %v693, 127
        %v897 = vpop.permute.xlu0 %896
        %898 = vrot.lane.b32.xlu0 %v695, 127
        %v899 = vpop.permute.xlu0 %898
        %900 = vrot.lane.b32.xlu0 %v696, 127
        %v901 = vpop.permute.xlu0 %900
        %902 = vrot.lane.b32.xlu0 %v698, 127
        %v903 = vpop.permute.xlu0 %902
        %904 = vrot.lane.b32.xlu0 %v699, 127
        %v905 = vpop.permute.xlu0 %904
        %906 = vrot.lane.b32.xlu0 %v701, 127
        %v907 = vpop.permute.xlu0 %906
        %908 = vrot.lane.b32.xlu0 %v702, 127
        %v909 = vpop.permute.xlu0 %908
        %v918 = vrot.slane %v903, 4
        %v919 = vsel %vm448, %v918, %v895
        %v920 = vrot.slane %v895, 4
        %v921 = vsel %vm448, %v903, %v920
        %v923 = vunpack.c.l.s4 1983009808
        %v924 = vunpack.c.0.s8 %v923
        %v925 = vperm.slane %v919, %v924
        %v927 = vunpack.c.l.s4 1983009808
        %v928 = vunpack.c.0.s8 %v927
        %v929 = vperm.slane %v921, %v928
        %v930 = vrot.slane %v907, 4
        %v931 = vsel %vm448, %v930, %v899
        %v932 = vrot.slane %v899, 4
        %v933 = vsel %vm448, %v907, %v932
        %v935 = vunpack.c.l.s4 1983009808
        %v936 = vunpack.c.0.s8 %v935
        %v937 = vperm.slane %v931, %v936
        %v939 = vunpack.c.l.s4 1983009808
        %v940 = vunpack.c.0.s8 %v939
        %v941 = vperm.slane %v933, %v940
        %v942 = vrot.slane %v937, 4
        %v943 = vsel %vm448, %v942, %v925
        %v944 = vrot.slane %v925, 4
        %v945 = vsel %vm448, %v937, %v944
        %v947 = vunpack.c.l.s4 1934713408
        %v948 = vunpack.c.0.s8 %v947
        %v949 = vperm.slane %v943, %v948
        %v951 = vunpack.c.l.s4 1934713408
        %v952 = vunpack.c.0.s8 %v951
        %v953 = vperm.slane %v945, %v952
        %v954 = vrot.slane %v941, 4
        %v955 = vsel %vm448, %v954, %v929
        %v956 = vrot.slane %v929, 4
        %v957 = vsel %vm448, %v941, %v956
        %v959 = vunpack.c.l.s4 1934713408
        %v960 = vunpack.c.0.s8 %v959
        %v961 = vperm.slane %v955, %v960
        %v963 = vunpack.c.l.s4 1934713408
        %v964 = vunpack.c.0.s8 %v963
        %v965 = vperm.slane %v957, %v964
        %v966 = vrot.slane %v949, 4
        %v967 = vsel %vm448, 0.0, %v966
        %v968 = vrot.slane %v953, 4
        %v969 = vsel %vm448, 0.0, %v968
        %v970 = vrot.slane %v961, 4
        %v971 = vsel %vm448, 0.0, %v970
        %v972 = vrot.slane %v965, 4
        %v973 = vsel %vm448, 0.0, %v972
        %v974 = vrot.slane %v905, 4
        %v975 = vsel %vm448, %v974, %v897
        %v976 = vrot.slane %v897, 4
        %v977 = vsel %vm448, %v905, %v976
        %v979 = vunpack.c.l.s4 1983009808
        %v980 = vunpack.c.0.s8 %v979
        %v981 = vperm.slane %v975, %v980
        %v983 = vunpack.c.l.s4 1983009808
        %v984 = vunpack.c.0.s8 %v983
        %v985 = vperm.slane %v977, %v984
        %v986 = vrot.slane %v909, 4
        %v987 = vsel %vm448, %v986, %v901
        %v988 = vrot.slane %v901, 4
        %v989 = vsel %vm448, %v909, %v988
        %v991 = vunpack.c.l.s4 1983009808
        %v992 = vunpack.c.0.s8 %v991
        %v993 = vperm.slane %v987, %v992
        %v995 = vunpack.c.l.s4 1983009808
        %v996 = vunpack.c.0.s8 %v995
        %v997 = vperm.slane %v989, %v996
        %v998 = vrot.slane %v993, 4
        %v999 = vsel %vm448, %v998, %v981
        %v1000 = vrot.slane %v981, 4
        %v1001 = vsel %vm448, %v993, %v1000
        %v1003 = vunpack.c.l.s4 1934713408
        %v1004 = vunpack.c.0.s8 %v1003
        %v1005 = vperm.slane %v999, %v1004
        %v1007 = vunpack.c.l.s4 1934713408
        %v1008 = vunpack.c.0.s8 %v1007
        %v1009 = vperm.slane %v1001, %v1008
        %v1010 = vrot.slane %v997, 4
        %v1011 = vsel %vm448, %v1010, %v985
        %v1012 = vrot.slane %v985, 4
        %v1013 = vsel %vm448, %v997, %v1012
        %v1015 = vunpack.c.l.s4 1934713408
        %v1016 = vunpack.c.0.s8 %v1015
        %v1017 = vperm.slane %v1011, %v1016
        %v1019 = vunpack.c.l.s4 1934713408
        %v1020 = vunpack.c.0.s8 %v1019
        %v1021 = vperm.slane %v1013, %v1020
        %v1022 = vrot.slane %v1005, 4
        %v1023 = vsel %vm448, 0.0, %v1022
        %v1024 = vrot.slane %v1009, 4
        %v1025 = vsel %vm448, 0.0, %v1024
        %v1026 = vrot.slane %v1017, 4
        %v1027 = vsel %vm448, 0.0, %v1026
        %v1028 = vrot.slane %v1021, 4
        %v1029 = vsel %vm448, 0.0, %v1028
        %1031 = vrot.lane.b32.xlu0 %v967, 16
        %v1032 = vpop.permute.xlu0 %1031
        %1035 = vrot.lane.b32.xlu0 %v953, 32
        %v1036 = vpop.permute.xlu0 %1035
        %1039 = vrot.lane.b32.xlu0 %v969, 48
        %v1040 = vpop.permute.xlu0 %1039
        %1043 = vrot.lane.b32.xlu0 %v961, 64
        %v1044 = vpop.permute.xlu0 %1043
        %1047 = vrot.lane.b32.xlu0 %v971, 80
        %v1048 = vpop.permute.xlu0 %1047
        %1051 = vrot.lane.b32.xlu0 %v965, 96
        %v1052 = vpop.permute.xlu0 %1051
        %1055 = vrot.lane.b32.xlu0 %v973, 112
        %v1056 = vpop.permute.xlu0 %1055
        %1059 = vrot.lane.b32.xlu0 %v1023, 16
        %v1060 = vpop.permute.xlu0 %1059
        %1063 = vrot.lane.b32.xlu0 %v1009, 32
        %v1064 = vpop.permute.xlu0 %1063
        %1067 = vrot.lane.b32.xlu0 %v1025, 48
        %v1068 = vpop.permute.xlu0 %1067
        %1071 = vrot.lane.b32.xlu0 %v1017, 64
        %v1072 = vpop.permute.xlu0 %1071
        %1075 = vrot.lane.b32.xlu0 %v1027, 80
        %v1076 = vpop.permute.xlu0 %1075
        %1079 = vrot.lane.b32.xlu0 %v1021, 96
        %v1080 = vpop.permute.xlu0 %1079
        %1083 = vrot.lane.b32.xlu0 %v1029, 112
        %v1084 = vpop.permute.xlu0 %1083
        %v1086 = vsel %vm616, %v949, %v1032
        %v1087 = vsel %vm618, %v1086, %v1036
        %v1088 = vsel %vm620, %v1087, %v1040
        %v1089 = vsel %vm622, %v1088, %v1044
        %v1090 = vsel %vm624, %v1089, %v1048
        %v1091 = vsel %vm626, %v1090, %v1052
        %v1092 = vsel %vm628, %v1091, %v1056
        %v1093 = vsel %vm616, %v1005, %v1060
        %v1094 = vsel %vm618, %v1093, %v1064
        %v1095 = vsel %vm620, %v1094, %v1068
        %v1096 = vsel %vm622, %v1095, %v1072
        %v1097 = vsel %vm624, %v1096, %v1076
        %v1098 = vsel %vm626, %v1097, %v1080
        %v1099 = vsel %vm628, %v1098, %v1084
        %1100 = vrot.lane.b32.xlu0 %v692, 126
        %v1101 = vpop.permute.xlu0 %1100
        %1102 = vrot.lane.b32.xlu0 %v693, 126
        %v1103 = vpop.permute.xlu0 %1102
        %1104 = vrot.lane.b32.xlu0 %v695, 126
        %v1105 = vpop.permute.xlu0 %1104
        %1106 = vrot.lane.b32.xlu0 %v696, 126
        %v1107 = vpop.permute.xlu0 %1106
        %1108 = vrot.lane.b32.xlu0 %v698, 126
        %v1109 = vpop.permute.xlu0 %1108
        %1110 = vrot.lane.b32.xlu0 %v699, 126
        %v1111 = vpop.permute.xlu0 %1110
        %1112 = vrot.lane.b32.xlu0 %v701, 126
        %v1113 = vpop.permute.xlu0 %1112
        %1114 = vrot.lane.b32.xlu0 %v702, 126
        %v1115 = vpop.permute.xlu0 %1114
        %v1124 = vrot.slane %v1109, 4
        %v1125 = vsel %vm448, %v1124, %v1101
        %v1126 = vrot.slane %v1101, 4
        %v1127 = vsel %vm448, %v1109, %v1126
        %v1129 = vunpack.c.l.s4 1983009808
        %v1130 = vunpack.c.0.s8 %v1129
        %v1131 = vperm.slane %v1125, %v1130
        %v1133 = vunpack.c.l.s4 1983009808
        %v1134 = vunpack.c.0.s8 %v1133
        %v1135 = vperm.slane %v1127, %v1134
        %v1136 = vrot.slane %v1113, 4
        %v1137 = vsel %vm448, %v1136, %v1105
        %v1138 = vrot.slane %v1105, 4
        %v1139 = vsel %vm448, %v1113, %v1138
        %v1141 = vunpack.c.l.s4 1983009808
        %v1142 = vunpack.c.0.s8 %v1141
        %v1143 = vperm.slane %v1137, %v1142
        %v1145 = vunpack.c.l.s4 1983009808
        %v1146 = vunpack.c.0.s8 %v1145
        %v1147 = vperm.slane %v1139, %v1146
        %v1148 = vrot.slane %v1143, 4
        %v1149 = vsel %vm448, %v1148, %v1131
        %v1150 = vrot.slane %v1131, 4
        %v1151 = vsel %vm448, %v1143, %v1150
        %v1153 = vunpack.c.l.s4 1934713408
        %v1154 = vunpack.c.0.s8 %v1153
        %v1155 = vperm.slane %v1149, %v1154
        %v1157 = vunpack.c.l.s4 1934713408
        %v1158 = vunpack.c.0.s8 %v1157
        %v1159 = vperm.slane %v1151, %v1158
        %v1160 = vrot.slane %v1147, 4
        %v1161 = vsel %vm448, %v1160, %v1135
        %v1162 = vrot.slane %v1135, 4
        %v1163 = vsel %vm448, %v1147, %v1162
        %v1165 = vunpack.c.l.s4 1934713408
        %v1166 = vunpack.c.0.s8 %v1165
        %v1167 = vperm.slane %v1161, %v1166
        %v1169 = vunpack.c.l.s4 1934713408
        %v1170 = vunpack.c.0.s8 %v1169
        %v1171 = vperm.slane %v1163, %v1170
        %v1172 = vrot.slane %v1155, 4
        %v1173 = vsel %vm448, 0.0, %v1172
        %v1174 = vrot.slane %v1159, 4
        %v1175 = vsel %vm448, 0.0, %v1174
        %v1176 = vrot.slane %v1167, 4
        %v1177 = vsel %vm448, 0.0, %v1176
        %v1178 = vrot.slane %v1171, 4
        %v1179 = vsel %vm448, 0.0, %v1178
        %v1180 = vrot.slane %v1111, 4
        %v1181 = vsel %vm448, %v1180, %v1103
        %v1182 = vrot.slane %v1103, 4
        %v1183 = vsel %vm448, %v1111, %v1182
        %v1185 = vunpack.c.l.s4 1983009808
        %v1186 = vunpack.c.0.s8 %v1185
        %v1187 = vperm.slane %v1181, %v1186
        %v1189 = vunpack.c.l.s4 1983009808
        %v1190 = vunpack.c.0.s8 %v1189
        %v1191 = vperm.slane %v1183, %v1190
        %v1192 = vrot.slane %v1115, 4
        %v1193 = vsel %vm448, %v1192, %v1107
        %v1194 = vrot.slane %v1107, 4
        %v1195 = vsel %vm448, %v1115, %v1194
        %v1197 = vunpack.c.l.s4 1983009808
        %v1198 = vunpack.c.0.s8 %v1197
        %v1199 = vperm.slane %v1193, %v1198
        %v1201 = vunpack.c.l.s4 1983009808
        %v1202 = vunpack.c.0.s8 %v1201
        %v1203 = vperm.slane %v1195, %v1202
        %v1204 = vrot.slane %v1199, 4
        %v1205 = vsel %vm448, %v1204, %v1187
        %v1206 = vrot.slane %v1187, 4
        %v1207 = vsel %vm448, %v1199, %v1206
        %v1209 = vunpack.c.l.s4 1934713408
        %v1210 = vunpack.c.0.s8 %v1209
        %v1211 = vperm.slane %v1205, %v1210
        %v1213 = vunpack.c.l.s4 1934713408
        %v1214 = vunpack.c.0.s8 %v1213
        %v1215 = vperm.slane %v1207, %v1214
        %v1216 = vrot.slane %v1203, 4
        %v1217 = vsel %vm448, %v1216, %v1191
        %v1218 = vrot.slane %v1191, 4
        %v1219 = vsel %vm448, %v1203, %v1218
        %v1221 = vunpack.c.l.s4 1934713408
        %v1222 = vunpack.c.0.s8 %v1221
        %v1223 = vperm.slane %v1217, %v1222
        %v1225 = vunpack.c.l.s4 1934713408
        %v1226 = vunpack.c.0.s8 %v1225
        %v1227 = vperm.slane %v1219, %v1226
        %v1228 = vrot.slane %v1211, 4
        %v1229 = vsel %vm448, 0.0, %v1228
        %v1230 = vrot.slane %v1215, 4
        %v1231 = vsel %vm448, 0.0, %v1230
        %v1232 = vrot.slane %v1223, 4
        %v1233 = vsel %vm448, 0.0, %v1232
        %v1234 = vrot.slane %v1227, 4
        %v1235 = vsel %vm448, 0.0, %v1234
        %1237 = vrot.lane.b32.xlu0 %v1173, 16
        %v1238 = vpop.permute.xlu0 %1237
        %1241 = vrot.lane.b32.xlu0 %v1159, 32
        %v1242 = vpop.permute.xlu0 %1241
        %1245 = vrot.lane.b32.xlu0 %v1175, 48
        %v1246 = vpop.permute.xlu0 %1245
        %1249 = vrot.lane.b32.xlu0 %v1167, 64
        %v1250 = vpop.permute.xlu0 %1249
        %1253 = vrot.lane.b32.xlu0 %v1177, 80
        %v1254 = vpop.permute.xlu0 %1253
        %1257 = vrot.lane.b32.xlu0 %v1171, 96
        %v1258 = vpop.permute.xlu0 %1257
        %1261 = vrot.lane.b32.xlu0 %v1179, 112
        %v1262 = vpop.permute.xlu0 %1261
        %1265 = vrot.lane.b32.xlu0 %v1229, 16
        %v1266 = vpop.permute.xlu0 %1265
        %1269 = vrot.lane.b32.xlu0 %v1215, 32
        %v1270 = vpop.permute.xlu0 %1269
        %1273 = vrot.lane.b32.xlu0 %v1231, 48
        %v1274 = vpop.permute.xlu0 %1273
        %1277 = vrot.lane.b32.xlu0 %v1223, 64
        %v1278 = vpop.permute.xlu0 %1277
        %1281 = vrot.lane.b32.xlu0 %v1233, 80
        %v1282 = vpop.permute.xlu0 %1281
        %1285 = vrot.lane.b32.xlu0 %v1227, 96
        %v1286 = vpop.permute.xlu0 %1285
        %1289 = vrot.lane.b32.xlu0 %v1235, 112
        %v1290 = vpop.permute.xlu0 %1289
        %v1292 = vsel %vm616, %v1155, %v1238
        %v1293 = vsel %vm618, %v1292, %v1242
        %v1294 = vsel %vm620, %v1293, %v1246
        %v1295 = vsel %vm622, %v1294, %v1250
        %v1296 = vsel %vm624, %v1295, %v1254
        %v1297 = vsel %vm626, %v1296, %v1258
        %v1298 = vsel %vm628, %v1297, %v1262
        %v1299 = vsel %vm616, %v1211, %v1266
        %v1300 = vsel %vm618, %v1299, %v1270
        %v1301 = vsel %vm620, %v1300, %v1274
        %v1302 = vsel %vm622, %v1301, %v1278
        %v1303 = vsel %vm624, %v1302, %v1282
        %v1304 = vsel %vm626, %v1303, %v1286
        %v1305 = vsel %vm628, %v1304, %v1290
        %vm1310 = vcmask 1046528
        %v1311 = vrot.slane %v692, 1
        %v1312 = vrot.slane %v693, 1
        %v1313 = vsel %vm1310, %v1311, %v1312
        %v1314 = vrot.slane %v694, 1
        %v1315 = vsel %vm1310, %v1312, %v1314
        %v1316 = vrot.slane %v695, 1
        %v1317 = vrot.slane %v696, 1
        %v1318 = vsel %vm1310, %v1316, %v1317
        %v1319 = vrot.slane %v697, 1
        %v1320 = vsel %vm1310, %v1317, %v1319
        %v1321 = vrot.slane %v698, 1
        %v1322 = vrot.slane %v699, 1
        %v1323 = vsel %vm1310, %v1321, %v1322
        %v1324 = vrot.slane %v700, 1
        %v1325 = vsel %vm1310, %v1322, %v1324
        %v1326 = vrot.slane %v701, 1
        %v1327 = vrot.slane %v702, 1
        %v1328 = vsel %vm1310, %v1326, %v1327
        %v1329 = vrot.slane %v703, 1
        %v1330 = vsel %vm1310, %v1327, %v1329
        %v1339 = vrot.slane %v1323, 4
        %v1340 = vsel %vm448, %v1339, %v1313
        %v1341 = vrot.slane %v1313, 4
        %v1342 = vsel %vm448, %v1323, %v1341
        %v1344 = vunpack.c.l.s4 1983009808
        %v1345 = vunpack.c.0.s8 %v1344
        %v1346 = vperm.slane %v1340, %v1345
        %v1348 = vunpack.c.l.s4 1983009808
        %v1349 = vunpack.c.0.s8 %v1348
        %v1350 = vperm.slane %v1342, %v1349
        %v1351 = vrot.slane %v1328, 4
        %v1352 = vsel %vm448, %v1351, %v1318
        %v1353 = vrot.slane %v1318, 4
        %v1354 = vsel %vm448, %v1328, %v1353
        %v1356 = vunpack.c.l.s4 1983009808
        %v1357 = vunpack.c.0.s8 %v1356
        %v1358 = vperm.slane %v1352, %v1357
        %v1360 = vunpack.c.l.s4 1983009808
        %v1361 = vunpack.c.0.s8 %v1360
        %v1362 = vperm.slane %v1354, %v1361
        %v1363 = vrot.slane %v1358, 4
        %v1364 = vsel %vm448, %v1363, %v1346
        %v1365 = vrot.slane %v1346, 4
        %v1366 = vsel %vm448, %v1358, %v1365
        %v1368 = vunpack.c.l.s4 1934713408
        %v1369 = vunpack.c.0.s8 %v1368
        %v1370 = vperm.slane %v1364, %v1369
        %v1372 = vunpack.c.l.s4 1934713408
        %v1373 = vunpack.c.0.s8 %v1372
        %v1374 = vperm.slane %v1366, %v1373
        %v1375 = vrot.slane %v1362, 4
        %v1376 = vsel %vm448, %v1375, %v1350
        %v1377 = vrot.slane %v1350, 4
        %v1378 = vsel %vm448, %v1362, %v1377
        %v1380 = vunpack.c.l.s4 1934713408
        %v1381 = vunpack.c.0.s8 %v1380
        %v1382 = vperm.slane %v1376, %v1381
        %v1384 = vunpack.c.l.s4 1934713408
        %v1385 = vunpack.c.0.s8 %v1384
        %v1386 = vperm.slane %v1378, %v1385
        %v1387 = vrot.slane %v1370, 4
        %v1388 = vsel %vm448, 0.0, %v1387
        %v1389 = vrot.slane %v1374, 4
        %v1390 = vsel %vm448, 0.0, %v1389
        %v1391 = vrot.slane %v1382, 4
        %v1392 = vsel %vm448, 0.0, %v1391
        %v1393 = vrot.slane %v1386, 4
        %v1394 = vsel %vm448, 0.0, %v1393
        %v1395 = vrot.slane %v1325, 4
        %v1396 = vsel %vm448, %v1395, %v1315
        %v1397 = vrot.slane %v1315, 4
        %v1398 = vsel %vm448, %v1325, %v1397
        %v1400 = vunpack.c.l.s4 1983009808
        %v1401 = vunpack.c.0.s8 %v1400
        %v1402 = vperm.slane %v1396, %v1401
        %v1404 = vunpack.c.l.s4 1983009808
        %v1405 = vunpack.c.0.s8 %v1404
        %v1406 = vperm.slane %v1398, %v1405
        %v1407 = vrot.slane %v1330, 4
        %v1408 = vsel %vm448, %v1407, %v1320
        %v1409 = vrot.slane %v1320, 4
        %v1410 = vsel %vm448, %v1330, %v1409
        %v1412 = vunpack.c.l.s4 1983009808
        %v1413 = vunpack.c.0.s8 %v1412
        %v1414 = vperm.slane %v1408, %v1413
        %v1416 = vunpack.c.l.s4 1983009808
        %v1417 = vunpack.c.0.s8 %v1416
        %v1418 = vperm.slane %v1410, %v1417
        %v1419 = vrot.slane %v1414, 4
        %v1420 = vsel %vm448, %v1419, %v1402
        %v1421 = vrot.slane %v1402, 4
        %v1422 = vsel %vm448, %v1414, %v1421
        %v1424 = vunpack.c.l.s4 1934713408
        %v1425 = vunpack.c.0.s8 %v1424
        %v1426 = vperm.slane %v1420, %v1425
        %v1428 = vunpack.c.l.s4 1934713408
        %v1429 = vunpack.c.0.s8 %v1428
        %v1430 = vperm.slane %v1422, %v1429
        %v1431 = vrot.slane %v1418, 4
        %v1432 = vsel %vm448, %v1431, %v1406
        %v1433 = vrot.slane %v1406, 4
        %v1434 = vsel %vm448, %v1418, %v1433
        %v1436 = vunpack.c.l.s4 1934713408
        %v1437 = vunpack.c.0.s8 %v1436
        %v1438 = vperm.slane %v1432, %v1437
        %v1440 = vunpack.c.l.s4 1934713408
        %v1441 = vunpack.c.0.s8 %v1440
        %v1442 = vperm.slane %v1434, %v1441
        %v1443 = vrot.slane %v1426, 4
        %v1444 = vsel %vm448, 0.0, %v1443
        %v1445 = vrot.slane %v1430, 4
        %v1446 = vsel %vm448, 0.0, %v1445
        %v1447 = vrot.slane %v1438, 4
        %v1448 = vsel %vm448, 0.0, %v1447
        %v1449 = vrot.slane %v1442, 4
        %v1450 = vsel %vm448, 0.0, %v1449
        %1452 = vrot.lane.b32.xlu0 %v1388, 16
        %v1453 = vpop.permute.xlu0 %1452
        %1456 = vrot.lane.b32.xlu0 %v1374, 32
        %v1457 = vpop.permute.xlu0 %1456
        %1460 = vrot.lane.b32.xlu0 %v1390, 48
        %v1461 = vpop.permute.xlu0 %1460
        %1464 = vrot.lane.b32.xlu0 %v1382, 64
        %v1465 = vpop.permute.xlu0 %1464
        %1468 = vrot.lane.b32.xlu0 %v1392, 80
        %v1469 = vpop.permute.xlu0 %1468
        %1472 = vrot.lane.b32.xlu0 %v1386, 96
        %v1473 = vpop.permute.xlu0 %1472
        %1476 = vrot.lane.b32.xlu0 %v1394, 112
        %v1477 = vpop.permute.xlu0 %1476
        %1480 = vrot.lane.b32.xlu0 %v1444, 16
        %v1481 = vpop.permute.xlu0 %1480
        %1484 = vrot.lane.b32.xlu0 %v1430, 32
        %v1485 = vpop.permute.xlu0 %1484
        %1488 = vrot.lane.b32.xlu0 %v1446, 48
        %v1489 = vpop.permute.xlu0 %1488
        %1492 = vrot.lane.b32.xlu0 %v1438, 64
        %v1493 = vpop.permute.xlu0 %1492
        %1496 = vrot.lane.b32.xlu0 %v1448, 80
        %v1497 = vpop.permute.xlu0 %1496
        %1500 = vrot.lane.b32.xlu0 %v1442, 96
        %v1501 = vpop.permute.xlu0 %1500
        %1504 = vrot.lane.b32.xlu0 %v1450, 112
        %v1505 = vpop.permute.xlu0 %1504
        %v1507 = vsel %vm616, %v1370, %v1453
        %v1508 = vsel %vm618, %v1507, %v1457
        %v1509 = vsel %vm620, %v1508, %v1461
        %v1510 = vsel %vm622, %v1509, %v1465
        %v1511 = vsel %vm624, %v1510, %v1469
        %v1512 = vsel %vm626, %v1511, %v1473
        %v1513 = vsel %vm628, %v1512, %v1477
        %v1514 = vsel %vm616, %v1426, %v1481
        %v1515 = vsel %vm618, %v1514, %v1485
        %v1516 = vsel %vm620, %v1515, %v1489
        %v1517 = vsel %vm622, %v1516, %v1493
        %v1518 = vsel %vm624, %v1517, %v1497
        %v1519 = vsel %vm626, %v1518, %v1501
        %v1520 = vsel %vm628, %v1519, %v1505
        %1521 = vrot.lane.b32.xlu0 %v1313, 127
        %v1522 = vpop.permute.xlu0 %1521
        %1523 = vrot.lane.b32.xlu0 %v1315, 127
        %v1524 = vpop.permute.xlu0 %1523
        %1525 = vrot.lane.b32.xlu0 %v1318, 127
        %v1526 = vpop.permute.xlu0 %1525
        %1527 = vrot.lane.b32.xlu0 %v1320, 127
        %v1528 = vpop.permute.xlu0 %1527
        %1529 = vrot.lane.b32.xlu0 %v1323, 127
        %v1530 = vpop.permute.xlu0 %1529
        %1531 = vrot.lane.b32.xlu0 %v1325, 127
        %v1532 = vpop.permute.xlu0 %1531
        %1533 = vrot.lane.b32.xlu0 %v1328, 127
        %v1534 = vpop.permute.xlu0 %1533
        %1535 = vrot.lane.b32.xlu0 %v1330, 127
        %v1536 = vpop.permute.xlu0 %1535
        %v1545 = vrot.slane %v1530, 4
        %v1546 = vsel %vm448, %v1545, %v1522
        %v1547 = vrot.slane %v1522, 4
        %v1548 = vsel %vm448, %v1530, %v1547
        %v1550 = vunpack.c.l.s4 1983009808
        %v1551 = vunpack.c.0.s8 %v1550
        %v1552 = vperm.slane %v1546, %v1551
        %v1554 = vunpack.c.l.s4 1983009808
        %v1555 = vunpack.c.0.s8 %v1554
        %v1556 = vperm.slane %v1548, %v1555
        %v1557 = vrot.slane %v1534, 4
        %v1558 = vsel %vm448, %v1557, %v1526
        %v1559 = vrot.slane %v1526, 4
        %v1560 = vsel %vm448, %v1534, %v1559
        %v1562 = vunpack.c.l.s4 1983009808
        %v1563 = vunpack.c.0.s8 %v1562
        %v1564 = vperm.slane %v1558, %v1563
        %v1566 = vunpack.c.l.s4 1983009808
        %v1567 = vunpack.c.0.s8 %v1566
        %v1568 = vperm.slane %v1560, %v1567
        %v1569 = vrot.slane %v1564, 4
        %v1570 = vsel %vm448, %v1569, %v1552
        %v1571 = vrot.slane %v1552, 4
        %v1572 = vsel %vm448, %v1564, %v1571
        %v1574 = vunpack.c.l.s4 1934713408
        %v1575 = vunpack.c.0.s8 %v1574
        %v1576 = vperm.slane %v1570, %v1575
        %v1578 = vunpack.c.l.s4 1934713408
        %v1579 = vunpack.c.0.s8 %v1578
        %v1580 = vperm.slane %v1572, %v1579
        %v1581 = vrot.slane %v1568, 4
        %v1582 = vsel %vm448, %v1581, %v1556
        %v1583 = vrot.slane %v1556, 4
        %v1584 = vsel %vm448, %v1568, %v1583
        %v1586 = vunpack.c.l.s4 1934713408
        %v1587 = vunpack.c.0.s8 %v1586
        %v1588 = vperm.slane %v1582, %v1587
        %v1590 = vunpack.c.l.s4 1934713408
        %v1591 = vunpack.c.0.s8 %v1590
        %v1592 = vperm.slane %v1584, %v1591
        %v1593 = vrot.slane %v1576, 4
        %v1594 = vsel %vm448, 0.0, %v1593
        %v1595 = vrot.slane %v1580, 4
        %v1596 = vsel %vm448, 0.0, %v1595
        %v1597 = vrot.slane %v1588, 4
        %v1598 = vsel %vm448, 0.0, %v1597
        %v1599 = vrot.slane %v1592, 4
        %v1600 = vsel %vm448, 0.0, %v1599
        %v1601 = vrot.slane %v1532, 4
        %v1602 = vsel %vm448, %v1601, %v1524
        %v1603 = vrot.slane %v1524, 4
        %v1604 = vsel %vm448, %v1532, %v1603
        %v1606 = vunpack.c.l.s4 1983009808
        %v1607 = vunpack.c.0.s8 %v1606
        %v1608 = vperm.slane %v1602, %v1607
        %v1610 = vunpack.c.l.s4 1983009808
        %v1611 = vunpack.c.0.s8 %v1610
        %v1612 = vperm.slane %v1604, %v1611
        %v1613 = vrot.slane %v1536, 4
        %v1614 = vsel %vm448, %v1613, %v1528
        %v1615 = vrot.slane %v1528, 4
        %v1616 = vsel %vm448, %v1536, %v1615
        %v1618 = vunpack.c.l.s4 1983009808
        %v1619 = vunpack.c.0.s8 %v1618
        %v1620 = vperm.slane %v1614, %v1619
        %v1622 = vunpack.c.l.s4 1983009808
        %v1623 = vunpack.c.0.s8 %v1622
        %v1624 = vperm.slane %v1616, %v1623
        %v1625 = vrot.slane %v1620, 4
        %v1626 = vsel %vm448, %v1625, %v1608
        %v1627 = vrot.slane %v1608, 4
        %v1628 = vsel %vm448, %v1620, %v1627
        %v1630 = vunpack.c.l.s4 1934713408
        %v1631 = vunpack.c.0.s8 %v1630
        %v1632 = vperm.slane %v1626, %v1631
        %v1634 = vunpack.c.l.s4 1934713408
        %v1635 = vunpack.c.0.s8 %v1634
        %v1636 = vperm.slane %v1628, %v1635
        %v1637 = vrot.slane %v1624, 4
        %v1638 = vsel %vm448, %v1637, %v1612
        %v1639 = vrot.slane %v1612, 4
        %v1640 = vsel %vm448, %v1624, %v1639
        %v1642 = vunpack.c.l.s4 1934713408
        %v1643 = vunpack.c.0.s8 %v1642
        %v1644 = vperm.slane %v1638, %v1643
        %v1646 = vunpack.c.l.s4 1934713408
        %v1647 = vunpack.c.0.s8 %v1646
        %v1648 = vperm.slane %v1640, %v1647
        %v1649 = vrot.slane %v1632, 4
        %v1650 = vsel %vm448, 0.0, %v1649
        %v1651 = vrot.slane %v1636, 4
        %v1652 = vsel %vm448, 0.0, %v1651
        %v1653 = vrot.slane %v1644, 4
        %v1654 = vsel %vm448, 0.0, %v1653
        %v1655 = vrot.slane %v1648, 4
        %v1656 = vsel %vm448, 0.0, %v1655
        %1658 = vrot.lane.b32.xlu0 %v1594, 16
        %v1659 = vpop.permute.xlu0 %1658
        %1662 = vrot.lane.b32.xlu0 %v1580, 32
        %v1663 = vpop.permute.xlu0 %1662
        %1666 = vrot.lane.b32.xlu0 %v1596, 48
        %v1667 = vpop.permute.xlu0 %1666
        %1670 = vrot.lane.b32.xlu0 %v1588, 64
        %v1671 = vpop.permute.xlu0 %1670
        %1674 = vrot.lane.b32.xlu0 %v1598, 80
        %v1675 = vpop.permute.xlu0 %1674
        %1678 = vrot.lane.b32.xlu0 %v1592, 96
        %v1679 = vpop.permute.xlu0 %1678
        %1682 = vrot.lane.b32.xlu0 %v1600, 112
        %v1683 = vpop.permute.xlu0 %1682
        %1686 = vrot.lane.b32.xlu0 %v1650, 16
        %v1687 = vpop.permute.xlu0 %1686
        %1690 = vrot.lane.b32.xlu0 %v1636, 32
        %v1691 = vpop.permute.xlu0 %1690
        %1694 = vrot.lane.b32.xlu0 %v1652, 48
        %v1695 = vpop.permute.xlu0 %1694
        %1698 = vrot.lane.b32.xlu0 %v1644, 64
        %v1699 = vpop.permute.xlu0 %1698
        %1702 = vrot.lane.b32.xlu0 %v1654, 80
        %v1703 = vpop.permute.xlu0 %1702
        %1706 = vrot.lane.b32.xlu0 %v1648, 96
        %v1707 = vpop.permute.xlu0 %1706
        %1710 = vrot.lane.b32.xlu0 %v1656, 112
        %v1711 = vpop.permute.xlu0 %1710
        %v1713 = vsel %vm616, %v1576, %v1659
        %v1714 = vsel %vm618, %v1713, %v1663
        %v1715 = vsel %vm620, %v1714, %v1667
        %v1716 = vsel %vm622, %v1715, %v1671
        %v1717 = vsel %vm624, %v1716, %v1675
        %v1718 = vsel %vm626, %v1717, %v1679
        %v1719 = vsel %vm628, %v1718, %v1683
        %v1720 = vsel %vm616, %v1632, %v1687
        %v1721 = vsel %vm618, %v1720, %v1691
        %v1722 = vsel %vm620, %v1721, %v1695
        %v1723 = vsel %vm622, %v1722, %v1699
        %v1724 = vsel %vm624, %v1723, %v1703
        %v1725 = vsel %vm626, %v1724, %v1707
        %v1726 = vsel %vm628, %v1725, %v1711
        %1727 = vrot.lane.b32.xlu0 %v1313, 126
        %v1728 = vpop.permute.xlu0 %1727
        %1729 = vrot.lane.b32.xlu0 %v1315, 126
        %v1730 = vpop.permute.xlu0 %1729
        %1731 = vrot.lane.b32.xlu0 %v1318, 126
        %v1732 = vpop.permute.xlu0 %1731
        %1733 = vrot.lane.b32.xlu0 %v1320, 126
        %v1734 = vpop.permute.xlu0 %1733
        %1735 = vrot.lane.b32.xlu0 %v1323, 126
        %v1736 = vpop.permute.xlu0 %1735
        %1737 = vrot.lane.b32.xlu0 %v1325, 126
        %v1738 = vpop.permute.xlu0 %1737
        %1739 = vrot.lane.b32.xlu0 %v1328, 126
        %v1740 = vpop.permute.xlu0 %1739
        %1741 = vrot.lane.b32.xlu0 %v1330, 126
        %v1742 = vpop.permute.xlu0 %1741
        %v1751 = vrot.slane %v1736, 4
        %v1752 = vsel %vm448, %v1751, %v1728
        %v1753 = vrot.slane %v1728, 4
        %v1754 = vsel %vm448, %v1736, %v1753
        %v1756 = vunpack.c.l.s4 1983009808
        %v1757 = vunpack.c.0.s8 %v1756
        %v1758 = vperm.slane %v1752, %v1757
        %v1760 = vunpack.c.l.s4 1983009808
        %v1761 = vunpack.c.0.s8 %v1760
        %v1762 = vperm.slane %v1754, %v1761
        %v1763 = vrot.slane %v1740, 4
        %v1764 = vsel %vm448, %v1763, %v1732
        %v1765 = vrot.slane %v1732, 4
        %v1766 = vsel %vm448, %v1740, %v1765
        %v1768 = vunpack.c.l.s4 1983009808
        %v1769 = vunpack.c.0.s8 %v1768
        %v1770 = vperm.slane %v1764, %v1769
        %v1772 = vunpack.c.l.s4 1983009808
        %v1773 = vunpack.c.0.s8 %v1772
        %v1774 = vperm.slane %v1766, %v1773
        %v1775 = vrot.slane %v1770, 4
        %v1776 = vsel %vm448, %v1775, %v1758
        %v1777 = vrot.slane %v1758, 4
        %v1778 = vsel %vm448, %v1770, %v1777
        %v1780 = vunpack.c.l.s4 1934713408
        %v1781 = vunpack.c.0.s8 %v1780
        %v1782 = vperm.slane %v1776, %v1781
        %v1784 = vunpack.c.l.s4 1934713408
        %v1785 = vunpack.c.0.s8 %v1784
        %v1786 = vperm.slane %v1778, %v1785
        %v1787 = vrot.slane %v1774, 4
        %v1788 = vsel %vm448, %v1787, %v1762
        %v1789 = vrot.slane %v1762, 4
        %v1790 = vsel %vm448, %v1774, %v1789
        %v1792 = vunpack.c.l.s4 1934713408
        %v1793 = vunpack.c.0.s8 %v1792
        %v1794 = vperm.slane %v1788, %v1793
        %v1796 = vunpack.c.l.s4 1934713408
        %v1797 = vunpack.c.0.s8 %v1796
        %v1798 = vperm.slane %v1790, %v1797
        %v1799 = vrot.slane %v1782, 4
        %v1800 = vsel %vm448, 0.0, %v1799
        %v1801 = vrot.slane %v1786, 4
        %v1802 = vsel %vm448, 0.0, %v1801
        %v1803 = vrot.slane %v1794, 4
        %v1804 = vsel %vm448, 0.0, %v1803
        %v1805 = vrot.slane %v1798, 4
        %v1806 = vsel %vm448, 0.0, %v1805
        %v1807 = vrot.slane %v1738, 4
        %v1808 = vsel %vm448, %v1807, %v1730
        %v1809 = vrot.slane %v1730, 4
        %v1810 = vsel %vm448, %v1738, %v1809
        %v1812 = vunpack.c.l.s4 1983009808
        %v1813 = vunpack.c.0.s8 %v1812
        %v1814 = vperm.slane %v1808, %v1813
        %v1816 = vunpack.c.l.s4 1983009808
        %v1817 = vunpack.c.0.s8 %v1816
        %v1818 = vperm.slane %v1810, %v1817
        %v1819 = vrot.slane %v1742, 4
        %v1820 = vsel %vm448, %v1819, %v1734
        %v1821 = vrot.slane %v1734, 4
        %v1822 = vsel %vm448, %v1742, %v1821
        %v1824 = vunpack.c.l.s4 1983009808
        %v1825 = vunpack.c.0.s8 %v1824
        %v1826 = vperm.slane %v1820, %v1825
        %v1828 = vunpack.c.l.s4 1983009808
        %v1829 = vunpack.c.0.s8 %v1828
        %v1830 = vperm.slane %v1822, %v1829
        %v1831 = vrot.slane %v1826, 4
        %v1832 = vsel %vm448, %v1831, %v1814
        %v1833 = vrot.slane %v1814, 4
        %v1834 = vsel %vm448, %v1826, %v1833
        %v1836 = vunpack.c.l.s4 1934713408
        %v1837 = vunpack.c.0.s8 %v1836
        %v1838 = vperm.slane %v1832, %v1837
        %v1840 = vunpack.c.l.s4 1934713408
        %v1841 = vunpack.c.0.s8 %v1840
        %v1842 = vperm.slane %v1834, %v1841
        %v1843 = vrot.slane %v1830, 4
        %v1844 = vsel %vm448, %v1843, %v1818
        %v1845 = vrot.slane %v1818, 4
        %v1846 = vsel %vm448, %v1830, %v1845
        %v1848 = vunpack.c.l.s4 1934713408
        %v1849 = vunpack.c.0.s8 %v1848
        %v1850 = vperm.slane %v1844, %v1849
        %v1852 = vunpack.c.l.s4 1934713408
        %v1853 = vunpack.c.0.s8 %v1852
        %v1854 = vperm.slane %v1846, %v1853
        %v1855 = vrot.slane %v1838, 4
        %v1856 = vsel %vm448, 0.0, %v1855
        %v1857 = vrot.slane %v1842, 4
        %v1858 = vsel %vm448, 0.0, %v1857
        %v1859 = vrot.slane %v1850, 4
        %v1860 = vsel %vm448, 0.0, %v1859
        %v1861 = vrot.slane %v1854, 4
        %v1862 = vsel %vm448, 0.0, %v1861
        %1864 = vrot.lane.b32.xlu0 %v1800, 16
        %v1865 = vpop.permute.xlu0 %1864
        %1868 = vrot.lane.b32.xlu0 %v1786, 32
        %v1869 = vpop.permute.xlu0 %1868
        %1872 = vrot.lane.b32.xlu0 %v1802, 48
        %v1873 = vpop.permute.xlu0 %1872
        %1876 = vrot.lane.b32.xlu0 %v1794, 64
        %v1877 = vpop.permute.xlu0 %1876
        %1880 = vrot.lane.b32.xlu0 %v1804, 80
        %v1881 = vpop.permute.xlu0 %1880
        %1884 = vrot.lane.b32.xlu0 %v1798, 96
        %v1885 = vpop.permute.xlu0 %1884
        %1888 = vrot.lane.b32.xlu0 %v1806, 112
        %v1889 = vpop.permute.xlu0 %1888
        %1892 = vrot.lane.b32.xlu0 %v1856, 16
        %v1893 = vpop.permute.xlu0 %1892
        %1896 = vrot.lane.b32.xlu0 %v1842, 32
        %v1897 = vpop.permute.xlu0 %1896
        %1900 = vrot.lane.b32.xlu0 %v1858, 48
        %v1901 = vpop.permute.xlu0 %1900
        %1904 = vrot.lane.b32.xlu0 %v1850, 64
        %v1905 = vpop.permute.xlu0 %1904
        %1908 = vrot.lane.b32.xlu0 %v1860, 80
        %v1909 = vpop.permute.xlu0 %1908
        %1912 = vrot.lane.b32.xlu0 %v1854, 96
        %v1913 = vpop.permute.xlu0 %1912
        %1916 = vrot.lane.b32.xlu0 %v1862, 112
        %v1917 = vpop.permute.xlu0 %1916
        %v1919 = vsel %vm616, %v1782, %v1865
        %v1920 = vsel %vm618, %v1919, %v1869
        %v1921 = vsel %vm620, %v1920, %v1873
        %v1922 = vsel %vm622, %v1921, %v1877
        %v1923 = vsel %vm624, %v1922, %v1881
        %v1924 = vsel %vm626, %v1923, %v1885
        %v1925 = vsel %vm628, %v1924, %v1889
        %v1926 = vsel %vm616, %v1838, %v1893
        %v1927 = vsel %vm618, %v1926, %v1897
        %v1928 = vsel %vm620, %v1927, %v1901
        %v1929 = vsel %vm622, %v1928, %v1905
        %v1930 = vsel %vm624, %v1929, %v1909
        %v1931 = vsel %vm626, %v1930, %v1913
        %v1932 = vsel %vm628, %v1931, %v1917
        %vm1933 = vcmask 1045504
        %v1934 = vrot.slane %v692, 2
        %v1935 = vrot.slane %v693, 2
        %v1936 = vsel %vm1933, %v1934, %v1935
        %v1937 = vrot.slane %v694, 2
        %v1938 = vsel %vm1933, %v1935, %v1937
        %v1939 = vrot.slane %v695, 2
        %v1940 = vrot.slane %v696, 2
        %v1941 = vsel %vm1933, %v1939, %v1940
        %v1942 = vrot.slane %v697, 2
        %v1943 = vsel %vm1933, %v1940, %v1942
        %v1944 = vrot.slane %v698, 2
        %v1945 = vrot.slane %v699, 2
        %v1946 = vsel %vm1933, %v1944, %v1945
        %v1947 = vrot.slane %v700, 2
        %v1948 = vsel %vm1933, %v1945, %v1947
        %v1949 = vrot.slane %v701, 2
        %v1950 = vrot.slane %v702, 2
        %v1951 = vsel %vm1933, %v1949, %v1950
        %v1952 = vrot.slane %v703, 2
        %v1953 = vsel %vm1933, %v1950, %v1952
        %v1962 = vrot.slane %v1946, 4
        %v1963 = vsel %vm448, %v1962, %v1936
        %v1964 = vrot.slane %v1936, 4
        %v1965 = vsel %vm448, %v1946, %v1964
        %v1967 = vunpack.c.l.s4 1983009808
        %v1968 = vunpack.c.0.s8 %v1967
        %v1969 = vperm.slane %v1963, %v1968
        %v1971 = vunpack.c.l.s4 1983009808
        %v1972 = vunpack.c.0.s8 %v1971
        %v1973 = vperm.slane %v1965, %v1972
        %v1974 = vrot.slane %v1951, 4
        %v1975 = vsel %vm448, %v1974, %v1941
        %v1976 = vrot.slane %v1941, 4
        %v1977 = vsel %vm448, %v1951, %v1976
        %v1979 = vunpack.c.l.s4 1983009808
        %v1980 = vunpack.c.0.s8 %v1979
        %v1981 = vperm.slane %v1975, %v1980
        %v1983 = vunpack.c.l.s4 1983009808
        %v1984 = vunpack.c.0.s8 %v1983
        %v1985 = vperm.slane %v1977, %v1984
        %v1986 = vrot.slane %v1981, 4
        %v1987 = vsel %vm448, %v1986, %v1969
        %v1988 = vrot.slane %v1969, 4
        %v1989 = vsel %vm448, %v1981, %v1988
        %v1991 = vunpack.c.l.s4 1934713408
        %v1992 = vunpack.c.0.s8 %v1991
        %v1993 = vperm.slane %v1987, %v1992
        %v1995 = vunpack.c.l.s4 1934713408
        %v1996 = vunpack.c.0.s8 %v1995
        %v1997 = vperm.slane %v1989, %v1996
        %v1998 = vrot.slane %v1985, 4
        %v1999 = vsel %vm448, %v1998, %v1973
        %v2000 = vrot.slane %v1973, 4
        %v2001 = vsel %vm448, %v1985, %v2000
        %v2003 = vunpack.c.l.s4 1934713408
        %v2004 = vunpack.c.0.s8 %v2003
        %v2005 = vperm.slane %v1999, %v2004
        %v2007 = vunpack.c.l.s4 1934713408
        %v2008 = vunpack.c.0.s8 %v2007
        %v2009 = vperm.slane %v2001, %v2008
        %v2010 = vrot.slane %v1993, 4
        %v2011 = vsel %vm448, 0.0, %v2010
        %v2012 = vrot.slane %v1997, 4
        %v2013 = vsel %vm448, 0.0, %v2012
        %v2014 = vrot.slane %v2005, 4
        %v2015 = vsel %vm448, 0.0, %v2014
        %v2016 = vrot.slane %v2009, 4
        %v2017 = vsel %vm448, 0.0, %v2016
        %v2018 = vrot.slane %v1948, 4
        %v2019 = vsel %vm448, %v2018, %v1938
        %v2020 = vrot.slane %v1938, 4
        %v2021 = vsel %vm448, %v1948, %v2020
        %v2023 = vunpack.c.l.s4 1983009808
        %v2024 = vunpack.c.0.s8 %v2023
        %v2025 = vperm.slane %v2019, %v2024
        %v2027 = vunpack.c.l.s4 1983009808
        %v2028 = vunpack.c.0.s8 %v2027
        %v2029 = vperm.slane %v2021, %v2028
        %v2030 = vrot.slane %v1953, 4
        %v2031 = vsel %vm448, %v2030, %v1943
        %v2032 = vrot.slane %v1943, 4
        %v2033 = vsel %vm448, %v1953, %v2032
        %v2035 = vunpack.c.l.s4 1983009808
        %v2036 = vunpack.c.0.s8 %v2035
        %v2037 = vperm.slane %v2031, %v2036
        %v2039 = vunpack.c.l.s4 1983009808
        %v2040 = vunpack.c.0.s8 %v2039
        %v2041 = vperm.slane %v2033, %v2040
        %v2042 = vrot.slane %v2037, 4
        %v2043 = vsel %vm448, %v2042, %v2025
        %v2044 = vrot.slane %v2025, 4
        %v2045 = vsel %vm448, %v2037, %v2044
        %v2047 = vunpack.c.l.s4 1934713408
        %v2048 = vunpack.c.0.s8 %v2047
        %v2049 = vperm.slane %v2043, %v2048
        %v2051 = vunpack.c.l.s4 1934713408
        %v2052 = vunpack.c.0.s8 %v2051
        %v2053 = vperm.slane %v2045, %v2052
        %v2054 = vrot.slane %v2041, 4
        %v2055 = vsel %vm448, %v2054, %v2029
        %v2056 = vrot.slane %v2029, 4
        %v2057 = vsel %vm448, %v2041, %v2056
        %v2059 = vunpack.c.l.s4 1934713408
        %v2060 = vunpack.c.0.s8 %v2059
        %v2061 = vperm.slane %v2055, %v2060
        %v2063 = vunpack.c.l.s4 1934713408
        %v2064 = vunpack.c.0.s8 %v2063
        %v2065 = vperm.slane %v2057, %v2064
        %v2066 = vrot.slane %v2049, 4
        %v2067 = vsel %vm448, 0.0, %v2066
        %v2068 = vrot.slane %v2053, 4
        %v2069 = vsel %vm448, 0.0, %v2068
        %v2070 = vrot.slane %v2061, 4
        %v2071 = vsel %vm448, 0.0, %v2070
        %v2072 = vrot.slane %v2065, 4
        %v2073 = vsel %vm448, 0.0, %v2072
        %2075 = vrot.lane.b32.xlu0 %v2011, 16
        %v2076 = vpop.permute.xlu0 %2075
        %2079 = vrot.lane.b32.xlu0 %v1997, 32
        %v2080 = vpop.permute.xlu0 %2079
        %2083 = vrot.lane.b32.xlu0 %v2013, 48
        %v2084 = vpop.permute.xlu0 %2083
        %2087 = vrot.lane.b32.xlu0 %v2005, 64
        %v2088 = vpop.permute.xlu0 %2087
        %2091 = vrot.lane.b32.xlu0 %v2015, 80
        %v2092 = vpop.permute.xlu0 %2091
        %2095 = vrot.lane.b32.xlu0 %v2009, 96
        %v2096 = vpop.permute.xlu0 %2095
        %2099 = vrot.lane.b32.xlu0 %v2017, 112
        %v2100 = vpop.permute.xlu0 %2099
        %2103 = vrot.lane.b32.xlu0 %v2067, 16
        %v2104 = vpop.permute.xlu0 %2103
        %2107 = vrot.lane.b32.xlu0 %v2053, 32
        %v2108 = vpop.permute.xlu0 %2107
        %2111 = vrot.lane.b32.xlu0 %v2069, 48
        %v2112 = vpop.permute.xlu0 %2111
        %2115 = vrot.lane.b32.xlu0 %v2061, 64
        %v2116 = vpop.permute.xlu0 %2115
        %2119 = vrot.lane.b32.xlu0 %v2071, 80
        %v2120 = vpop.permute.xlu0 %2119
        %2123 = vrot.lane.b32.xlu0 %v2065, 96
        %v2124 = vpop.permute.xlu0 %2123
        %2127 = vrot.lane.b32.xlu0 %v2073, 112
        %v2128 = vpop.permute.xlu0 %2127
        %v2130 = vsel %vm616, %v1993, %v2076
        %v2131 = vsel %vm618, %v2130, %v2080
        %v2132 = vsel %vm620, %v2131, %v2084
        %v2133 = vsel %vm622, %v2132, %v2088
        %v2134 = vsel %vm624, %v2133, %v2092
        %v2135 = vsel %vm626, %v2134, %v2096
        %v2136 = vsel %vm628, %v2135, %v2100
        %v2137 = vsel %vm616, %v2049, %v2104
        %v2138 = vsel %vm618, %v2137, %v2108
        %v2139 = vsel %vm620, %v2138, %v2112
        %v2140 = vsel %vm622, %v2139, %v2116
        %v2141 = vsel %vm624, %v2140, %v2120
        %v2142 = vsel %vm626, %v2141, %v2124
        %v2143 = vsel %vm628, %v2142, %v2128
        %2144 = vrot.lane.b32.xlu0 %v1936, 127
        %v2145 = vpop.permute.xlu0 %2144
        %2146 = vrot.lane.b32.xlu0 %v1938, 127
        %v2147 = vpop.permute.xlu0 %2146
        %2148 = vrot.lane.b32.xlu0 %v1941, 127
        %v2149 = vpop.permute.xlu0 %2148
        %2150 = vrot.lane.b32.xlu0 %v1943, 127
        %v2151 = vpop.permute.xlu0 %2150
        %2152 = vrot.lane.b32.xlu0 %v1946, 127
        %v2153 = vpop.permute.xlu0 %2152
        %2154 = vrot.lane.b32.xlu0 %v1948, 127
        %v2155 = vpop.permute.xlu0 %2154
        %2156 = vrot.lane.b32.xlu0 %v1951, 127
        %v2157 = vpop.permute.xlu0 %2156
        %2158 = vrot.lane.b32.xlu0 %v1953, 127
        %v2159 = vpop.permute.xlu0 %2158
        %v2168 = vrot.slane %v2153, 4
        %v2169 = vsel %vm448, %v2168, %v2145
        %v2170 = vrot.slane %v2145, 4
        %v2171 = vsel %vm448, %v2153, %v2170
        %v2173 = vunpack.c.l.s4 1983009808
        %v2174 = vunpack.c.0.s8 %v2173
        %v2175 = vperm.slane %v2169, %v2174
        %v2177 = vunpack.c.l.s4 1983009808
        %v2178 = vunpack.c.0.s8 %v2177
        %v2179 = vperm.slane %v2171, %v2178
        %v2180 = vrot.slane %v2157, 4
        %v2181 = vsel %vm448, %v2180, %v2149
        %v2182 = vrot.slane %v2149, 4
        %v2183 = vsel %vm448, %v2157, %v2182
        %v2185 = vunpack.c.l.s4 1983009808
        %v2186 = vunpack.c.0.s8 %v2185
        %v2187 = vperm.slane %v2181, %v2186
        %v2189 = vunpack.c.l.s4 1983009808
        %v2190 = vunpack.c.0.s8 %v2189
        %v2191 = vperm.slane %v2183, %v2190
        %v2192 = vrot.slane %v2187, 4
        %v2193 = vsel %vm448, %v2192, %v2175
        %v2194 = vrot.slane %v2175, 4
        %v2195 = vsel %vm448, %v2187, %v2194
        %v2197 = vunpack.c.l.s4 1934713408
        %v2198 = vunpack.c.0.s8 %v2197
        %v2199 = vperm.slane %v2193, %v2198
        %v2201 = vunpack.c.l.s4 1934713408
        %v2202 = vunpack.c.0.s8 %v2201
        %v2203 = vperm.slane %v2195, %v2202
        %v2204 = vrot.slane %v2191, 4
        %v2205 = vsel %vm448, %v2204, %v2179
        %v2206 = vrot.slane %v2179, 4
        %v2207 = vsel %vm448, %v2191, %v2206
        %v2209 = vunpack.c.l.s4 1934713408
        %v2210 = vunpack.c.0.s8 %v2209
        %v2211 = vperm.slane %v2205, %v2210
        %v2213 = vunpack.c.l.s4 1934713408
        %v2214 = vunpack.c.0.s8 %v2213
        %v2215 = vperm.slane %v2207, %v2214
        %v2216 = vrot.slane %v2199, 4
        %v2217 = vsel %vm448, 0.0, %v2216
        %v2218 = vrot.slane %v2203, 4
        %v2219 = vsel %vm448, 0.0, %v2218
        %v2220 = vrot.slane %v2211, 4
        %v2221 = vsel %vm448, 0.0, %v2220
        %v2222 = vrot.slane %v2215, 4
        %v2223 = vsel %vm448, 0.0, %v2222
        %v2224 = vrot.slane %v2155, 4
        %v2225 = vsel %vm448, %v2224, %v2147
        %v2226 = vrot.slane %v2147, 4
        %v2227 = vsel %vm448, %v2155, %v2226
        %v2229 = vunpack.c.l.s4 1983009808
        %v2230 = vunpack.c.0.s8 %v2229
        %v2231 = vperm.slane %v2225, %v2230
        %v2233 = vunpack.c.l.s4 1983009808
        %v2234 = vunpack.c.0.s8 %v2233
        %v2235 = vperm.slane %v2227, %v2234
        %v2236 = vrot.slane %v2159, 4
        %v2237 = vsel %vm448, %v2236, %v2151
        %v2238 = vrot.slane %v2151, 4
        %v2239 = vsel %vm448, %v2159, %v2238
        %v2241 = vunpack.c.l.s4 1983009808
        %v2242 = vunpack.c.0.s8 %v2241
        %v2243 = vperm.slane %v2237, %v2242
        %v2245 = vunpack.c.l.s4 1983009808
        %v2246 = vunpack.c.0.s8 %v2245
        %v2247 = vperm.slane %v2239, %v2246
        %v2248 = vrot.slane %v2243, 4
        %v2249 = vsel %vm448, %v2248, %v2231
        %v2250 = vrot.slane %v2231, 4
        %v2251 = vsel %vm448, %v2243, %v2250
        %v2253 = vunpack.c.l.s4 1934713408
        %v2254 = vunpack.c.0.s8 %v2253
        %v2255 = vperm.slane %v2249, %v2254
        %v2257 = vunpack.c.l.s4 1934713408
        %v2258 = vunpack.c.0.s8 %v2257
        %v2259 = vperm.slane %v2251, %v2258
        %v2260 = vrot.slane %v2247, 4
        %v2261 = vsel %vm448, %v2260, %v2235
        %v2262 = vrot.slane %v2235, 4
        %v2263 = vsel %vm448, %v2247, %v2262
        %v2265 = vunpack.c.l.s4 1934713408
        %v2266 = vunpack.c.0.s8 %v2265
        %v2267 = vperm.slane %v2261, %v2266
        %v2269 = vunpack.c.l.s4 1934713408
        %v2270 = vunpack.c.0.s8 %v2269
        %v2271 = vperm.slane %v2263, %v2270
        %v2272 = vrot.slane %v2255, 4
        %v2273 = vsel %vm448, 0.0, %v2272
        %v2274 = vrot.slane %v2259, 4
        %v2275 = vsel %vm448, 0.0, %v2274
        %v2276 = vrot.slane %v2267, 4
        %v2277 = vsel %vm448, 0.0, %v2276
        %v2278 = vrot.slane %v2271, 4
        %v2279 = vsel %vm448, 0.0, %v2278
        %2281 = vrot.lane.b32.xlu0 %v2217, 16
        %v2282 = vpop.permute.xlu0 %2281
        %2285 = vrot.lane.b32.xlu0 %v2203, 32
        %v2286 = vpop.permute.xlu0 %2285
        %2289 = vrot.lane.b32.xlu0 %v2219, 48
        %v2290 = vpop.permute.xlu0 %2289
        %2293 = vrot.lane.b32.xlu0 %v2211, 64
        %v2294 = vpop.permute.xlu0 %2293
        %2297 = vrot.lane.b32.xlu0 %v2221, 80
        %v2298 = vpop.permute.xlu0 %2297
        %2301 = vrot.lane.b32.xlu0 %v2215, 96
        %v2302 = vpop.permute.xlu0 %2301
        %2305 = vrot.lane.b32.xlu0 %v2223, 112
        %v2306 = vpop.permute.xlu0 %2305
        %2309 = vrot.lane.b32.xlu0 %v2273, 16
        %v2310 = vpop.permute.xlu0 %2309
        %2313 = vrot.lane.b32.xlu0 %v2259, 32
        %v2314 = vpop.permute.xlu0 %2313
        %2317 = vrot.lane.b32.xlu0 %v2275, 48
        %v2318 = vpop.permute.xlu0 %2317
        %2321 = vrot.lane.b32.xlu0 %v2267, 64
        %v2322 = vpop.permute.xlu0 %2321
        %2325 = vrot.lane.b32.xlu0 %v2277, 80
        %v2326 = vpop.permute.xlu0 %2325
        %2329 = vrot.lane.b32.xlu0 %v2271, 96
        %v2330 = vpop.permute.xlu0 %2329
        %2333 = vrot.lane.b32.xlu0 %v2279, 112
        %v2334 = vpop.permute.xlu0 %2333
        %v2336 = vsel %vm616, %v2199, %v2282
        %v2337 = vsel %vm618, %v2336, %v2286
        %v2338 = vsel %vm620, %v2337, %v2290
        %v2339 = vsel %vm622, %v2338, %v2294
        %v2340 = vsel %vm624, %v2339, %v2298
        %v2341 = vsel %vm626, %v2340, %v2302
        %v2342 = vsel %vm628, %v2341, %v2306
        %v2343 = vsel %vm616, %v2255, %v2310
        %v2344 = vsel %vm618, %v2343, %v2314
        %v2345 = vsel %vm620, %v2344, %v2318
        %v2346 = vsel %vm622, %v2345, %v2322
        %v2347 = vsel %vm624, %v2346, %v2326
        %v2348 = vsel %vm626, %v2347, %v2330
        %v2349 = vsel %vm628, %v2348, %v2334
        %2350 = vrot.lane.b32.xlu0 %v1936, 126
        %v2351 = vpop.permute.xlu0 %2350
        %2352 = vrot.lane.b32.xlu0 %v1938, 126
        %v2353 = vpop.permute.xlu0 %2352
        %2354 = vrot.lane.b32.xlu0 %v1941, 126
        %v2355 = vpop.permute.xlu0 %2354
        %2356 = vrot.lane.b32.xlu0 %v1943, 126
        %v2357 = vpop.permute.xlu0 %2356
        %2358 = vrot.lane.b32.xlu0 %v1946, 126
        %v2359 = vpop.permute.xlu0 %2358
        %2360 = vrot.lane.b32.xlu0 %v1948, 126
        %v2361 = vpop.permute.xlu0 %2360
        %2362 = vrot.lane.b32.xlu0 %v1951, 126
        %v2363 = vpop.permute.xlu0 %2362
        %2364 = vrot.lane.b32.xlu0 %v1953, 126
        %v2365 = vpop.permute.xlu0 %2364
        %v2374 = vrot.slane %v2359, 4
        %v2375 = vsel %vm448, %v2374, %v2351
        %v2376 = vrot.slane %v2351, 4
        %v2377 = vsel %vm448, %v2359, %v2376
        %v2379 = vunpack.c.l.s4 1983009808
        %v2380 = vunpack.c.0.s8 %v2379
        %v2381 = vperm.slane %v2375, %v2380
        %v2383 = vunpack.c.l.s4 1983009808
        %v2384 = vunpack.c.0.s8 %v2383
        %v2385 = vperm.slane %v2377, %v2384
        %v2386 = vrot.slane %v2363, 4
        %v2387 = vsel %vm448, %v2386, %v2355
        %v2388 = vrot.slane %v2355, 4
        %v2389 = vsel %vm448, %v2363, %v2388
        %v2391 = vunpack.c.l.s4 1983009808
        %v2392 = vunpack.c.0.s8 %v2391
        %v2393 = vperm.slane %v2387, %v2392
        %v2395 = vunpack.c.l.s4 1983009808
        %v2396 = vunpack.c.0.s8 %v2395
        %v2397 = vperm.slane %v2389, %v2396
        %v2398 = vrot.slane %v2393, 4
        %v2399 = vsel %vm448, %v2398, %v2381
        %v2400 = vrot.slane %v2381, 4
        %v2401 = vsel %vm448, %v2393, %v2400
        %v2403 = vunpack.c.l.s4 1934713408
        %v2404 = vunpack.c.0.s8 %v2403
        %v2405 = vperm.slane %v2399, %v2404
        %v2407 = vunpack.c.l.s4 1934713408
        %v2408 = vunpack.c.0.s8 %v2407
        %v2409 = vperm.slane %v2401, %v2408
        %v2410 = vrot.slane %v2397, 4
        %v2411 = vsel %vm448, %v2410, %v2385
        %v2412 = vrot.slane %v2385, 4
        %v2413 = vsel %vm448, %v2397, %v2412
        %v2415 = vunpack.c.l.s4 1934713408
        %v2416 = vunpack.c.0.s8 %v2415
        %v2417 = vperm.slane %v2411, %v2416
        %v2419 = vunpack.c.l.s4 1934713408
        %v2420 = vunpack.c.0.s8 %v2419
        %v2421 = vperm.slane %v2413, %v2420
        %v2422 = vrot.slane %v2405, 4
        %v2423 = vsel %vm448, 0.0, %v2422
        %v2424 = vrot.slane %v2409, 4
        %v2425 = vsel %vm448, 0.0, %v2424
        %v2426 = vrot.slane %v2417, 4
        %v2427 = vsel %vm448, 0.0, %v2426
        %v2428 = vrot.slane %v2421, 4
        %v2429 = vsel %vm448, 0.0, %v2428
        %v2430 = vrot.slane %v2361, 4
        %v2431 = vsel %vm448, %v2430, %v2353
        %v2432 = vrot.slane %v2353, 4
        %v2433 = vsel %vm448, %v2361, %v2432
        %v2435 = vunpack.c.l.s4 1983009808
        %v2436 = vunpack.c.0.s8 %v2435
        %v2437 = vperm.slane %v2431, %v2436
        %v2439 = vunpack.c.l.s4 1983009808
        %v2440 = vunpack.c.0.s8 %v2439
        %v2441 = vperm.slane %v2433, %v2440
        %v2442 = vrot.slane %v2365, 4
        %v2443 = vsel %vm448, %v2442, %v2357
        %v2444 = vrot.slane %v2357, 4
        %v2445 = vsel %vm448, %v2365, %v2444
        %v2447 = vunpack.c.l.s4 1983009808
        %v2448 = vunpack.c.0.s8 %v2447
        %v2449 = vperm.slane %v2443, %v2448
        %v2451 = vunpack.c.l.s4 1983009808
        %v2452 = vunpack.c.0.s8 %v2451
        %v2453 = vperm.slane %v2445, %v2452
        %v2454 = vrot.slane %v2449, 4
        %v2455 = vsel %vm448, %v2454, %v2437
        %v2456 = vrot.slane %v2437, 4
        %v2457 = vsel %vm448, %v2449, %v2456
        %v2459 = vunpack.c.l.s4 1934713408
        %v2460 = vunpack.c.0.s8 %v2459
        %v2461 = vperm.slane %v2455, %v2460
        %v2463 = vunpack.c.l.s4 1934713408
        %v2464 = vunpack.c.0.s8 %v2463
        %v2465 = vperm.slane %v2457, %v2464
        %v2466 = vrot.slane %v2453, 4
        %v2467 = vsel %vm448, %v2466, %v2441
        %v2468 = vrot.slane %v2441, 4
        %v2469 = vsel %vm448, %v2453, %v2468
        %v2471 = vunpack.c.l.s4 1934713408
        %v2472 = vunpack.c.0.s8 %v2471
        %v2473 = vperm.slane %v2467, %v2472
        %v2475 = vunpack.c.l.s4 1934713408
        %v2476 = vunpack.c.0.s8 %v2475
        %v2477 = vperm.slane %v2469, %v2476
        %v2478 = vrot.slane %v2461, 4
        %v2479 = vsel %vm448, 0.0, %v2478
        %v2480 = vrot.slane %v2465, 4
        %v2481 = vsel %vm448, 0.0, %v2480
        %v2482 = vrot.slane %v2473, 4
        %v2483 = vsel %vm448, 0.0, %v2482
        %v2484 = vrot.slane %v2477, 4
        %v2485 = vsel %vm448, 0.0, %v2484
        %2487 = vrot.lane.b32.xlu0 %v2423, 16
        %v2488 = vpop.permute.xlu0 %2487
        %2491 = vrot.lane.b32.xlu0 %v2409, 32
        %v2492 = vpop.permute.xlu0 %2491
        %2495 = vrot.lane.b32.xlu0 %v2425, 48
        %v2496 = vpop.permute.xlu0 %2495
        %2499 = vrot.lane.b32.xlu0 %v2417, 64
        %v2500 = vpop.permute.xlu0 %2499
        %2503 = vrot.lane.b32.xlu0 %v2427, 80
        %v2504 = vpop.permute.xlu0 %2503
        %2507 = vrot.lane.b32.xlu0 %v2421, 96
        %v2508 = vpop.permute.xlu0 %2507
        %2511 = vrot.lane.b32.xlu0 %v2429, 112
        %v2512 = vpop.permute.xlu0 %2511
        %2515 = vrot.lane.b32.xlu0 %v2479, 16
        %v2516 = vpop.permute.xlu0 %2515
        %2519 = vrot.lane.b32.xlu0 %v2465, 32
        %v2520 = vpop.permute.xlu0 %2519
        %2523 = vrot.lane.b32.xlu0 %v2481, 48
        %v2524 = vpop.permute.xlu0 %2523
        %2527 = vrot.lane.b32.xlu0 %v2473, 64
        %v2528 = vpop.permute.xlu0 %2527
        %2531 = vrot.lane.b32.xlu0 %v2483, 80
        %v2532 = vpop.permute.xlu0 %2531
        %2535 = vrot.lane.b32.xlu0 %v2477, 96
        %v2536 = vpop.permute.xlu0 %2535
        %2539 = vrot.lane.b32.xlu0 %v2485, 112
        %v2540 = vpop.permute.xlu0 %2539
        %v2542 = vsel %vm616, %v2405, %v2488
        %v2543 = vsel %vm618, %v2542, %v2492
        %v2544 = vsel %vm620, %v2543, %v2496
        %v2545 = vsel %vm622, %v2544, %v2500
        %v2546 = vsel %vm624, %v2545, %v2504
        %v2547 = vsel %vm626, %v2546, %v2508
        %v2548 = vsel %vm628, %v2547, %v2512
        %v2549 = vsel %vm616, %v2461, %v2516
        %v2550 = vsel %vm618, %v2549, %v2520
        %v2551 = vsel %vm620, %v2550, %v2524
        %v2552 = vsel %vm622, %v2551, %v2528
        %v2553 = vsel %vm624, %v2552, %v2532
        %v2554 = vsel %vm626, %v2553, %v2536
        %v2555 = vsel %vm628, %v2554, %v2540
        %v2558 = vrot.slane %v1092, 4
        %v2559 = vrot.slane %v1099, 4
        %v2564 = vrot.slane %v1513, 4
        %v2565 = vrot.slane %v1520, 4
        %v2570 = vrot.slane %v1925, 4
        %v2571 = vrot.slane %v1932, 4
        %v2576 = vrot.slane %v2342, 4
        %v2577 = vrot.slane %v2349, 4
        %vm2580 = vcmask 1043456
        %v2581 = vsel %vm2580, %v878, %v2558
        %v2582 = vsel %vm2580, %v885, %v2559
        %v2583 = vsel %vm2580, %v1298, %v2564
        %v2584 = vsel %vm2580, %v1305, %v2565
        %v2585 = vsel %vm2580, %v1719, %v2570
        %v2586 = vsel %vm2580, %v1726, %v2571
        %v2587 = vsel %vm2580, %v2136, %v2576
        %v2588 = vsel %vm2580, %v2143, %v2577
        %v2589 = vld [vmem:[%s1] sm:$0xf]
        %v2590 = vld [vmem:[%s2] sm:$0xf]
        %2592 = vset.pattern.permute.xlu0 0
        %2593 = vperm.xlu0 %2592, %v2590
        %v2594 = vpop.permute.xlu0 %2593
        %vm2596 = vcmask 293888
        %v2598 = vsel %vm2596, %v2589, 0
        %v2601 = vsel %vm2580, %v2548, 0
        %v2604 = vsel %vm2580, %v2555, 0
        %2606 = vmatpush.msra.mxu0 0.0
        %2607 = vmatpush.msra.mxu0 0.0
        %2608 = vmatpush.msra.mxu0 0.0
        %2609 = vmatpush.msra.mxu0 0.0
        %2610 = vmatpush.msra.mxu0 0.0
        %2611 = vmatpush.msra.mxu0 0.0
        %2612 = vmatpush.msra.mxu0 0.0
        %2613 = vmatpush.msra.mxu0 0.0
        %2614 = vmatpush.msra.mxu0 0.0
        %2615 = vmatpush.msra.mxu0 0.0
        %2616 = vmatpush.msra.mxu0 0.0
        %2617 = vmatpush.msra.mxu0 %v2601
        %2618 = vmatpush.msra.mxu0 %v2587
        %2619 = vmatpush.msra.mxu0 %v2585
        %2620 = vmatpush.msra.mxu0 %v2583
        %2621 = vmatpush.msra.mxu0 %v2581
        %2622 = vmatmul.f32.gmra.mxu0 %v2598
        %v2623 = vpop.f32.mrf.mxu0
        %v2624 = vadd.f32 %v2594, %v2623
        %2625 = vdwg.mxu0
        %2626 = vmatpush.msra.mxu0 0.0
        %2627 = vmatpush.msra.mxu0 0.0
        %2628 = vmatpush.msra.mxu0 0.0
        %2629 = vmatpush.msra.mxu0 0.0
        %2630 = vmatpush.msra.mxu0 0.0
        %2631 = vmatpush.msra.mxu0 0.0
        %2632 = vmatpush.msra.mxu0 0.0
        %2633 = vmatpush.msra.mxu0 0.0
        %2634 = vmatpush.msra.mxu0 0.0
        %2635 = vmatpush.msra.mxu0 0.0
        %2636 = vmatpush.msra.mxu0 0.0
        %2637 = vmatpush.msra.mxu0 %v2604
        %2638 = vmatpush.msra.mxu0 %v2588
        %2639 = vmatpush.msra.mxu0 %v2586
        %2640 = vmatpush.msra.mxu0 %v2584
        %2641 = vmatpush.msra.mxu0 %v2582
        %2642 = vmatmul.f32.gmra.mxu0 %v2598
        %v2643 = vpop.f32.mrf.mxu0
        %v2644 = vadd.f32 %v2594, %v2643
        %2645 = vdwg.mxu0
        %v2646 = vmax.f32 %v2624, 0.0
        %v2647 = vmax.f32 %v2644, 0.0
        %2649 = vrot.lane.b32.xlu0 %v2646, 112
        %v2650 = vpop.permute.xlu0 %2649
        %2652 = vrot.lane.b32.xlu0 %v2646, 96
        %v2653 = vpop.permute.xlu0 %2652
        %2655 = vrot.lane.b32.xlu0 %v2646, 80
        %v2656 = vpop.permute.xlu0 %2655
        %2658 = vrot.lane.b32.xlu0 %v2646, 64
        %v2659 = vpop.permute.xlu0 %2658
        %2661 = vrot.lane.b32.xlu0 %v2646, 48
        %v2662 = vpop.permute.xlu0 %2661
        %2664 = vrot.lane.b32.xlu0 %v2646, 32
        %v2665 = vpop.permute.xlu0 %2664
        %2667 = vrot.lane.b32.xlu0 %v2646, 16
        %v2668 = vpop.permute.xlu0 %2667
        %2671 = vrot.lane.b32.xlu0 %v2647, 112
        %v2672 = vpop.permute.xlu0 %2671
        %2674 = vrot.lane.b32.xlu0 %v2647, 96
        %v2675 = vpop.permute.xlu0 %2674
        %2677 = vrot.lane.b32.xlu0 %v2647, 80
        %v2678 = vpop.permute.xlu0 %2677
        %2680 = vrot.lane.b32.xlu0 %v2647, 64
        %v2681 = vpop.permute.xlu0 %2680
        %2683 = vrot.lane.b32.xlu0 %v2647, 48
        %v2684 = vpop.permute.xlu0 %2683
        %2686 = vrot.lane.b32.xlu0 %v2647, 32
        %v2687 = vpop.permute.xlu0 %2686
        %2689 = vrot.lane.b32.xlu0 %v2647, 16
        %v2690 = vpop.permute.xlu0 %2689
        %v2692 = vrot.slane %v2653, 4
        %v2693 = vsel %vm448, %v2692, %v2646
        %v2695 = vunpack.c.l.s4 1983009808
        %v2696 = vunpack.c.0.s8 %v2695
        %v2697 = vperm.slane %v2693, %v2696
        %v2698 = vrot.slane %v2656, 4
        %v2699 = vsel %vm448, %v2698, %v2650
        %v2701 = vunpack.c.l.s4 1983009808
        %v2702 = vunpack.c.0.s8 %v2701
        %v2703 = vperm.slane %v2699, %v2702
        %v2704 = vrot.slane %v2665, 4
        %v2705 = vsel %vm448, %v2704, %v2659
        %v2707 = vunpack.c.l.s4 1983009808
        %v2708 = vunpack.c.0.s8 %v2707
        %v2709 = vperm.slane %v2705, %v2708
        %v2710 = vrot.slane %v2668, 4
        %v2711 = vsel %vm448, %v2710, %v2662
        %v2713 = vunpack.c.l.s4 1983009808
        %v2714 = vunpack.c.0.s8 %v2713
        %v2715 = vperm.slane %v2711, %v2714
        %v2716 = vrot.slane %v2703, 4
        %v2717 = vsel %vm448, %v2716, %v2697
        %v2718 = vrot.slane %v2697, 4
        %v2719 = vsel %vm448, %v2703, %v2718
        %v2721 = vunpack.c.l.s4 1934713408
        %v2722 = vunpack.c.0.s8 %v2721
        %v2723 = vperm.slane %v2717, %v2722
        %v2725 = vunpack.c.l.s4 1934713408
        %v2726 = vunpack.c.0.s8 %v2725
        %v2727 = vperm.slane %v2719, %v2726
        %v2728 = vrot.slane %v2715, 4
        %v2729 = vsel %vm448, %v2728, %v2709
        %v2730 = vrot.slane %v2709, 4
        %v2731 = vsel %vm448, %v2715, %v2730
        %v2733 = vunpack.c.l.s4 1934713408
        %v2734 = vunpack.c.0.s8 %v2733
        %v2735 = vperm.slane %v2729, %v2734
        %v2737 = vunpack.c.l.s4 1934713408
        %v2738 = vunpack.c.0.s8 %v2737
        %v2739 = vperm.slane %v2731, %v2738
        %v2740 = vrot.slane %v2735, 4
        %v2741 = vsel %vm448, %v2740, %v2723
        %v2742 = vrot.slane %v2723, 4
        %v2743 = vsel %vm448, %v2735, %v2742
        %v2744 = vrot.slane %v2739, 4
        %v2745 = vsel %vm448, %v2744, %v2727
        %v2746 = vrot.slane %v2727, 4
        %v2747 = vsel %vm448, %v2739, %v2746
        %v2748 = vrot.slane %v2675, 4
        %v2749 = vsel %vm448, %v2748, %v2647
        %v2751 = vunpack.c.l.s4 1983009808
        %v2752 = vunpack.c.0.s8 %v2751
        %v2753 = vperm.slane %v2749, %v2752
        %v2754 = vrot.slane %v2678, 4
        %v2755 = vsel %vm448, %v2754, %v2672
        %v2757 = vunpack.c.l.s4 1983009808
        %v2758 = vunpack.c.0.s8 %v2757
        %v2759 = vperm.slane %v2755, %v2758
        %v2760 = vrot.slane %v2687, 4
        %v2761 = vsel %vm448, %v2760, %v2681
        %v2763 = vunpack.c.l.s4 1983009808
        %v2764 = vunpack.c.0.s8 %v2763
        %v2765 = vperm.slane %v2761, %v2764
        %v2766 = vrot.slane %v2690, 4
        %v2767 = vsel %vm448, %v2766, %v2684
        %v2769 = vunpack.c.l.s4 1983009808
        %v2770 = vunpack.c.0.s8 %v2769
        %v2771 = vperm.slane %v2767, %v2770
        %v2772 = vrot.slane %v2759, 4
        %v2773 = vsel %vm448, %v2772, %v2753
        %v2774 = vrot.slane %v2753, 4
        %v2775 = vsel %vm448, %v2759, %v2774
        %v2777 = vunpack.c.l.s4 1934713408
        %v2778 = vunpack.c.0.s8 %v2777
        %v2779 = vperm.slane %v2773, %v2778
        %v2781 = vunpack.c.l.s4 1934713408
        %v2782 = vunpack.c.0.s8 %v2781
        %v2783 = vperm.slane %v2775, %v2782
        %v2784 = vrot.slane %v2771, 4
        %v2785 = vsel %vm448, %v2784, %v2765
        %v2786 = vrot.slane %v2765, 4
        %v2787 = vsel %vm448, %v2771, %v2786
        %v2789 = vunpack.c.l.s4 1934713408
        %v2790 = vunpack.c.0.s8 %v2789
        %v2791 = vperm.slane %v2785, %v2790
        %v2793 = vunpack.c.l.s4 1934713408
        %v2794 = vunpack.c.0.s8 %v2793
        %v2795 = vperm.slane %v2787, %v2794
        %v2796 = vrot.slane %v2791, 4
        %v2797 = vsel %vm448, %v2796, %v2779
        %v2798 = vrot.slane %v2779, 4
        %v2799 = vsel %vm448, %v2791, %v2798
        %v2800 = vrot.slane %v2795, 4
        %v2801 = vsel %vm448, %v2800, %v2783
        %v2802 = vrot.slane %v2783, 4
        %v2803 = vsel %vm448, %v2795, %v2802
        %2804 = vst.msk [vmem:[#allocation2] sm:$0xff] %vm637, 0.0
        %2805 = vst.msk [vmem:[#allocation2 + $0x8] sm:$0xff] %vm637, 0.0
        %2806 = vst.msk [vmem:[#allocation2 + $0x10] sm:$0x3] %vm640, 0.0
        %2807 = vst.msk [vmem:[#allocation2 + $0x18] sm:$0xff] %vm637, 0.0
        %2808 = vst.msk [vmem:[#allocation2 + $0x20] sm:$0xff] %vm637, 0.0
        %2809 = vst.msk [vmem:[#allocation2 + $0x28] sm:$0x3] %vm640, 0.0
        %2810 = vst.msk [vmem:[#allocation2 + $0x30] sm:$0xff] %vm637, 0.0
        %2811 = vst.msk [vmem:[#allocation2 + $0x38] sm:$0xff] %vm637, 0.0
        %2812 = vst.msk [vmem:[#allocation2 + $0x40] sm:$0x3] %vm640, 0.0
        %2813 = vst.msk [vmem:[#allocation2 + $0x48] sm:$0xff] %vm637, 0.0
        %2814 = vst.msk [vmem:[#allocation2 + $0x50] sm:$0xff] %vm637, 0.0
        %2815 = vst.msk [vmem:[#allocation2 + $0x58] sm:$0x3] %vm640, 0.0
        %2824 = vrot.lane.b32.xlu0 %v2741, 1
        %v2825 = vpop.permute.xlu0 %2824
        %2826 = vrot.lane.b32.xlu0 %v2797, 1
        %v2827 = vpop.permute.xlu0 %2826
        %2828 = vrot.lane.b32.xlu0 %v2743, 1
        %v2829 = vpop.permute.xlu0 %2828
        %2830 = vrot.lane.b32.xlu0 %v2799, 1
        %v2831 = vpop.permute.xlu0 %2830
        %2832 = vrot.lane.b32.xlu0 %v2745, 1
        %v2833 = vpop.permute.xlu0 %2832
        %2834 = vrot.lane.b32.xlu0 %v2801, 1
        %v2835 = vpop.permute.xlu0 %2834
        %2836 = vrot.lane.b32.xlu0 %v2747, 1
        %v2837 = vpop.permute.xlu0 %2836
        %2838 = vrot.lane.b32.xlu0 %v2803, 1
        %v2839 = vpop.permute.xlu0 %2838
        %2848 = vst.msk [vmem:[#allocation2 + $0x1] sm:$0xff] %vm683, %v2825
        %2849 = vst.msk [vmem:[#allocation2 + $0x9] sm:$0xff] %vm683, %v2827
        %2850 = vst.msk [vmem:[#allocation2 + $0x19] sm:$0xff] %vm683, %v2829
        %2851 = vst.msk [vmem:[#allocation2 + $0x21] sm:$0xff] %vm683, %v2831
        %2852 = vst.msk [vmem:[#allocation2 + $0x31] sm:$0xff] %vm683, %v2833
        %2853 = vst.msk [vmem:[#allocation2 + $0x39] sm:$0xff] %vm683, %v2835
        %2854 = vst.msk [vmem:[#allocation2 + $0x49] sm:$0xff] %vm683, %v2837
        %2855 = vst.msk [vmem:[#allocation2 + $0x51] sm:$0xff] %vm683, %v2839
        %v2856 = vld [vmem:[#allocation2] sm:$0xff]
        %v2857 = vld [vmem:[#allocation2 + $0x8] sm:$0xff]
        %v2858 = vld [vmem:[#allocation2 + $0x10] sm:$0x3]
        %v2859 = vld [vmem:[#allocation2 + $0x18] sm:$0xff]
        %v2860 = vld [vmem:[#allocation2 + $0x20] sm:$0xff]
        %v2861 = vld [vmem:[#allocation2 + $0x28] sm:$0x3]
        %v2862 = vld [vmem:[#allocation2 + $0x30] sm:$0xff]
        %v2863 = vld [vmem:[#allocation2 + $0x38] sm:$0xff]
        %v2864 = vld [vmem:[#allocation2 + $0x40] sm:$0x3]
        %v2865 = vld [vmem:[#allocation2 + $0x48] sm:$0xff]
        %v2866 = vld [vmem:[#allocation2 + $0x50] sm:$0xff]
        %v2867 = vld [vmem:[#allocation2 + $0x58] sm:$0x3]
        %v2868 = vrot.slane %v2862, 4
        %v2869 = vsel %vm448, %v2868, %v2856
        %v2870 = vrot.slane %v2856, 4
        %v2871 = vsel %vm448, %v2862, %v2870
        %v2873 = vunpack.c.l.s4 1983009808
        %v2874 = vunpack.c.0.s8 %v2873
        %v2875 = vperm.slane %v2869, %v2874
        %v2877 = vunpack.c.l.s4 1983009808
        %v2878 = vunpack.c.0.s8 %v2877
        %v2879 = vperm.slane %v2871, %v2878
        %v2880 = vrot.slane %v2865, 4
        %v2881 = vsel %vm448, %v2880, %v2859
        %v2882 = vrot.slane %v2859, 4
        %v2883 = vsel %vm448, %v2865, %v2882
        %v2885 = vunpack.c.l.s4 1983009808
        %v2886 = vunpack.c.0.s8 %v2885
        %v2887 = vperm.slane %v2881, %v2886
        %v2889 = vunpack.c.l.s4 1983009808
        %v2890 = vunpack.c.0.s8 %v2889
        %v2891 = vperm.slane %v2883, %v2890
        %v2892 = vrot.slane %v2887, 4
        %v2893 = vsel %vm448, %v2892, %v2875
        %v2894 = vrot.slane %v2875, 4
        %v2895 = vsel %vm448, %v2887, %v2894
        %v2897 = vunpack.c.l.s4 1934713408
        %v2898 = vunpack.c.0.s8 %v2897
        %v2899 = vperm.slane %v2893, %v2898
        %v2901 = vunpack.c.l.s4 1934713408
        %v2902 = vunpack.c.0.s8 %v2901
        %v2903 = vperm.slane %v2895, %v2902
        %v2904 = vrot.slane %v2891, 4
        %v2905 = vsel %vm448, %v2904, %v2879
        %v2906 = vrot.slane %v2879, 4
        %v2907 = vsel %vm448, %v2891, %v2906
        %v2909 = vunpack.c.l.s4 1934713408
        %v2910 = vunpack.c.0.s8 %v2909
        %v2911 = vperm.slane %v2905, %v2910
        %v2913 = vunpack.c.l.s4 1934713408
        %v2914 = vunpack.c.0.s8 %v2913
        %v2915 = vperm.slane %v2907, %v2914
        %v2916 = vrot.slane %v2899, 4
        %v2917 = vsel %vm448, 0.0, %v2916
        %v2918 = vrot.slane %v2903, 4
        %v2919 = vsel %vm448, 0.0, %v2918
        %v2920 = vrot.slane %v2911, 4
        %v2921 = vsel %vm448, 0.0, %v2920
        %v2922 = vrot.slane %v2915, 4
        %v2923 = vsel %vm448, 0.0, %v2922
        %v2924 = vrot.slane %v2863, 4
        %v2925 = vsel %vm448, %v2924, %v2857
        %v2926 = vrot.slane %v2857, 4
        %v2927 = vsel %vm448, %v2863, %v2926
        %v2929 = vunpack.c.l.s4 1983009808
        %v2930 = vunpack.c.0.s8 %v2929
        %v2931 = vperm.slane %v2925, %v2930
        %v2933 = vunpack.c.l.s4 1983009808
        %v2934 = vunpack.c.0.s8 %v2933
        %v2935 = vperm.slane %v2927, %v2934
        %v2936 = vrot.slane %v2866, 4
        %v2937 = vsel %vm448, %v2936, %v2860
        %v2938 = vrot.slane %v2860, 4
        %v2939 = vsel %vm448, %v2866, %v2938
        %v2941 = vunpack.c.l.s4 1983009808
        %v2942 = vunpack.c.0.s8 %v2941
        %v2943 = vperm.slane %v2937, %v2942
        %v2945 = vunpack.c.l.s4 1983009808
        %v2946 = vunpack.c.0.s8 %v2945
        %v2947 = vperm.slane %v2939, %v2946
        %v2948 = vrot.slane %v2943, 4
        %v2949 = vsel %vm448, %v2948, %v2931
        %v2950 = vrot.slane %v2931, 4
        %v2951 = vsel %vm448, %v2943, %v2950
        %v2953 = vunpack.c.l.s4 1934713408
        %v2954 = vunpack.c.0.s8 %v2953
        %v2955 = vperm.slane %v2949, %v2954
        %v2957 = vunpack.c.l.s4 1934713408
        %v2958 = vunpack.c.0.s8 %v2957
        %v2959 = vperm.slane %v2951, %v2958
        %v2960 = vrot.slane %v2947, 4
        %v2961 = vsel %vm448, %v2960, %v2935
        %v2962 = vrot.slane %v2935, 4
        %v2963 = vsel %vm448, %v2947, %v2962
        %v2965 = vunpack.c.l.s4 1934713408
        %v2966 = vunpack.c.0.s8 %v2965
        %v2967 = vperm.slane %v2961, %v2966
        %v2969 = vunpack.c.l.s4 1934713408
        %v2970 = vunpack.c.0.s8 %v2969
        %v2971 = vperm.slane %v2963, %v2970
        %v2972 = vrot.slane %v2955, 4
        %v2973 = vsel %vm448, 0.0, %v2972
        %v2974 = vrot.slane %v2959, 4
        %v2975 = vsel %vm448, 0.0, %v2974
        %v2976 = vrot.slane %v2967, 4
        %v2977 = vsel %vm448, 0.0, %v2976
        %v2978 = vrot.slane %v2971, 4
        %v2979 = vsel %vm448, 0.0, %v2978
        %2981 = vrot.lane.b32.xlu0 %v2917, 16
        %v2982 = vpop.permute.xlu0 %2981
        %2985 = vrot.lane.b32.xlu0 %v2903, 32
        %v2986 = vpop.permute.xlu0 %2985
        %2989 = vrot.lane.b32.xlu0 %v2919, 48
        %v2990 = vpop.permute.xlu0 %2989
        %2993 = vrot.lane.b32.xlu0 %v2911, 64
        %v2994 = vpop.permute.xlu0 %2993
        %2997 = vrot.lane.b32.xlu0 %v2921, 80
        %v2998 = vpop.permute.xlu0 %2997
        %3001 = vrot.lane.b32.xlu0 %v2915, 96
        %v3002 = vpop.permute.xlu0 %3001
        %3005 = vrot.lane.b32.xlu0 %v2923, 112
        %v3006 = vpop.permute.xlu0 %3005
        %3009 = vrot.lane.b32.xlu0 %v2973, 16
        %v3010 = vpop.permute.xlu0 %3009
        %3013 = vrot.lane.b32.xlu0 %v2959, 32
        %v3014 = vpop.permute.xlu0 %3013
        %3017 = vrot.lane.b32.xlu0 %v2975, 48
        %v3018 = vpop.permute.xlu0 %3017
        %3021 = vrot.lane.b32.xlu0 %v2967, 64
        %v3022 = vpop.permute.xlu0 %3021
        %3025 = vrot.lane.b32.xlu0 %v2977, 80
        %v3026 = vpop.permute.xlu0 %3025
        %3029 = vrot.lane.b32.xlu0 %v2971, 96
        %v3030 = vpop.permute.xlu0 %3029
        %3033 = vrot.lane.b32.xlu0 %v2979, 112
        %v3034 = vpop.permute.xlu0 %3033
        %v3036 = vsel %vm616, %v2899, %v2982
        %v3037 = vsel %vm618, %v3036, %v2986
        %v3038 = vsel %vm620, %v3037, %v2990
        %v3039 = vsel %vm622, %v3038, %v2994
        %v3040 = vsel %vm624, %v3039, %v2998
        %v3041 = vsel %vm626, %v3040, %v3002
        %v3042 = vsel %vm628, %v3041, %v3006
        %v3043 = vsel %vm616, %v2955, %v3010
        %v3044 = vsel %vm618, %v3043, %v3014
        %v3045 = vsel %vm620, %v3044, %v3018
        %v3046 = vsel %vm622, %v3045, %v3022
        %v3047 = vsel %vm624, %v3046, %v3026
        %v3048 = vsel %vm626, %v3047, %v3030
        %v3049 = vsel %vm628, %v3048, %v3034
        %3058 = vrot.lane.b32.xlu0 %v2856, 127
        %v3059 = vpop.permute.xlu0 %3058
        %3060 = vrot.lane.b32.xlu0 %v2857, 127
        %v3061 = vpop.permute.xlu0 %3060
        %3062 = vrot.lane.b32.xlu0 %v2859, 127
        %v3063 = vpop.permute.xlu0 %3062
        %3064 = vrot.lane.b32.xlu0 %v2860, 127
        %v3065 = vpop.permute.xlu0 %3064
        %3066 = vrot.lane.b32.xlu0 %v2862, 127
        %v3067 = vpop.permute.xlu0 %3066
        %3068 = vrot.lane.b32.xlu0 %v2863, 127
        %v3069 = vpop.permute.xlu0 %3068
        %3070 = vrot.lane.b32.xlu0 %v2865, 127
        %v3071 = vpop.permute.xlu0 %3070
        %3072 = vrot.lane.b32.xlu0 %v2866, 127
        %v3073 = vpop.permute.xlu0 %3072
        %v3082 = vrot.slane %v3067, 4
        %v3083 = vsel %vm448, %v3082, %v3059
        %v3084 = vrot.slane %v3059, 4
        %v3085 = vsel %vm448, %v3067, %v3084
        %v3087 = vunpack.c.l.s4 1983009808
        %v3088 = vunpack.c.0.s8 %v3087
        %v3089 = vperm.slane %v3083, %v3088
        %v3091 = vunpack.c.l.s4 1983009808
        %v3092 = vunpack.c.0.s8 %v3091
        %v3093 = vperm.slane %v3085, %v3092
        %v3094 = vrot.slane %v3071, 4
        %v3095 = vsel %vm448, %v3094, %v3063
        %v3096 = vrot.slane %v3063, 4
        %v3097 = vsel %vm448, %v3071, %v3096
        %v3099 = vunpack.c.l.s4 1983009808
        %v3100 = vunpack.c.0.s8 %v3099
        %v3101 = vperm.slane %v3095, %v3100
        %v3103 = vunpack.c.l.s4 1983009808
        %v3104 = vunpack.c.0.s8 %v3103
        %v3105 = vperm.slane %v3097, %v3104
        %v3106 = vrot.slane %v3101, 4
        %v3107 = vsel %vm448, %v3106, %v3089
        %v3108 = vrot.slane %v3089, 4
        %v3109 = vsel %vm448, %v3101, %v3108
        %v3111 = vunpack.c.l.s4 1934713408
        %v3112 = vunpack.c.0.s8 %v3111
        %v3113 = vperm.slane %v3107, %v3112
        %v3115 = vunpack.c.l.s4 1934713408
        %v3116 = vunpack.c.0.s8 %v3115
        %v3117 = vperm.slane %v3109, %v3116
        %v3118 = vrot.slane %v3105, 4
        %v3119 = vsel %vm448, %v3118, %v3093
        %v3120 = vrot.slane %v3093, 4
        %v3121 = vsel %vm448, %v3105, %v3120
        %v3123 = vunpack.c.l.s4 1934713408
        %v3124 = vunpack.c.0.s8 %v3123
        %v3125 = vperm.slane %v3119, %v3124
        %v3127 = vunpack.c.l.s4 1934713408
        %v3128 = vunpack.c.0.s8 %v3127
        %v3129 = vperm.slane %v3121, %v3128
        %v3130 = vrot.slane %v3113, 4
        %v3131 = vsel %vm448, 0.0, %v3130
        %v3132 = vrot.slane %v3117, 4
        %v3133 = vsel %vm448, 0.0, %v3132
        %v3134 = vrot.slane %v3125, 4
        %v3135 = vsel %vm448, 0.0, %v3134
        %v3136 = vrot.slane %v3129, 4
        %v3137 = vsel %vm448, 0.0, %v3136
        %v3138 = vrot.slane %v3069, 4
        %v3139 = vsel %vm448, %v3138, %v3061
        %v3140 = vrot.slane %v3061, 4
        %v3141 = vsel %vm448, %v3069, %v3140
        %v3143 = vunpack.c.l.s4 1983009808
        %v3144 = vunpack.c.0.s8 %v3143
        %v3145 = vperm.slane %v3139, %v3144
        %v3147 = vunpack.c.l.s4 1983009808
        %v3148 = vunpack.c.0.s8 %v3147
        %v3149 = vperm.slane %v3141, %v3148
        %v3150 = vrot.slane %v3073, 4
        %v3151 = vsel %vm448, %v3150, %v3065
        %v3152 = vrot.slane %v3065, 4
        %v3153 = vsel %vm448, %v3073, %v3152
        %v3155 = vunpack.c.l.s4 1983009808
        %v3156 = vunpack.c.0.s8 %v3155
        %v3157 = vperm.slane %v3151, %v3156
        %v3159 = vunpack.c.l.s4 1983009808
        %v3160 = vunpack.c.0.s8 %v3159
        %v3161 = vperm.slane %v3153, %v3160
        %v3162 = vrot.slane %v3157, 4
        %v3163 = vsel %vm448, %v3162, %v3145
        %v3164 = vrot.slane %v3145, 4
        %v3165 = vsel %vm448, %v3157, %v3164
        %v3167 = vunpack.c.l.s4 1934713408
        %v3168 = vunpack.c.0.s8 %v3167
        %v3169 = vperm.slane %v3163, %v3168
        %v3171 = vunpack.c.l.s4 1934713408
        %v3172 = vunpack.c.0.s8 %v3171
        %v3173 = vperm.slane %v3165, %v3172
        %v3174 = vrot.slane %v3161, 4
        %v3175 = vsel %vm448, %v3174, %v3149
        %v3176 = vrot.slane %v3149, 4
        %v3177 = vsel %vm448, %v3161, %v3176
        %v3179 = vunpack.c.l.s4 1934713408
        %v3180 = vunpack.c.0.s8 %v3179
        %v3181 = vperm.slane %v3175, %v3180
        %v3183 = vunpack.c.l.s4 1934713408
        %v3184 = vunpack.c.0.s8 %v3183
        %v3185 = vperm.slane %v3177, %v3184
        %v3186 = vrot.slane %v3169, 4
        %v3187 = vsel %vm448, 0.0, %v3186
        %v3188 = vrot.slane %v3173, 4
        %v3189 = vsel %vm448, 0.0, %v3188
        %v3190 = vrot.slane %v3181, 4
        %v3191 = vsel %vm448, 0.0, %v3190
        %v3192 = vrot.slane %v3185, 4
        %v3193 = vsel %vm448, 0.0, %v3192
        %3195 = vrot.lane.b32.xlu0 %v3131, 16
        %v3196 = vpop.permute.xlu0 %3195
        %3199 = vrot.lane.b32.xlu0 %v3117, 32
        %v3200 = vpop.permute.xlu0 %3199
        %3203 = vrot.lane.b32.xlu0 %v3133, 48
        %v3204 = vpop.permute.xlu0 %3203
        %3207 = vrot.lane.b32.xlu0 %v3125, 64
        %v3208 = vpop.permute.xlu0 %3207
        %3211 = vrot.lane.b32.xlu0 %v3135, 80
        %v3212 = vpop.permute.xlu0 %3211
        %3215 = vrot.lane.b32.xlu0 %v3129, 96
        %v3216 = vpop.permute.xlu0 %3215
        %3219 = vrot.lane.b32.xlu0 %v3137, 112
        %v3220 = vpop.permute.xlu0 %3219
        %3223 = vrot.lane.b32.xlu0 %v3187, 16
        %v3224 = vpop.permute.xlu0 %3223
        %3227 = vrot.lane.b32.xlu0 %v3173, 32
        %v3228 = vpop.permute.xlu0 %3227
        %3231 = vrot.lane.b32.xlu0 %v3189, 48
        %v3232 = vpop.permute.xlu0 %3231
        %3235 = vrot.lane.b32.xlu0 %v3181, 64
        %v3236 = vpop.permute.xlu0 %3235
        %3239 = vrot.lane.b32.xlu0 %v3191, 80
        %v3240 = vpop.permute.xlu0 %3239
        %3243 = vrot.lane.b32.xlu0 %v3185, 96
        %v3244 = vpop.permute.xlu0 %3243
        %3247 = vrot.lane.b32.xlu0 %v3193, 112
        %v3248 = vpop.permute.xlu0 %3247
        %v3250 = vsel %vm616, %v3113, %v3196
        %v3251 = vsel %vm618, %v3250, %v3200
        %v3252 = vsel %vm620, %v3251, %v3204
        %v3253 = vsel %vm622, %v3252, %v3208
        %v3254 = vsel %vm624, %v3253, %v3212
        %v3255 = vsel %vm626, %v3254, %v3216
        %v3256 = vsel %vm628, %v3255, %v3220
        %v3257 = vsel %vm616, %v3169, %v3224
        %v3258 = vsel %vm618, %v3257, %v3228
        %v3259 = vsel %vm620, %v3258, %v3232
        %v3260 = vsel %vm622, %v3259, %v3236
        %v3261 = vsel %vm624, %v3260, %v3240
        %v3262 = vsel %vm626, %v3261, %v3244
        %v3263 = vsel %vm628, %v3262, %v3248
        %3264 = vrot.lane.b32.xlu0 %v2856, 126
        %v3265 = vpop.permute.xlu0 %3264
        %3266 = vrot.lane.b32.xlu0 %v2857, 126
        %v3267 = vpop.permute.xlu0 %3266
        %3268 = vrot.lane.b32.xlu0 %v2859, 126
        %v3269 = vpop.permute.xlu0 %3268
        %3270 = vrot.lane.b32.xlu0 %v2860, 126
        %v3271 = vpop.permute.xlu0 %3270
        %3272 = vrot.lane.b32.xlu0 %v2862, 126
        %v3273 = vpop.permute.xlu0 %3272
        %3274 = vrot.lane.b32.xlu0 %v2863, 126
        %v3275 = vpop.permute.xlu0 %3274
        %3276 = vrot.lane.b32.xlu0 %v2865, 126
        %v3277 = vpop.permute.xlu0 %3276
        %3278 = vrot.lane.b32.xlu0 %v2866, 126
        %v3279 = vpop.permute.xlu0 %3278
        %v3288 = vrot.slane %v3273, 4
        %v3289 = vsel %vm448, %v3288, %v3265
        %v3290 = vrot.slane %v3265, 4
        %v3291 = vsel %vm448, %v3273, %v3290
        %v3293 = vunpack.c.l.s4 1983009808
        %v3294 = vunpack.c.0.s8 %v3293
        %v3295 = vperm.slane %v3289, %v3294
        %v3297 = vunpack.c.l.s4 1983009808
        %v3298 = vunpack.c.0.s8 %v3297
        %v3299 = vperm.slane %v3291, %v3298
        %v3300 = vrot.slane %v3277, 4
        %v3301 = vsel %vm448, %v3300, %v3269
        %v3302 = vrot.slane %v3269, 4
        %v3303 = vsel %vm448, %v3277, %v3302
        %v3305 = vunpack.c.l.s4 1983009808
        %v3306 = vunpack.c.0.s8 %v3305
        %v3307 = vperm.slane %v3301, %v3306
        %v3309 = vunpack.c.l.s4 1983009808
        %v3310 = vunpack.c.0.s8 %v3309
        %v3311 = vperm.slane %v3303, %v3310
        %v3312 = vrot.slane %v3307, 4
        %v3313 = vsel %vm448, %v3312, %v3295
        %v3314 = vrot.slane %v3295, 4
        %v3315 = vsel %vm448, %v3307, %v3314
        %v3317 = vunpack.c.l.s4 1934713408
        %v3318 = vunpack.c.0.s8 %v3317
        %v3319 = vperm.slane %v3313, %v3318
        %v3321 = vunpack.c.l.s4 1934713408
        %v3322 = vunpack.c.0.s8 %v3321
        %v3323 = vperm.slane %v3315, %v3322
        %v3324 = vrot.slane %v3311, 4
        %v3325 = vsel %vm448, %v3324, %v3299
        %v3326 = vrot.slane %v3299, 4
        %v3327 = vsel %vm448, %v3311, %v3326
        %v3329 = vunpack.c.l.s4 1934713408
        %v3330 = vunpack.c.0.s8 %v3329
        %v3331 = vperm.slane %v3325, %v3330
        %v3333 = vunpack.c.l.s4 1934713408
        %v3334 = vunpack.c.0.s8 %v3333
        %v3335 = vperm.slane %v3327, %v3334
        %v3336 = vrot.slane %v3319, 4
        %v3337 = vsel %vm448, 0.0, %v3336
        %v3338 = vrot.slane %v3323, 4
        %v3339 = vsel %vm448, 0.0, %v3338
        %v3340 = vrot.slane %v3331, 4
        %v3341 = vsel %vm448, 0.0, %v3340
        %v3342 = vrot.slane %v3335, 4
        %v3343 = vsel %vm448, 0.0, %v3342
        %v3344 = vrot.slane %v3275, 4
        %v3345 = vsel %vm448, %v3344, %v3267
        %v3346 = vrot.slane %v3267, 4
        %v3347 = vsel %vm448, %v3275, %v3346
        %v3349 = vunpack.c.l.s4 1983009808
        %v3350 = vunpack.c.0.s8 %v3349
        %v3351 = vperm.slane %v3345, %v3350
        %v3353 = vunpack.c.l.s4 1983009808
        %v3354 = vunpack.c.0.s8 %v3353
        %v3355 = vperm.slane %v3347, %v3354
        %v3356 = vrot.slane %v3279, 4
        %v3357 = vsel %vm448, %v3356, %v3271
        %v3358 = vrot.slane %v3271, 4
        %v3359 = vsel %vm448, %v3279, %v3358
        %v3361 = vunpack.c.l.s4 1983009808
        %v3362 = vunpack.c.0.s8 %v3361
        %v3363 = vperm.slane %v3357, %v3362
        %v3365 = vunpack.c.l.s4 1983009808
        %v3366 = vunpack.c.0.s8 %v3365
        %v3367 = vperm.slane %v3359, %v3366
        %v3368 = vrot.slane %v3363, 4
        %v3369 = vsel %vm448, %v3368, %v3351
        %v3370 = vrot.slane %v3351, 4
        %v3371 = vsel %vm448, %v3363, %v3370
        %v3373 = vunpack.c.l.s4 1934713408
        %v3374 = vunpack.c.0.s8 %v3373
        %v3375 = vperm.slane %v3369, %v3374
        %v3377 = vunpack.c.l.s4 1934713408
        %v3378 = vunpack.c.0.s8 %v3377
        %v3379 = vperm.slane %v3371, %v3378
        %v3380 = vrot.slane %v3367, 4
        %v3381 = vsel %vm448, %v3380, %v3355
        %v3382 = vrot.slane %v3355, 4
        %v3383 = vsel %vm448, %v3367, %v3382
        %v3385 = vunpack.c.l.s4 1934713408
        %v3386 = vunpack.c.0.s8 %v3385
        %v3387 = vperm.slane %v3381, %v3386
        %v3389 = vunpack.c.l.s4 1934713408
        %v3390 = vunpack.c.0.s8 %v3389
        %v3391 = vperm.slane %v3383, %v3390
        %v3392 = vrot.slane %v3375, 4
        %v3393 = vsel %vm448, 0.0, %v3392
        %v3394 = vrot.slane %v3379, 4
        %v3395 = vsel %vm448, 0.0, %v3394
        %v3396 = vrot.slane %v3387, 4
        %v3397 = vsel %vm448, 0.0, %v3396
        %v3398 = vrot.slane %v3391, 4
        %v3399 = vsel %vm448, 0.0, %v3398
        %3401 = vrot.lane.b32.xlu0 %v3337, 16
        %v3402 = vpop.permute.xlu0 %3401
        %3405 = vrot.lane.b32.xlu0 %v3323, 32
        %v3406 = vpop.permute.xlu0 %3405
        %3409 = vrot.lane.b32.xlu0 %v3339, 48
        %v3410 = vpop.permute.xlu0 %3409
        %3413 = vrot.lane.b32.xlu0 %v3331, 64
        %v3414 = vpop.permute.xlu0 %3413
        %3417 = vrot.lane.b32.xlu0 %v3341, 80
        %v3418 = vpop.permute.xlu0 %3417
        %3421 = vrot.lane.b32.xlu0 %v3335, 96
        %v3422 = vpop.permute.xlu0 %3421
        %3425 = vrot.lane.b32.xlu0 %v3343, 112
        %v3426 = vpop.permute.xlu0 %3425
        %3429 = vrot.lane.b32.xlu0 %v3393, 16
        %v3430 = vpop.permute.xlu0 %3429
        %3433 = vrot.lane.b32.xlu0 %v3379, 32
        %v3434 = vpop.permute.xlu0 %3433
        %3437 = vrot.lane.b32.xlu0 %v3395, 48
        %v3438 = vpop.permute.xlu0 %3437
        %3441 = vrot.lane.b32.xlu0 %v3387, 64
        %v3442 = vpop.permute.xlu0 %3441
        %3445 = vrot.lane.b32.xlu0 %v3397, 80
        %v3446 = vpop.permute.xlu0 %3445
        %3449 = vrot.lane.b32.xlu0 %v3391, 96
        %v3450 = vpop.permute.xlu0 %3449
        %3453 = vrot.lane.b32.xlu0 %v3399, 112
        %v3454 = vpop.permute.xlu0 %3453
        %v3456 = vsel %vm616, %v3319, %v3402
        %v3457 = vsel %vm618, %v3456, %v3406
        %v3458 = vsel %vm620, %v3457, %v3410
        %v3459 = vsel %vm622, %v3458, %v3414
        %v3460 = vsel %vm624, %v3459, %v3418
        %v3461 = vsel %vm626, %v3460, %v3422
        %v3462 = vsel %vm628, %v3461, %v3426
        %v3463 = vsel %vm616, %v3375, %v3430
        %v3464 = vsel %vm618, %v3463, %v3434
        %v3465 = vsel %vm620, %v3464, %v3438
        %v3466 = vsel %vm622, %v3465, %v3442
        %v3467 = vsel %vm624, %v3466, %v3446
        %v3468 = vsel %vm626, %v3467, %v3450
        %v3469 = vsel %vm628, %v3468, %v3454
        %v3474 = vrot.slane %v2856, 1
        %v3475 = vrot.slane %v2857, 1
        %v3476 = vsel %vm1310, %v3474, %v3475
        %v3477 = vrot.slane %v2858, 1
        %v3478 = vsel %vm1310, %v3475, %v3477
        %v3479 = vrot.slane %v2859, 1
        %v3480 = vrot.slane %v2860, 1
        %v3481 = vsel %vm1310, %v3479, %v3480
        %v3482 = vrot.slane %v2861, 1
        %v3483 = vsel %vm1310, %v3480, %v3482
        %v3484 = vrot.slane %v2862, 1
        %v3485 = vrot.slane %v2863, 1
        %v3486 = vsel %vm1310, %v3484, %v3485
        %v3487 = vrot.slane %v2864, 1
        %v3488 = vsel %vm1310, %v3485, %v3487
        %v3489 = vrot.slane %v2865, 1
        %v3490 = vrot.slane %v2866, 1
        %v3491 = vsel %vm1310, %v3489, %v3490
        %v3492 = vrot.slane %v2867, 1
        %v3493 = vsel %vm1310, %v3490, %v3492
        %v3502 = vrot.slane %v3486, 4
        %v3503 = vsel %vm448, %v3502, %v3476
        %v3504 = vrot.slane %v3476, 4
        %v3505 = vsel %vm448, %v3486, %v3504
        %v3507 = vunpack.c.l.s4 1983009808
        %v3508 = vunpack.c.0.s8 %v3507
        %v3509 = vperm.slane %v3503, %v3508
        %v3511 = vunpack.c.l.s4 1983009808
        %v3512 = vunpack.c.0.s8 %v3511
        %v3513 = vperm.slane %v3505, %v3512
        %v3514 = vrot.slane %v3491, 4
        %v3515 = vsel %vm448, %v3514, %v3481
        %v3516 = vrot.slane %v3481, 4
        %v3517 = vsel %vm448, %v3491, %v3516
        %v3519 = vunpack.c.l.s4 1983009808
        %v3520 = vunpack.c.0.s8 %v3519
        %v3521 = vperm.slane %v3515, %v3520
        %v3523 = vunpack.c.l.s4 1983009808
        %v3524 = vunpack.c.0.s8 %v3523
        %v3525 = vperm.slane %v3517, %v3524
        %v3526 = vrot.slane %v3521, 4
        %v3527 = vsel %vm448, %v3526, %v3509
        %v3528 = vrot.slane %v3509, 4
        %v3529 = vsel %vm448, %v3521, %v3528
        %v3531 = vunpack.c.l.s4 1934713408
        %v3532 = vunpack.c.0.s8 %v3531
        %v3533 = vperm.slane %v3527, %v3532
        %v3535 = vunpack.c.l.s4 1934713408
        %v3536 = vunpack.c.0.s8 %v3535
        %v3537 = vperm.slane %v3529, %v3536
        %v3538 = vrot.slane %v3525, 4
        %v3539 = vsel %vm448, %v3538, %v3513
        %v3540 = vrot.slane %v3513, 4
        %v3541 = vsel %vm448, %v3525, %v3540
        %v3543 = vunpack.c.l.s4 1934713408
        %v3544 = vunpack.c.0.s8 %v3543
        %v3545 = vperm.slane %v3539, %v3544
        %v3547 = vunpack.c.l.s4 1934713408
        %v3548 = vunpack.c.0.s8 %v3547
        %v3549 = vperm.slane %v3541, %v3548
        %v3550 = vrot.slane %v3533, 4
        %v3551 = vsel %vm448, 0.0, %v3550
        %v3552 = vrot.slane %v3537, 4
        %v3553 = vsel %vm448, 0.0, %v3552
        %v3554 = vrot.slane %v3545, 4
        %v3555 = vsel %vm448, 0.0, %v3554
        %v3556 = vrot.slane %v3549, 4
        %v3557 = vsel %vm448, 0.0, %v3556
        %v3558 = vrot.slane %v3488, 4
        %v3559 = vsel %vm448, %v3558, %v3478
        %v3560 = vrot.slane %v3478, 4
        %v3561 = vsel %vm448, %v3488, %v3560
        %v3563 = vunpack.c.l.s4 1983009808
        %v3564 = vunpack.c.0.s8 %v3563
        %v3565 = vperm.slane %v3559, %v3564
        %v3567 = vunpack.c.l.s4 1983009808
        %v3568 = vunpack.c.0.s8 %v3567
        %v3569 = vperm.slane %v3561, %v3568
        %v3570 = vrot.slane %v3493, 4
        %v3571 = vsel %vm448, %v3570, %v3483
        %v3572 = vrot.slane %v3483, 4
        %v3573 = vsel %vm448, %v3493, %v3572
        %v3575 = vunpack.c.l.s4 1983009808
        %v3576 = vunpack.c.0.s8 %v3575
        %v3577 = vperm.slane %v3571, %v3576
        %v3579 = vunpack.c.l.s4 1983009808
        %v3580 = vunpack.c.0.s8 %v3579
        %v3581 = vperm.slane %v3573, %v3580
        %v3582 = vrot.slane %v3577, 4
        %v3583 = vsel %vm448, %v3582, %v3565
        %v3584 = vrot.slane %v3565, 4
        %v3585 = vsel %vm448, %v3577, %v3584
        %v3587 = vunpack.c.l.s4 1934713408
        %v3588 = vunpack.c.0.s8 %v3587
        %v3589 = vperm.slane %v3583, %v3588
        %v3591 = vunpack.c.l.s4 1934713408
        %v3592 = vunpack.c.0.s8 %v3591
        %v3593 = vperm.slane %v3585, %v3592
        %v3594 = vrot.slane %v3581, 4
        %v3595 = vsel %vm448, %v3594, %v3569
        %v3596 = vrot.slane %v3569, 4
        %v3597 = vsel %vm448, %v3581, %v3596
        %v3599 = vunpack.c.l.s4 1934713408
        %v3600 = vunpack.c.0.s8 %v3599
        %v3601 = vperm.slane %v3595, %v3600
        %v3603 = vunpack.c.l.s4 1934713408
        %v3604 = vunpack.c.0.s8 %v3603
        %v3605 = vperm.slane %v3597, %v3604
        %v3606 = vrot.slane %v3589, 4
        %v3607 = vsel %vm448, 0.0, %v3606
        %v3608 = vrot.slane %v3593, 4
        %v3609 = vsel %vm448, 0.0, %v3608
        %v3610 = vrot.slane %v3601, 4
        %v3611 = vsel %vm448, 0.0, %v3610
        %v3612 = vrot.slane %v3605, 4
        %v3613 = vsel %vm448, 0.0, %v3612
        %3615 = vrot.lane.b32.xlu0 %v3551, 16
        %v3616 = vpop.permute.xlu0 %3615
        %3619 = vrot.lane.b32.xlu0 %v3537, 32
        %v3620 = vpop.permute.xlu0 %3619
        %3623 = vrot.lane.b32.xlu0 %v3553, 48
        %v3624 = vpop.permute.xlu0 %3623
        %3627 = vrot.lane.b32.xlu0 %v3545, 64
        %v3628 = vpop.permute.xlu0 %3627
        %3631 = vrot.lane.b32.xlu0 %v3555, 80
        %v3632 = vpop.permute.xlu0 %3631
        %3635 = vrot.lane.b32.xlu0 %v3549, 96
        %v3636 = vpop.permute.xlu0 %3635
        %3639 = vrot.lane.b32.xlu0 %v3557, 112
        %v3640 = vpop.permute.xlu0 %3639
        %3643 = vrot.lane.b32.xlu0 %v3607, 16
        %v3644 = vpop.permute.xlu0 %3643
        %3647 = vrot.lane.b32.xlu0 %v3593, 32
        %v3648 = vpop.permute.xlu0 %3647
        %3651 = vrot.lane.b32.xlu0 %v3609, 48
        %v3652 = vpop.permute.xlu0 %3651
        %3655 = vrot.lane.b32.xlu0 %v3601, 64
        %v3656 = vpop.permute.xlu0 %3655
        %3659 = vrot.lane.b32.xlu0 %v3611, 80
        %v3660 = vpop.permute.xlu0 %3659
        %3663 = vrot.lane.b32.xlu0 %v3605, 96
        %v3664 = vpop.permute.xlu0 %3663
        %3667 = vrot.lane.b32.xlu0 %v3613, 112
        %v3668 = vpop.permute.xlu0 %3667
        %v3670 = vsel %vm616, %v3533, %v3616
        %v3671 = vsel %vm618, %v3670, %v3620
        %v3672 = vsel %vm620, %v3671, %v3624
        %v3673 = vsel %vm622, %v3672, %v3628
        %v3674 = vsel %vm624, %v3673, %v3632
        %v3675 = vsel %vm626, %v3674, %v3636
        %v3676 = vsel %vm628, %v3675, %v3640
        %v3677 = vsel %vm616, %v3589, %v3644
        %v3678 = vsel %vm618, %v3677, %v3648
        %v3679 = vsel %vm620, %v3678, %v3652
        %v3680 = vsel %vm622, %v3679, %v3656
        %v3681 = vsel %vm624, %v3680, %v3660
        %v3682 = vsel %vm626, %v3681, %v3664
        %v3683 = vsel %vm628, %v3682, %v3668
        %3684 = vrot.lane.b32.xlu0 %v3476, 127
        %v3685 = vpop.permute.xlu0 %3684
        %3686 = vrot.lane.b32.xlu0 %v3478, 127
        %v3687 = vpop.permute.xlu0 %3686
        %3688 = vrot.lane.b32.xlu0 %v3481, 127
        %v3689 = vpop.permute.xlu0 %3688
        %3690 = vrot.lane.b32.xlu0 %v3483, 127
        %v3691 = vpop.permute.xlu0 %3690
        %3692 = vrot.lane.b32.xlu0 %v3486, 127
        %v3693 = vpop.permute.xlu0 %3692
        %3694 = vrot.lane.b32.xlu0 %v3488, 127
        %v3695 = vpop.permute.xlu0 %3694
        %3696 = vrot.lane.b32.xlu0 %v3491, 127
        %v3697 = vpop.permute.xlu0 %3696
        %3698 = vrot.lane.b32.xlu0 %v3493, 127
        %v3699 = vpop.permute.xlu0 %3698
        %v3708 = vrot.slane %v3693, 4
        %v3709 = vsel %vm448, %v3708, %v3685
        %v3710 = vrot.slane %v3685, 4
        %v3711 = vsel %vm448, %v3693, %v3710
        %v3713 = vunpack.c.l.s4 1983009808
        %v3714 = vunpack.c.0.s8 %v3713
        %v3715 = vperm.slane %v3709, %v3714
        %v3717 = vunpack.c.l.s4 1983009808
        %v3718 = vunpack.c.0.s8 %v3717
        %v3719 = vperm.slane %v3711, %v3718
        %v3720 = vrot.slane %v3697, 4
        %v3721 = vsel %vm448, %v3720, %v3689
        %v3722 = vrot.slane %v3689, 4
        %v3723 = vsel %vm448, %v3697, %v3722
        %v3725 = vunpack.c.l.s4 1983009808
        %v3726 = vunpack.c.0.s8 %v3725
        %v3727 = vperm.slane %v3721, %v3726
        %v3729 = vunpack.c.l.s4 1983009808
        %v3730 = vunpack.c.0.s8 %v3729
        %v3731 = vperm.slane %v3723, %v3730
        %v3732 = vrot.slane %v3727, 4
        %v3733 = vsel %vm448, %v3732, %v3715
        %v3734 = vrot.slane %v3715, 4
        %v3735 = vsel %vm448, %v3727, %v3734
        %v3737 = vunpack.c.l.s4 1934713408
        %v3738 = vunpack.c.0.s8 %v3737
        %v3739 = vperm.slane %v3733, %v3738
        %v3741 = vunpack.c.l.s4 1934713408
        %v3742 = vunpack.c.0.s8 %v3741
        %v3743 = vperm.slane %v3735, %v3742
        %v3744 = vrot.slane %v3731, 4
        %v3745 = vsel %vm448, %v3744, %v3719
        %v3746 = vrot.slane %v3719, 4
        %v3747 = vsel %vm448, %v3731, %v3746
        %v3749 = vunpack.c.l.s4 1934713408
        %v3750 = vunpack.c.0.s8 %v3749
        %v3751 = vperm.slane %v3745, %v3750
        %v3753 = vunpack.c.l.s4 1934713408
        %v3754 = vunpack.c.0.s8 %v3753
        %v3755 = vperm.slane %v3747, %v3754
        %v3756 = vrot.slane %v3739, 4
        %v3757 = vsel %vm448, 0.0, %v3756
        %v3758 = vrot.slane %v3743, 4
        %v3759 = vsel %vm448, 0.0, %v3758
        %v3760 = vrot.slane %v3751, 4
        %v3761 = vsel %vm448, 0.0, %v3760
        %v3762 = vrot.slane %v3755, 4
        %v3763 = vsel %vm448, 0.0, %v3762
        %v3764 = vrot.slane %v3695, 4
        %v3765 = vsel %vm448, %v3764, %v3687
        %v3766 = vrot.slane %v3687, 4
        %v3767 = vsel %vm448, %v3695, %v3766
        %v3769 = vunpack.c.l.s4 1983009808
        %v3770 = vunpack.c.0.s8 %v3769
        %v3771 = vperm.slane %v3765, %v3770
        %v3773 = vunpack.c.l.s4 1983009808
        %v3774 = vunpack.c.0.s8 %v3773
        %v3775 = vperm.slane %v3767, %v3774
        %v3776 = vrot.slane %v3699, 4
        %v3777 = vsel %vm448, %v3776, %v3691
        %v3778 = vrot.slane %v3691, 4
        %v3779 = vsel %vm448, %v3699, %v3778
        %v3781 = vunpack.c.l.s4 1983009808
        %v3782 = vunpack.c.0.s8 %v3781
        %v3783 = vperm.slane %v3777, %v3782
        %v3785 = vunpack.c.l.s4 1983009808
        %v3786 = vunpack.c.0.s8 %v3785
        %v3787 = vperm.slane %v3779, %v3786
        %v3788 = vrot.slane %v3783, 4
        %v3789 = vsel %vm448, %v3788, %v3771
        %v3790 = vrot.slane %v3771, 4
        %v3791 = vsel %vm448, %v3783, %v3790
        %v3793 = vunpack.c.l.s4 1934713408
        %v3794 = vunpack.c.0.s8 %v3793
        %v3795 = vperm.slane %v3789, %v3794
        %v3797 = vunpack.c.l.s4 1934713408
        %v3798 = vunpack.c.0.s8 %v3797
        %v3799 = vperm.slane %v3791, %v3798
        %v3800 = vrot.slane %v3787, 4
        %v3801 = vsel %vm448, %v3800, %v3775
        %v3802 = vrot.slane %v3775, 4
        %v3803 = vsel %vm448, %v3787, %v3802
        %v3805 = vunpack.c.l.s4 1934713408
        %v3806 = vunpack.c.0.s8 %v3805
        %v3807 = vperm.slane %v3801, %v3806
        %v3809 = vunpack.c.l.s4 1934713408
        %v3810 = vunpack.c.0.s8 %v3809
        %v3811 = vperm.slane %v3803, %v3810
        %v3812 = vrot.slane %v3795, 4
        %v3813 = vsel %vm448, 0.0, %v3812
        %v3814 = vrot.slane %v3799, 4
        %v3815 = vsel %vm448, 0.0, %v3814
        %v3816 = vrot.slane %v3807, 4
        %v3817 = vsel %vm448, 0.0, %v3816
        %v3818 = vrot.slane %v3811, 4
        %v3819 = vsel %vm448, 0.0, %v3818
        %3821 = vrot.lane.b32.xlu0 %v3757, 16
        %v3822 = vpop.permute.xlu0 %3821
        %3825 = vrot.lane.b32.xlu0 %v3743, 32
        %v3826 = vpop.permute.xlu0 %3825
        %3829 = vrot.lane.b32.xlu0 %v3759, 48
        %v3830 = vpop.permute.xlu0 %3829
        %3833 = vrot.lane.b32.xlu0 %v3751, 64
        %v3834 = vpop.permute.xlu0 %3833
        %3837 = vrot.lane.b32.xlu0 %v3761, 80
        %v3838 = vpop.permute.xlu0 %3837
        %3841 = vrot.lane.b32.xlu0 %v3755, 96
        %v3842 = vpop.permute.xlu0 %3841
        %3845 = vrot.lane.b32.xlu0 %v3763, 112
        %v3846 = vpop.permute.xlu0 %3845
        %3849 = vrot.lane.b32.xlu0 %v3813, 16
        %v3850 = vpop.permute.xlu0 %3849
        %3853 = vrot.lane.b32.xlu0 %v3799, 32
        %v3854 = vpop.permute.xlu0 %3853
        %3857 = vrot.lane.b32.xlu0 %v3815, 48
        %v3858 = vpop.permute.xlu0 %3857
        %3861 = vrot.lane.b32.xlu0 %v3807, 64
        %v3862 = vpop.permute.xlu0 %3861
        %3865 = vrot.lane.b32.xlu0 %v3817, 80
        %v3866 = vpop.permute.xlu0 %3865
        %3869 = vrot.lane.b32.xlu0 %v3811, 96
        %v3870 = vpop.permute.xlu0 %3869
        %3873 = vrot.lane.b32.xlu0 %v3819, 112
        %v3874 = vpop.permute.xlu0 %3873
        %v3876 = vsel %vm616, %v3739, %v3822
        %v3877 = vsel %vm618, %v3876, %v3826
        %v3878 = vsel %vm620, %v3877, %v3830
        %v3879 = vsel %vm622, %v3878, %v3834
        %v3880 = vsel %vm624, %v3879, %v3838
        %v3881 = vsel %vm626, %v3880, %v3842
        %v3882 = vsel %vm628, %v3881, %v3846
        %v3883 = vsel %vm616, %v3795, %v3850
        %v3884 = vsel %vm618, %v3883, %v3854
        %v3885 = vsel %vm620, %v3884, %v3858
        %v3886 = vsel %vm622, %v3885, %v3862
        %v3887 = vsel %vm624, %v3886, %v3866
        %v3888 = vsel %vm626, %v3887, %v3870
        %v3889 = vsel %vm628, %v3888, %v3874
        %3890 = vrot.lane.b32.xlu0 %v3476, 126
        %v3891 = vpop.permute.xlu0 %3890
        %3892 = vrot.lane.b32.xlu0 %v3478, 126
        %v3893 = vpop.permute.xlu0 %3892
        %3894 = vrot.lane.b32.xlu0 %v3481, 126
        %v3895 = vpop.permute.xlu0 %3894
        %3896 = vrot.lane.b32.xlu0 %v3483, 126
        %v3897 = vpop.permute.xlu0 %3896
        %3898 = vrot.lane.b32.xlu0 %v3486, 126
        %v3899 = vpop.permute.xlu0 %3898
        %3900 = vrot.lane.b32.xlu0 %v3488, 126
        %v3901 = vpop.permute.xlu0 %3900
        %3902 = vrot.lane.b32.xlu0 %v3491, 126
        %v3903 = vpop.permute.xlu0 %3902
        %3904 = vrot.lane.b32.xlu0 %v3493, 126
        %v3905 = vpop.permute.xlu0 %3904
        %v3914 = vrot.slane %v3899, 4
        %v3915 = vsel %vm448, %v3914, %v3891
        %v3916 = vrot.slane %v3891, 4
        %v3917 = vsel %vm448, %v3899, %v3916
        %v3919 = vunpack.c.l.s4 1983009808
        %v3920 = vunpack.c.0.s8 %v3919
        %v3921 = vperm.slane %v3915, %v3920
        %v3923 = vunpack.c.l.s4 1983009808
        %v3924 = vunpack.c.0.s8 %v3923
        %v3925 = vperm.slane %v3917, %v3924
        %v3926 = vrot.slane %v3903, 4
        %v3927 = vsel %vm448, %v3926, %v3895
        %v3928 = vrot.slane %v3895, 4
        %v3929 = vsel %vm448, %v3903, %v3928
        %v3931 = vunpack.c.l.s4 1983009808
        %v3932 = vunpack.c.0.s8 %v3931
        %v3933 = vperm.slane %v3927, %v3932
        %v3935 = vunpack.c.l.s4 1983009808
        %v3936 = vunpack.c.0.s8 %v3935
        %v3937 = vperm.slane %v3929, %v3936
        %v3938 = vrot.slane %v3933, 4
        %v3939 = vsel %vm448, %v3938, %v3921
        %v3940 = vrot.slane %v3921, 4
        %v3941 = vsel %vm448, %v3933, %v3940
        %v3943 = vunpack.c.l.s4 1934713408
        %v3944 = vunpack.c.0.s8 %v3943
        %v3945 = vperm.slane %v3939, %v3944
        %v3947 = vunpack.c.l.s4 1934713408
        %v3948 = vunpack.c.0.s8 %v3947
        %v3949 = vperm.slane %v3941, %v3948
        %v3950 = vrot.slane %v3937, 4
        %v3951 = vsel %vm448, %v3950, %v3925
        %v3952 = vrot.slane %v3925, 4
        %v3953 = vsel %vm448, %v3937, %v3952
        %v3955 = vunpack.c.l.s4 1934713408
        %v3956 = vunpack.c.0.s8 %v3955
        %v3957 = vperm.slane %v3951, %v3956
        %v3959 = vunpack.c.l.s4 1934713408
        %v3960 = vunpack.c.0.s8 %v3959
        %v3961 = vperm.slane %v3953, %v3960
        %v3962 = vrot.slane %v3945, 4
        %v3963 = vsel %vm448, 0.0, %v3962
        %v3964 = vrot.slane %v3949, 4
        %v3965 = vsel %vm448, 0.0, %v3964
        %v3966 = vrot.slane %v3957, 4
        %v3967 = vsel %vm448, 0.0, %v3966
        %v3968 = vrot.slane %v3961, 4
        %v3969 = vsel %vm448, 0.0, %v3968
        %v3970 = vrot.slane %v3901, 4
        %v3971 = vsel %vm448, %v3970, %v3893
        %v3972 = vrot.slane %v3893, 4
        %v3973 = vsel %vm448, %v3901, %v3972
        %v3975 = vunpack.c.l.s4 1983009808
        %v3976 = vunpack.c.0.s8 %v3975
        %v3977 = vperm.slane %v3971, %v3976
        %v3979 = vunpack.c.l.s4 1983009808
        %v3980 = vunpack.c.0.s8 %v3979
        %v3981 = vperm.slane %v3973, %v3980
        %v3982 = vrot.slane %v3905, 4
        %v3983 = vsel %vm448, %v3982, %v3897
        %v3984 = vrot.slane %v3897, 4
        %v3985 = vsel %vm448, %v3905, %v3984
        %v3987 = vunpack.c.l.s4 1983009808
        %v3988 = vunpack.c.0.s8 %v3987
        %v3989 = vperm.slane %v3983, %v3988
        %v3991 = vunpack.c.l.s4 1983009808
        %v3992 = vunpack.c.0.s8 %v3991
        %v3993 = vperm.slane %v3985, %v3992
        %v3994 = vrot.slane %v3989, 4
        %v3995 = vsel %vm448, %v3994, %v3977
        %v3996 = vrot.slane %v3977, 4
        %v3997 = vsel %vm448, %v3989, %v3996
        %v3999 = vunpack.c.l.s4 1934713408
        %v4000 = vunpack.c.0.s8 %v3999
        %v4001 = vperm.slane %v3995, %v4000
        %v4003 = vunpack.c.l.s4 1934713408
        %v4004 = vunpack.c.0.s8 %v4003
        %v4005 = vperm.slane %v3997, %v4004
        %v4006 = vrot.slane %v3993, 4
        %v4007 = vsel %vm448, %v4006, %v3981
        %v4008 = vrot.slane %v3981, 4
        %v4009 = vsel %vm448, %v3993, %v4008
        %v4011 = vunpack.c.l.s4 1934713408
        %v4012 = vunpack.c.0.s8 %v4011
        %v4013 = vperm.slane %v4007, %v4012
        %v4015 = vunpack.c.l.s4 1934713408
        %v4016 = vunpack.c.0.s8 %v4015
        %v4017 = vperm.slane %v4009, %v4016
        %v4018 = vrot.slane %v4001, 4
        %v4019 = vsel %vm448, 0.0, %v4018
        %v4020 = vrot.slane %v4005, 4
        %v4021 = vsel %vm448, 0.0, %v4020
        %v4022 = vrot.slane %v4013, 4
        %v4023 = vsel %vm448, 0.0, %v4022
        %v4024 = vrot.slane %v4017, 4
        %v4025 = vsel %vm448, 0.0, %v4024
        %4027 = vrot.lane.b32.xlu0 %v3963, 16
        %v4028 = vpop.permute.xlu0 %4027
        %4031 = vrot.lane.b32.xlu0 %v3949, 32
        %v4032 = vpop.permute.xlu0 %4031
        %4035 = vrot.lane.b32.xlu0 %v3965, 48
        %v4036 = vpop.permute.xlu0 %4035
        %4039 = vrot.lane.b32.xlu0 %v3957, 64
        %v4040 = vpop.permute.xlu0 %4039
        %4043 = vrot.lane.b32.xlu0 %v3967, 80
        %v4044 = vpop.permute.xlu0 %4043
        %4047 = vrot.lane.b32.xlu0 %v3961, 96
        %v4048 = vpop.permute.xlu0 %4047
        %4051 = vrot.lane.b32.xlu0 %v3969, 112
        %v4052 = vpop.permute.xlu0 %4051
        %4055 = vrot.lane.b32.xlu0 %v4019, 16
        %v4056 = vpop.permute.xlu0 %4055
        %4059 = vrot.lane.b32.xlu0 %v4005, 32
        %v4060 = vpop.permute.xlu0 %4059
        %4063 = vrot.lane.b32.xlu0 %v4021, 48
        %v4064 = vpop.permute.xlu0 %4063
        %4067 = vrot.lane.b32.xlu0 %v4013, 64
        %v4068 = vpop.permute.xlu0 %4067
        %4071 = vrot.lane.b32.xlu0 %v4023, 80
        %v4072 = vpop.permute.xlu0 %4071
        %4075 = vrot.lane.b32.xlu0 %v4017, 96
        %v4076 = vpop.permute.xlu0 %4075
        %4079 = vrot.lane.b32.xlu0 %v4025, 112
        %v4080 = vpop.permute.xlu0 %4079
        %v4082 = vsel %vm616, %v3945, %v4028
        %v4083 = vsel %vm618, %v4082, %v4032
        %v4084 = vsel %vm620, %v4083, %v4036
        %v4085 = vsel %vm622, %v4084, %v4040
        %v4086 = vsel %vm624, %v4085, %v4044
        %v4087 = vsel %vm626, %v4086, %v4048
        %v4088 = vsel %vm628, %v4087, %v4052
        %v4089 = vsel %vm616, %v4001, %v4056
        %v4090 = vsel %vm618, %v4089, %v4060
        %v4091 = vsel %vm620, %v4090, %v4064
        %v4092 = vsel %vm622, %v4091, %v4068
        %v4093 = vsel %vm624, %v4092, %v4072
        %v4094 = vsel %vm626, %v4093, %v4076
        %v4095 = vsel %vm628, %v4094, %v4080
        %v4096 = vrot.slane %v2856, 2
        %v4097 = vrot.slane %v2857, 2
        %v4098 = vsel %vm1933, %v4096, %v4097
        %v4099 = vrot.slane %v2858, 2
        %v4100 = vsel %vm1933, %v4097, %v4099
        %v4101 = vrot.slane %v2859, 2
        %v4102 = vrot.slane %v2860, 2
        %v4103 = vsel %vm1933, %v4101, %v4102
        %v4104 = vrot.slane %v2861, 2
        %v4105 = vsel %vm1933, %v4102, %v4104
        %v4106 = vrot.slane %v2862, 2
        %v4107 = vrot.slane %v2863, 2
        %v4108 = vsel %vm1933, %v4106, %v4107
        %v4109 = vrot.slane %v2864, 2
        %v4110 = vsel %vm1933, %v4107, %v4109
        %v4111 = vrot.slane %v2865, 2
        %v4112 = vrot.slane %v2866, 2
        %v4113 = vsel %vm1933, %v4111, %v4112
        %v4114 = vrot.slane %v2867, 2
        %v4115 = vsel %vm1933, %v4112, %v4114
        %v4124 = vrot.slane %v4108, 4
        %v4125 = vsel %vm448, %v4124, %v4098
        %v4126 = vrot.slane %v4098, 4
        %v4127 = vsel %vm448, %v4108, %v4126
        %v4129 = vunpack.c.l.s4 1983009808
        %v4130 = vunpack.c.0.s8 %v4129
        %v4131 = vperm.slane %v4125, %v4130
        %v4133 = vunpack.c.l.s4 1983009808
        %v4134 = vunpack.c.0.s8 %v4133
        %v4135 = vperm.slane %v4127, %v4134
        %v4136 = vrot.slane %v4113, 4
        %v4137 = vsel %vm448, %v4136, %v4103
        %v4138 = vrot.slane %v4103, 4
        %v4139 = vsel %vm448, %v4113, %v4138
        %v4141 = vunpack.c.l.s4 1983009808
        %v4142 = vunpack.c.0.s8 %v4141
        %v4143 = vperm.slane %v4137, %v4142
        %v4145 = vunpack.c.l.s4 1983009808
        %v4146 = vunpack.c.0.s8 %v4145
        %v4147 = vperm.slane %v4139, %v4146
        %v4148 = vrot.slane %v4143, 4
        %v4149 = vsel %vm448, %v4148, %v4131
        %v4150 = vrot.slane %v4131, 4
        %v4151 = vsel %vm448, %v4143, %v4150
        %v4153 = vunpack.c.l.s4 1934713408
        %v4154 = vunpack.c.0.s8 %v4153
        %v4155 = vperm.slane %v4149, %v4154
        %v4157 = vunpack.c.l.s4 1934713408
        %v4158 = vunpack.c.0.s8 %v4157
        %v4159 = vperm.slane %v4151, %v4158
        %v4160 = vrot.slane %v4147, 4
        %v4161 = vsel %vm448, %v4160, %v4135
        %v4162 = vrot.slane %v4135, 4
        %v4163 = vsel %vm448, %v4147, %v4162
        %v4165 = vunpack.c.l.s4 1934713408
        %v4166 = vunpack.c.0.s8 %v4165
        %v4167 = vperm.slane %v4161, %v4166
        %v4169 = vunpack.c.l.s4 1934713408
        %v4170 = vunpack.c.0.s8 %v4169
        %v4171 = vperm.slane %v4163, %v4170
        %v4172 = vrot.slane %v4155, 4
        %v4173 = vsel %vm448, 0.0, %v4172
        %v4174 = vrot.slane %v4159, 4
        %v4175 = vsel %vm448, 0.0, %v4174
        %v4176 = vrot.slane %v4167, 4
        %v4177 = vsel %vm448, 0.0, %v4176
        %v4178 = vrot.slane %v4171, 4
        %v4179 = vsel %vm448, 0.0, %v4178
        %v4180 = vrot.slane %v4110, 4
        %v4181 = vsel %vm448, %v4180, %v4100
        %v4182 = vrot.slane %v4100, 4
        %v4183 = vsel %vm448, %v4110, %v4182
        %v4185 = vunpack.c.l.s4 1983009808
        %v4186 = vunpack.c.0.s8 %v4185
        %v4187 = vperm.slane %v4181, %v4186
        %v4189 = vunpack.c.l.s4 1983009808
        %v4190 = vunpack.c.0.s8 %v4189
        %v4191 = vperm.slane %v4183, %v4190
        %v4192 = vrot.slane %v4115, 4
        %v4193 = vsel %vm448, %v4192, %v4105
        %v4194 = vrot.slane %v4105, 4
        %v4195 = vsel %vm448, %v4115, %v4194
        %v4197 = vunpack.c.l.s4 1983009808
        %v4198 = vunpack.c.0.s8 %v4197
        %v4199 = vperm.slane %v4193, %v4198
        %v4201 = vunpack.c.l.s4 1983009808
        %v4202 = vunpack.c.0.s8 %v4201
        %v4203 = vperm.slane %v4195, %v4202
        %v4204 = vrot.slane %v4199, 4
        %v4205 = vsel %vm448, %v4204, %v4187
        %v4206 = vrot.slane %v4187, 4
        %v4207 = vsel %vm448, %v4199, %v4206
        %v4209 = vunpack.c.l.s4 1934713408
        %v4210 = vunpack.c.0.s8 %v4209
        %v4211 = vperm.slane %v4205, %v4210
        %v4213 = vunpack.c.l.s4 1934713408
        %v4214 = vunpack.c.0.s8 %v4213
        %v4215 = vperm.slane %v4207, %v4214
        %v4216 = vrot.slane %v4203, 4
        %v4217 = vsel %vm448, %v4216, %v4191
        %v4218 = vrot.slane %v4191, 4
        %v4219 = vsel %vm448, %v4203, %v4218
        %v4221 = vunpack.c.l.s4 1934713408
        %v4222 = vunpack.c.0.s8 %v4221
        %v4223 = vperm.slane %v4217, %v4222
        %v4225 = vunpack.c.l.s4 1934713408
        %v4226 = vunpack.c.0.s8 %v4225
        %v4227 = vperm.slane %v4219, %v4226
        %v4228 = vrot.slane %v4211, 4
        %v4229 = vsel %vm448, 0.0, %v4228
        %v4230 = vrot.slane %v4215, 4
        %v4231 = vsel %vm448, 0.0, %v4230
        %v4232 = vrot.slane %v4223, 4
        %v4233 = vsel %vm448, 0.0, %v4232
        %v4234 = vrot.slane %v4227, 4
        %v4235 = vsel %vm448, 0.0, %v4234
        %4237 = vrot.lane.b32.xlu0 %v4173, 16
        %v4238 = vpop.permute.xlu0 %4237
        %4241 = vrot.lane.b32.xlu0 %v4159, 32
        %v4242 = vpop.permute.xlu0 %4241
        %4245 = vrot.lane.b32.xlu0 %v4175, 48
        %v4246 = vpop.permute.xlu0 %4245
        %4249 = vrot.lane.b32.xlu0 %v4167, 64
        %v4250 = vpop.permute.xlu0 %4249
        %4253 = vrot.lane.b32.xlu0 %v4177, 80
        %v4254 = vpop.permute.xlu0 %4253
        %4257 = vrot.lane.b32.xlu0 %v4171, 96
        %v4258 = vpop.permute.xlu0 %4257
        %4261 = vrot.lane.b32.xlu0 %v4179, 112
        %v4262 = vpop.permute.xlu0 %4261
        %4265 = vrot.lane.b32.xlu0 %v4229, 16
        %v4266 = vpop.permute.xlu0 %4265
        %4269 = vrot.lane.b32.xlu0 %v4215, 32
        %v4270 = vpop.permute.xlu0 %4269
        %4273 = vrot.lane.b32.xlu0 %v4231, 48
        %v4274 = vpop.permute.xlu0 %4273
        %4277 = vrot.lane.b32.xlu0 %v4223, 64
        %v4278 = vpop.permute.xlu0 %4277
        %4281 = vrot.lane.b32.xlu0 %v4233, 80
        %v4282 = vpop.permute.xlu0 %4281
        %4285 = vrot.lane.b32.xlu0 %v4227, 96
        %v4286 = vpop.permute.xlu0 %4285
        %4289 = vrot.lane.b32.xlu0 %v4235, 112
        %v4290 = vpop.permute.xlu0 %4289
        %v4292 = vsel %vm616, %v4155, %v4238
        %v4293 = vsel %vm618, %v4292, %v4242
        %v4294 = vsel %vm620, %v4293, %v4246
        %v4295 = vsel %vm622, %v4294, %v4250
        %v4296 = vsel %vm624, %v4295, %v4254
        %v4297 = vsel %vm626, %v4296, %v4258
        %v4298 = vsel %vm628, %v4297, %v4262
        %v4299 = vsel %vm616, %v4211, %v4266
        %v4300 = vsel %vm618, %v4299, %v4270
        %v4301 = vsel %vm620, %v4300, %v4274
        %v4302 = vsel %vm622, %v4301, %v4278
        %v4303 = vsel %vm624, %v4302, %v4282
        %v4304 = vsel %vm626, %v4303, %v4286
        %v4305 = vsel %vm628, %v4304, %v4290
        %4306 = vrot.lane.b32.xlu0 %v4098, 127
        %v4307 = vpop.permute.xlu0 %4306
        %4308 = vrot.lane.b32.xlu0 %v4100, 127
        %v4309 = vpop.permute.xlu0 %4308
        %4310 = vrot.lane.b32.xlu0 %v4103, 127
        %v4311 = vpop.permute.xlu0 %4310
        %4312 = vrot.lane.b32.xlu0 %v4105, 127
        %v4313 = vpop.permute.xlu0 %4312
        %4314 = vrot.lane.b32.xlu0 %v4108, 127
        %v4315 = vpop.permute.xlu0 %4314
        %4316 = vrot.lane.b32.xlu0 %v4110, 127
        %v4317 = vpop.permute.xlu0 %4316
        %4318 = vrot.lane.b32.xlu0 %v4113, 127
        %v4319 = vpop.permute.xlu0 %4318
        %4320 = vrot.lane.b32.xlu0 %v4115, 127
        %v4321 = vpop.permute.xlu0 %4320
        %v4330 = vrot.slane %v4315, 4
        %v4331 = vsel %vm448, %v4330, %v4307
        %v4332 = vrot.slane %v4307, 4
        %v4333 = vsel %vm448, %v4315, %v4332
        %v4335 = vunpack.c.l.s4 1983009808
        %v4336 = vunpack.c.0.s8 %v4335
        %v4337 = vperm.slane %v4331, %v4336
        %v4339 = vunpack.c.l.s4 1983009808
        %v4340 = vunpack.c.0.s8 %v4339
        %v4341 = vperm.slane %v4333, %v4340
        %v4342 = vrot.slane %v4319, 4
        %v4343 = vsel %vm448, %v4342, %v4311
        %v4344 = vrot.slane %v4311, 4
        %v4345 = vsel %vm448, %v4319, %v4344
        %v4347 = vunpack.c.l.s4 1983009808
        %v4348 = vunpack.c.0.s8 %v4347
        %v4349 = vperm.slane %v4343, %v4348
        %v4351 = vunpack.c.l.s4 1983009808
        %v4352 = vunpack.c.0.s8 %v4351
        %v4353 = vperm.slane %v4345, %v4352
        %v4354 = vrot.slane %v4349, 4
        %v4355 = vsel %vm448, %v4354, %v4337
        %v4356 = vrot.slane %v4337, 4
        %v4357 = vsel %vm448, %v4349, %v4356
        %v4359 = vunpack.c.l.s4 1934713408
        %v4360 = vunpack.c.0.s8 %v4359
        %v4361 = vperm.slane %v4355, %v4360
        %v4363 = vunpack.c.l.s4 1934713408
        %v4364 = vunpack.c.0.s8 %v4363
        %v4365 = vperm.slane %v4357, %v4364
        %v4366 = vrot.slane %v4353, 4
        %v4367 = vsel %vm448, %v4366, %v4341
        %v4368 = vrot.slane %v4341, 4
        %v4369 = vsel %vm448, %v4353, %v4368
        %v4371 = vunpack.c.l.s4 1934713408
        %v4372 = vunpack.c.0.s8 %v4371
        %v4373 = vperm.slane %v4367, %v4372
        %v4375 = vunpack.c.l.s4 1934713408
        %v4376 = vunpack.c.0.s8 %v4375
        %v4377 = vperm.slane %v4369, %v4376
        %v4378 = vrot.slane %v4361, 4
        %v4379 = vsel %vm448, 0.0, %v4378
        %v4380 = vrot.slane %v4365, 4
        %v4381 = vsel %vm448, 0.0, %v4380
        %v4382 = vrot.slane %v4373, 4
        %v4383 = vsel %vm448, 0.0, %v4382
        %v4384 = vrot.slane %v4377, 4
        %v4385 = vsel %vm448, 0.0, %v4384
        %v4386 = vrot.slane %v4317, 4
        %v4387 = vsel %vm448, %v4386, %v4309
        %v4388 = vrot.slane %v4309, 4
        %v4389 = vsel %vm448, %v4317, %v4388
        %v4391 = vunpack.c.l.s4 1983009808
        %v4392 = vunpack.c.0.s8 %v4391
        %v4393 = vperm.slane %v4387, %v4392
        %v4395 = vunpack.c.l.s4 1983009808
        %v4396 = vunpack.c.0.s8 %v4395
        %v4397 = vperm.slane %v4389, %v4396
        %v4398 = vrot.slane %v4321, 4
        %v4399 = vsel %vm448, %v4398, %v4313
        %v4400 = vrot.slane %v4313, 4
        %v4401 = vsel %vm448, %v4321, %v4400
        %v4403 = vunpack.c.l.s4 1983009808
        %v4404 = vunpack.c.0.s8 %v4403
        %v4405 = vperm.slane %v4399, %v4404
        %v4407 = vunpack.c.l.s4 1983009808
        %v4408 = vunpack.c.0.s8 %v4407
        %v4409 = vperm.slane %v4401, %v4408
        %v4410 = vrot.slane %v4405, 4
        %v4411 = vsel %vm448, %v4410, %v4393
        %v4412 = vrot.slane %v4393, 4
        %v4413 = vsel %vm448, %v4405, %v4412
        %v4415 = vunpack.c.l.s4 1934713408
        %v4416 = vunpack.c.0.s8 %v4415
        %v4417 = vperm.slane %v4411, %v4416
        %v4419 = vunpack.c.l.s4 1934713408
        %v4420 = vunpack.c.0.s8 %v4419
        %v4421 = vperm.slane %v4413, %v4420
        %v4422 = vrot.slane %v4409, 4
        %v4423 = vsel %vm448, %v4422, %v4397
        %v4424 = vrot.slane %v4397, 4
        %v4425 = vsel %vm448, %v4409, %v4424
        %v4427 = vunpack.c.l.s4 1934713408
        %v4428 = vunpack.c.0.s8 %v4427
        %v4429 = vperm.slane %v4423, %v4428
        %v4431 = vunpack.c.l.s4 1934713408
        %v4432 = vunpack.c.0.s8 %v4431
        %v4433 = vperm.slane %v4425, %v4432
        %v4434 = vrot.slane %v4417, 4
        %v4435 = vsel %vm448, 0.0, %v4434
        %v4436 = vrot.slane %v4421, 4
        %v4437 = vsel %vm448, 0.0, %v4436
        %v4438 = vrot.slane %v4429, 4
        %v4439 = vsel %vm448, 0.0, %v4438
        %v4440 = vrot.slane %v4433, 4
        %v4441 = vsel %vm448, 0.0, %v4440
        %4443 = vrot.lane.b32.xlu0 %v4379, 16
        %v4444 = vpop.permute.xlu0 %4443
        %4447 = vrot.lane.b32.xlu0 %v4365, 32
        %v4448 = vpop.permute.xlu0 %4447
        %4451 = vrot.lane.b32.xlu0 %v4381, 48
        %v4452 = vpop.permute.xlu0 %4451
        %4455 = vrot.lane.b32.xlu0 %v4373, 64
        %v4456 = vpop.permute.xlu0 %4455
        %4459 = vrot.lane.b32.xlu0 %v4383, 80
        %v4460 = vpop.permute.xlu0 %4459
        %4463 = vrot.lane.b32.xlu0 %v4377, 96
        %v4464 = vpop.permute.xlu0 %4463
        %4467 = vrot.lane.b32.xlu0 %v4385, 112
        %v4468 = vpop.permute.xlu0 %4467
        %4471 = vrot.lane.b32.xlu0 %v4435, 16
        %v4472 = vpop.permute.xlu0 %4471
        %4475 = vrot.lane.b32.xlu0 %v4421, 32
        %v4476 = vpop.permute.xlu0 %4475
        %4479 = vrot.lane.b32.xlu0 %v4437, 48
        %v4480 = vpop.permute.xlu0 %4479
        %4483 = vrot.lane.b32.xlu0 %v4429, 64
        %v4484 = vpop.permute.xlu0 %4483
        %4487 = vrot.lane.b32.xlu0 %v4439, 80
        %v4488 = vpop.permute.xlu0 %4487
        %4491 = vrot.lane.b32.xlu0 %v4433, 96
        %v4492 = vpop.permute.xlu0 %4491
        %4495 = vrot.lane.b32.xlu0 %v4441, 112
        %v4496 = vpop.permute.xlu0 %4495
        %v4498 = vsel %vm616, %v4361, %v4444
        %v4499 = vsel %vm618, %v4498, %v4448
        %v4500 = vsel %vm620, %v4499, %v4452
        %v4501 = vsel %vm622, %v4500, %v4456
        %v4502 = vsel %vm624, %v4501, %v4460
        %v4503 = vsel %vm626, %v4502, %v4464
        %v4504 = vsel %vm628, %v4503, %v4468
        %v4505 = vsel %vm616, %v4417, %v4472
        %v4506 = vsel %vm618, %v4505, %v4476
        %v4507 = vsel %vm620, %v4506, %v4480
        %v4508 = vsel %vm622, %v4507, %v4484
        %v4509 = vsel %vm624, %v4508, %v4488
        %v4510 = vsel %vm626, %v4509, %v4492
        %v4511 = vsel %vm628, %v4510, %v4496
        %4512 = vrot.lane.b32.xlu0 %v4098, 126
        %v4513 = vpop.permute.xlu0 %4512
        %4514 = vrot.lane.b32.xlu0 %v4100, 126
        %v4515 = vpop.permute.xlu0 %4514
        %4516 = vrot.lane.b32.xlu0 %v4103, 126
        %v4517 = vpop.permute.xlu0 %4516
        %4518 = vrot.lane.b32.xlu0 %v4105, 126
        %v4519 = vpop.permute.xlu0 %4518
        %4520 = vrot.lane.b32.xlu0 %v4108, 126
        %v4521 = vpop.permute.xlu0 %4520
        %4522 = vrot.lane.b32.xlu0 %v4110, 126
        %v4523 = vpop.permute.xlu0 %4522
        %4524 = vrot.lane.b32.xlu0 %v4113, 126
        %v4525 = vpop.permute.xlu0 %4524
        %4526 = vrot.lane.b32.xlu0 %v4115, 126
        %v4527 = vpop.permute.xlu0 %4526
        %v4536 = vrot.slane %v4521, 4
        %v4537 = vsel %vm448, %v4536, %v4513
        %v4538 = vrot.slane %v4513, 4
        %v4539 = vsel %vm448, %v4521, %v4538
        %v4541 = vunpack.c.l.s4 1983009808
        %v4542 = vunpack.c.0.s8 %v4541
        %v4543 = vperm.slane %v4537, %v4542
        %v4545 = vunpack.c.l.s4 1983009808
        %v4546 = vunpack.c.0.s8 %v4545
        %v4547 = vperm.slane %v4539, %v4546
        %v4548 = vrot.slane %v4525, 4
        %v4549 = vsel %vm448, %v4548, %v4517
        %v4550 = vrot.slane %v4517, 4
        %v4551 = vsel %vm448, %v4525, %v4550
        %v4553 = vunpack.c.l.s4 1983009808
        %v4554 = vunpack.c.0.s8 %v4553
        %v4555 = vperm.slane %v4549, %v4554
        %v4557 = vunpack.c.l.s4 1983009808
        %v4558 = vunpack.c.0.s8 %v4557
        %v4559 = vperm.slane %v4551, %v4558
        %v4560 = vrot.slane %v4555, 4
        %v4561 = vsel %vm448, %v4560, %v4543
        %v4562 = vrot.slane %v4543, 4
        %v4563 = vsel %vm448, %v4555, %v4562
        %v4565 = vunpack.c.l.s4 1934713408
        %v4566 = vunpack.c.0.s8 %v4565
        %v4567 = vperm.slane %v4561, %v4566
        %v4569 = vunpack.c.l.s4 1934713408
        %v4570 = vunpack.c.0.s8 %v4569
        %v4571 = vperm.slane %v4563, %v4570
        %v4572 = vrot.slane %v4559, 4
        %v4573 = vsel %vm448, %v4572, %v4547
        %v4574 = vrot.slane %v4547, 4
        %v4575 = vsel %vm448, %v4559, %v4574
        %v4577 = vunpack.c.l.s4 1934713408
        %v4578 = vunpack.c.0.s8 %v4577
        %v4579 = vperm.slane %v4573, %v4578
        %v4581 = vunpack.c.l.s4 1934713408
        %v4582 = vunpack.c.0.s8 %v4581
        %v4583 = vperm.slane %v4575, %v4582
        %v4584 = vrot.slane %v4567, 4
        %v4585 = vsel %vm448, 0.0, %v4584
        %v4586 = vrot.slane %v4571, 4
        %v4587 = vsel %vm448, 0.0, %v4586
        %v4588 = vrot.slane %v4579, 4
        %v4589 = vsel %vm448, 0.0, %v4588
        %v4590 = vrot.slane %v4583, 4
        %v4591 = vsel %vm448, 0.0, %v4590
        %v4592 = vrot.slane %v4523, 4
        %v4593 = vsel %vm448, %v4592, %v4515
        %v4594 = vrot.slane %v4515, 4
        %v4595 = vsel %vm448, %v4523, %v4594
        %v4597 = vunpack.c.l.s4 1983009808
        %v4598 = vunpack.c.0.s8 %v4597
        %v4599 = vperm.slane %v4593, %v4598
        %v4601 = vunpack.c.l.s4 1983009808
        %v4602 = vunpack.c.0.s8 %v4601
        %v4603 = vperm.slane %v4595, %v4602
        %v4604 = vrot.slane %v4527, 4
        %v4605 = vsel %vm448, %v4604, %v4519
        %v4606 = vrot.slane %v4519, 4
        %v4607 = vsel %vm448, %v4527, %v4606
        %v4609 = vunpack.c.l.s4 1983009808
        %v4610 = vunpack.c.0.s8 %v4609
        %v4611 = vperm.slane %v4605, %v4610
        %v4613 = vunpack.c.l.s4 1983009808
        %v4614 = vunpack.c.0.s8 %v4613
        %v4615 = vperm.slane %v4607, %v4614
        %v4616 = vrot.slane %v4611, 4
        %v4617 = vsel %vm448, %v4616, %v4599
        %v4618 = vrot.slane %v4599, 4
        %v4619 = vsel %vm448, %v4611, %v4618
        %v4621 = vunpack.c.l.s4 1934713408
        %v4622 = vunpack.c.0.s8 %v4621
        %v4623 = vperm.slane %v4617, %v4622
        %v4625 = vunpack.c.l.s4 1934713408
        %v4626 = vunpack.c.0.s8 %v4625
        %v4627 = vperm.slane %v4619, %v4626
        %v4628 = vrot.slane %v4615, 4
        %v4629 = vsel %vm448, %v4628, %v4603
        %v4630 = vrot.slane %v4603, 4
        %v4631 = vsel %vm448, %v4615, %v4630
        %v4633 = vunpack.c.l.s4 1934713408
        %v4634 = vunpack.c.0.s8 %v4633
        %v4635 = vperm.slane %v4629, %v4634
        %v4637 = vunpack.c.l.s4 1934713408
        %v4638 = vunpack.c.0.s8 %v4637
        %v4639 = vperm.slane %v4631, %v4638
        %v4640 = vrot.slane %v4623, 4
        %v4641 = vsel %vm448, 0.0, %v4640
        %v4642 = vrot.slane %v4627, 4
        %v4643 = vsel %vm448, 0.0, %v4642
        %v4644 = vrot.slane %v4635, 4
        %v4645 = vsel %vm448, 0.0, %v4644
        %v4646 = vrot.slane %v4639, 4
        %v4647 = vsel %vm448, 0.0, %v4646
        %4649 = vrot.lane.b32.xlu0 %v4585, 16
        %v4650 = vpop.permute.xlu0 %4649
        %4653 = vrot.lane.b32.xlu0 %v4571, 32
        %v4654 = vpop.permute.xlu0 %4653
        %4657 = vrot.lane.b32.xlu0 %v4587, 48
        %v4658 = vpop.permute.xlu0 %4657
        %4661 = vrot.lane.b32.xlu0 %v4579, 64
        %v4662 = vpop.permute.xlu0 %4661
        %4665 = vrot.lane.b32.xlu0 %v4589, 80
        %v4666 = vpop.permute.xlu0 %4665
        %4669 = vrot.lane.b32.xlu0 %v4583, 96
        %v4670 = vpop.permute.xlu0 %4669
        %4673 = vrot.lane.b32.xlu0 %v4591, 112
        %v4674 = vpop.permute.xlu0 %4673
        %4677 = vrot.lane.b32.xlu0 %v4641, 16
        %v4678 = vpop.permute.xlu0 %4677
        %4681 = vrot.lane.b32.xlu0 %v4627, 32
        %v4682 = vpop.permute.xlu0 %4681
        %4685 = vrot.lane.b32.xlu0 %v4643, 48
        %v4686 = vpop.permute.xlu0 %4685
        %4689 = vrot.lane.b32.xlu0 %v4635, 64
        %v4690 = vpop.permute.xlu0 %4689
        %4693 = vrot.lane.b32.xlu0 %v4645, 80
        %v4694 = vpop.permute.xlu0 %4693
        %4697 = vrot.lane.b32.xlu0 %v4639, 96
        %v4698 = vpop.permute.xlu0 %4697
        %4701 = vrot.lane.b32.xlu0 %v4647, 112
        %v4702 = vpop.permute.xlu0 %4701
        %v4704 = vsel %vm616, %v4567, %v4650
        %v4705 = vsel %vm618, %v4704, %v4654
        %v4706 = vsel %vm620, %v4705, %v4658
        %v4707 = vsel %vm622, %v4706, %v4662
        %v4708 = vsel %vm624, %v4707, %v4666
        %v4709 = vsel %vm626, %v4708, %v4670
        %v4710 = vsel %vm628, %v4709, %v4674
        %v4711 = vsel %vm616, %v4623, %v4678
        %v4712 = vsel %vm618, %v4711, %v4682
        %v4713 = vsel %vm620, %v4712, %v4686
        %v4714 = vsel %vm622, %v4713, %v4690
        %v4715 = vsel %vm624, %v4714, %v4694
        %v4716 = vsel %vm626, %v4715, %v4698
        %v4717 = vsel %vm628, %v4716, %v4702
        %v4720 = vrot.slane %v3256, 4
        %v4721 = vrot.slane %v3263, 4
        %v4726 = vrot.slane %v3676, 4
        %v4727 = vrot.slane %v3683, 4
        %v4732 = vrot.slane %v4088, 4
        %v4733 = vrot.slane %v4095, 4
        %v4738 = vrot.slane %v4504, 4
        %v4739 = vrot.slane %v4511, 4
        %v4742 = vsel %vm2580, %v3042, %v4720
        %v4743 = vsel %vm2580, %v3049, %v4721
        %v4744 = vsel %vm2580, %v3462, %v4726
        %v4745 = vsel %vm2580, %v3469, %v4727
        %v4746 = vsel %vm2580, %v3882, %v4732
        %v4747 = vsel %vm2580, %v3889, %v4733
        %v4748 = vsel %vm2580, %v4298, %v4738
        %v4749 = vsel %vm2580, %v4305, %v4739
        %v4750 = vld [vmem:[%s3] sm:$0xf]
        %v4751 = vld [vmem:[%s4] sm:$0xf]
        %4753 = vset.pattern.permute.xlu0 0
        %4754 = vperm.xlu0 %4753, %v4751
        %v4755 = vpop.permute.xlu0 %4754
        %v4758 = vsel %vm2596, %v4750, 0
        %v4761 = vsel %vm2580, %v4710, 0
        %v4764 = vsel %vm2580, %v4717, 0
        %4766 = vmatpush.msra.mxu0 0.0
        %4767 = vmatpush.msra.mxu0 0.0
        %4768 = vmatpush.msra.mxu0 0.0
        %4769 = vmatpush.msra.mxu0 0.0
        %4770 = vmatpush.msra.mxu0 0.0
        %4771 = vmatpush.msra.mxu0 0.0
        %4772 = vmatpush.msra.mxu0 0.0
        %4773 = vmatpush.msra.mxu0 0.0
        %4774 = vmatpush.msra.mxu0 0.0
        %4775 = vmatpush.msra.mxu0 0.0
        %4776 = vmatpush.msra.mxu0 0.0
        %4777 = vmatpush.msra.mxu0 %v4761
        %4778 = vmatpush.msra.mxu0 %v4748
        %4779 = vmatpush.msra.mxu0 %v4746
        %4780 = vmatpush.msra.mxu0 %v4744
        %4781 = vmatpush.msra.mxu0 %v4742
        %4782 = vmatmul.f32.gmra.mxu0 %v4758
        %v4783 = vpop.f32.mrf.mxu0
        %v4784 = vadd.f32 %v4755, %v4783
        %4785 = vdwg.mxu0
        %4786 = vmatpush.msra.mxu0 0.0
        %4787 = vmatpush.msra.mxu0 0.0
        %4788 = vmatpush.msra.mxu0 0.0
        %4789 = vmatpush.msra.mxu0 0.0
        %4790 = vmatpush.msra.mxu0 0.0
        %4791 = vmatpush.msra.mxu0 0.0
        %4792 = vmatpush.msra.mxu0 0.0
        %4793 = vmatpush.msra.mxu0 0.0
        %4794 = vmatpush.msra.mxu0 0.0
        %4795 = vmatpush.msra.mxu0 0.0
        %4796 = vmatpush.msra.mxu0 0.0
        %4797 = vmatpush.msra.mxu0 %v4764
        %4798 = vmatpush.msra.mxu0 %v4749
        %4799 = vmatpush.msra.mxu0 %v4747
        %4800 = vmatpush.msra.mxu0 %v4745
        %4801 = vmatpush.msra.mxu0 %v4743
        %4802 = vmatmul.f32.gmra.mxu0 %v4758
        %v4803 = vpop.f32.mrf.mxu0
        %v4804 = vadd.f32 %v4755, %v4803
        %4805 = vdwg.mxu0
        %v4806 = vadd.f32 %v4784, %v629
        %v4807 = vadd.f32 %v4804, %v636
        %v4808 = vmax.f32 %v4806, 0.0
        %v4809 = vmax.f32 %v4807, 0.0
        %4811 = vrot.lane.b32.xlu0 %v4808, 112
        %v4812 = vpop.permute.xlu0 %4811
        %4814 = vrot.lane.b32.xlu0 %v4808, 96
        %v4815 = vpop.permute.xlu0 %4814
        %4817 = vrot.lane.b32.xlu0 %v4808, 80
        %v4818 = vpop.permute.xlu0 %4817
        %4820 = vrot.lane.b32.xlu0 %v4808, 64
        %v4821 = vpop.permute.xlu0 %4820
        %4823 = vrot.lane.b32.xlu0 %v4808, 48
        %v4824 = vpop.permute.xlu0 %4823
        %4826 = vrot.lane.b32.xlu0 %v4808, 32
        %v4827 = vpop.permute.xlu0 %4826
        %4829 = vrot.lane.b32.xlu0 %v4808, 16
        %v4830 = vpop.permute.xlu0 %4829
        %4833 = vrot.lane.b32.xlu0 %v4809, 112
        %v4834 = vpop.permute.xlu0 %4833
        %4836 = vrot.lane.b32.xlu0 %v4809, 96
        %v4837 = vpop.permute.xlu0 %4836
        %4839 = vrot.lane.b32.xlu0 %v4809, 80
        %v4840 = vpop.permute.xlu0 %4839
        %4842 = vrot.lane.b32.xlu0 %v4809, 64
        %v4843 = vpop.permute.xlu0 %4842
        %4845 = vrot.lane.b32.xlu0 %v4809, 48
        %v4846 = vpop.permute.xlu0 %4845
        %4848 = vrot.lane.b32.xlu0 %v4809, 32
        %v4849 = vpop.permute.xlu0 %4848
        %4851 = vrot.lane.b32.xlu0 %v4809, 16
        %v4852 = vpop.permute.xlu0 %4851
        %v4854 = vrot.slane %v4815, 4
        %v4855 = vsel %vm448, %v4854, %v4808
        %v4857 = vunpack.c.l.s4 1983009808
        %v4858 = vunpack.c.0.s8 %v4857
        %v4859 = vperm.slane %v4855, %v4858
        %v4860 = vrot.slane %v4818, 4
        %v4861 = vsel %vm448, %v4860, %v4812
        %v4863 = vunpack.c.l.s4 1983009808
        %v4864 = vunpack.c.0.s8 %v4863
        %v4865 = vperm.slane %v4861, %v4864
        %v4866 = vrot.slane %v4827, 4
        %v4867 = vsel %vm448, %v4866, %v4821
        %v4869 = vunpack.c.l.s4 1983009808
        %v4870 = vunpack.c.0.s8 %v4869
        %v4871 = vperm.slane %v4867, %v4870
        %v4872 = vrot.slane %v4830, 4
        %v4873 = vsel %vm448, %v4872, %v4824
        %v4875 = vunpack.c.l.s4 1983009808
        %v4876 = vunpack.c.0.s8 %v4875
        %v4877 = vperm.slane %v4873, %v4876
        %v4878 = vrot.slane %v4865, 4
        %v4879 = vsel %vm448, %v4878, %v4859
        %v4880 = vrot.slane %v4859, 4
        %v4881 = vsel %vm448, %v4865, %v4880
        %v4883 = vunpack.c.l.s4 1934713408
        %v4884 = vunpack.c.0.s8 %v4883
        %v4885 = vperm.slane %v4879, %v4884
        %v4887 = vunpack.c.l.s4 1934713408
        %v4888 = vunpack.c.0.s8 %v4887
        %v4889 = vperm.slane %v4881, %v4888
        %v4890 = vrot.slane %v4877, 4
        %v4891 = vsel %vm448, %v4890, %v4871
        %v4892 = vrot.slane %v4871, 4
        %v4893 = vsel %vm448, %v4877, %v4892
        %v4895 = vunpack.c.l.s4 1934713408
        %v4896 = vunpack.c.0.s8 %v4895
        %v4897 = vperm.slane %v4891, %v4896
        %v4899 = vunpack.c.l.s4 1934713408
        %v4900 = vunpack.c.0.s8 %v4899
        %v4901 = vperm.slane %v4893, %v4900
        %v4902 = vrot.slane %v4897, 4
        %v4903 = vsel %vm448, %v4902, %v4885
        %v4904 = vrot.slane %v4885, 4
        %v4905 = vsel %vm448, %v4897, %v4904
        %v4906 = vrot.slane %v4901, 4
        %v4907 = vsel %vm448, %v4906, %v4889
        %v4908 = vrot.slane %v4889, 4
        %v4909 = vsel %vm448, %v4901, %v4908
        %v4910 = vrot.slane %v4837, 4
        %v4911 = vsel %vm448, %v4910, %v4809
        %v4913 = vunpack.c.l.s4 1983009808
        %v4914 = vunpack.c.0.s8 %v4913
        %v4915 = vperm.slane %v4911, %v4914
        %v4916 = vrot.slane %v4840, 4
        %v4917 = vsel %vm448, %v4916, %v4834
        %v4919 = vunpack.c.l.s4 1983009808
        %v4920 = vunpack.c.0.s8 %v4919
        %v4921 = vperm.slane %v4917, %v4920
        %v4922 = vrot.slane %v4849, 4
        %v4923 = vsel %vm448, %v4922, %v4843
        %v4925 = vunpack.c.l.s4 1983009808
        %v4926 = vunpack.c.0.s8 %v4925
        %v4927 = vperm.slane %v4923, %v4926
        %v4928 = vrot.slane %v4852, 4
        %v4929 = vsel %vm448, %v4928, %v4846
        %v4931 = vunpack.c.l.s4 1983009808
        %v4932 = vunpack.c.0.s8 %v4931
        %v4933 = vperm.slane %v4929, %v4932
        %v4934 = vrot.slane %v4921, 4
        %v4935 = vsel %vm448, %v4934, %v4915
        %v4936 = vrot.slane %v4915, 4
        %v4937 = vsel %vm448, %v4921, %v4936
        %v4939 = vunpack.c.l.s4 1934713408
        %v4940 = vunpack.c.0.s8 %v4939
        %v4941 = vperm.slane %v4935, %v4940
        %v4943 = vunpack.c.l.s4 1934713408
        %v4944 = vunpack.c.0.s8 %v4943
        %v4945 = vperm.slane %v4937, %v4944
        %v4946 = vrot.slane %v4933, 4
        %v4947 = vsel %vm448, %v4946, %v4927
        %v4948 = vrot.slane %v4927, 4
        %v4949 = vsel %vm448, %v4933, %v4948
        %v4951 = vunpack.c.l.s4 1934713408
        %v4952 = vunpack.c.0.s8 %v4951
        %v4953 = vperm.slane %v4947, %v4952
        %v4955 = vunpack.c.l.s4 1934713408
        %v4956 = vunpack.c.0.s8 %v4955
        %v4957 = vperm.slane %v4949, %v4956
        %v4958 = vrot.slane %v4953, 4
        %v4959 = vsel %vm448, %v4958, %v4941
        %v4960 = vrot.slane %v4941, 4
        %v4961 = vsel %vm448, %v4953, %v4960
        %v4962 = vrot.slane %v4957, 4
        %v4963 = vsel %vm448, %v4962, %v4945
        %v4964 = vrot.slane %v4945, 4
        %v4965 = vsel %vm448, %v4957, %v4964
        %4966 = vst.msk [vmem:[#allocation2] sm:$0xff] %vm637, 0.0
        %4967 = vst.msk [vmem:[#allocation2 + $0x8] sm:$0xff] %vm637, 0.0
        %4968 = vst.msk [vmem:[#allocation2 + $0x10] sm:$0x3] %vm640, 0.0
        %4969 = vst.msk [vmem:[#allocation2 + $0x18] sm:$0xff] %vm637, 0.0
        %4970 = vst.msk [vmem:[#allocation2 + $0x20] sm:$0xff] %vm637, 0.0
        %4971 = vst.msk [vmem:[#allocation2 + $0x28] sm:$0x3] %vm640, 0.0
        %4972 = vst.msk [vmem:[#allocation2 + $0x30] sm:$0xff] %vm637, 0.0
        %4973 = vst.msk [vmem:[#allocation2 + $0x38] sm:$0xff] %vm637, 0.0
        %4974 = vst.msk [vmem:[#allocation2 + $0x40] sm:$0x3] %vm640, 0.0
        %4975 = vst.msk [vmem:[#allocation2 + $0x48] sm:$0xff] %vm637, 0.0
        %4976 = vst.msk [vmem:[#allocation2 + $0x50] sm:$0xff] %vm637, 0.0
        %4977 = vst.msk [vmem:[#allocation2 + $0x58] sm:$0x3] %vm640, 0.0
        %4986 = vrot.lane.b32.xlu0 %v4903, 1
        %v4987 = vpop.permute.xlu0 %4986
        %4988 = vrot.lane.b32.xlu0 %v4959, 1
        %v4989 = vpop.permute.xlu0 %4988
        %4990 = vrot.lane.b32.xlu0 %v4905, 1
        %v4991 = vpop.permute.xlu0 %4990
        %4992 = vrot.lane.b32.xlu0 %v4961, 1
        %v4993 = vpop.permute.xlu0 %4992
        %4994 = vrot.lane.b32.xlu0 %v4907, 1
        %v4995 = vpop.permute.xlu0 %4994
        %4996 = vrot.lane.b32.xlu0 %v4963, 1
        %v4997 = vpop.permute.xlu0 %4996
        %4998 = vrot.lane.b32.xlu0 %v4909, 1
        %v4999 = vpop.permute.xlu0 %4998
        %5000 = vrot.lane.b32.xlu0 %v4965, 1
        %v5001 = vpop.permute.xlu0 %5000
        %5010 = vst.msk [vmem:[#allocation2 + $0x1] sm:$0xff] %vm683, %v4987
        %5011 = vst.msk [vmem:[#allocation2 + $0x9] sm:$0xff] %vm683, %v4989
        %5012 = vst.msk [vmem:[#allocation2 + $0x19] sm:$0xff] %vm683, %v4991
        %5013 = vst.msk [vmem:[#allocation2 + $0x21] sm:$0xff] %vm683, %v4993
        %5014 = vst.msk [vmem:[#allocation2 + $0x31] sm:$0xff] %vm683, %v4995
        %5015 = vst.msk [vmem:[#allocation2 + $0x39] sm:$0xff] %vm683, %v4997
        %5016 = vst.msk [vmem:[#allocation2 + $0x49] sm:$0xff] %vm683, %v4999
        %5017 = vst.msk [vmem:[#allocation2 + $0x51] sm:$0xff] %vm683, %v5001
        %v5018 = vld [vmem:[#allocation2] sm:$0xff]
        %v5019 = vld [vmem:[#allocation2 + $0x8] sm:$0xff]
        %v5020 = vld [vmem:[#allocation2 + $0x10] sm:$0x3]
        %v5021 = vld [vmem:[#allocation2 + $0x18] sm:$0xff]
        %v5022 = vld [vmem:[#allocation2 + $0x20] sm:$0xff]
        %v5023 = vld [vmem:[#allocation2 + $0x28] sm:$0x3]
        %v5024 = vld [vmem:[#allocation2 + $0x30] sm:$0xff]
        %v5025 = vld [vmem:[#allocation2 + $0x38] sm:$0xff]
        %v5026 = vld [vmem:[#allocation2 + $0x40] sm:$0x3]
        %v5027 = vld [vmem:[#allocation2 + $0x48] sm:$0xff]
        %v5028 = vld [vmem:[#allocation2 + $0x50] sm:$0xff]
        %v5029 = vld [vmem:[#allocation2 + $0x58] sm:$0x3]
        %v5030 = vrot.slane %v5024, 4
        %v5031 = vsel %vm448, %v5030, %v5018
        %v5032 = vrot.slane %v5018, 4
        %v5033 = vsel %vm448, %v5024, %v5032
        %v5035 = vunpack.c.l.s4 1983009808
        %v5036 = vunpack.c.0.s8 %v5035
        %v5037 = vperm.slane %v5031, %v5036
        %v5039 = vunpack.c.l.s4 1983009808
        %v5040 = vunpack.c.0.s8 %v5039
        %v5041 = vperm.slane %v5033, %v5040
        %v5042 = vrot.slane %v5027, 4
        %v5043 = vsel %vm448, %v5042, %v5021
        %v5044 = vrot.slane %v5021, 4
        %v5045 = vsel %vm448, %v5027, %v5044
        %v5047 = vunpack.c.l.s4 1983009808
        %v5048 = vunpack.c.0.s8 %v5047
        %v5049 = vperm.slane %v5043, %v5048
        %v5051 = vunpack.c.l.s4 1983009808
        %v5052 = vunpack.c.0.s8 %v5051
        %v5053 = vperm.slane %v5045, %v5052
        %v5054 = vrot.slane %v5049, 4
        %v5055 = vsel %vm448, %v5054, %v5037
        %v5056 = vrot.slane %v5037, 4
        %v5057 = vsel %vm448, %v5049, %v5056
        %v5059 = vunpack.c.l.s4 1934713408
        %v5060 = vunpack.c.0.s8 %v5059
        %v5061 = vperm.slane %v5055, %v5060
        %v5063 = vunpack.c.l.s4 1934713408
        %v5064 = vunpack.c.0.s8 %v5063
        %v5065 = vperm.slane %v5057, %v5064
        %v5066 = vrot.slane %v5053, 4
        %v5067 = vsel %vm448, %v5066, %v5041
        %v5068 = vrot.slane %v5041, 4
        %v5069 = vsel %vm448, %v5053, %v5068
        %v5071 = vunpack.c.l.s4 1934713408
        %v5072 = vunpack.c.0.s8 %v5071
        %v5073 = vperm.slane %v5067, %v5072
        %v5075 = vunpack.c.l.s4 1934713408
        %v5076 = vunpack.c.0.s8 %v5075
        %v5077 = vperm.slane %v5069, %v5076
        %v5078 = vrot.slane %v5061, 4
        %v5079 = vsel %vm448, 0.0, %v5078
        %v5080 = vrot.slane %v5065, 4
        %v5081 = vsel %vm448, 0.0, %v5080
        %v5082 = vrot.slane %v5073, 4
        %v5083 = vsel %vm448, 0.0, %v5082
        %v5084 = vrot.slane %v5077, 4
        %v5085 = vsel %vm448, 0.0, %v5084
        %v5086 = vrot.slane %v5025, 4
        %v5087 = vsel %vm448, %v5086, %v5019
        %v5088 = vrot.slane %v5019, 4
        %v5089 = vsel %vm448, %v5025, %v5088
        %v5091 = vunpack.c.l.s4 1983009808
        %v5092 = vunpack.c.0.s8 %v5091
        %v5093 = vperm.slane %v5087, %v5092
        %v5095 = vunpack.c.l.s4 1983009808
        %v5096 = vunpack.c.0.s8 %v5095
        %v5097 = vperm.slane %v5089, %v5096
        %v5098 = vrot.slane %v5028, 4
        %v5099 = vsel %vm448, %v5098, %v5022
        %v5100 = vrot.slane %v5022, 4
        %v5101 = vsel %vm448, %v5028, %v5100
        %v5103 = vunpack.c.l.s4 1983009808
        %v5104 = vunpack.c.0.s8 %v5103
        %v5105 = vperm.slane %v5099, %v5104
        %v5107 = vunpack.c.l.s4 1983009808
        %v5108 = vunpack.c.0.s8 %v5107
        %v5109 = vperm.slane %v5101, %v5108
        %v5110 = vrot.slane %v5105, 4
        %v5111 = vsel %vm448, %v5110, %v5093
        %v5112 = vrot.slane %v5093, 4
        %v5113 = vsel %vm448, %v5105, %v5112
        %v5115 = vunpack.c.l.s4 1934713408
        %v5116 = vunpack.c.0.s8 %v5115
        %v5117 = vperm.slane %v5111, %v5116
        %v5119 = vunpack.c.l.s4 1934713408
        %v5120 = vunpack.c.0.s8 %v5119
        %v5121 = vperm.slane %v5113, %v5120
        %v5122 = vrot.slane %v5109, 4
        %v5123 = vsel %vm448, %v5122, %v5097
        %v5124 = vrot.slane %v5097, 4
        %v5125 = vsel %vm448, %v5109, %v5124
        %v5127 = vunpack.c.l.s4 1934713408
        %v5128 = vunpack.c.0.s8 %v5127
        %v5129 = vperm.slane %v5123, %v5128
        %v5131 = vunpack.c.l.s4 1934713408
        %v5132 = vunpack.c.0.s8 %v5131
        %v5133 = vperm.slane %v5125, %v5132
        %v5134 = vrot.slane %v5117, 4
        %v5135 = vsel %vm448, 0.0, %v5134
        %v5136 = vrot.slane %v5121, 4
        %v5137 = vsel %vm448, 0.0, %v5136
        %v5138 = vrot.slane %v5129, 4
        %v5139 = vsel %vm448, 0.0, %v5138
        %v5140 = vrot.slane %v5133, 4
        %v5141 = vsel %vm448, 0.0, %v5140
        %5143 = vrot.lane.b32.xlu0 %v5079, 16
        %v5144 = vpop.permute.xlu0 %5143
        %5147 = vrot.lane.b32.xlu0 %v5065, 32
        %v5148 = vpop.permute.xlu0 %5147
        %5151 = vrot.lane.b32.xlu0 %v5081, 48
        %v5152 = vpop.permute.xlu0 %5151
        %5155 = vrot.lane.b32.xlu0 %v5073, 64
        %v5156 = vpop.permute.xlu0 %5155
        %5159 = vrot.lane.b32.xlu0 %v5083, 80
        %v5160 = vpop.permute.xlu0 %5159
        %5163 = vrot.lane.b32.xlu0 %v5077, 96
        %v5164 = vpop.permute.xlu0 %5163
        %5167 = vrot.lane.b32.xlu0 %v5085, 112
        %v5168 = vpop.permute.xlu0 %5167
        %5171 = vrot.lane.b32.xlu0 %v5135, 16
        %v5172 = vpop.permute.xlu0 %5171
        %5175 = vrot.lane.b32.xlu0 %v5121, 32
        %v5176 = vpop.permute.xlu0 %5175
        %5179 = vrot.lane.b32.xlu0 %v5137, 48
        %v5180 = vpop.permute.xlu0 %5179
        %5183 = vrot.lane.b32.xlu0 %v5129, 64
        %v5184 = vpop.permute.xlu0 %5183
        %5187 = vrot.lane.b32.xlu0 %v5139, 80
        %v5188 = vpop.permute.xlu0 %5187
        %5191 = vrot.lane.b32.xlu0 %v5133, 96
        %v5192 = vpop.permute.xlu0 %5191
        %5195 = vrot.lane.b32.xlu0 %v5141, 112
        %v5196 = vpop.permute.xlu0 %5195
        %v5198 = vsel %vm616, %v5061, %v5144
        %v5199 = vsel %vm618, %v5198, %v5148
        %v5200 = vsel %vm620, %v5199, %v5152
        %v5201 = vsel %vm622, %v5200, %v5156
        %v5202 = vsel %vm624, %v5201, %v5160
        %v5203 = vsel %vm626, %v5202, %v5164
        %v5204 = vsel %vm628, %v5203, %v5168
        %v5205 = vsel %vm616, %v5117, %v5172
        %v5206 = vsel %vm618, %v5205, %v5176
        %v5207 = vsel %vm620, %v5206, %v5180
        %v5208 = vsel %vm622, %v5207, %v5184
        %v5209 = vsel %vm624, %v5208, %v5188
        %v5210 = vsel %vm626, %v5209, %v5192
        %v5211 = vsel %vm628, %v5210, %v5196
        %5220 = vrot.lane.b32.xlu0 %v5018, 127
        %v5221 = vpop.permute.xlu0 %5220
        %5222 = vrot.lane.b32.xlu0 %v5019, 127
        %v5223 = vpop.permute.xlu0 %5222
        %5224 = vrot.lane.b32.xlu0 %v5021, 127
        %v5225 = vpop.permute.xlu0 %5224
        %5226 = vrot.lane.b32.xlu0 %v5022, 127
        %v5227 = vpop.permute.xlu0 %5226
        %5228 = vrot.lane.b32.xlu0 %v5024, 127
        %v5229 = vpop.permute.xlu0 %5228
        %5230 = vrot.lane.b32.xlu0 %v5025, 127
        %v5231 = vpop.permute.xlu0 %5230
        %5232 = vrot.lane.b32.xlu0 %v5027, 127
        %v5233 = vpop.permute.xlu0 %5232
        %5234 = vrot.lane.b32.xlu0 %v5028, 127
        %v5235 = vpop.permute.xlu0 %5234
        %v5244 = vrot.slane %v5229, 4
        %v5245 = vsel %vm448, %v5244, %v5221
        %v5246 = vrot.slane %v5221, 4
        %v5247 = vsel %vm448, %v5229, %v5246
        %v5249 = vunpack.c.l.s4 1983009808
        %v5250 = vunpack.c.0.s8 %v5249
        %v5251 = vperm.slane %v5245, %v5250
        %v5253 = vunpack.c.l.s4 1983009808
        %v5254 = vunpack.c.0.s8 %v5253
        %v5255 = vperm.slane %v5247, %v5254
        %v5256 = vrot.slane %v5233, 4
        %v5257 = vsel %vm448, %v5256, %v5225
        %v5258 = vrot.slane %v5225, 4
        %v5259 = vsel %vm448, %v5233, %v5258
        %v5261 = vunpack.c.l.s4 1983009808
        %v5262 = vunpack.c.0.s8 %v5261
        %v5263 = vperm.slane %v5257, %v5262
        %v5265 = vunpack.c.l.s4 1983009808
        %v5266 = vunpack.c.0.s8 %v5265
        %v5267 = vperm.slane %v5259, %v5266
        %v5268 = vrot.slane %v5263, 4
        %v5269 = vsel %vm448, %v5268, %v5251
        %v5270 = vrot.slane %v5251, 4
        %v5271 = vsel %vm448, %v5263, %v5270
        %v5273 = vunpack.c.l.s4 1934713408
        %v5274 = vunpack.c.0.s8 %v5273
        %v5275 = vperm.slane %v5269, %v5274
        %v5277 = vunpack.c.l.s4 1934713408
        %v5278 = vunpack.c.0.s8 %v5277
        %v5279 = vperm.slane %v5271, %v5278
        %v5280 = vrot.slane %v5267, 4
        %v5281 = vsel %vm448, %v5280, %v5255
        %v5282 = vrot.slane %v5255, 4
        %v5283 = vsel %vm448, %v5267, %v5282
        %v5285 = vunpack.c.l.s4 1934713408
        %v5286 = vunpack.c.0.s8 %v5285
        %v5287 = vperm.slane %v5281, %v5286
        %v5289 = vunpack.c.l.s4 1934713408
        %v5290 = vunpack.c.0.s8 %v5289
        %v5291 = vperm.slane %v5283, %v5290
        %v5292 = vrot.slane %v5275, 4
        %v5293 = vsel %vm448, 0.0, %v5292
        %v5294 = vrot.slane %v5279, 4
        %v5295 = vsel %vm448, 0.0, %v5294
        %v5296 = vrot.slane %v5287, 4
        %v5297 = vsel %vm448, 0.0, %v5296
        %v5298 = vrot.slane %v5291, 4
        %v5299 = vsel %vm448, 0.0, %v5298
        %v5300 = vrot.slane %v5231, 4
        %v5301 = vsel %vm448, %v5300, %v5223
        %v5302 = vrot.slane %v5223, 4
        %v5303 = vsel %vm448, %v5231, %v5302
        %v5305 = vunpack.c.l.s4 1983009808
        %v5306 = vunpack.c.0.s8 %v5305
        %v5307 = vperm.slane %v5301, %v5306
        %v5309 = vunpack.c.l.s4 1983009808
        %v5310 = vunpack.c.0.s8 %v5309
        %v5311 = vperm.slane %v5303, %v5310
        %v5312 = vrot.slane %v5235, 4
        %v5313 = vsel %vm448, %v5312, %v5227
        %v5314 = vrot.slane %v5227, 4
        %v5315 = vsel %vm448, %v5235, %v5314
        %v5317 = vunpack.c.l.s4 1983009808
        %v5318 = vunpack.c.0.s8 %v5317
        %v5319 = vperm.slane %v5313, %v5318
        %v5321 = vunpack.c.l.s4 1983009808
        %v5322 = vunpack.c.0.s8 %v5321
        %v5323 = vperm.slane %v5315, %v5322
        %v5324 = vrot.slane %v5319, 4
        %v5325 = vsel %vm448, %v5324, %v5307
        %v5326 = vrot.slane %v5307, 4
        %v5327 = vsel %vm448, %v5319, %v5326
        %v5329 = vunpack.c.l.s4 1934713408
        %v5330 = vunpack.c.0.s8 %v5329
        %v5331 = vperm.slane %v5325, %v5330
        %v5333 = vunpack.c.l.s4 1934713408
        %v5334 = vunpack.c.0.s8 %v5333
        %v5335 = vperm.slane %v5327, %v5334
        %v5336 = vrot.slane %v5323, 4
        %v5337 = vsel %vm448, %v5336, %v5311
        %v5338 = vrot.slane %v5311, 4
        %v5339 = vsel %vm448, %v5323, %v5338
        %v5341 = vunpack.c.l.s4 1934713408
        %v5342 = vunpack.c.0.s8 %v5341
        %v5343 = vperm.slane %v5337, %v5342
        %v5345 = vunpack.c.l.s4 1934713408
        %v5346 = vunpack.c.0.s8 %v5345
        %v5347 = vperm.slane %v5339, %v5346
        %v5348 = vrot.slane %v5331, 4
        %v5349 = vsel %vm448, 0.0, %v5348
        %v5350 = vrot.slane %v5335, 4
        %v5351 = vsel %vm448, 0.0, %v5350
        %v5352 = vrot.slane %v5343, 4
        %v5353 = vsel %vm448, 0.0, %v5352
        %v5354 = vrot.slane %v5347, 4
        %v5355 = vsel %vm448, 0.0, %v5354
        %5357 = vrot.lane.b32.xlu0 %v5293, 16
        %v5358 = vpop.permute.xlu0 %5357
        %5361 = vrot.lane.b32.xlu0 %v5279, 32
        %v5362 = vpop.permute.xlu0 %5361
        %5365 = vrot.lane.b32.xlu0 %v5295, 48
        %v5366 = vpop.permute.xlu0 %5365
        %5369 = vrot.lane.b32.xlu0 %v5287, 64
        %v5370 = vpop.permute.xlu0 %5369
        %5373 = vrot.lane.b32.xlu0 %v5297, 80
        %v5374 = vpop.permute.xlu0 %5373
        %5377 = vrot.lane.b32.xlu0 %v5291, 96
        %v5378 = vpop.permute.xlu0 %5377
        %5381 = vrot.lane.b32.xlu0 %v5299, 112
        %v5382 = vpop.permute.xlu0 %5381
        %5385 = vrot.lane.b32.xlu0 %v5349, 16
        %v5386 = vpop.permute.xlu0 %5385
        %5389 = vrot.lane.b32.xlu0 %v5335, 32
        %v5390 = vpop.permute.xlu0 %5389
        %5393 = vrot.lane.b32.xlu0 %v5351, 48
        %v5394 = vpop.permute.xlu0 %5393
        %5397 = vrot.lane.b32.xlu0 %v5343, 64
        %v5398 = vpop.permute.xlu0 %5397
        %5401 = vrot.lane.b32.xlu0 %v5353, 80
        %v5402 = vpop.permute.xlu0 %5401
        %5405 = vrot.lane.b32.xlu0 %v5347, 96
        %v5406 = vpop.permute.xlu0 %5405
        %5409 = vrot.lane.b32.xlu0 %v5355, 112
        %v5410 = vpop.permute.xlu0 %5409
        %v5412 = vsel %vm616, %v5275, %v5358
        %v5413 = vsel %vm618, %v5412, %v5362
        %v5414 = vsel %vm620, %v5413, %v5366
        %v5415 = vsel %vm622, %v5414, %v5370
        %v5416 = vsel %vm624, %v5415, %v5374
        %v5417 = vsel %vm626, %v5416, %v5378
        %v5418 = vsel %vm628, %v5417, %v5382
        %v5419 = vsel %vm616, %v5331, %v5386
        %v5420 = vsel %vm618, %v5419, %v5390
        %v5421 = vsel %vm620, %v5420, %v5394
        %v5422 = vsel %vm622, %v5421, %v5398
        %v5423 = vsel %vm624, %v5422, %v5402
        %v5424 = vsel %vm626, %v5423, %v5406
        %v5425 = vsel %vm628, %v5424, %v5410
        %5426 = vrot.lane.b32.xlu0 %v5018, 126
        %v5427 = vpop.permute.xlu0 %5426
        %5428 = vrot.lane.b32.xlu0 %v5019, 126
        %v5429 = vpop.permute.xlu0 %5428
        %5430 = vrot.lane.b32.xlu0 %v5021, 126
        %v5431 = vpop.permute.xlu0 %5430
        %5432 = vrot.lane.b32.xlu0 %v5022, 126
        %v5433 = vpop.permute.xlu0 %5432
        %5434 = vrot.lane.b32.xlu0 %v5024, 126
        %v5435 = vpop.permute.xlu0 %5434
        %5436 = vrot.lane.b32.xlu0 %v5025, 126
        %v5437 = vpop.permute.xlu0 %5436
        %5438 = vrot.lane.b32.xlu0 %v5027, 126
        %v5439 = vpop.permute.xlu0 %5438
        %5440 = vrot.lane.b32.xlu0 %v5028, 126
        %v5441 = vpop.permute.xlu0 %5440
        %v5450 = vrot.slane %v5435, 4
        %v5451 = vsel %vm448, %v5450, %v5427
        %v5452 = vrot.slane %v5427, 4
        %v5453 = vsel %vm448, %v5435, %v5452
        %v5455 = vunpack.c.l.s4 1983009808
        %v5456 = vunpack.c.0.s8 %v5455
        %v5457 = vperm.slane %v5451, %v5456
        %v5459 = vunpack.c.l.s4 1983009808
        %v5460 = vunpack.c.0.s8 %v5459
        %v5461 = vperm.slane %v5453, %v5460
        %v5462 = vrot.slane %v5439, 4
        %v5463 = vsel %vm448, %v5462, %v5431
        %v5464 = vrot.slane %v5431, 4
        %v5465 = vsel %vm448, %v5439, %v5464
        %v5467 = vunpack.c.l.s4 1983009808
        %v5468 = vunpack.c.0.s8 %v5467
        %v5469 = vperm.slane %v5463, %v5468
        %v5471 = vunpack.c.l.s4 1983009808
        %v5472 = vunpack.c.0.s8 %v5471
        %v5473 = vperm.slane %v5465, %v5472
        %v5474 = vrot.slane %v5469, 4
        %v5475 = vsel %vm448, %v5474, %v5457
        %v5476 = vrot.slane %v5457, 4
        %v5477 = vsel %vm448, %v5469, %v5476
        %v5479 = vunpack.c.l.s4 1934713408
        %v5480 = vunpack.c.0.s8 %v5479
        %v5481 = vperm.slane %v5475, %v5480
        %v5483 = vunpack.c.l.s4 1934713408
        %v5484 = vunpack.c.0.s8 %v5483
        %v5485 = vperm.slane %v5477, %v5484
        %v5486 = vrot.slane %v5473, 4
        %v5487 = vsel %vm448, %v5486, %v5461
        %v5488 = vrot.slane %v5461, 4
        %v5489 = vsel %vm448, %v5473, %v5488
        %v5491 = vunpack.c.l.s4 1934713408
        %v5492 = vunpack.c.0.s8 %v5491
        %v5493 = vperm.slane %v5487, %v5492
        %v5495 = vunpack.c.l.s4 1934713408
        %v5496 = vunpack.c.0.s8 %v5495
        %v5497 = vperm.slane %v5489, %v5496
        %v5498 = vrot.slane %v5481, 4
        %v5499 = vsel %vm448, 0.0, %v5498
        %v5500 = vrot.slane %v5485, 4
        %v5501 = vsel %vm448, 0.0, %v5500
        %v5502 = vrot.slane %v5493, 4
        %v5503 = vsel %vm448, 0.0, %v5502
        %v5504 = vrot.slane %v5497, 4
        %v5505 = vsel %vm448, 0.0, %v5504
        %v5506 = vrot.slane %v5437, 4
        %v5507 = vsel %vm448, %v5506, %v5429
        %v5508 = vrot.slane %v5429, 4
        %v5509 = vsel %vm448, %v5437, %v5508
        %v5511 = vunpack.c.l.s4 1983009808
        %v5512 = vunpack.c.0.s8 %v5511
        %v5513 = vperm.slane %v5507, %v5512
        %v5515 = vunpack.c.l.s4 1983009808
        %v5516 = vunpack.c.0.s8 %v5515
        %v5517 = vperm.slane %v5509, %v5516
        %v5518 = vrot.slane %v5441, 4
        %v5519 = vsel %vm448, %v5518, %v5433
        %v5520 = vrot.slane %v5433, 4
        %v5521 = vsel %vm448, %v5441, %v5520
        %v5523 = vunpack.c.l.s4 1983009808
        %v5524 = vunpack.c.0.s8 %v5523
        %v5525 = vperm.slane %v5519, %v5524
        %v5527 = vunpack.c.l.s4 1983009808
        %v5528 = vunpack.c.0.s8 %v5527
        %v5529 = vperm.slane %v5521, %v5528
        %v5530 = vrot.slane %v5525, 4
        %v5531 = vsel %vm448, %v5530, %v5513
        %v5532 = vrot.slane %v5513, 4
        %v5533 = vsel %vm448, %v5525, %v5532
        %v5535 = vunpack.c.l.s4 1934713408
        %v5536 = vunpack.c.0.s8 %v5535
        %v5537 = vperm.slane %v5531, %v5536
        %v5539 = vunpack.c.l.s4 1934713408
        %v5540 = vunpack.c.0.s8 %v5539
        %v5541 = vperm.slane %v5533, %v5540
        %v5542 = vrot.slane %v5529, 4
        %v5543 = vsel %vm448, %v5542, %v5517
        %v5544 = vrot.slane %v5517, 4
        %v5545 = vsel %vm448, %v5529, %v5544
        %v5547 = vunpack.c.l.s4 1934713408
        %v5548 = vunpack.c.0.s8 %v5547
        %v5549 = vperm.slane %v5543, %v5548
        %v5551 = vunpack.c.l.s4 1934713408
        %v5552 = vunpack.c.0.s8 %v5551
        %v5553 = vperm.slane %v5545, %v5552
        %v5554 = vrot.slane %v5537, 4
        %v5555 = vsel %vm448, 0.0, %v5554
        %v5556 = vrot.slane %v5541, 4
        %v5557 = vsel %vm448, 0.0, %v5556
        %v5558 = vrot.slane %v5549, 4
        %v5559 = vsel %vm448, 0.0, %v5558
        %v5560 = vrot.slane %v5553, 4
        %v5561 = vsel %vm448, 0.0, %v5560
        %5563 = vrot.lane.b32.xlu0 %v5499, 16
        %v5564 = vpop.permute.xlu0 %5563
        %5567 = vrot.lane.b32.xlu0 %v5485, 32
        %v5568 = vpop.permute.xlu0 %5567
        %5571 = vrot.lane.b32.xlu0 %v5501, 48
        %v5572 = vpop.permute.xlu0 %5571
        %5575 = vrot.lane.b32.xlu0 %v5493, 64
        %v5576 = vpop.permute.xlu0 %5575
        %5579 = vrot.lane.b32.xlu0 %v5503, 80
        %v5580 = vpop.permute.xlu0 %5579
        %5583 = vrot.lane.b32.xlu0 %v5497, 96
        %v5584 = vpop.permute.xlu0 %5583
        %5587 = vrot.lane.b32.xlu0 %v5505, 112
        %v5588 = vpop.permute.xlu0 %5587
        %5591 = vrot.lane.b32.xlu0 %v5555, 16
        %v5592 = vpop.permute.xlu0 %5591
        %5595 = vrot.lane.b32.xlu0 %v5541, 32
        %v5596 = vpop.permute.xlu0 %5595
        %5599 = vrot.lane.b32.xlu0 %v5557, 48
        %v5600 = vpop.permute.xlu0 %5599
        %5603 = vrot.lane.b32.xlu0 %v5549, 64
        %v5604 = vpop.permute.xlu0 %5603
        %5607 = vrot.lane.b32.xlu0 %v5559, 80
        %v5608 = vpop.permute.xlu0 %5607
        %5611 = vrot.lane.b32.xlu0 %v5553, 96
        %v5612 = vpop.permute.xlu0 %5611
        %5615 = vrot.lane.b32.xlu0 %v5561, 112
        %v5616 = vpop.permute.xlu0 %5615
        %v5618 = vsel %vm616, %v5481, %v5564
        %v5619 = vsel %vm618, %v5618, %v5568
        %v5620 = vsel %vm620, %v5619, %v5572
        %v5621 = vsel %vm622, %v5620, %v5576
        %v5622 = vsel %vm624, %v5621, %v5580
        %v5623 = vsel %vm626, %v5622, %v5584
        %v5624 = vsel %vm628, %v5623, %v5588
        %v5625 = vsel %vm616, %v5537, %v5592
        %v5626 = vsel %vm618, %v5625, %v5596
        %v5627 = vsel %vm620, %v5626, %v5600
        %v5628 = vsel %vm622, %v5627, %v5604
        %v5629 = vsel %vm624, %v5628, %v5608
        %v5630 = vsel %vm626, %v5629, %v5612
        %v5631 = vsel %vm628, %v5630, %v5616
        %v5636 = vrot.slane %v5018, 1
        %v5637 = vrot.slane %v5019, 1
        %v5638 = vsel %vm1310, %v5636, %v5637
        %v5639 = vrot.slane %v5020, 1
        %v5640 = vsel %vm1310, %v5637, %v5639
        %v5641 = vrot.slane %v5021, 1
        %v5642 = vrot.slane %v5022, 1
        %v5643 = vsel %vm1310, %v5641, %v5642
        %v5644 = vrot.slane %v5023, 1
        %v5645 = vsel %vm1310, %v5642, %v5644
        %v5646 = vrot.slane %v5024, 1
        %v5647 = vrot.slane %v5025, 1
        %v5648 = vsel %vm1310, %v5646, %v5647
        %v5649 = vrot.slane %v5026, 1
        %v5650 = vsel %vm1310, %v5647, %v5649
        %v5651 = vrot.slane %v5027, 1
        %v5652 = vrot.slane %v5028, 1
        %v5653 = vsel %vm1310, %v5651, %v5652
        %v5654 = vrot.slane %v5029, 1
        %v5655 = vsel %vm1310, %v5652, %v5654
        %v5664 = vrot.slane %v5648, 4
        %v5665 = vsel %vm448, %v5664, %v5638
        %v5666 = vrot.slane %v5638, 4
        %v5667 = vsel %vm448, %v5648, %v5666
        %v5669 = vunpack.c.l.s4 1983009808
        %v5670 = vunpack.c.0.s8 %v5669
        %v5671 = vperm.slane %v5665, %v5670
        %v5673 = vunpack.c.l.s4 1983009808
        %v5674 = vunpack.c.0.s8 %v5673
        %v5675 = vperm.slane %v5667, %v5674
        %v5676 = vrot.slane %v5653, 4
        %v5677 = vsel %vm448, %v5676, %v5643
        %v5678 = vrot.slane %v5643, 4
        %v5679 = vsel %vm448, %v5653, %v5678
        %v5681 = vunpack.c.l.s4 1983009808
        %v5682 = vunpack.c.0.s8 %v5681
        %v5683 = vperm.slane %v5677, %v5682
        %v5685 = vunpack.c.l.s4 1983009808
        %v5686 = vunpack.c.0.s8 %v5685
        %v5687 = vperm.slane %v5679, %v5686
        %v5688 = vrot.slane %v5683, 4
        %v5689 = vsel %vm448, %v5688, %v5671
        %v5690 = vrot.slane %v5671, 4
        %v5691 = vsel %vm448, %v5683, %v5690
        %v5693 = vunpack.c.l.s4 1934713408
        %v5694 = vunpack.c.0.s8 %v5693
        %v5695 = vperm.slane %v5689, %v5694
        %v5697 = vunpack.c.l.s4 1934713408
        %v5698 = vunpack.c.0.s8 %v5697
        %v5699 = vperm.slane %v5691, %v5698
        %v5700 = vrot.slane %v5687, 4
        %v5701 = vsel %vm448, %v5700, %v5675
        %v5702 = vrot.slane %v5675, 4
        %v5703 = vsel %vm448, %v5687, %v5702
        %v5705 = vunpack.c.l.s4 1934713408
        %v5706 = vunpack.c.0.s8 %v5705
        %v5707 = vperm.slane %v5701, %v5706
        %v5709 = vunpack.c.l.s4 1934713408
        %v5710 = vunpack.c.0.s8 %v5709
        %v5711 = vperm.slane %v5703, %v5710
        %v5712 = vrot.slane %v5695, 4
        %v5713 = vsel %vm448, 0.0, %v5712
        %v5714 = vrot.slane %v5699, 4
        %v5715 = vsel %vm448, 0.0, %v5714
        %v5716 = vrot.slane %v5707, 4
        %v5717 = vsel %vm448, 0.0, %v5716
        %v5718 = vrot.slane %v5711, 4
        %v5719 = vsel %vm448, 0.0, %v5718
        %v5720 = vrot.slane %v5650, 4
        %v5721 = vsel %vm448, %v5720, %v5640
        %v5722 = vrot.slane %v5640, 4
        %v5723 = vsel %vm448, %v5650, %v5722
        %v5725 = vunpack.c.l.s4 1983009808
        %v5726 = vunpack.c.0.s8 %v5725
        %v5727 = vperm.slane %v5721, %v5726
        %v5729 = vunpack.c.l.s4 1983009808
        %v5730 = vunpack.c.0.s8 %v5729
        %v5731 = vperm.slane %v5723, %v5730
        %v5732 = vrot.slane %v5655, 4
        %v5733 = vsel %vm448, %v5732, %v5645
        %v5734 = vrot.slane %v5645, 4
        %v5735 = vsel %vm448, %v5655, %v5734
        %v5737 = vunpack.c.l.s4 1983009808
        %v5738 = vunpack.c.0.s8 %v5737
        %v5739 = vperm.slane %v5733, %v5738
        %v5741 = vunpack.c.l.s4 1983009808
        %v5742 = vunpack.c.0.s8 %v5741
        %v5743 = vperm.slane %v5735, %v5742
        %v5744 = vrot.slane %v5739, 4
        %v5745 = vsel %vm448, %v5744, %v5727
        %v5746 = vrot.slane %v5727, 4
        %v5747 = vsel %vm448, %v5739, %v5746
        %v5749 = vunpack.c.l.s4 1934713408
        %v5750 = vunpack.c.0.s8 %v5749
        %v5751 = vperm.slane %v5745, %v5750
        %v5753 = vunpack.c.l.s4 1934713408
        %v5754 = vunpack.c.0.s8 %v5753
        %v5755 = vperm.slane %v5747, %v5754
        %v5756 = vrot.slane %v5743, 4
        %v5757 = vsel %vm448, %v5756, %v5731
        %v5758 = vrot.slane %v5731, 4
        %v5759 = vsel %vm448, %v5743, %v5758
        %v5761 = vunpack.c.l.s4 1934713408
        %v5762 = vunpack.c.0.s8 %v5761
        %v5763 = vperm.slane %v5757, %v5762
        %v5765 = vunpack.c.l.s4 1934713408
        %v5766 = vunpack.c.0.s8 %v5765
        %v5767 = vperm.slane %v5759, %v5766
        %v5768 = vrot.slane %v5751, 4
        %v5769 = vsel %vm448, 0.0, %v5768
        %v5770 = vrot.slane %v5755, 4
        %v5771 = vsel %vm448, 0.0, %v5770
        %v5772 = vrot.slane %v5763, 4
        %v5773 = vsel %vm448, 0.0, %v5772
        %v5774 = vrot.slane %v5767, 4
        %v5775 = vsel %vm448, 0.0, %v5774
        %5777 = vrot.lane.b32.xlu0 %v5713, 16
        %v5778 = vpop.permute.xlu0 %5777
        %5781 = vrot.lane.b32.xlu0 %v5699, 32
        %v5782 = vpop.permute.xlu0 %5781
        %5785 = vrot.lane.b32.xlu0 %v5715, 48
        %v5786 = vpop.permute.xlu0 %5785
        %5789 = vrot.lane.b32.xlu0 %v5707, 64
        %v5790 = vpop.permute.xlu0 %5789
        %5793 = vrot.lane.b32.xlu0 %v5717, 80
        %v5794 = vpop.permute.xlu0 %5793
        %5797 = vrot.lane.b32.xlu0 %v5711, 96
        %v5798 = vpop.permute.xlu0 %5797
        %5801 = vrot.lane.b32.xlu0 %v5719, 112
        %v5802 = vpop.permute.xlu0 %5801
        %5805 = vrot.lane.b32.xlu0 %v5769, 16
        %v5806 = vpop.permute.xlu0 %5805
        %5809 = vrot.lane.b32.xlu0 %v5755, 32
        %v5810 = vpop.permute.xlu0 %5809
        %5813 = vrot.lane.b32.xlu0 %v5771, 48
        %v5814 = vpop.permute.xlu0 %5813
        %5817 = vrot.lane.b32.xlu0 %v5763, 64
        %v5818 = vpop.permute.xlu0 %5817
        %5821 = vrot.lane.b32.xlu0 %v5773, 80
        %v5822 = vpop.permute.xlu0 %5821
        %5825 = vrot.lane.b32.xlu0 %v5767, 96
        %v5826 = vpop.permute.xlu0 %5825
        %5829 = vrot.lane.b32.xlu0 %v5775, 112
        %v5830 = vpop.permute.xlu0 %5829
        %v5832 = vsel %vm616, %v5695, %v5778
        %v5833 = vsel %vm618, %v5832, %v5782
        %v5834 = vsel %vm620, %v5833, %v5786
        %v5835 = vsel %vm622, %v5834, %v5790
        %v5836 = vsel %vm624, %v5835, %v5794
        %v5837 = vsel %vm626, %v5836, %v5798
        %v5838 = vsel %vm628, %v5837, %v5802
        %v5839 = vsel %vm616, %v5751, %v5806
        %v5840 = vsel %vm618, %v5839, %v5810
        %v5841 = vsel %vm620, %v5840, %v5814
        %v5842 = vsel %vm622, %v5841, %v5818
        %v5843 = vsel %vm624, %v5842, %v5822
        %v5844 = vsel %vm626, %v5843, %v5826
        %v5845 = vsel %vm628, %v5844, %v5830
        %5846 = vrot.lane.b32.xlu0 %v5638, 127
        %v5847 = vpop.permute.xlu0 %5846
        %5848 = vrot.lane.b32.xlu0 %v5640, 127
        %v5849 = vpop.permute.xlu0 %5848
        %5850 = vrot.lane.b32.xlu0 %v5643, 127
        %v5851 = vpop.permute.xlu0 %5850
        %5852 = vrot.lane.b32.xlu0 %v5645, 127
        %v5853 = vpop.permute.xlu0 %5852
        %5854 = vrot.lane.b32.xlu0 %v5648, 127
        %v5855 = vpop.permute.xlu0 %5854
        %5856 = vrot.lane.b32.xlu0 %v5650, 127
        %v5857 = vpop.permute.xlu0 %5856
        %5858 = vrot.lane.b32.xlu0 %v5653, 127
        %v5859 = vpop.permute.xlu0 %5858
        %5860 = vrot.lane.b32.xlu0 %v5655, 127
        %v5861 = vpop.permute.xlu0 %5860
        %v5870 = vrot.slane %v5855, 4
        %v5871 = vsel %vm448, %v5870, %v5847
        %v5872 = vrot.slane %v5847, 4
        %v5873 = vsel %vm448, %v5855, %v5872
        %v5875 = vunpack.c.l.s4 1983009808
        %v5876 = vunpack.c.0.s8 %v5875
        %v5877 = vperm.slane %v5871, %v5876
        %v5879 = vunpack.c.l.s4 1983009808
        %v5880 = vunpack.c.0.s8 %v5879
        %v5881 = vperm.slane %v5873, %v5880
        %v5882 = vrot.slane %v5859, 4
        %v5883 = vsel %vm448, %v5882, %v5851
        %v5884 = vrot.slane %v5851, 4
        %v5885 = vsel %vm448, %v5859, %v5884
        %v5887 = vunpack.c.l.s4 1983009808
        %v5888 = vunpack.c.0.s8 %v5887
        %v5889 = vperm.slane %v5883, %v5888
        %v5891 = vunpack.c.l.s4 1983009808
        %v5892 = vunpack.c.0.s8 %v5891
        %v5893 = vperm.slane %v5885, %v5892
        %v5894 = vrot.slane %v5889, 4
        %v5895 = vsel %vm448, %v5894, %v5877
        %v5896 = vrot.slane %v5877, 4
        %v5897 = vsel %vm448, %v5889, %v5896
        %v5899 = vunpack.c.l.s4 1934713408
        %v5900 = vunpack.c.0.s8 %v5899
        %v5901 = vperm.slane %v5895, %v5900
        %v5903 = vunpack.c.l.s4 1934713408
        %v5904 = vunpack.c.0.s8 %v5903
        %v5905 = vperm.slane %v5897, %v5904
        %v5906 = vrot.slane %v5893, 4
        %v5907 = vsel %vm448, %v5906, %v5881
        %v5908 = vrot.slane %v5881, 4
        %v5909 = vsel %vm448, %v5893, %v5908
        %v5911 = vunpack.c.l.s4 1934713408
        %v5912 = vunpack.c.0.s8 %v5911
        %v5913 = vperm.slane %v5907, %v5912
        %v5915 = vunpack.c.l.s4 1934713408
        %v5916 = vunpack.c.0.s8 %v5915
        %v5917 = vperm.slane %v5909, %v5916
        %v5918 = vrot.slane %v5901, 4
        %v5919 = vsel %vm448, 0.0, %v5918
        %v5920 = vrot.slane %v5905, 4
        %v5921 = vsel %vm448, 0.0, %v5920
        %v5922 = vrot.slane %v5913, 4
        %v5923 = vsel %vm448, 0.0, %v5922
        %v5924 = vrot.slane %v5917, 4
        %v5925 = vsel %vm448, 0.0, %v5924
        %v5926 = vrot.slane %v5857, 4
        %v5927 = vsel %vm448, %v5926, %v5849
        %v5928 = vrot.slane %v5849, 4
        %v5929 = vsel %vm448, %v5857, %v5928
        %v5931 = vunpack.c.l.s4 1983009808
        %v5932 = vunpack.c.0.s8 %v5931
        %v5933 = vperm.slane %v5927, %v5932
        %v5935 = vunpack.c.l.s4 1983009808
        %v5936 = vunpack.c.0.s8 %v5935
        %v5937 = vperm.slane %v5929, %v5936
        %v5938 = vrot.slane %v5861, 4
        %v5939 = vsel %vm448, %v5938, %v5853
        %v5940 = vrot.slane %v5853, 4
        %v5941 = vsel %vm448, %v5861, %v5940
        %v5943 = vunpack.c.l.s4 1983009808
        %v5944 = vunpack.c.0.s8 %v5943
        %v5945 = vperm.slane %v5939, %v5944
        %v5947 = vunpack.c.l.s4 1983009808
        %v5948 = vunpack.c.0.s8 %v5947
        %v5949 = vperm.slane %v5941, %v5948
        %v5950 = vrot.slane %v5945, 4
        %v5951 = vsel %vm448, %v5950, %v5933
        %v5952 = vrot.slane %v5933, 4
        %v5953 = vsel %vm448, %v5945, %v5952
        %v5955 = vunpack.c.l.s4 1934713408
        %v5956 = vunpack.c.0.s8 %v5955
        %v5957 = vperm.slane %v5951, %v5956
        %v5959 = vunpack.c.l.s4 1934713408
        %v5960 = vunpack.c.0.s8 %v5959
        %v5961 = vperm.slane %v5953, %v5960
        %v5962 = vrot.slane %v5949, 4
        %v5963 = vsel %vm448, %v5962, %v5937
        %v5964 = vrot.slane %v5937, 4
        %v5965 = vsel %vm448, %v5949, %v5964
        %v5967 = vunpack.c.l.s4 1934713408
        %v5968 = vunpack.c.0.s8 %v5967
        %v5969 = vperm.slane %v5963, %v5968
        %v5971 = vunpack.c.l.s4 1934713408
        %v5972 = vunpack.c.0.s8 %v5971
        %v5973 = vperm.slane %v5965, %v5972
        %v5974 = vrot.slane %v5957, 4
        %v5975 = vsel %vm448, 0.0, %v5974
        %v5976 = vrot.slane %v5961, 4
        %v5977 = vsel %vm448, 0.0, %v5976
        %v5978 = vrot.slane %v5969, 4
        %v5979 = vsel %vm448, 0.0, %v5978
        %v5980 = vrot.slane %v5973, 4
        %v5981 = vsel %vm448, 0.0, %v5980
        %5983 = vrot.lane.b32.xlu0 %v5919, 16
        %v5984 = vpop.permute.xlu0 %5983
        %5987 = vrot.lane.b32.xlu0 %v5905, 32
        %v5988 = vpop.permute.xlu0 %5987
        %5991 = vrot.lane.b32.xlu0 %v5921, 48
        %v5992 = vpop.permute.xlu0 %5991
        %5995 = vrot.lane.b32.xlu0 %v5913, 64
        %v5996 = vpop.permute.xlu0 %5995
        %5999 = vrot.lane.b32.xlu0 %v5923, 80
        %v6000 = vpop.permute.xlu0 %5999
        %6003 = vrot.lane.b32.xlu0 %v5917, 96
        %v6004 = vpop.permute.xlu0 %6003
        %6007 = vrot.lane.b32.xlu0 %v5925, 112
        %v6008 = vpop.permute.xlu0 %6007
        %6011 = vrot.lane.b32.xlu0 %v5975, 16
        %v6012 = vpop.permute.xlu0 %6011
        %6015 = vrot.lane.b32.xlu0 %v5961, 32
        %v6016 = vpop.permute.xlu0 %6015
        %6019 = vrot.lane.b32.xlu0 %v5977, 48
        %v6020 = vpop.permute.xlu0 %6019
        %6023 = vrot.lane.b32.xlu0 %v5969, 64
        %v6024 = vpop.permute.xlu0 %6023
        %6027 = vrot.lane.b32.xlu0 %v5979, 80
        %v6028 = vpop.permute.xlu0 %6027
        %6031 = vrot.lane.b32.xlu0 %v5973, 96
        %v6032 = vpop.permute.xlu0 %6031
        %6035 = vrot.lane.b32.xlu0 %v5981, 112
        %v6036 = vpop.permute.xlu0 %6035
        %v6038 = vsel %vm616, %v5901, %v5984
        %v6039 = vsel %vm618, %v6038, %v5988
        %v6040 = vsel %vm620, %v6039, %v5992
        %v6041 = vsel %vm622, %v6040, %v5996
        %v6042 = vsel %vm624, %v6041, %v6000
        %v6043 = vsel %vm626, %v6042, %v6004
        %v6044 = vsel %vm628, %v6043, %v6008
        %v6045 = vsel %vm616, %v5957, %v6012
        %v6046 = vsel %vm618, %v6045, %v6016
        %v6047 = vsel %vm620, %v6046, %v6020
        %v6048 = vsel %vm622, %v6047, %v6024
        %v6049 = vsel %vm624, %v6048, %v6028
        %v6050 = vsel %vm626, %v6049, %v6032
        %v6051 = vsel %vm628, %v6050, %v6036
        %6052 = vrot.lane.b32.xlu0 %v5638, 126
        %v6053 = vpop.permute.xlu0 %6052
        %6054 = vrot.lane.b32.xlu0 %v5640, 126
        %v6055 = vpop.permute.xlu0 %6054
        %6056 = vrot.lane.b32.xlu0 %v5643, 126
        %v6057 = vpop.permute.xlu0 %6056
        %6058 = vrot.lane.b32.xlu0 %v5645, 126
        %v6059 = vpop.permute.xlu0 %6058
        %6060 = vrot.lane.b32.xlu0 %v5648, 126
        %v6061 = vpop.permute.xlu0 %6060
        %6062 = vrot.lane.b32.xlu0 %v5650, 126
        %v6063 = vpop.permute.xlu0 %6062
        %6064 = vrot.lane.b32.xlu0 %v5653, 126
        %v6065 = vpop.permute.xlu0 %6064
        %6066 = vrot.lane.b32.xlu0 %v5655, 126
        %v6067 = vpop.permute.xlu0 %6066
        %v6076 = vrot.slane %v6061, 4
        %v6077 = vsel %vm448, %v6076, %v6053
        %v6078 = vrot.slane %v6053, 4
        %v6079 = vsel %vm448, %v6061, %v6078
        %v6081 = vunpack.c.l.s4 1983009808
        %v6082 = vunpack.c.0.s8 %v6081
        %v6083 = vperm.slane %v6077, %v6082
        %v6085 = vunpack.c.l.s4 1983009808
        %v6086 = vunpack.c.0.s8 %v6085
        %v6087 = vperm.slane %v6079, %v6086
        %v6088 = vrot.slane %v6065, 4
        %v6089 = vsel %vm448, %v6088, %v6057
        %v6090 = vrot.slane %v6057, 4
        %v6091 = vsel %vm448, %v6065, %v6090
        %v6093 = vunpack.c.l.s4 1983009808
        %v6094 = vunpack.c.0.s8 %v6093
        %v6095 = vperm.slane %v6089, %v6094
        %v6097 = vunpack.c.l.s4 1983009808
        %v6098 = vunpack.c.0.s8 %v6097
        %v6099 = vperm.slane %v6091, %v6098
        %v6100 = vrot.slane %v6095, 4
        %v6101 = vsel %vm448, %v6100, %v6083
        %v6102 = vrot.slane %v6083, 4
        %v6103 = vsel %vm448, %v6095, %v6102
        %v6105 = vunpack.c.l.s4 1934713408
        %v6106 = vunpack.c.0.s8 %v6105
        %v6107 = vperm.slane %v6101, %v6106
        %v6109 = vunpack.c.l.s4 1934713408
        %v6110 = vunpack.c.0.s8 %v6109
        %v6111 = vperm.slane %v6103, %v6110
        %v6112 = vrot.slane %v6099, 4
        %v6113 = vsel %vm448, %v6112, %v6087
        %v6114 = vrot.slane %v6087, 4
        %v6115 = vsel %vm448, %v6099, %v6114
        %v6117 = vunpack.c.l.s4 1934713408
        %v6118 = vunpack.c.0.s8 %v6117
        %v6119 = vperm.slane %v6113, %v6118
        %v6121 = vunpack.c.l.s4 1934713408
        %v6122 = vunpack.c.0.s8 %v6121
        %v6123 = vperm.slane %v6115, %v6122
        %v6124 = vrot.slane %v6107, 4
        %v6125 = vsel %vm448, 0.0, %v6124
        %v6126 = vrot.slane %v6111, 4
        %v6127 = vsel %vm448, 0.0, %v6126
        %v6128 = vrot.slane %v6119, 4
        %v6129 = vsel %vm448, 0.0, %v6128
        %v6130 = vrot.slane %v6123, 4
        %v6131 = vsel %vm448, 0.0, %v6130
        %v6132 = vrot.slane %v6063, 4
        %v6133 = vsel %vm448, %v6132, %v6055
        %v6134 = vrot.slane %v6055, 4
        %v6135 = vsel %vm448, %v6063, %v6134
        %v6137 = vunpack.c.l.s4 1983009808
        %v6138 = vunpack.c.0.s8 %v6137
        %v6139 = vperm.slane %v6133, %v6138
        %v6141 = vunpack.c.l.s4 1983009808
        %v6142 = vunpack.c.0.s8 %v6141
        %v6143 = vperm.slane %v6135, %v6142
        %v6144 = vrot.slane %v6067, 4
        %v6145 = vsel %vm448, %v6144, %v6059
        %v6146 = vrot.slane %v6059, 4
        %v6147 = vsel %vm448, %v6067, %v6146
        %v6149 = vunpack.c.l.s4 1983009808
        %v6150 = vunpack.c.0.s8 %v6149
        %v6151 = vperm.slane %v6145, %v6150
        %v6153 = vunpack.c.l.s4 1983009808
        %v6154 = vunpack.c.0.s8 %v6153
        %v6155 = vperm.slane %v6147, %v6154
        %v6156 = vrot.slane %v6151, 4
        %v6157 = vsel %vm448, %v6156, %v6139
        %v6158 = vrot.slane %v6139, 4
        %v6159 = vsel %vm448, %v6151, %v6158
        %v6161 = vunpack.c.l.s4 1934713408
        %v6162 = vunpack.c.0.s8 %v6161
        %v6163 = vperm.slane %v6157, %v6162
        %v6165 = vunpack.c.l.s4 1934713408
        %v6166 = vunpack.c.0.s8 %v6165
        %v6167 = vperm.slane %v6159, %v6166
        %v6168 = vrot.slane %v6155, 4
        %v6169 = vsel %vm448, %v6168, %v6143
        %v6170 = vrot.slane %v6143, 4
        %v6171 = vsel %vm448, %v6155, %v6170
        %v6173 = vunpack.c.l.s4 1934713408
        %v6174 = vunpack.c.0.s8 %v6173
        %v6175 = vperm.slane %v6169, %v6174
        %v6177 = vunpack.c.l.s4 1934713408
        %v6178 = vunpack.c.0.s8 %v6177
        %v6179 = vperm.slane %v6171, %v6178
        %v6180 = vrot.slane %v6163, 4
        %v6181 = vsel %vm448, 0.0, %v6180
        %v6182 = vrot.slane %v6167, 4
        %v6183 = vsel %vm448, 0.0, %v6182
        %v6184 = vrot.slane %v6175, 4
        %v6185 = vsel %vm448, 0.0, %v6184
        %v6186 = vrot.slane %v6179, 4
        %v6187 = vsel %vm448, 0.0, %v6186
        %6189 = vrot.lane.b32.xlu0 %v6125, 16
        %v6190 = vpop.permute.xlu0 %6189
        %6193 = vrot.lane.b32.xlu0 %v6111, 32
        %v6194 = vpop.permute.xlu0 %6193
        %6197 = vrot.lane.b32.xlu0 %v6127, 48
        %v6198 = vpop.permute.xlu0 %6197
        %6201 = vrot.lane.b32.xlu0 %v6119, 64
        %v6202 = vpop.permute.xlu0 %6201
        %6205 = vrot.lane.b32.xlu0 %v6129, 80
        %v6206 = vpop.permute.xlu0 %6205
        %6209 = vrot.lane.b32.xlu0 %v6123, 96
        %v6210 = vpop.permute.xlu0 %6209
        %6213 = vrot.lane.b32.xlu0 %v6131, 112
        %v6214 = vpop.permute.xlu0 %6213
        %6217 = vrot.lane.b32.xlu0 %v6181, 16
        %v6218 = vpop.permute.xlu0 %6217
        %6221 = vrot.lane.b32.xlu0 %v6167, 32
        %v6222 = vpop.permute.xlu0 %6221
        %6225 = vrot.lane.b32.xlu0 %v6183, 48
        %v6226 = vpop.permute.xlu0 %6225
        %6229 = vrot.lane.b32.xlu0 %v6175, 64
        %v6230 = vpop.permute.xlu0 %6229
        %6233 = vrot.lane.b32.xlu0 %v6185, 80
        %v6234 = vpop.permute.xlu0 %6233
        %6237 = vrot.lane.b32.xlu0 %v6179, 96
        %v6238 = vpop.permute.xlu0 %6237
        %6241 = vrot.lane.b32.xlu0 %v6187, 112
        %v6242 = vpop.permute.xlu0 %6241
        %v6244 = vsel %vm616, %v6107, %v6190
        %v6245 = vsel %vm618, %v6244, %v6194
        %v6246 = vsel %vm620, %v6245, %v6198
        %v6247 = vsel %vm622, %v6246, %v6202
        %v6248 = vsel %vm624, %v6247, %v6206
        %v6249 = vsel %vm626, %v6248, %v6210
        %v6250 = vsel %vm628, %v6249, %v6214
        %v6251 = vsel %vm616, %v6163, %v6218
        %v6252 = vsel %vm618, %v6251, %v6222
        %v6253 = vsel %vm620, %v6252, %v6226
        %v6254 = vsel %vm622, %v6253, %v6230
        %v6255 = vsel %vm624, %v6254, %v6234
        %v6256 = vsel %vm626, %v6255, %v6238
        %v6257 = vsel %vm628, %v6256, %v6242
        %v6258 = vrot.slane %v5018, 2
        %v6259 = vrot.slane %v5019, 2
        %v6260 = vsel %vm1933, %v6258, %v6259
        %v6261 = vrot.slane %v5020, 2
        %v6262 = vsel %vm1933, %v6259, %v6261
        %v6263 = vrot.slane %v5021, 2
        %v6264 = vrot.slane %v5022, 2
        %v6265 = vsel %vm1933, %v6263, %v6264
        %v6266 = vrot.slane %v5023, 2
        %v6267 = vsel %vm1933, %v6264, %v6266
        %v6268 = vrot.slane %v5024, 2
        %v6269 = vrot.slane %v5025, 2
        %v6270 = vsel %vm1933, %v6268, %v6269
        %v6271 = vrot.slane %v5026, 2
        %v6272 = vsel %vm1933, %v6269, %v6271
        %v6273 = vrot.slane %v5027, 2
        %v6274 = vrot.slane %v5028, 2
        %v6275 = vsel %vm1933, %v6273, %v6274
        %v6276 = vrot.slane %v5029, 2
        %v6277 = vsel %vm1933, %v6274, %v6276
        %v6286 = vrot.slane %v6270, 4
        %v6287 = vsel %vm448, %v6286, %v6260
        %v6288 = vrot.slane %v6260, 4
        %v6289 = vsel %vm448, %v6270, %v6288
        %v6291 = vunpack.c.l.s4 1983009808
        %v6292 = vunpack.c.0.s8 %v6291
        %v6293 = vperm.slane %v6287, %v6292
        %v6295 = vunpack.c.l.s4 1983009808
        %v6296 = vunpack.c.0.s8 %v6295
        %v6297 = vperm.slane %v6289, %v6296
        %v6298 = vrot.slane %v6275, 4
        %v6299 = vsel %vm448, %v6298, %v6265
        %v6300 = vrot.slane %v6265, 4
        %v6301 = vsel %vm448, %v6275, %v6300
        %v6303 = vunpack.c.l.s4 1983009808
        %v6304 = vunpack.c.0.s8 %v6303
        %v6305 = vperm.slane %v6299, %v6304
        %v6307 = vunpack.c.l.s4 1983009808
        %v6308 = vunpack.c.0.s8 %v6307
        %v6309 = vperm.slane %v6301, %v6308
        %v6310 = vrot.slane %v6305, 4
        %v6311 = vsel %vm448, %v6310, %v6293
        %v6312 = vrot.slane %v6293, 4
        %v6313 = vsel %vm448, %v6305, %v6312
        %v6315 = vunpack.c.l.s4 1934713408
        %v6316 = vunpack.c.0.s8 %v6315
        %v6317 = vperm.slane %v6311, %v6316
        %v6319 = vunpack.c.l.s4 1934713408
        %v6320 = vunpack.c.0.s8 %v6319
        %v6321 = vperm.slane %v6313, %v6320
        %v6322 = vrot.slane %v6309, 4
        %v6323 = vsel %vm448, %v6322, %v6297
        %v6324 = vrot.slane %v6297, 4
        %v6325 = vsel %vm448, %v6309, %v6324
        %v6327 = vunpack.c.l.s4 1934713408
        %v6328 = vunpack.c.0.s8 %v6327
        %v6329 = vperm.slane %v6323, %v6328
        %v6331 = vunpack.c.l.s4 1934713408
        %v6332 = vunpack.c.0.s8 %v6331
        %v6333 = vperm.slane %v6325, %v6332
        %v6334 = vrot.slane %v6317, 4
        %v6335 = vsel %vm448, 0.0, %v6334
        %v6336 = vrot.slane %v6321, 4
        %v6337 = vsel %vm448, 0.0, %v6336
        %v6338 = vrot.slane %v6329, 4
        %v6339 = vsel %vm448, 0.0, %v6338
        %v6340 = vrot.slane %v6333, 4
        %v6341 = vsel %vm448, 0.0, %v6340
        %v6342 = vrot.slane %v6272, 4
        %v6343 = vsel %vm448, %v6342, %v6262
        %v6344 = vrot.slane %v6262, 4
        %v6345 = vsel %vm448, %v6272, %v6344
        %v6347 = vunpack.c.l.s4 1983009808
        %v6348 = vunpack.c.0.s8 %v6347
        %v6349 = vperm.slane %v6343, %v6348
        %v6351 = vunpack.c.l.s4 1983009808
        %v6352 = vunpack.c.0.s8 %v6351
        %v6353 = vperm.slane %v6345, %v6352
        %v6354 = vrot.slane %v6277, 4
        %v6355 = vsel %vm448, %v6354, %v6267
        %v6356 = vrot.slane %v6267, 4
        %v6357 = vsel %vm448, %v6277, %v6356
        %v6359 = vunpack.c.l.s4 1983009808
        %v6360 = vunpack.c.0.s8 %v6359
        %v6361 = vperm.slane %v6355, %v6360
        %v6363 = vunpack.c.l.s4 1983009808
        %v6364 = vunpack.c.0.s8 %v6363
        %v6365 = vperm.slane %v6357, %v6364
        %v6366 = vrot.slane %v6361, 4
        %v6367 = vsel %vm448, %v6366, %v6349
        %v6368 = vrot.slane %v6349, 4
        %v6369 = vsel %vm448, %v6361, %v6368
        %v6371 = vunpack.c.l.s4 1934713408
        %v6372 = vunpack.c.0.s8 %v6371
        %v6373 = vperm.slane %v6367, %v6372
        %v6375 = vunpack.c.l.s4 1934713408
        %v6376 = vunpack.c.0.s8 %v6375
        %v6377 = vperm.slane %v6369, %v6376
        %v6378 = vrot.slane %v6365, 4
        %v6379 = vsel %vm448, %v6378, %v6353
        %v6380 = vrot.slane %v6353, 4
        %v6381 = vsel %vm448, %v6365, %v6380
        %v6383 = vunpack.c.l.s4 1934713408
        %v6384 = vunpack.c.0.s8 %v6383
        %v6385 = vperm.slane %v6379, %v6384
        %v6387 = vunpack.c.l.s4 1934713408
        %v6388 = vunpack.c.0.s8 %v6387
        %v6389 = vperm.slane %v6381, %v6388
        %v6390 = vrot.slane %v6373, 4
        %v6391 = vsel %vm448, 0.0, %v6390
        %v6392 = vrot.slane %v6377, 4
        %v6393 = vsel %vm448, 0.0, %v6392
        %v6394 = vrot.slane %v6385, 4
        %v6395 = vsel %vm448, 0.0, %v6394
        %v6396 = vrot.slane %v6389, 4
        %v6397 = vsel %vm448, 0.0, %v6396
        %6399 = vrot.lane.b32.xlu0 %v6335, 16
        %v6400 = vpop.permute.xlu0 %6399
        %6403 = vrot.lane.b32.xlu0 %v6321, 32
        %v6404 = vpop.permute.xlu0 %6403
        %6407 = vrot.lane.b32.xlu0 %v6337, 48
        %v6408 = vpop.permute.xlu0 %6407
        %6411 = vrot.lane.b32.xlu0 %v6329, 64
        %v6412 = vpop.permute.xlu0 %6411
        %6415 = vrot.lane.b32.xlu0 %v6339, 80
        %v6416 = vpop.permute.xlu0 %6415
        %6419 = vrot.lane.b32.xlu0 %v6333, 96
        %v6420 = vpop.permute.xlu0 %6419
        %6423 = vrot.lane.b32.xlu0 %v6341, 112
        %v6424 = vpop.permute.xlu0 %6423
        %6427 = vrot.lane.b32.xlu0 %v6391, 16
        %v6428 = vpop.permute.xlu0 %6427
        %6431 = vrot.lane.b32.xlu0 %v6377, 32
        %v6432 = vpop.permute.xlu0 %6431
        %6435 = vrot.lane.b32.xlu0 %v6393, 48
        %v6436 = vpop.permute.xlu0 %6435
        %6439 = vrot.lane.b32.xlu0 %v6385, 64
        %v6440 = vpop.permute.xlu0 %6439
        %6443 = vrot.lane.b32.xlu0 %v6395, 80
        %v6444 = vpop.permute.xlu0 %6443
        %6447 = vrot.lane.b32.xlu0 %v6389, 96
        %v6448 = vpop.permute.xlu0 %6447
        %6451 = vrot.lane.b32.xlu0 %v6397, 112
        %v6452 = vpop.permute.xlu0 %6451
        %v6454 = vsel %vm616, %v6317, %v6400
        %v6455 = vsel %vm618, %v6454, %v6404
        %v6456 = vsel %vm620, %v6455, %v6408
        %v6457 = vsel %vm622, %v6456, %v6412
        %v6458 = vsel %vm624, %v6457, %v6416
        %v6459 = vsel %vm626, %v6458, %v6420
        %v6460 = vsel %vm628, %v6459, %v6424
        %v6461 = vsel %vm616, %v6373, %v6428
        %v6462 = vsel %vm618, %v6461, %v6432
        %v6463 = vsel %vm620, %v6462, %v6436
        %v6464 = vsel %vm622, %v6463, %v6440
        %v6465 = vsel %vm624, %v6464, %v6444
        %v6466 = vsel %vm626, %v6465, %v6448
        %v6467 = vsel %vm628, %v6466, %v6452
        %6468 = vrot.lane.b32.xlu0 %v6260, 127
        %v6469 = vpop.permute.xlu0 %6468
        %6470 = vrot.lane.b32.xlu0 %v6262, 127
        %v6471 = vpop.permute.xlu0 %6470
        %6472 = vrot.lane.b32.xlu0 %v6265, 127
        %v6473 = vpop.permute.xlu0 %6472
        %6474 = vrot.lane.b32.xlu0 %v6267, 127
        %v6475 = vpop.permute.xlu0 %6474
        %6476 = vrot.lane.b32.xlu0 %v6270, 127
        %v6477 = vpop.permute.xlu0 %6476
        %6478 = vrot.lane.b32.xlu0 %v6272, 127
        %v6479 = vpop.permute.xlu0 %6478
        %6480 = vrot.lane.b32.xlu0 %v6275, 127
        %v6481 = vpop.permute.xlu0 %6480
        %6482 = vrot.lane.b32.xlu0 %v6277, 127
        %v6483 = vpop.permute.xlu0 %6482
        %v6492 = vrot.slane %v6477, 4
        %v6493 = vsel %vm448, %v6492, %v6469
        %v6494 = vrot.slane %v6469, 4
        %v6495 = vsel %vm448, %v6477, %v6494
        %v6497 = vunpack.c.l.s4 1983009808
        %v6498 = vunpack.c.0.s8 %v6497
        %v6499 = vperm.slane %v6493, %v6498
        %v6501 = vunpack.c.l.s4 1983009808
        %v6502 = vunpack.c.0.s8 %v6501
        %v6503 = vperm.slane %v6495, %v6502
        %v6504 = vrot.slane %v6481, 4
        %v6505 = vsel %vm448, %v6504, %v6473
        %v6506 = vrot.slane %v6473, 4
        %v6507 = vsel %vm448, %v6481, %v6506
        %v6509 = vunpack.c.l.s4 1983009808
        %v6510 = vunpack.c.0.s8 %v6509
        %v6511 = vperm.slane %v6505, %v6510
        %v6513 = vunpack.c.l.s4 1983009808
        %v6514 = vunpack.c.0.s8 %v6513
        %v6515 = vperm.slane %v6507, %v6514
        %v6516 = vrot.slane %v6511, 4
        %v6517 = vsel %vm448, %v6516, %v6499
        %v6518 = vrot.slane %v6499, 4
        %v6519 = vsel %vm448, %v6511, %v6518
        %v6521 = vunpack.c.l.s4 1934713408
        %v6522 = vunpack.c.0.s8 %v6521
        %v6523 = vperm.slane %v6517, %v6522
        %v6525 = vunpack.c.l.s4 1934713408
        %v6526 = vunpack.c.0.s8 %v6525
        %v6527 = vperm.slane %v6519, %v6526
        %v6528 = vrot.slane %v6515, 4
        %v6529 = vsel %vm448, %v6528, %v6503
        %v6530 = vrot.slane %v6503, 4
        %v6531 = vsel %vm448, %v6515, %v6530
        %v6533 = vunpack.c.l.s4 1934713408
        %v6534 = vunpack.c.0.s8 %v6533
        %v6535 = vperm.slane %v6529, %v6534
        %v6537 = vunpack.c.l.s4 1934713408
        %v6538 = vunpack.c.0.s8 %v6537
        %v6539 = vperm.slane %v6531, %v6538
        %v6540 = vrot.slane %v6523, 4
        %v6541 = vsel %vm448, 0.0, %v6540
        %v6542 = vrot.slane %v6527, 4
        %v6543 = vsel %vm448, 0.0, %v6542
        %v6544 = vrot.slane %v6535, 4
        %v6545 = vsel %vm448, 0.0, %v6544
        %v6546 = vrot.slane %v6539, 4
        %v6547 = vsel %vm448, 0.0, %v6546
        %v6548 = vrot.slane %v6479, 4
        %v6549 = vsel %vm448, %v6548, %v6471
        %v6550 = vrot.slane %v6471, 4
        %v6551 = vsel %vm448, %v6479, %v6550
        %v6553 = vunpack.c.l.s4 1983009808
        %v6554 = vunpack.c.0.s8 %v6553
        %v6555 = vperm.slane %v6549, %v6554
        %v6557 = vunpack.c.l.s4 1983009808
        %v6558 = vunpack.c.0.s8 %v6557
        %v6559 = vperm.slane %v6551, %v6558
        %v6560 = vrot.slane %v6483, 4
        %v6561 = vsel %vm448, %v6560, %v6475
        %v6562 = vrot.slane %v6475, 4
        %v6563 = vsel %vm448, %v6483, %v6562
        %v6565 = vunpack.c.l.s4 1983009808
        %v6566 = vunpack.c.0.s8 %v6565
        %v6567 = vperm.slane %v6561, %v6566
        %v6569 = vunpack.c.l.s4 1983009808
        %v6570 = vunpack.c.0.s8 %v6569
        %v6571 = vperm.slane %v6563, %v6570
        %v6572 = vrot.slane %v6567, 4
        %v6573 = vsel %vm448, %v6572, %v6555
        %v6574 = vrot.slane %v6555, 4
        %v6575 = vsel %vm448, %v6567, %v6574
        %v6577 = vunpack.c.l.s4 1934713408
        %v6578 = vunpack.c.0.s8 %v6577
        %v6579 = vperm.slane %v6573, %v6578
        %v6581 = vunpack.c.l.s4 1934713408
        %v6582 = vunpack.c.0.s8 %v6581
        %v6583 = vperm.slane %v6575, %v6582
        %v6584 = vrot.slane %v6571, 4
        %v6585 = vsel %vm448, %v6584, %v6559
        %v6586 = vrot.slane %v6559, 4
        %v6587 = vsel %vm448, %v6571, %v6586
        %v6589 = vunpack.c.l.s4 1934713408
        %v6590 = vunpack.c.0.s8 %v6589
        %v6591 = vperm.slane %v6585, %v6590
        %v6593 = vunpack.c.l.s4 1934713408
        %v6594 = vunpack.c.0.s8 %v6593
        %v6595 = vperm.slane %v6587, %v6594
        %v6596 = vrot.slane %v6579, 4
        %v6597 = vsel %vm448, 0.0, %v6596
        %v6598 = vrot.slane %v6583, 4
        %v6599 = vsel %vm448, 0.0, %v6598
        %v6600 = vrot.slane %v6591, 4
        %v6601 = vsel %vm448, 0.0, %v6600
        %v6602 = vrot.slane %v6595, 4
        %v6603 = vsel %vm448, 0.0, %v6602
        %6605 = vrot.lane.b32.xlu0 %v6541, 16
        %v6606 = vpop.permute.xlu0 %6605
        %6609 = vrot.lane.b32.xlu0 %v6527, 32
        %v6610 = vpop.permute.xlu0 %6609
        %6613 = vrot.lane.b32.xlu0 %v6543, 48
        %v6614 = vpop.permute.xlu0 %6613
        %6617 = vrot.lane.b32.xlu0 %v6535, 64
        %v6618 = vpop.permute.xlu0 %6617
        %6621 = vrot.lane.b32.xlu0 %v6545, 80
        %v6622 = vpop.permute.xlu0 %6621
        %6625 = vrot.lane.b32.xlu0 %v6539, 96
        %v6626 = vpop.permute.xlu0 %6625
        %6629 = vrot.lane.b32.xlu0 %v6547, 112
        %v6630 = vpop.permute.xlu0 %6629
        %6633 = vrot.lane.b32.xlu0 %v6597, 16
        %v6634 = vpop.permute.xlu0 %6633
        %6637 = vrot.lane.b32.xlu0 %v6583, 32
        %v6638 = vpop.permute.xlu0 %6637
        %6641 = vrot.lane.b32.xlu0 %v6599, 48
        %v6642 = vpop.permute.xlu0 %6641
        %6645 = vrot.lane.b32.xlu0 %v6591, 64
        %v6646 = vpop.permute.xlu0 %6645
        %6649 = vrot.lane.b32.xlu0 %v6601, 80
        %v6650 = vpop.permute.xlu0 %6649
        %6653 = vrot.lane.b32.xlu0 %v6595, 96
        %v6654 = vpop.permute.xlu0 %6653
        %6657 = vrot.lane.b32.xlu0 %v6603, 112
        %v6658 = vpop.permute.xlu0 %6657
        %v6660 = vsel %vm616, %v6523, %v6606
        %v6661 = vsel %vm618, %v6660, %v6610
        %v6662 = vsel %vm620, %v6661, %v6614
        %v6663 = vsel %vm622, %v6662, %v6618
        %v6664 = vsel %vm624, %v6663, %v6622
        %v6665 = vsel %vm626, %v6664, %v6626
        %v6666 = vsel %vm628, %v6665, %v6630
        %v6667 = vsel %vm616, %v6579, %v6634
        %v6668 = vsel %vm618, %v6667, %v6638
        %v6669 = vsel %vm620, %v6668, %v6642
        %v6670 = vsel %vm622, %v6669, %v6646
        %v6671 = vsel %vm624, %v6670, %v6650
        %v6672 = vsel %vm626, %v6671, %v6654
        %v6673 = vsel %vm628, %v6672, %v6658
        %6674 = vrot.lane.b32.xlu0 %v6260, 126
        %v6675 = vpop.permute.xlu0 %6674
        %6676 = vrot.lane.b32.xlu0 %v6262, 126
        %v6677 = vpop.permute.xlu0 %6676
        %6678 = vrot.lane.b32.xlu0 %v6265, 126
        %v6679 = vpop.permute.xlu0 %6678
        %6680 = vrot.lane.b32.xlu0 %v6267, 126
        %v6681 = vpop.permute.xlu0 %6680
        %6682 = vrot.lane.b32.xlu0 %v6270, 126
        %v6683 = vpop.permute.xlu0 %6682
        %6684 = vrot.lane.b32.xlu0 %v6272, 126
        %v6685 = vpop.permute.xlu0 %6684
        %6686 = vrot.lane.b32.xlu0 %v6275, 126
        %v6687 = vpop.permute.xlu0 %6686
        %6688 = vrot.lane.b32.xlu0 %v6277, 126
        %v6689 = vpop.permute.xlu0 %6688
        %v6698 = vrot.slane %v6683, 4
        %v6699 = vsel %vm448, %v6698, %v6675
        %v6700 = vrot.slane %v6675, 4
        %v6701 = vsel %vm448, %v6683, %v6700
        %v6703 = vunpack.c.l.s4 1983009808
        %v6704 = vunpack.c.0.s8 %v6703
        %v6705 = vperm.slane %v6699, %v6704
        %v6707 = vunpack.c.l.s4 1983009808
        %v6708 = vunpack.c.0.s8 %v6707
        %v6709 = vperm.slane %v6701, %v6708
        %v6710 = vrot.slane %v6687, 4
        %v6711 = vsel %vm448, %v6710, %v6679
        %v6712 = vrot.slane %v6679, 4
        %v6713 = vsel %vm448, %v6687, %v6712
        %v6715 = vunpack.c.l.s4 1983009808
        %v6716 = vunpack.c.0.s8 %v6715
        %v6717 = vperm.slane %v6711, %v6716
        %v6719 = vunpack.c.l.s4 1983009808
        %v6720 = vunpack.c.0.s8 %v6719
        %v6721 = vperm.slane %v6713, %v6720
        %v6722 = vrot.slane %v6717, 4
        %v6723 = vsel %vm448, %v6722, %v6705
        %v6724 = vrot.slane %v6705, 4
        %v6725 = vsel %vm448, %v6717, %v6724
        %v6727 = vunpack.c.l.s4 1934713408
        %v6728 = vunpack.c.0.s8 %v6727
        %v6729 = vperm.slane %v6723, %v6728
        %v6731 = vunpack.c.l.s4 1934713408
        %v6732 = vunpack.c.0.s8 %v6731
        %v6733 = vperm.slane %v6725, %v6732
        %v6734 = vrot.slane %v6721, 4
        %v6735 = vsel %vm448, %v6734, %v6709
        %v6736 = vrot.slane %v6709, 4
        %v6737 = vsel %vm448, %v6721, %v6736
        %v6739 = vunpack.c.l.s4 1934713408
        %v6740 = vunpack.c.0.s8 %v6739
        %v6741 = vperm.slane %v6735, %v6740
        %v6743 = vunpack.c.l.s4 1934713408
        %v6744 = vunpack.c.0.s8 %v6743
        %v6745 = vperm.slane %v6737, %v6744
        %v6746 = vrot.slane %v6729, 4
        %v6747 = vsel %vm448, 0.0, %v6746
        %v6748 = vrot.slane %v6733, 4
        %v6749 = vsel %vm448, 0.0, %v6748
        %v6750 = vrot.slane %v6741, 4
        %v6751 = vsel %vm448, 0.0, %v6750
        %v6752 = vrot.slane %v6745, 4
        %v6753 = vsel %vm448, 0.0, %v6752
        %v6754 = vrot.slane %v6685, 4
        %v6755 = vsel %vm448, %v6754, %v6677
        %v6756 = vrot.slane %v6677, 4
        %v6757 = vsel %vm448, %v6685, %v6756
        %v6759 = vunpack.c.l.s4 1983009808
        %v6760 = vunpack.c.0.s8 %v6759
        %v6761 = vperm.slane %v6755, %v6760
        %v6763 = vunpack.c.l.s4 1983009808
        %v6764 = vunpack.c.0.s8 %v6763
        %v6765 = vperm.slane %v6757, %v6764
        %v6766 = vrot.slane %v6689, 4
        %v6767 = vsel %vm448, %v6766, %v6681
        %v6768 = vrot.slane %v6681, 4
        %v6769 = vsel %vm448, %v6689, %v6768
        %v6771 = vunpack.c.l.s4 1983009808
        %v6772 = vunpack.c.0.s8 %v6771
        %v6773 = vperm.slane %v6767, %v6772
        %v6775 = vunpack.c.l.s4 1983009808
        %v6776 = vunpack.c.0.s8 %v6775
        %v6777 = vperm.slane %v6769, %v6776
        %v6778 = vrot.slane %v6773, 4
        %v6779 = vsel %vm448, %v6778, %v6761
        %v6780 = vrot.slane %v6761, 4
        %v6781 = vsel %vm448, %v6773, %v6780
        %v6783 = vunpack.c.l.s4 1934713408
        %v6784 = vunpack.c.0.s8 %v6783
        %v6785 = vperm.slane %v6779, %v6784
        %v6787 = vunpack.c.l.s4 1934713408
        %v6788 = vunpack.c.0.s8 %v6787
        %v6789 = vperm.slane %v6781, %v6788
        %v6790 = vrot.slane %v6777, 4
        %v6791 = vsel %vm448, %v6790, %v6765
        %v6792 = vrot.slane %v6765, 4
        %v6793 = vsel %vm448, %v6777, %v6792
        %v6795 = vunpack.c.l.s4 1934713408
        %v6796 = vunpack.c.0.s8 %v6795
        %v6797 = vperm.slane %v6791, %v6796
        %v6799 = vunpack.c.l.s4 1934713408
        %v6800 = vunpack.c.0.s8 %v6799
        %v6801 = vperm.slane %v6793, %v6800
        %v6802 = vrot.slane %v6785, 4
        %v6803 = vsel %vm448, 0.0, %v6802
        %v6804 = vrot.slane %v6789, 4
        %v6805 = vsel %vm448, 0.0, %v6804
        %v6806 = vrot.slane %v6797, 4
        %v6807 = vsel %vm448, 0.0, %v6806
        %v6808 = vrot.slane %v6801, 4
        %v6809 = vsel %vm448, 0.0, %v6808
        %6811 = vrot.lane.b32.xlu0 %v6747, 16
        %v6812 = vpop.permute.xlu0 %6811
        %6815 = vrot.lane.b32.xlu0 %v6733, 32
        %v6816 = vpop.permute.xlu0 %6815
        %6819 = vrot.lane.b32.xlu0 %v6749, 48
        %v6820 = vpop.permute.xlu0 %6819
        %6823 = vrot.lane.b32.xlu0 %v6741, 64
        %v6824 = vpop.permute.xlu0 %6823
        %6827 = vrot.lane.b32.xlu0 %v6751, 80
        %v6828 = vpop.permute.xlu0 %6827
        %6831 = vrot.lane.b32.xlu0 %v6745, 96
        %v6832 = vpop.permute.xlu0 %6831
        %6835 = vrot.lane.b32.xlu0 %v6753, 112
        %v6836 = vpop.permute.xlu0 %6835
        %6839 = vrot.lane.b32.xlu0 %v6803, 16
        %v6840 = vpop.permute.xlu0 %6839
        %6843 = vrot.lane.b32.xlu0 %v6789, 32
        %v6844 = vpop.permute.xlu0 %6843
        %6847 = vrot.lane.b32.xlu0 %v6805, 48
        %v6848 = vpop.permute.xlu0 %6847
        %6851 = vrot.lane.b32.xlu0 %v6797, 64
        %v6852 = vpop.permute.xlu0 %6851
        %6855 = vrot.lane.b32.xlu0 %v6807, 80
        %v6856 = vpop.permute.xlu0 %6855
        %6859 = vrot.lane.b32.xlu0 %v6801, 96
        %v6860 = vpop.permute.xlu0 %6859
        %6863 = vrot.lane.b32.xlu0 %v6809, 112
        %v6864 = vpop.permute.xlu0 %6863
        %v6866 = vsel %vm616, %v6729, %v6812
        %v6867 = vsel %vm618, %v6866, %v6816
        %v6868 = vsel %vm620, %v6867, %v6820
        %v6869 = vsel %vm622, %v6868, %v6824
        %v6870 = vsel %vm624, %v6869, %v6828
        %v6871 = vsel %vm626, %v6870, %v6832
        %v6872 = vsel %vm628, %v6871, %v6836
        %v6873 = vsel %vm616, %v6785, %v6840
        %v6874 = vsel %vm618, %v6873, %v6844
        %v6875 = vsel %vm620, %v6874, %v6848
        %v6876 = vsel %vm622, %v6875, %v6852
        %v6877 = vsel %vm624, %v6876, %v6856
        %v6878 = vsel %vm626, %v6877, %v6860
        %v6879 = vsel %vm628, %v6878, %v6864
        %v6882 = vrot.slane %v5418, 4
        %v6883 = vrot.slane %v5425, 4
        %v6888 = vrot.slane %v5838, 4
        %v6889 = vrot.slane %v5845, 4
        %v6894 = vrot.slane %v6250, 4
        %v6895 = vrot.slane %v6257, 4
        %v6900 = vrot.slane %v6666, 4
        %v6901 = vrot.slane %v6673, 4
        %v6904 = vsel %vm2580, %v5204, %v6882
        %v6905 = vsel %vm2580, %v5211, %v6883
        %v6906 = vsel %vm2580, %v5624, %v6888
        %v6907 = vsel %vm2580, %v5631, %v6889
        %v6908 = vsel %vm2580, %v6044, %v6894
        %v6909 = vsel %vm2580, %v6051, %v6895
        %v6910 = vsel %vm2580, %v6460, %v6900
        %v6911 = vsel %vm2580, %v6467, %v6901
        %v6912 = vld [vmem:[%s5] sm:$0xf]
        %v6913 = vld [vmem:[%s6] sm:$0xf]
        %6915 = vset.pattern.permute.xlu0 0
        %6916 = vperm.xlu0 %6915, %v6913
        %v6917 = vpop.permute.xlu0 %6916
        %v6920 = vsel %vm2596, %v6912, 0
        %v6923 = vsel %vm2580, %v6872, 0
        %v6926 = vsel %vm2580, %v6879, 0
        %6928 = vmatpush.msra.mxu0 0.0
        %6929 = vmatpush.msra.mxu0 0.0
        %6930 = vmatpush.msra.mxu0 0.0
        %6931 = vmatpush.msra.mxu0 0.0
        %6932 = vmatpush.msra.mxu0 0.0
        %6933 = vmatpush.msra.mxu0 0.0
        %6934 = vmatpush.msra.mxu0 0.0
        %6935 = vmatpush.msra.mxu0 0.0
        %6936 = vmatpush.msra.mxu0 0.0
        %6937 = vmatpush.msra.mxu0 0.0
        %6938 = vmatpush.msra.mxu0 0.0
        %6939 = vmatpush.msra.mxu0 %v6923
        %6940 = vmatpush.msra.mxu0 %v6910
        %6941 = vmatpush.msra.mxu0 %v6908
        %6942 = vmatpush.msra.mxu0 %v6906
        %6943 = vmatpush.msra.mxu0 %v6904
        %6944 = vmatmul.f32.gmra.mxu0 %v6920
        %v6945 = vpop.f32.mrf.mxu0
        %v6946 = vadd.f32 %v6917, %v6945
        %6947 = vdwg.mxu0
        %6948 = vmatpush.msra.mxu0 0.0
        %6949 = vmatpush.msra.mxu0 0.0
        %6950 = vmatpush.msra.mxu0 0.0
        %6951 = vmatpush.msra.mxu0 0.0
        %6952 = vmatpush.msra.mxu0 0.0
        %6953 = vmatpush.msra.mxu0 0.0
        %6954 = vmatpush.msra.mxu0 0.0
        %6955 = vmatpush.msra.mxu0 0.0
        %6956 = vmatpush.msra.mxu0 0.0
        %6957 = vmatpush.msra.mxu0 0.0
        %6958 = vmatpush.msra.mxu0 0.0
        %6959 = vmatpush.msra.mxu0 %v6926
        %6960 = vmatpush.msra.mxu0 %v6911
        %6961 = vmatpush.msra.mxu0 %v6909
        %6962 = vmatpush.msra.mxu0 %v6907
        %6963 = vmatpush.msra.mxu0 %v6905
        %6964 = vmatmul.f32.gmra.mxu0 %v6920
        %v6965 = vpop.f32.mrf.mxu0
        %v6966 = vadd.f32 %v6917, %v6965
        %6967 = vdwg.mxu0
        %v6968 = vmax.f32 %v6946, 0.0
        %v6969 = vmax.f32 %v6966, 0.0
        %6971 = vrot.lane.b32.xlu0 %v6968, 112
        %v6972 = vpop.permute.xlu0 %6971
        %6974 = vrot.lane.b32.xlu0 %v6968, 96
        %v6975 = vpop.permute.xlu0 %6974
        %6977 = vrot.lane.b32.xlu0 %v6968, 80
        %v6978 = vpop.permute.xlu0 %6977
        %6980 = vrot.lane.b32.xlu0 %v6968, 64
        %v6981 = vpop.permute.xlu0 %6980
        %6983 = vrot.lane.b32.xlu0 %v6968, 48
        %v6984 = vpop.permute.xlu0 %6983
        %6986 = vrot.lane.b32.xlu0 %v6968, 32
        %v6987 = vpop.permute.xlu0 %6986
        %6989 = vrot.lane.b32.xlu0 %v6968, 16
        %v6990 = vpop.permute.xlu0 %6989
        %6993 = vrot.lane.b32.xlu0 %v6969, 112
        %v6994 = vpop.permute.xlu0 %6993
        %6996 = vrot.lane.b32.xlu0 %v6969, 96
        %v6997 = vpop.permute.xlu0 %6996
        %6999 = vrot.lane.b32.xlu0 %v6969, 80
        %v7000 = vpop.permute.xlu0 %6999
        %7002 = vrot.lane.b32.xlu0 %v6969, 64
        %v7003 = vpop.permute.xlu0 %7002
        %7005 = vrot.lane.b32.xlu0 %v6969, 48
        %v7006 = vpop.permute.xlu0 %7005
        %7008 = vrot.lane.b32.xlu0 %v6969, 32
        %v7009 = vpop.permute.xlu0 %7008
        %7011 = vrot.lane.b32.xlu0 %v6969, 16
        %v7012 = vpop.permute.xlu0 %7011
        %v7014 = vrot.slane %v6975, 4
        %v7015 = vsel %vm448, %v7014, %v6968
        %v7017 = vunpack.c.l.s4 1983009808
        %v7018 = vunpack.c.0.s8 %v7017
        %v7019 = vperm.slane %v7015, %v7018
        %v7020 = vrot.slane %v6978, 4
        %v7021 = vsel %vm448, %v7020, %v6972
        %v7023 = vunpack.c.l.s4 1983009808
        %v7024 = vunpack.c.0.s8 %v7023
        %v7025 = vperm.slane %v7021, %v7024
        %v7026 = vrot.slane %v6987, 4
        %v7027 = vsel %vm448, %v7026, %v6981
        %v7029 = vunpack.c.l.s4 1983009808
        %v7030 = vunpack.c.0.s8 %v7029
        %v7031 = vperm.slane %v7027, %v7030
        %v7032 = vrot.slane %v6990, 4
        %v7033 = vsel %vm448, %v7032, %v6984
        %v7035 = vunpack.c.l.s4 1983009808
        %v7036 = vunpack.c.0.s8 %v7035
        %v7037 = vperm.slane %v7033, %v7036
        %v7038 = vrot.slane %v7025, 4
        %v7039 = vsel %vm448, %v7038, %v7019
        %v7040 = vrot.slane %v7019, 4
        %v7041 = vsel %vm448, %v7025, %v7040
        %v7043 = vunpack.c.l.s4 1934713408
        %v7044 = vunpack.c.0.s8 %v7043
        %v7045 = vperm.slane %v7039, %v7044
        %v7047 = vunpack.c.l.s4 1934713408
        %v7048 = vunpack.c.0.s8 %v7047
        %v7049 = vperm.slane %v7041, %v7048
        %v7050 = vrot.slane %v7037, 4
        %v7051 = vsel %vm448, %v7050, %v7031
        %v7052 = vrot.slane %v7031, 4
        %v7053 = vsel %vm448, %v7037, %v7052
        %v7055 = vunpack.c.l.s4 1934713408
        %v7056 = vunpack.c.0.s8 %v7055
        %v7057 = vperm.slane %v7051, %v7056
        %v7059 = vunpack.c.l.s4 1934713408
        %v7060 = vunpack.c.0.s8 %v7059
        %v7061 = vperm.slane %v7053, %v7060
        %v7062 = vrot.slane %v7057, 4
        %v7063 = vsel %vm448, %v7062, %v7045
        %v7064 = vrot.slane %v7045, 4
        %v7065 = vsel %vm448, %v7057, %v7064
        %v7066 = vrot.slane %v7061, 4
        %v7067 = vsel %vm448, %v7066, %v7049
        %v7068 = vrot.slane %v7049, 4
        %v7069 = vsel %vm448, %v7061, %v7068
        %v7070 = vrot.slane %v6997, 4
        %v7071 = vsel %vm448, %v7070, %v6969
        %v7073 = vunpack.c.l.s4 1983009808
        %v7074 = vunpack.c.0.s8 %v7073
        %v7075 = vperm.slane %v7071, %v7074
        %v7076 = vrot.slane %v7000, 4
        %v7077 = vsel %vm448, %v7076, %v6994
        %v7079 = vunpack.c.l.s4 1983009808
        %v7080 = vunpack.c.0.s8 %v7079
        %v7081 = vperm.slane %v7077, %v7080
        %v7082 = vrot.slane %v7009, 4
        %v7083 = vsel %vm448, %v7082, %v7003
        %v7085 = vunpack.c.l.s4 1983009808
        %v7086 = vunpack.c.0.s8 %v7085
        %v7087 = vperm.slane %v7083, %v7086
        %v7088 = vrot.slane %v7012, 4
        %v7089 = vsel %vm448, %v7088, %v7006
        %v7091 = vunpack.c.l.s4 1983009808
        %v7092 = vunpack.c.0.s8 %v7091
        %v7093 = vperm.slane %v7089, %v7092
        %v7094 = vrot.slane %v7081, 4
        %v7095 = vsel %vm448, %v7094, %v7075
        %v7096 = vrot.slane %v7075, 4
        %v7097 = vsel %vm448, %v7081, %v7096
        %v7099 = vunpack.c.l.s4 1934713408
        %v7100 = vunpack.c.0.s8 %v7099
        %v7101 = vperm.slane %v7095, %v7100
        %v7103 = vunpack.c.l.s4 1934713408
        %v7104 = vunpack.c.0.s8 %v7103
        %v7105 = vperm.slane %v7097, %v7104
        %v7106 = vrot.slane %v7093, 4
        %v7107 = vsel %vm448, %v7106, %v7087
        %v7108 = vrot.slane %v7087, 4
        %v7109 = vsel %vm448, %v7093, %v7108
        %v7111 = vunpack.c.l.s4 1934713408
        %v7112 = vunpack.c.0.s8 %v7111
        %v7113 = vperm.slane %v7107, %v7112
        %v7115 = vunpack.c.l.s4 1934713408
        %v7116 = vunpack.c.0.s8 %v7115
        %v7117 = vperm.slane %v7109, %v7116
        %v7118 = vrot.slane %v7113, 4
        %v7119 = vsel %vm448, %v7118, %v7101
        %v7120 = vrot.slane %v7101, 4
        %v7121 = vsel %vm448, %v7113, %v7120
        %v7122 = vrot.slane %v7117, 4
        %v7123 = vsel %vm448, %v7122, %v7105
        %v7124 = vrot.slane %v7105, 4
        %v7125 = vsel %vm448, %v7117, %v7124
        %7126 = vst.msk [vmem:[#allocation2] sm:$0xff] %vm637, 0.0
        %7127 = vst.msk [vmem:[#allocation2 + $0x8] sm:$0xff] %vm637, 0.0
        %7128 = vst.msk [vmem:[#allocation2 + $0x10] sm:$0x3] %vm640, 0.0
        %7129 = vst.msk [vmem:[#allocation2 + $0x18] sm:$0xff] %vm637, 0.0
        %7130 = vst.msk [vmem:[#allocation2 + $0x20] sm:$0xff] %vm637, 0.0
        %7131 = vst.msk [vmem:[#allocation2 + $0x28] sm:$0x3] %vm640, 0.0
        %7132 = vst.msk [vmem:[#allocation2 + $0x30] sm:$0xff] %vm637, 0.0
        %7133 = vst.msk [vmem:[#allocation2 + $0x38] sm:$0xff] %vm637, 0.0
        %7134 = vst.msk [vmem:[#allocation2 + $0x40] sm:$0x3] %vm640, 0.0
        %7135 = vst.msk [vmem:[#allocation2 + $0x48] sm:$0xff] %vm637, 0.0
        %7136 = vst.msk [vmem:[#allocation2 + $0x50] sm:$0xff] %vm637, 0.0
        %7137 = vst.msk [vmem:[#allocation2 + $0x58] sm:$0x3] %vm640, 0.0
        %7146 = vrot.lane.b32.xlu0 %v7063, 1
        %v7147 = vpop.permute.xlu0 %7146
        %7148 = vrot.lane.b32.xlu0 %v7119, 1
        %v7149 = vpop.permute.xlu0 %7148
        %7150 = vrot.lane.b32.xlu0 %v7065, 1
        %v7151 = vpop.permute.xlu0 %7150
        %7152 = vrot.lane.b32.xlu0 %v7121, 1
        %v7153 = vpop.permute.xlu0 %7152
        %7154 = vrot.lane.b32.xlu0 %v7067, 1
        %v7155 = vpop.permute.xlu0 %7154
        %7156 = vrot.lane.b32.xlu0 %v7123, 1
        %v7157 = vpop.permute.xlu0 %7156
        %7158 = vrot.lane.b32.xlu0 %v7069, 1
        %v7159 = vpop.permute.xlu0 %7158
        %7160 = vrot.lane.b32.xlu0 %v7125, 1
        %v7161 = vpop.permute.xlu0 %7160
        %7170 = vst.msk [vmem:[#allocation2 + $0x1] sm:$0xff] %vm683, %v7147
        %7171 = vst.msk [vmem:[#allocation2 + $0x9] sm:$0xff] %vm683, %v7149
        %7172 = vst.msk [vmem:[#allocation2 + $0x19] sm:$0xff] %vm683, %v7151
        %7173 = vst.msk [vmem:[#allocation2 + $0x21] sm:$0xff] %vm683, %v7153
        %7174 = vst.msk [vmem:[#allocation2 + $0x31] sm:$0xff] %vm683, %v7155
        %7175 = vst.msk [vmem:[#allocation2 + $0x39] sm:$0xff] %vm683, %v7157
        %7176 = vst.msk [vmem:[#allocation2 + $0x49] sm:$0xff] %vm683, %v7159
        %7177 = vst.msk [vmem:[#allocation2 + $0x51] sm:$0xff] %vm683, %v7161
        %v7178 = vld [vmem:[#allocation2] sm:$0xff]
        %v7179 = vld [vmem:[#allocation2 + $0x8] sm:$0xff]
        %v7180 = vld [vmem:[#allocation2 + $0x10] sm:$0x3]
        %v7181 = vld [vmem:[#allocation2 + $0x18] sm:$0xff]
        %v7182 = vld [vmem:[#allocation2 + $0x20] sm:$0xff]
        %v7183 = vld [vmem:[#allocation2 + $0x28] sm:$0x3]
        %v7184 = vld [vmem:[#allocation2 + $0x30] sm:$0xff]
        %v7185 = vld [vmem:[#allocation2 + $0x38] sm:$0xff]
        %v7186 = vld [vmem:[#allocation2 + $0x40] sm:$0x3]
        %v7187 = vld [vmem:[#allocation2 + $0x48] sm:$0xff]
        %v7188 = vld [vmem:[#allocation2 + $0x50] sm:$0xff]
        %v7189 = vld [vmem:[#allocation2 + $0x58] sm:$0x3]
        %v7190 = vrot.slane %v7184, 4
        %v7191 = vsel %vm448, %v7190, %v7178
        %v7192 = vrot.slane %v7178, 4
        %v7193 = vsel %vm448, %v7184, %v7192
        %v7195 = vunpack.c.l.s4 1983009808
        %v7196 = vunpack.c.0.s8 %v7195
        %v7197 = vperm.slane %v7191, %v7196
        %v7199 = vunpack.c.l.s4 1983009808
        %v7200 = vunpack.c.0.s8 %v7199
        %v7201 = vperm.slane %v7193, %v7200
        %v7202 = vrot.slane %v7187, 4
        %v7203 = vsel %vm448, %v7202, %v7181
        %v7204 = vrot.slane %v7181, 4
        %v7205 = vsel %vm448, %v7187, %v7204
        %v7207 = vunpack.c.l.s4 1983009808
        %v7208 = vunpack.c.0.s8 %v7207
        %v7209 = vperm.slane %v7203, %v7208
        %v7211 = vunpack.c.l.s4 1983009808
        %v7212 = vunpack.c.0.s8 %v7211
        %v7213 = vperm.slane %v7205, %v7212
        %v7214 = vrot.slane %v7209, 4
        %v7215 = vsel %vm448, %v7214, %v7197
        %v7216 = vrot.slane %v7197, 4
        %v7217 = vsel %vm448, %v7209, %v7216
        %v7219 = vunpack.c.l.s4 1934713408
        %v7220 = vunpack.c.0.s8 %v7219
        %v7221 = vperm.slane %v7215, %v7220
        %v7223 = vunpack.c.l.s4 1934713408
        %v7224 = vunpack.c.0.s8 %v7223
        %v7225 = vperm.slane %v7217, %v7224
        %v7226 = vrot.slane %v7213, 4
        %v7227 = vsel %vm448, %v7226, %v7201
        %v7228 = vrot.slane %v7201, 4
        %v7229 = vsel %vm448, %v7213, %v7228
        %v7231 = vunpack.c.l.s4 1934713408
        %v7232 = vunpack.c.0.s8 %v7231
        %v7233 = vperm.slane %v7227, %v7232
        %v7235 = vunpack.c.l.s4 1934713408
        %v7236 = vunpack.c.0.s8 %v7235
        %v7237 = vperm.slane %v7229, %v7236
        %v7238 = vrot.slane %v7221, 4
        %v7239 = vsel %vm448, 0.0, %v7238
        %v7240 = vrot.slane %v7225, 4
        %v7241 = vsel %vm448, 0.0, %v7240
        %v7242 = vrot.slane %v7233, 4
        %v7243 = vsel %vm448, 0.0, %v7242
        %v7244 = vrot.slane %v7237, 4
        %v7245 = vsel %vm448, 0.0, %v7244
        %v7246 = vrot.slane %v7185, 4
        %v7247 = vsel %vm448, %v7246, %v7179
        %v7248 = vrot.slane %v7179, 4
        %v7249 = vsel %vm448, %v7185, %v7248
        %v7251 = vunpack.c.l.s4 1983009808
        %v7252 = vunpack.c.0.s8 %v7251
        %v7253 = vperm.slane %v7247, %v7252
        %v7255 = vunpack.c.l.s4 1983009808
        %v7256 = vunpack.c.0.s8 %v7255
        %v7257 = vperm.slane %v7249, %v7256
        %v7258 = vrot.slane %v7188, 4
        %v7259 = vsel %vm448, %v7258, %v7182
        %v7260 = vrot.slane %v7182, 4
        %v7261 = vsel %vm448, %v7188, %v7260
        %v7263 = vunpack.c.l.s4 1983009808
        %v7264 = vunpack.c.0.s8 %v7263
        %v7265 = vperm.slane %v7259, %v7264
        %v7267 = vunpack.c.l.s4 1983009808
        %v7268 = vunpack.c.0.s8 %v7267
        %v7269 = vperm.slane %v7261, %v7268
        %v7270 = vrot.slane %v7265, 4
        %v7271 = vsel %vm448, %v7270, %v7253
        %v7272 = vrot.slane %v7253, 4
        %v7273 = vsel %vm448, %v7265, %v7272
        %v7275 = vunpack.c.l.s4 1934713408
        %v7276 = vunpack.c.0.s8 %v7275
        %v7277 = vperm.slane %v7271, %v7276
        %v7279 = vunpack.c.l.s4 1934713408
        %v7280 = vunpack.c.0.s8 %v7279
        %v7281 = vperm.slane %v7273, %v7280
        %v7282 = vrot.slane %v7269, 4
        %v7283 = vsel %vm448, %v7282, %v7257
        %v7284 = vrot.slane %v7257, 4
        %v7285 = vsel %vm448, %v7269, %v7284
        %v7287 = vunpack.c.l.s4 1934713408
        %v7288 = vunpack.c.0.s8 %v7287
        %v7289 = vperm.slane %v7283, %v7288
        %v7291 = vunpack.c.l.s4 1934713408
        %v7292 = vunpack.c.0.s8 %v7291
        %v7293 = vperm.slane %v7285, %v7292
        %v7294 = vrot.slane %v7277, 4
        %v7295 = vsel %vm448, 0.0, %v7294
        %v7296 = vrot.slane %v7281, 4
        %v7297 = vsel %vm448, 0.0, %v7296
        %v7298 = vrot.slane %v7289, 4
        %v7299 = vsel %vm448, 0.0, %v7298
        %v7300 = vrot.slane %v7293, 4
        %v7301 = vsel %vm448, 0.0, %v7300
        %7303 = vrot.lane.b32.xlu0 %v7239, 16
        %v7304 = vpop.permute.xlu0 %7303
        %7307 = vrot.lane.b32.xlu0 %v7225, 32
        %v7308 = vpop.permute.xlu0 %7307
        %7311 = vrot.lane.b32.xlu0 %v7241, 48
        %v7312 = vpop.permute.xlu0 %7311
        %7315 = vrot.lane.b32.xlu0 %v7233, 64
        %v7316 = vpop.permute.xlu0 %7315
        %7319 = vrot.lane.b32.xlu0 %v7243, 80
        %v7320 = vpop.permute.xlu0 %7319
        %7323 = vrot.lane.b32.xlu0 %v7237, 96
        %v7324 = vpop.permute.xlu0 %7323
        %7327 = vrot.lane.b32.xlu0 %v7245, 112
        %v7328 = vpop.permute.xlu0 %7327
        %7331 = vrot.lane.b32.xlu0 %v7295, 16
        %v7332 = vpop.permute.xlu0 %7331
        %7335 = vrot.lane.b32.xlu0 %v7281, 32
        %v7336 = vpop.permute.xlu0 %7335
        %7339 = vrot.lane.b32.xlu0 %v7297, 48
        %v7340 = vpop.permute.xlu0 %7339
        %7343 = vrot.lane.b32.xlu0 %v7289, 64
        %v7344 = vpop.permute.xlu0 %7343
        %7347 = vrot.lane.b32.xlu0 %v7299, 80
        %v7348 = vpop.permute.xlu0 %7347
        %7351 = vrot.lane.b32.xlu0 %v7293, 96
        %v7352 = vpop.permute.xlu0 %7351
        %7355 = vrot.lane.b32.xlu0 %v7301, 112
        %v7356 = vpop.permute.xlu0 %7355
        %v7358 = vsel %vm616, %v7221, %v7304
        %v7359 = vsel %vm618, %v7358, %v7308
        %v7360 = vsel %vm620, %v7359, %v7312
        %v7361 = vsel %vm622, %v7360, %v7316
        %v7362 = vsel %vm624, %v7361, %v7320
        %v7363 = vsel %vm626, %v7362, %v7324
        %v7364 = vsel %vm628, %v7363, %v7328
        %v7365 = vsel %vm616, %v7277, %v7332
        %v7366 = vsel %vm618, %v7365, %v7336
        %v7367 = vsel %vm620, %v7366, %v7340
        %v7368 = vsel %vm622, %v7367, %v7344
        %v7369 = vsel %vm624, %v7368, %v7348
        %v7370 = vsel %vm626, %v7369, %v7352
        %v7371 = vsel %vm628, %v7370, %v7356
        %7380 = vrot.lane.b32.xlu0 %v7178, 127
        %v7381 = vpop.permute.xlu0 %7380
        %7382 = vrot.lane.b32.xlu0 %v7179, 127
        %v7383 = vpop.permute.xlu0 %7382
        %7384 = vrot.lane.b32.xlu0 %v7181, 127
        %v7385 = vpop.permute.xlu0 %7384
        %7386 = vrot.lane.b32.xlu0 %v7182, 127
        %v7387 = vpop.permute.xlu0 %7386
        %7388 = vrot.lane.b32.xlu0 %v7184, 127
        %v7389 = vpop.permute.xlu0 %7388
        %7390 = vrot.lane.b32.xlu0 %v7185, 127
        %v7391 = vpop.permute.xlu0 %7390
        %7392 = vrot.lane.b32.xlu0 %v7187, 127
        %v7393 = vpop.permute.xlu0 %7392
        %7394 = vrot.lane.b32.xlu0 %v7188, 127
        %v7395 = vpop.permute.xlu0 %7394
        %v7404 = vrot.slane %v7389, 4
        %v7405 = vsel %vm448, %v7404, %v7381
        %v7406 = vrot.slane %v7381, 4
        %v7407 = vsel %vm448, %v7389, %v7406
        %v7409 = vunpack.c.l.s4 1983009808
        %v7410 = vunpack.c.0.s8 %v7409
        %v7411 = vperm.slane %v7405, %v7410
        %v7413 = vunpack.c.l.s4 1983009808
        %v7414 = vunpack.c.0.s8 %v7413
        %v7415 = vperm.slane %v7407, %v7414
        %v7416 = vrot.slane %v7393, 4
        %v7417 = vsel %vm448, %v7416, %v7385
        %v7418 = vrot.slane %v7385, 4
        %v7419 = vsel %vm448, %v7393, %v7418
        %v7421 = vunpack.c.l.s4 1983009808
        %v7422 = vunpack.c.0.s8 %v7421
        %v7423 = vperm.slane %v7417, %v7422
        %v7425 = vunpack.c.l.s4 1983009808
        %v7426 = vunpack.c.0.s8 %v7425
        %v7427 = vperm.slane %v7419, %v7426
        %v7428 = vrot.slane %v7423, 4
        %v7429 = vsel %vm448, %v7428, %v7411
        %v7430 = vrot.slane %v7411, 4
        %v7431 = vsel %vm448, %v7423, %v7430
        %v7433 = vunpack.c.l.s4 1934713408
        %v7434 = vunpack.c.0.s8 %v7433
        %v7435 = vperm.slane %v7429, %v7434
        %v7437 = vunpack.c.l.s4 1934713408
        %v7438 = vunpack.c.0.s8 %v7437
        %v7439 = vperm.slane %v7431, %v7438
        %v7440 = vrot.slane %v7427, 4
        %v7441 = vsel %vm448, %v7440, %v7415
        %v7442 = vrot.slane %v7415, 4
        %v7443 = vsel %vm448, %v7427, %v7442
        %v7445 = vunpack.c.l.s4 1934713408
        %v7446 = vunpack.c.0.s8 %v7445
        %v7447 = vperm.slane %v7441, %v7446
        %v7449 = vunpack.c.l.s4 1934713408
        %v7450 = vunpack.c.0.s8 %v7449
        %v7451 = vperm.slane %v7443, %v7450
        %v7452 = vrot.slane %v7435, 4
        %v7453 = vsel %vm448, 0.0, %v7452
        %v7454 = vrot.slane %v7439, 4
        %v7455 = vsel %vm448, 0.0, %v7454
        %v7456 = vrot.slane %v7447, 4
        %v7457 = vsel %vm448, 0.0, %v7456
        %v7458 = vrot.slane %v7451, 4
        %v7459 = vsel %vm448, 0.0, %v7458
        %v7460 = vrot.slane %v7391, 4
        %v7461 = vsel %vm448, %v7460, %v7383
        %v7462 = vrot.slane %v7383, 4
        %v7463 = vsel %vm448, %v7391, %v7462
        %v7465 = vunpack.c.l.s4 1983009808
        %v7466 = vunpack.c.0.s8 %v7465
        %v7467 = vperm.slane %v7461, %v7466
        %v7469 = vunpack.c.l.s4 1983009808
        %v7470 = vunpack.c.0.s8 %v7469
        %v7471 = vperm.slane %v7463, %v7470
        %v7472 = vrot.slane %v7395, 4
        %v7473 = vsel %vm448, %v7472, %v7387
        %v7474 = vrot.slane %v7387, 4
        %v7475 = vsel %vm448, %v7395, %v7474
        %v7477 = vunpack.c.l.s4 1983009808
        %v7478 = vunpack.c.0.s8 %v7477
        %v7479 = vperm.slane %v7473, %v7478
        %v7481 = vunpack.c.l.s4 1983009808
        %v7482 = vunpack.c.0.s8 %v7481
        %v7483 = vperm.slane %v7475, %v7482
        %v7484 = vrot.slane %v7479, 4
        %v7485 = vsel %vm448, %v7484, %v7467
        %v7486 = vrot.slane %v7467, 4
        %v7487 = vsel %vm448, %v7479, %v7486
        %v7489 = vunpack.c.l.s4 1934713408
        %v7490 = vunpack.c.0.s8 %v7489
        %v7491 = vperm.slane %v7485, %v7490
        %v7493 = vunpack.c.l.s4 1934713408
        %v7494 = vunpack.c.0.s8 %v7493
        %v7495 = vperm.slane %v7487, %v7494
        %v7496 = vrot.slane %v7483, 4
        %v7497 = vsel %vm448, %v7496, %v7471
        %v7498 = vrot.slane %v7471, 4
        %v7499 = vsel %vm448, %v7483, %v7498
        %v7501 = vunpack.c.l.s4 1934713408
        %v7502 = vunpack.c.0.s8 %v7501
        %v7503 = vperm.slane %v7497, %v7502
        %v7505 = vunpack.c.l.s4 1934713408
        %v7506 = vunpack.c.0.s8 %v7505
        %v7507 = vperm.slane %v7499, %v7506
        %v7508 = vrot.slane %v7491, 4
        %v7509 = vsel %vm448, 0.0, %v7508
        %v7510 = vrot.slane %v7495, 4
        %v7511 = vsel %vm448, 0.0, %v7510
        %v7512 = vrot.slane %v7503, 4
        %v7513 = vsel %vm448, 0.0, %v7512
        %v7514 = vrot.slane %v7507, 4
        %v7515 = vsel %vm448, 0.0, %v7514
        %7517 = vrot.lane.b32.xlu0 %v7453, 16
        %v7518 = vpop.permute.xlu0 %7517
        %7521 = vrot.lane.b32.xlu0 %v7439, 32
        %v7522 = vpop.permute.xlu0 %7521
        %7525 = vrot.lane.b32.xlu0 %v7455, 48
        %v7526 = vpop.permute.xlu0 %7525
        %7529 = vrot.lane.b32.xlu0 %v7447, 64
        %v7530 = vpop.permute.xlu0 %7529
        %7533 = vrot.lane.b32.xlu0 %v7457, 80
        %v7534 = vpop.permute.xlu0 %7533
        %7537 = vrot.lane.b32.xlu0 %v7451, 96
        %v7538 = vpop.permute.xlu0 %7537
        %7541 = vrot.lane.b32.xlu0 %v7459, 112
        %v7542 = vpop.permute.xlu0 %7541
        %7545 = vrot.lane.b32.xlu0 %v7509, 16
        %v7546 = vpop.permute.xlu0 %7545
        %7549 = vrot.lane.b32.xlu0 %v7495, 32
        %v7550 = vpop.permute.xlu0 %7549
        %7553 = vrot.lane.b32.xlu0 %v7511, 48
        %v7554 = vpop.permute.xlu0 %7553
        %7557 = vrot.lane.b32.xlu0 %v7503, 64
        %v7558 = vpop.permute.xlu0 %7557
        %7561 = vrot.lane.b32.xlu0 %v7513, 80
        %v7562 = vpop.permute.xlu0 %7561
        %7565 = vrot.lane.b32.xlu0 %v7507, 96
        %v7566 = vpop.permute.xlu0 %7565
        %7569 = vrot.lane.b32.xlu0 %v7515, 112
        %v7570 = vpop.permute.xlu0 %7569
        %v7572 = vsel %vm616, %v7435, %v7518
        %v7573 = vsel %vm618, %v7572, %v7522
        %v7574 = vsel %vm620, %v7573, %v7526
        %v7575 = vsel %vm622, %v7574, %v7530
        %v7576 = vsel %vm624, %v7575, %v7534
        %v7577 = vsel %vm626, %v7576, %v7538
        %v7578 = vsel %vm628, %v7577, %v7542
        %v7579 = vsel %vm616, %v7491, %v7546
        %v7580 = vsel %vm618, %v7579, %v7550
        %v7581 = vsel %vm620, %v7580, %v7554
        %v7582 = vsel %vm622, %v7581, %v7558
        %v7583 = vsel %vm624, %v7582, %v7562
        %v7584 = vsel %vm626, %v7583, %v7566
        %v7585 = vsel %vm628, %v7584, %v7570
        %7586 = vrot.lane.b32.xlu0 %v7178, 126
        %v7587 = vpop.permute.xlu0 %7586
        %7588 = vrot.lane.b32.xlu0 %v7179, 126
        %v7589 = vpop.permute.xlu0 %7588
        %7590 = vrot.lane.b32.xlu0 %v7181, 126
        %v7591 = vpop.permute.xlu0 %7590
        %7592 = vrot.lane.b32.xlu0 %v7182, 126
        %v7593 = vpop.permute.xlu0 %7592
        %7594 = vrot.lane.b32.xlu0 %v7184, 126
        %v7595 = vpop.permute.xlu0 %7594
        %7596 = vrot.lane.b32.xlu0 %v7185, 126
        %v7597 = vpop.permute.xlu0 %7596
        %7598 = vrot.lane.b32.xlu0 %v7187, 126
        %v7599 = vpop.permute.xlu0 %7598
        %7600 = vrot.lane.b32.xlu0 %v7188, 126
        %v7601 = vpop.permute.xlu0 %7600
        %v7610 = vrot.slane %v7595, 4
        %v7611 = vsel %vm448, %v7610, %v7587
        %v7612 = vrot.slane %v7587, 4
        %v7613 = vsel %vm448, %v7595, %v7612
        %v7615 = vunpack.c.l.s4 1983009808
        %v7616 = vunpack.c.0.s8 %v7615
        %v7617 = vperm.slane %v7611, %v7616
        %v7619 = vunpack.c.l.s4 1983009808
        %v7620 = vunpack.c.0.s8 %v7619
        %v7621 = vperm.slane %v7613, %v7620
        %v7622 = vrot.slane %v7599, 4
        %v7623 = vsel %vm448, %v7622, %v7591
        %v7624 = vrot.slane %v7591, 4
        %v7625 = vsel %vm448, %v7599, %v7624
        %v7627 = vunpack.c.l.s4 1983009808
        %v7628 = vunpack.c.0.s8 %v7627
        %v7629 = vperm.slane %v7623, %v7628
        %v7631 = vunpack.c.l.s4 1983009808
        %v7632 = vunpack.c.0.s8 %v7631
        %v7633 = vperm.slane %v7625, %v7632
        %v7634 = vrot.slane %v7629, 4
        %v7635 = vsel %vm448, %v7634, %v7617
        %v7636 = vrot.slane %v7617, 4
        %v7637 = vsel %vm448, %v7629, %v7636
        %v7639 = vunpack.c.l.s4 1934713408
        %v7640 = vunpack.c.0.s8 %v7639
        %v7641 = vperm.slane %v7635, %v7640
        %v7643 = vunpack.c.l.s4 1934713408
        %v7644 = vunpack.c.0.s8 %v7643
        %v7645 = vperm.slane %v7637, %v7644
        %v7646 = vrot.slane %v7633, 4
        %v7647 = vsel %vm448, %v7646, %v7621
        %v7648 = vrot.slane %v7621, 4
        %v7649 = vsel %vm448, %v7633, %v7648
        %v7651 = vunpack.c.l.s4 1934713408
        %v7652 = vunpack.c.0.s8 %v7651
        %v7653 = vperm.slane %v7647, %v7652
        %v7655 = vunpack.c.l.s4 1934713408
        %v7656 = vunpack.c.0.s8 %v7655
        %v7657 = vperm.slane %v7649, %v7656
        %v7658 = vrot.slane %v7641, 4
        %v7659 = vsel %vm448, 0.0, %v7658
        %v7660 = vrot.slane %v7645, 4
        %v7661 = vsel %vm448, 0.0, %v7660
        %v7662 = vrot.slane %v7653, 4
        %v7663 = vsel %vm448, 0.0, %v7662
        %v7664 = vrot.slane %v7657, 4
        %v7665 = vsel %vm448, 0.0, %v7664
        %v7666 = vrot.slane %v7597, 4
        %v7667 = vsel %vm448, %v7666, %v7589
        %v7668 = vrot.slane %v7589, 4
        %v7669 = vsel %vm448, %v7597, %v7668
        %v7671 = vunpack.c.l.s4 1983009808
        %v7672 = vunpack.c.0.s8 %v7671
        %v7673 = vperm.slane %v7667, %v7672
        %v7675 = vunpack.c.l.s4 1983009808
        %v7676 = vunpack.c.0.s8 %v7675
        %v7677 = vperm.slane %v7669, %v7676
        %v7678 = vrot.slane %v7601, 4
        %v7679 = vsel %vm448, %v7678, %v7593
        %v7680 = vrot.slane %v7593, 4
        %v7681 = vsel %vm448, %v7601, %v7680
        %v7683 = vunpack.c.l.s4 1983009808
        %v7684 = vunpack.c.0.s8 %v7683
        %v7685 = vperm.slane %v7679, %v7684
        %v7687 = vunpack.c.l.s4 1983009808
        %v7688 = vunpack.c.0.s8 %v7687
        %v7689 = vperm.slane %v7681, %v7688
        %v7690 = vrot.slane %v7685, 4
        %v7691 = vsel %vm448, %v7690, %v7673
        %v7692 = vrot.slane %v7673, 4
        %v7693 = vsel %vm448, %v7685, %v7692
        %v7695 = vunpack.c.l.s4 1934713408
        %v7696 = vunpack.c.0.s8 %v7695
        %v7697 = vperm.slane %v7691, %v7696
        %v7699 = vunpack.c.l.s4 1934713408
        %v7700 = vunpack.c.0.s8 %v7699
        %v7701 = vperm.slane %v7693, %v7700
        %v7702 = vrot.slane %v7689, 4
        %v7703 = vsel %vm448, %v7702, %v7677
        %v7704 = vrot.slane %v7677, 4
        %v7705 = vsel %vm448, %v7689, %v7704
        %v7707 = vunpack.c.l.s4 1934713408
        %v7708 = vunpack.c.0.s8 %v7707
        %v7709 = vperm.slane %v7703, %v7708
        %v7711 = vunpack.c.l.s4 1934713408
        %v7712 = vunpack.c.0.s8 %v7711
        %v7713 = vperm.slane %v7705, %v7712
        %v7714 = vrot.slane %v7697, 4
        %v7715 = vsel %vm448, 0.0, %v7714
        %v7716 = vrot.slane %v7701, 4
        %v7717 = vsel %vm448, 0.0, %v7716
        %v7718 = vrot.slane %v7709, 4
        %v7719 = vsel %vm448, 0.0, %v7718
        %v7720 = vrot.slane %v7713, 4
        %v7721 = vsel %vm448, 0.0, %v7720
        %7723 = vrot.lane.b32.xlu0 %v7659, 16
        %v7724 = vpop.permute.xlu0 %7723
        %7727 = vrot.lane.b32.xlu0 %v7645, 32
        %v7728 = vpop.permute.xlu0 %7727
        %7731 = vrot.lane.b32.xlu0 %v7661, 48
        %v7732 = vpop.permute.xlu0 %7731
        %7735 = vrot.lane.b32.xlu0 %v7653, 64
        %v7736 = vpop.permute.xlu0 %7735
        %7739 = vrot.lane.b32.xlu0 %v7663, 80
        %v7740 = vpop.permute.xlu0 %7739
        %7743 = vrot.lane.b32.xlu0 %v7657, 96
        %v7744 = vpop.permute.xlu0 %7743
        %7747 = vrot.lane.b32.xlu0 %v7665, 112
        %v7748 = vpop.permute.xlu0 %7747
        %7751 = vrot.lane.b32.xlu0 %v7715, 16
        %v7752 = vpop.permute.xlu0 %7751
        %7755 = vrot.lane.b32.xlu0 %v7701, 32
        %v7756 = vpop.permute.xlu0 %7755
        %7759 = vrot.lane.b32.xlu0 %v7717, 48
        %v7760 = vpop.permute.xlu0 %7759
        %7763 = vrot.lane.b32.xlu0 %v7709, 64
        %v7764 = vpop.permute.xlu0 %7763
        %7767 = vrot.lane.b32.xlu0 %v7719, 80
        %v7768 = vpop.permute.xlu0 %7767
        %7771 = vrot.lane.b32.xlu0 %v7713, 96
        %v7772 = vpop.permute.xlu0 %7771
        %7775 = vrot.lane.b32.xlu0 %v7721, 112
        %v7776 = vpop.permute.xlu0 %7775
        %v7778 = vsel %vm616, %v7641, %v7724
        %v7779 = vsel %vm618, %v7778, %v7728
        %v7780 = vsel %vm620, %v7779, %v7732
        %v7781 = vsel %vm622, %v7780, %v7736
        %v7782 = vsel %vm624, %v7781, %v7740
        %v7783 = vsel %vm626, %v7782, %v7744
        %v7784 = vsel %vm628, %v7783, %v7748
        %v7785 = vsel %vm616, %v7697, %v7752
        %v7786 = vsel %vm618, %v7785, %v7756
        %v7787 = vsel %vm620, %v7786, %v7760
        %v7788 = vsel %vm622, %v7787, %v7764
        %v7789 = vsel %vm624, %v7788, %v7768
        %v7790 = vsel %vm626, %v7789, %v7772
        %v7791 = vsel %vm628, %v7790, %v7776
        %v7796 = vrot.slane %v7178, 1
        %v7797 = vrot.slane %v7179, 1
        %v7798 = vsel %vm1310, %v7796, %v7797
        %v7799 = vrot.slane %v7180, 1
        %v7800 = vsel %vm1310, %v7797, %v7799
        %v7801 = vrot.slane %v7181, 1
        %v7802 = vrot.slane %v7182, 1
        %v7803 = vsel %vm1310, %v7801, %v7802
        %v7804 = vrot.slane %v7183, 1
        %v7805 = vsel %vm1310, %v7802, %v7804
        %v7806 = vrot.slane %v7184, 1
        %v7807 = vrot.slane %v7185, 1
        %v7808 = vsel %vm1310, %v7806, %v7807
        %v7809 = vrot.slane %v7186, 1
        %v7810 = vsel %vm1310, %v7807, %v7809
        %v7811 = vrot.slane %v7187, 1
        %v7812 = vrot.slane %v7188, 1
        %v7813 = vsel %vm1310, %v7811, %v7812
        %v7814 = vrot.slane %v7189, 1
        %v7815 = vsel %vm1310, %v7812, %v7814
        %v7824 = vrot.slane %v7808, 4
        %v7825 = vsel %vm448, %v7824, %v7798
        %v7826 = vrot.slane %v7798, 4
        %v7827 = vsel %vm448, %v7808, %v7826
        %v7829 = vunpack.c.l.s4 1983009808
        %v7830 = vunpack.c.0.s8 %v7829
        %v7831 = vperm.slane %v7825, %v7830
        %v7833 = vunpack.c.l.s4 1983009808
        %v7834 = vunpack.c.0.s8 %v7833
        %v7835 = vperm.slane %v7827, %v7834
        %v7836 = vrot.slane %v7813, 4
        %v7837 = vsel %vm448, %v7836, %v7803
        %v7838 = vrot.slane %v7803, 4
        %v7839 = vsel %vm448, %v7813, %v7838
        %v7841 = vunpack.c.l.s4 1983009808
        %v7842 = vunpack.c.0.s8 %v7841
        %v7843 = vperm.slane %v7837, %v7842
        %v7845 = vunpack.c.l.s4 1983009808
        %v7846 = vunpack.c.0.s8 %v7845
        %v7847 = vperm.slane %v7839, %v7846
        %v7848 = vrot.slane %v7843, 4
        %v7849 = vsel %vm448, %v7848, %v7831
        %v7850 = vrot.slane %v7831, 4
        %v7851 = vsel %vm448, %v7843, %v7850
        %v7853 = vunpack.c.l.s4 1934713408
        %v7854 = vunpack.c.0.s8 %v7853
        %v7855 = vperm.slane %v7849, %v7854
        %v7857 = vunpack.c.l.s4 1934713408
        %v7858 = vunpack.c.0.s8 %v7857
        %v7859 = vperm.slane %v7851, %v7858
        %v7860 = vrot.slane %v7847, 4
        %v7861 = vsel %vm448, %v7860, %v7835
        %v7862 = vrot.slane %v7835, 4
        %v7863 = vsel %vm448, %v7847, %v7862
        %v7865 = vunpack.c.l.s4 1934713408
        %v7866 = vunpack.c.0.s8 %v7865
        %v7867 = vperm.slane %v7861, %v7866
        %v7869 = vunpack.c.l.s4 1934713408
        %v7870 = vunpack.c.0.s8 %v7869
        %v7871 = vperm.slane %v7863, %v7870
        %v7872 = vrot.slane %v7855, 4
        %v7873 = vsel %vm448, 0.0, %v7872
        %v7874 = vrot.slane %v7859, 4
        %v7875 = vsel %vm448, 0.0, %v7874
        %v7876 = vrot.slane %v7867, 4
        %v7877 = vsel %vm448, 0.0, %v7876
        %v7878 = vrot.slane %v7871, 4
        %v7879 = vsel %vm448, 0.0, %v7878
        %v7880 = vrot.slane %v7810, 4
        %v7881 = vsel %vm448, %v7880, %v7800
        %v7882 = vrot.slane %v7800, 4
        %v7883 = vsel %vm448, %v7810, %v7882
        %v7885 = vunpack.c.l.s4 1983009808
        %v7886 = vunpack.c.0.s8 %v7885
        %v7887 = vperm.slane %v7881, %v7886
        %v7889 = vunpack.c.l.s4 1983009808
        %v7890 = vunpack.c.0.s8 %v7889
        %v7891 = vperm.slane %v7883, %v7890
        %v7892 = vrot.slane %v7815, 4
        %v7893 = vsel %vm448, %v7892, %v7805
        %v7894 = vrot.slane %v7805, 4
        %v7895 = vsel %vm448, %v7815, %v7894
        %v7897 = vunpack.c.l.s4 1983009808
        %v7898 = vunpack.c.0.s8 %v7897
        %v7899 = vperm.slane %v7893, %v7898
        %v7901 = vunpack.c.l.s4 1983009808
        %v7902 = vunpack.c.0.s8 %v7901
        %v7903 = vperm.slane %v7895, %v7902
        %v7904 = vrot.slane %v7899, 4
        %v7905 = vsel %vm448, %v7904, %v7887
        %v7906 = vrot.slane %v7887, 4
        %v7907 = vsel %vm448, %v7899, %v7906
        %v7909 = vunpack.c.l.s4 1934713408
        %v7910 = vunpack.c.0.s8 %v7909
        %v7911 = vperm.slane %v7905, %v7910
        %v7913 = vunpack.c.l.s4 1934713408
        %v7914 = vunpack.c.0.s8 %v7913
        %v7915 = vperm.slane %v7907, %v7914
        %v7916 = vrot.slane %v7903, 4
        %v7917 = vsel %vm448, %v7916, %v7891
        %v7918 = vrot.slane %v7891, 4
        %v7919 = vsel %vm448, %v7903, %v7918
        %v7921 = vunpack.c.l.s4 1934713408
        %v7922 = vunpack.c.0.s8 %v7921
        %v7923 = vperm.slane %v7917, %v7922
        %v7925 = vunpack.c.l.s4 1934713408
        %v7926 = vunpack.c.0.s8 %v7925
        %v7927 = vperm.slane %v7919, %v7926
        %v7928 = vrot.slane %v7911, 4
        %v7929 = vsel %vm448, 0.0, %v7928
        %v7930 = vrot.slane %v7915, 4
        %v7931 = vsel %vm448, 0.0, %v7930
        %v7932 = vrot.slane %v7923, 4
        %v7933 = vsel %vm448, 0.0, %v7932
        %v7934 = vrot.slane %v7927, 4
        %v7935 = vsel %vm448, 0.0, %v7934
        %7937 = vrot.lane.b32.xlu0 %v7873, 16
        %v7938 = vpop.permute.xlu0 %7937
        %7941 = vrot.lane.b32.xlu0 %v7859, 32
        %v7942 = vpop.permute.xlu0 %7941
        %7945 = vrot.lane.b32.xlu0 %v7875, 48
        %v7946 = vpop.permute.xlu0 %7945
        %7949 = vrot.lane.b32.xlu0 %v7867, 64
        %v7950 = vpop.permute.xlu0 %7949
        %7953 = vrot.lane.b32.xlu0 %v7877, 80
        %v7954 = vpop.permute.xlu0 %7953
        %7957 = vrot.lane.b32.xlu0 %v7871, 96
        %v7958 = vpop.permute.xlu0 %7957
        %7961 = vrot.lane.b32.xlu0 %v7879, 112
        %v7962 = vpop.permute.xlu0 %7961
        %7965 = vrot.lane.b32.xlu0 %v7929, 16
        %v7966 = vpop.permute.xlu0 %7965
        %7969 = vrot.lane.b32.xlu0 %v7915, 32
        %v7970 = vpop.permute.xlu0 %7969
        %7973 = vrot.lane.b32.xlu0 %v7931, 48
        %v7974 = vpop.permute.xlu0 %7973
        %7977 = vrot.lane.b32.xlu0 %v7923, 64
        %v7978 = vpop.permute.xlu0 %7977
        %7981 = vrot.lane.b32.xlu0 %v7933, 80
        %v7982 = vpop.permute.xlu0 %7981
        %7985 = vrot.lane.b32.xlu0 %v7927, 96
        %v7986 = vpop.permute.xlu0 %7985
        %7989 = vrot.lane.b32.xlu0 %v7935, 112
        %v7990 = vpop.permute.xlu0 %7989
        %v7992 = vsel %vm616, %v7855, %v7938
        %v7993 = vsel %vm618, %v7992, %v7942
        %v7994 = vsel %vm620, %v7993, %v7946
        %v7995 = vsel %vm622, %v7994, %v7950
        %v7996 = vsel %vm624, %v7995, %v7954
        %v7997 = vsel %vm626, %v7996, %v7958
        %v7998 = vsel %vm628, %v7997, %v7962
        %v7999 = vsel %vm616, %v7911, %v7966
        %v8000 = vsel %vm618, %v7999, %v7970
        %v8001 = vsel %vm620, %v8000, %v7974
        %v8002 = vsel %vm622, %v8001, %v7978
        %v8003 = vsel %vm624, %v8002, %v7982
        %v8004 = vsel %vm626, %v8003, %v7986
        %v8005 = vsel %vm628, %v8004, %v7990
        %8006 = vrot.lane.b32.xlu0 %v7798, 127
        %v8007 = vpop.permute.xlu0 %8006
        %8008 = vrot.lane.b32.xlu0 %v7800, 127
        %v8009 = vpop.permute.xlu0 %8008
        %8010 = vrot.lane.b32.xlu0 %v7803, 127
        %v8011 = vpop.permute.xlu0 %8010
        %8012 = vrot.lane.b32.xlu0 %v7805, 127
        %v8013 = vpop.permute.xlu0 %8012
        %8014 = vrot.lane.b32.xlu0 %v7808, 127
        %v8015 = vpop.permute.xlu0 %8014
        %8016 = vrot.lane.b32.xlu0 %v7810, 127
        %v8017 = vpop.permute.xlu0 %8016
        %8018 = vrot.lane.b32.xlu0 %v7813, 127
        %v8019 = vpop.permute.xlu0 %8018
        %8020 = vrot.lane.b32.xlu0 %v7815, 127
        %v8021 = vpop.permute.xlu0 %8020
        %v8030 = vrot.slane %v8015, 4
        %v8031 = vsel %vm448, %v8030, %v8007
        %v8032 = vrot.slane %v8007, 4
        %v8033 = vsel %vm448, %v8015, %v8032
        %v8035 = vunpack.c.l.s4 1983009808
        %v8036 = vunpack.c.0.s8 %v8035
        %v8037 = vperm.slane %v8031, %v8036
        %v8039 = vunpack.c.l.s4 1983009808
        %v8040 = vunpack.c.0.s8 %v8039
        %v8041 = vperm.slane %v8033, %v8040
        %v8042 = vrot.slane %v8019, 4
        %v8043 = vsel %vm448, %v8042, %v8011
        %v8044 = vrot.slane %v8011, 4
        %v8045 = vsel %vm448, %v8019, %v8044
        %v8047 = vunpack.c.l.s4 1983009808
        %v8048 = vunpack.c.0.s8 %v8047
        %v8049 = vperm.slane %v8043, %v8048
        %v8051 = vunpack.c.l.s4 1983009808
        %v8052 = vunpack.c.0.s8 %v8051
        %v8053 = vperm.slane %v8045, %v8052
        %v8054 = vrot.slane %v8049, 4
        %v8055 = vsel %vm448, %v8054, %v8037
        %v8056 = vrot.slane %v8037, 4
        %v8057 = vsel %vm448, %v8049, %v8056
        %v8059 = vunpack.c.l.s4 1934713408
        %v8060 = vunpack.c.0.s8 %v8059
        %v8061 = vperm.slane %v8055, %v8060
        %v8063 = vunpack.c.l.s4 1934713408
        %v8064 = vunpack.c.0.s8 %v8063
        %v8065 = vperm.slane %v8057, %v8064
        %v8066 = vrot.slane %v8053, 4
        %v8067 = vsel %vm448, %v8066, %v8041
        %v8068 = vrot.slane %v8041, 4
        %v8069 = vsel %vm448, %v8053, %v8068
        %v8071 = vunpack.c.l.s4 1934713408
        %v8072 = vunpack.c.0.s8 %v8071
        %v8073 = vperm.slane %v8067, %v8072
        %v8075 = vunpack.c.l.s4 1934713408
        %v8076 = vunpack.c.0.s8 %v8075
        %v8077 = vperm.slane %v8069, %v8076
        %v8078 = vrot.slane %v8061, 4
        %v8079 = vsel %vm448, 0.0, %v8078
        %v8080 = vrot.slane %v8065, 4
        %v8081 = vsel %vm448, 0.0, %v8080
        %v8082 = vrot.slane %v8073, 4
        %v8083 = vsel %vm448, 0.0, %v8082
        %v8084 = vrot.slane %v8077, 4
        %v8085 = vsel %vm448, 0.0, %v8084
        %v8086 = vrot.slane %v8017, 4
        %v8087 = vsel %vm448, %v8086, %v8009
        %v8088 = vrot.slane %v8009, 4
        %v8089 = vsel %vm448, %v8017, %v8088
        %v8091 = vunpack.c.l.s4 1983009808
        %v8092 = vunpack.c.0.s8 %v8091
        %v8093 = vperm.slane %v8087, %v8092
        %v8095 = vunpack.c.l.s4 1983009808
        %v8096 = vunpack.c.0.s8 %v8095
        %v8097 = vperm.slane %v8089, %v8096
        %v8098 = vrot.slane %v8021, 4
        %v8099 = vsel %vm448, %v8098, %v8013
        %v8100 = vrot.slane %v8013, 4
        %v8101 = vsel %vm448, %v8021, %v8100
        %v8103 = vunpack.c.l.s4 1983009808
        %v8104 = vunpack.c.0.s8 %v8103
        %v8105 = vperm.slane %v8099, %v8104
        %v8107 = vunpack.c.l.s4 1983009808
        %v8108 = vunpack.c.0.s8 %v8107
        %v8109 = vperm.slane %v8101, %v8108
        %v8110 = vrot.slane %v8105, 4
        %v8111 = vsel %vm448, %v8110, %v8093
        %v8112 = vrot.slane %v8093, 4
        %v8113 = vsel %vm448, %v8105, %v8112
        %v8115 = vunpack.c.l.s4 1934713408
        %v8116 = vunpack.c.0.s8 %v8115
        %v8117 = vperm.slane %v8111, %v8116
        %v8119 = vunpack.c.l.s4 1934713408
        %v8120 = vunpack.c.0.s8 %v8119
        %v8121 = vperm.slane %v8113, %v8120
        %v8122 = vrot.slane %v8109, 4
        %v8123 = vsel %vm448, %v8122, %v8097
        %v8124 = vrot.slane %v8097, 4
        %v8125 = vsel %vm448, %v8109, %v8124
        %v8127 = vunpack.c.l.s4 1934713408
        %v8128 = vunpack.c.0.s8 %v8127
        %v8129 = vperm.slane %v8123, %v8128
        %v8131 = vunpack.c.l.s4 1934713408
        %v8132 = vunpack.c.0.s8 %v8131
        %v8133 = vperm.slane %v8125, %v8132
        %v8134 = vrot.slane %v8117, 4
        %v8135 = vsel %vm448, 0.0, %v8134
        %v8136 = vrot.slane %v8121, 4
        %v8137 = vsel %vm448, 0.0, %v8136
        %v8138 = vrot.slane %v8129, 4
        %v8139 = vsel %vm448, 0.0, %v8138
        %v8140 = vrot.slane %v8133, 4
        %v8141 = vsel %vm448, 0.0, %v8140
        %8143 = vrot.lane.b32.xlu0 %v8079, 16
        %v8144 = vpop.permute.xlu0 %8143
        %8147 = vrot.lane.b32.xlu0 %v8065, 32
        %v8148 = vpop.permute.xlu0 %8147
        %8151 = vrot.lane.b32.xlu0 %v8081, 48
        %v8152 = vpop.permute.xlu0 %8151
        %8155 = vrot.lane.b32.xlu0 %v8073, 64
        %v8156 = vpop.permute.xlu0 %8155
        %8159 = vrot.lane.b32.xlu0 %v8083, 80
        %v8160 = vpop.permute.xlu0 %8159
        %8163 = vrot.lane.b32.xlu0 %v8077, 96
        %v8164 = vpop.permute.xlu0 %8163
        %8167 = vrot.lane.b32.xlu0 %v8085, 112
        %v8168 = vpop.permute.xlu0 %8167
        %8171 = vrot.lane.b32.xlu0 %v8135, 16
        %v8172 = vpop.permute.xlu0 %8171
        %8175 = vrot.lane.b32.xlu0 %v8121, 32
        %v8176 = vpop.permute.xlu0 %8175
        %8179 = vrot.lane.b32.xlu0 %v8137, 48
        %v8180 = vpop.permute.xlu0 %8179
        %8183 = vrot.lane.b32.xlu0 %v8129, 64
        %v8184 = vpop.permute.xlu0 %8183
        %8187 = vrot.lane.b32.xlu0 %v8139, 80
        %v8188 = vpop.permute.xlu0 %8187
        %8191 = vrot.lane.b32.xlu0 %v8133, 96
        %v8192 = vpop.permute.xlu0 %8191
        %8195 = vrot.lane.b32.xlu0 %v8141, 112
        %v8196 = vpop.permute.xlu0 %8195
        %v8198 = vsel %vm616, %v8061, %v8144
        %v8199 = vsel %vm618, %v8198, %v8148
        %v8200 = vsel %vm620, %v8199, %v8152
        %v8201 = vsel %vm622, %v8200, %v8156
        %v8202 = vsel %vm624, %v8201, %v8160
        %v8203 = vsel %vm626, %v8202, %v8164
        %v8204 = vsel %vm628, %v8203, %v8168
        %v8205 = vsel %vm616, %v8117, %v8172
        %v8206 = vsel %vm618, %v8205, %v8176
        %v8207 = vsel %vm620, %v8206, %v8180
        %v8208 = vsel %vm622, %v8207, %v8184
        %v8209 = vsel %vm624, %v8208, %v8188
        %v8210 = vsel %vm626, %v8209, %v8192
        %v8211 = vsel %vm628, %v8210, %v8196
        %8212 = vrot.lane.b32.xlu0 %v7798, 126
        %v8213 = vpop.permute.xlu0 %8212
        %8214 = vrot.lane.b32.xlu0 %v7800, 126
        %v8215 = vpop.permute.xlu0 %8214
        %8216 = vrot.lane.b32.xlu0 %v7803, 126
        %v8217 = vpop.permute.xlu0 %8216
        %8218 = vrot.lane.b32.xlu0 %v7805, 126
        %v8219 = vpop.permute.xlu0 %8218
        %8220 = vrot.lane.b32.xlu0 %v7808, 126
        %v8221 = vpop.permute.xlu0 %8220
        %8222 = vrot.lane.b32.xlu0 %v7810, 126
        %v8223 = vpop.permute.xlu0 %8222
        %8224 = vrot.lane.b32.xlu0 %v7813, 126
        %v8225 = vpop.permute.xlu0 %8224
        %8226 = vrot.lane.b32.xlu0 %v7815, 126
        %v8227 = vpop.permute.xlu0 %8226
        %v8236 = vrot.slane %v8221, 4
        %v8237 = vsel %vm448, %v8236, %v8213
        %v8238 = vrot.slane %v8213, 4
        %v8239 = vsel %vm448, %v8221, %v8238
        %v8241 = vunpack.c.l.s4 1983009808
        %v8242 = vunpack.c.0.s8 %v8241
        %v8243 = vperm.slane %v8237, %v8242
        %v8245 = vunpack.c.l.s4 1983009808
        %v8246 = vunpack.c.0.s8 %v8245
        %v8247 = vperm.slane %v8239, %v8246
        %v8248 = vrot.slane %v8225, 4
        %v8249 = vsel %vm448, %v8248, %v8217
        %v8250 = vrot.slane %v8217, 4
        %v8251 = vsel %vm448, %v8225, %v8250
        %v8253 = vunpack.c.l.s4 1983009808
        %v8254 = vunpack.c.0.s8 %v8253
        %v8255 = vperm.slane %v8249, %v8254
        %v8257 = vunpack.c.l.s4 1983009808
        %v8258 = vunpack.c.0.s8 %v8257
        %v8259 = vperm.slane %v8251, %v8258
        %v8260 = vrot.slane %v8255, 4
        %v8261 = vsel %vm448, %v8260, %v8243
        %v8262 = vrot.slane %v8243, 4
        %v8263 = vsel %vm448, %v8255, %v8262
        %v8265 = vunpack.c.l.s4 1934713408
        %v8266 = vunpack.c.0.s8 %v8265
        %v8267 = vperm.slane %v8261, %v8266
        %v8269 = vunpack.c.l.s4 1934713408
        %v8270 = vunpack.c.0.s8 %v8269
        %v8271 = vperm.slane %v8263, %v8270
        %v8272 = vrot.slane %v8259, 4
        %v8273 = vsel %vm448, %v8272, %v8247
        %v8274 = vrot.slane %v8247, 4
        %v8275 = vsel %vm448, %v8259, %v8274
        %v8277 = vunpack.c.l.s4 1934713408
        %v8278 = vunpack.c.0.s8 %v8277
        %v8279 = vperm.slane %v8273, %v8278
        %v8281 = vunpack.c.l.s4 1934713408
        %v8282 = vunpack.c.0.s8 %v8281
        %v8283 = vperm.slane %v8275, %v8282
        %v8284 = vrot.slane %v8267, 4
        %v8285 = vsel %vm448, 0.0, %v8284
        %v8286 = vrot.slane %v8271, 4
        %v8287 = vsel %vm448, 0.0, %v8286
        %v8288 = vrot.slane %v8279, 4
        %v8289 = vsel %vm448, 0.0, %v8288
        %v8290 = vrot.slane %v8283, 4
        %v8291 = vsel %vm448, 0.0, %v8290
        %v8292 = vrot.slane %v8223, 4
        %v8293 = vsel %vm448, %v8292, %v8215
        %v8294 = vrot.slane %v8215, 4
        %v8295 = vsel %vm448, %v8223, %v8294
        %v8297 = vunpack.c.l.s4 1983009808
        %v8298 = vunpack.c.0.s8 %v8297
        %v8299 = vperm.slane %v8293, %v8298
        %v8301 = vunpack.c.l.s4 1983009808
        %v8302 = vunpack.c.0.s8 %v8301
        %v8303 = vperm.slane %v8295, %v8302
        %v8304 = vrot.slane %v8227, 4
        %v8305 = vsel %vm448, %v8304, %v8219
        %v8306 = vrot.slane %v8219, 4
        %v8307 = vsel %vm448, %v8227, %v8306
        %v8309 = vunpack.c.l.s4 1983009808
        %v8310 = vunpack.c.0.s8 %v8309
        %v8311 = vperm.slane %v8305, %v8310
        %v8313 = vunpack.c.l.s4 1983009808
        %v8314 = vunpack.c.0.s8 %v8313
        %v8315 = vperm.slane %v8307, %v8314
        %v8316 = vrot.slane %v8311, 4
        %v8317 = vsel %vm448, %v8316, %v8299
        %v8318 = vrot.slane %v8299, 4
        %v8319 = vsel %vm448, %v8311, %v8318
        %v8321 = vunpack.c.l.s4 1934713408
        %v8322 = vunpack.c.0.s8 %v8321
        %v8323 = vperm.slane %v8317, %v8322
        %v8325 = vunpack.c.l.s4 1934713408
        %v8326 = vunpack.c.0.s8 %v8325
        %v8327 = vperm.slane %v8319, %v8326
        %v8328 = vrot.slane %v8315, 4
        %v8329 = vsel %vm448, %v8328, %v8303
        %v8330 = vrot.slane %v8303, 4
        %v8331 = vsel %vm448, %v8315, %v8330
        %v8333 = vunpack.c.l.s4 1934713408
        %v8334 = vunpack.c.0.s8 %v8333
        %v8335 = vperm.slane %v8329, %v8334
        %v8337 = vunpack.c.l.s4 1934713408
        %v8338 = vunpack.c.0.s8 %v8337
        %v8339 = vperm.slane %v8331, %v8338
        %v8340 = vrot.slane %v8323, 4
        %v8341 = vsel %vm448, 0.0, %v8340
        %v8342 = vrot.slane %v8327, 4
        %v8343 = vsel %vm448, 0.0, %v8342
        %v8344 = vrot.slane %v8335, 4
        %v8345 = vsel %vm448, 0.0, %v8344
        %v8346 = vrot.slane %v8339, 4
        %v8347 = vsel %vm448, 0.0, %v8346
        %8349 = vrot.lane.b32.xlu0 %v8285, 16
        %v8350 = vpop.permute.xlu0 %8349
        %8353 = vrot.lane.b32.xlu0 %v8271, 32
        %v8354 = vpop.permute.xlu0 %8353
        %8357 = vrot.lane.b32.xlu0 %v8287, 48
        %v8358 = vpop.permute.xlu0 %8357
        %8361 = vrot.lane.b32.xlu0 %v8279, 64
        %v8362 = vpop.permute.xlu0 %8361
        %8365 = vrot.lane.b32.xlu0 %v8289, 80
        %v8366 = vpop.permute.xlu0 %8365
        %8369 = vrot.lane.b32.xlu0 %v8283, 96
        %v8370 = vpop.permute.xlu0 %8369
        %8373 = vrot.lane.b32.xlu0 %v8291, 112
        %v8374 = vpop.permute.xlu0 %8373
        %8377 = vrot.lane.b32.xlu0 %v8341, 16
        %v8378 = vpop.permute.xlu0 %8377
        %8381 = vrot.lane.b32.xlu0 %v8327, 32
        %v8382 = vpop.permute.xlu0 %8381
        %8385 = vrot.lane.b32.xlu0 %v8343, 48
        %v8386 = vpop.permute.xlu0 %8385
        %8389 = vrot.lane.b32.xlu0 %v8335, 64
        %v8390 = vpop.permute.xlu0 %8389
        %8393 = vrot.lane.b32.xlu0 %v8345, 80
        %v8394 = vpop.permute.xlu0 %8393
        %8397 = vrot.lane.b32.xlu0 %v8339, 96
        %v8398 = vpop.permute.xlu0 %8397
        %8401 = vrot.lane.b32.xlu0 %v8347, 112
        %v8402 = vpop.permute.xlu0 %8401
        %v8404 = vsel %vm616, %v8267, %v8350
        %v8405 = vsel %vm618, %v8404, %v8354
        %v8406 = vsel %vm620, %v8405, %v8358
        %v8407 = vsel %vm622, %v8406, %v8362
        %v8408 = vsel %vm624, %v8407, %v8366
        %v8409 = vsel %vm626, %v8408, %v8370
        %v8410 = vsel %vm628, %v8409, %v8374
        %v8411 = vsel %vm616, %v8323, %v8378
        %v8412 = vsel %vm618, %v8411, %v8382
        %v8413 = vsel %vm620, %v8412, %v8386
        %v8414 = vsel %vm622, %v8413, %v8390
        %v8415 = vsel %vm624, %v8414, %v8394
        %v8416 = vsel %vm626, %v8415, %v8398
        %v8417 = vsel %vm628, %v8416, %v8402
        %v8418 = vrot.slane %v7178, 2
        %v8419 = vrot.slane %v7179, 2
        %v8420 = vsel %vm1933, %v8418, %v8419
        %v8421 = vrot.slane %v7180, 2
        %v8422 = vsel %vm1933, %v8419, %v8421
        %v8423 = vrot.slane %v7181, 2
        %v8424 = vrot.slane %v7182, 2
        %v8425 = vsel %vm1933, %v8423, %v8424
        %v8426 = vrot.slane %v7183, 2
        %v8427 = vsel %vm1933, %v8424, %v8426
        %v8428 = vrot.slane %v7184, 2
        %v8429 = vrot.slane %v7185, 2
        %v8430 = vsel %vm1933, %v8428, %v8429
        %v8431 = vrot.slane %v7186, 2
        %v8432 = vsel %vm1933, %v8429, %v8431
        %v8433 = vrot.slane %v7187, 2
        %v8434 = vrot.slane %v7188, 2
        %v8435 = vsel %vm1933, %v8433, %v8434
        %v8436 = vrot.slane %v7189, 2
        %v8437 = vsel %vm1933, %v8434, %v8436
        %v8446 = vrot.slane %v8430, 4
        %v8447 = vsel %vm448, %v8446, %v8420
        %v8448 = vrot.slane %v8420, 4
        %v8449 = vsel %vm448, %v8430, %v8448
        %v8451 = vunpack.c.l.s4 1983009808
        %v8452 = vunpack.c.0.s8 %v8451
        %v8453 = vperm.slane %v8447, %v8452
        %v8455 = vunpack.c.l.s4 1983009808
        %v8456 = vunpack.c.0.s8 %v8455
        %v8457 = vperm.slane %v8449, %v8456
        %v8458 = vrot.slane %v8435, 4
        %v8459 = vsel %vm448, %v8458, %v8425
        %v8460 = vrot.slane %v8425, 4
        %v8461 = vsel %vm448, %v8435, %v8460
        %v8463 = vunpack.c.l.s4 1983009808
        %v8464 = vunpack.c.0.s8 %v8463
        %v8465 = vperm.slane %v8459, %v8464
        %v8467 = vunpack.c.l.s4 1983009808
        %v8468 = vunpack.c.0.s8 %v8467
        %v8469 = vperm.slane %v8461, %v8468
        %v8470 = vrot.slane %v8465, 4
        %v8471 = vsel %vm448, %v8470, %v8453
        %v8472 = vrot.slane %v8453, 4
        %v8473 = vsel %vm448, %v8465, %v8472
        %v8475 = vunpack.c.l.s4 1934713408
        %v8476 = vunpack.c.0.s8 %v8475
        %v8477 = vperm.slane %v8471, %v8476
        %v8479 = vunpack.c.l.s4 1934713408
        %v8480 = vunpack.c.0.s8 %v8479
        %v8481 = vperm.slane %v8473, %v8480
        %v8482 = vrot.slane %v8469, 4
        %v8483 = vsel %vm448, %v8482, %v8457
        %v8484 = vrot.slane %v8457, 4
        %v8485 = vsel %vm448, %v8469, %v8484
        %v8487 = vunpack.c.l.s4 1934713408
        %v8488 = vunpack.c.0.s8 %v8487
        %v8489 = vperm.slane %v8483, %v8488
        %v8491 = vunpack.c.l.s4 1934713408
        %v8492 = vunpack.c.0.s8 %v8491
        %v8493 = vperm.slane %v8485, %v8492
        %v8494 = vrot.slane %v8477, 4
        %v8495 = vsel %vm448, 0.0, %v8494
        %v8496 = vrot.slane %v8481, 4
        %v8497 = vsel %vm448, 0.0, %v8496
        %v8498 = vrot.slane %v8489, 4
        %v8499 = vsel %vm448, 0.0, %v8498
        %v8500 = vrot.slane %v8493, 4
        %v8501 = vsel %vm448, 0.0, %v8500
        %v8502 = vrot.slane %v8432, 4
        %v8503 = vsel %vm448, %v8502, %v8422
        %v8504 = vrot.slane %v8422, 4
        %v8505 = vsel %vm448, %v8432, %v8504
        %v8507 = vunpack.c.l.s4 1983009808
        %v8508 = vunpack.c.0.s8 %v8507
        %v8509 = vperm.slane %v8503, %v8508
        %v8511 = vunpack.c.l.s4 1983009808
        %v8512 = vunpack.c.0.s8 %v8511
        %v8513 = vperm.slane %v8505, %v8512
        %v8514 = vrot.slane %v8437, 4
        %v8515 = vsel %vm448, %v8514, %v8427
        %v8516 = vrot.slane %v8427, 4
        %v8517 = vsel %vm448, %v8437, %v8516
        %v8519 = vunpack.c.l.s4 1983009808
        %v8520 = vunpack.c.0.s8 %v8519
        %v8521 = vperm.slane %v8515, %v8520
        %v8523 = vunpack.c.l.s4 1983009808
        %v8524 = vunpack.c.0.s8 %v8523
        %v8525 = vperm.slane %v8517, %v8524
        %v8526 = vrot.slane %v8521, 4
        %v8527 = vsel %vm448, %v8526, %v8509
        %v8528 = vrot.slane %v8509, 4
        %v8529 = vsel %vm448, %v8521, %v8528
        %v8531 = vunpack.c.l.s4 1934713408
        %v8532 = vunpack.c.0.s8 %v8531
        %v8533 = vperm.slane %v8527, %v8532
        %v8535 = vunpack.c.l.s4 1934713408
        %v8536 = vunpack.c.0.s8 %v8535
        %v8537 = vperm.slane %v8529, %v8536
        %v8538 = vrot.slane %v8525, 4
        %v8539 = vsel %vm448, %v8538, %v8513
        %v8540 = vrot.slane %v8513, 4
        %v8541 = vsel %vm448, %v8525, %v8540
        %v8543 = vunpack.c.l.s4 1934713408
        %v8544 = vunpack.c.0.s8 %v8543
        %v8545 = vperm.slane %v8539, %v8544
        %v8547 = vunpack.c.l.s4 1934713408
        %v8548 = vunpack.c.0.s8 %v8547
        %v8549 = vperm.slane %v8541, %v8548
        %v8550 = vrot.slane %v8533, 4
        %v8551 = vsel %vm448, 0.0, %v8550
        %v8552 = vrot.slane %v8537, 4
        %v8553 = vsel %vm448, 0.0, %v8552
        %v8554 = vrot.slane %v8545, 4
        %v8555 = vsel %vm448, 0.0, %v8554
        %v8556 = vrot.slane %v8549, 4
        %v8557 = vsel %vm448, 0.0, %v8556
        %8559 = vrot.lane.b32.xlu0 %v8495, 16
        %v8560 = vpop.permute.xlu0 %8559
        %8563 = vrot.lane.b32.xlu0 %v8481, 32
        %v8564 = vpop.permute.xlu0 %8563
        %8567 = vrot.lane.b32.xlu0 %v8497, 48
        %v8568 = vpop.permute.xlu0 %8567
        %8571 = vrot.lane.b32.xlu0 %v8489, 64
        %v8572 = vpop.permute.xlu0 %8571
        %8575 = vrot.lane.b32.xlu0 %v8499, 80
        %v8576 = vpop.permute.xlu0 %8575
        %8579 = vrot.lane.b32.xlu0 %v8493, 96
        %v8580 = vpop.permute.xlu0 %8579
        %8583 = vrot.lane.b32.xlu0 %v8501, 112
        %v8584 = vpop.permute.xlu0 %8583
        %8587 = vrot.lane.b32.xlu0 %v8551, 16
        %v8588 = vpop.permute.xlu0 %8587
        %8591 = vrot.lane.b32.xlu0 %v8537, 32
        %v8592 = vpop.permute.xlu0 %8591
        %8595 = vrot.lane.b32.xlu0 %v8553, 48
        %v8596 = vpop.permute.xlu0 %8595
        %8599 = vrot.lane.b32.xlu0 %v8545, 64
        %v8600 = vpop.permute.xlu0 %8599
        %8603 = vrot.lane.b32.xlu0 %v8555, 80
        %v8604 = vpop.permute.xlu0 %8603
        %8607 = vrot.lane.b32.xlu0 %v8549, 96
        %v8608 = vpop.permute.xlu0 %8607
        %8611 = vrot.lane.b32.xlu0 %v8557, 112
        %v8612 = vpop.permute.xlu0 %8611
        %v8614 = vsel %vm616, %v8477, %v8560
        %v8615 = vsel %vm618, %v8614, %v8564
        %v8616 = vsel %vm620, %v8615, %v8568
        %v8617 = vsel %vm622, %v8616, %v8572
        %v8618 = vsel %vm624, %v8617, %v8576
        %v8619 = vsel %vm626, %v8618, %v8580
        %v8620 = vsel %vm628, %v8619, %v8584
        %v8621 = vsel %vm616, %v8533, %v8588
        %v8622 = vsel %vm618, %v8621, %v8592
        %v8623 = vsel %vm620, %v8622, %v8596
        %v8624 = vsel %vm622, %v8623, %v8600
        %v8625 = vsel %vm624, %v8624, %v8604
        %v8626 = vsel %vm626, %v8625, %v8608
        %v8627 = vsel %vm628, %v8626, %v8612
        %8628 = vrot.lane.b32.xlu0 %v8420, 127
        %v8629 = vpop.permute.xlu0 %8628
        %8630 = vrot.lane.b32.xlu0 %v8422, 127
        %v8631 = vpop.permute.xlu0 %8630
        %8632 = vrot.lane.b32.xlu0 %v8425, 127
        %v8633 = vpop.permute.xlu0 %8632
        %8634 = vrot.lane.b32.xlu0 %v8427, 127
        %v8635 = vpop.permute.xlu0 %8634
        %8636 = vrot.lane.b32.xlu0 %v8430, 127
        %v8637 = vpop.permute.xlu0 %8636
        %8638 = vrot.lane.b32.xlu0 %v8432, 127
        %v8639 = vpop.permute.xlu0 %8638
        %8640 = vrot.lane.b32.xlu0 %v8435, 127
        %v8641 = vpop.permute.xlu0 %8640
        %8642 = vrot.lane.b32.xlu0 %v8437, 127
        %v8643 = vpop.permute.xlu0 %8642
        %v8652 = vrot.slane %v8637, 4
        %v8653 = vsel %vm448, %v8652, %v8629
        %v8654 = vrot.slane %v8629, 4
        %v8655 = vsel %vm448, %v8637, %v8654
        %v8657 = vunpack.c.l.s4 1983009808
        %v8658 = vunpack.c.0.s8 %v8657
        %v8659 = vperm.slane %v8653, %v8658
        %v8661 = vunpack.c.l.s4 1983009808
        %v8662 = vunpack.c.0.s8 %v8661
        %v8663 = vperm.slane %v8655, %v8662
        %v8664 = vrot.slane %v8641, 4
        %v8665 = vsel %vm448, %v8664, %v8633
        %v8666 = vrot.slane %v8633, 4
        %v8667 = vsel %vm448, %v8641, %v8666
        %v8669 = vunpack.c.l.s4 1983009808
        %v8670 = vunpack.c.0.s8 %v8669
        %v8671 = vperm.slane %v8665, %v8670
        %v8673 = vunpack.c.l.s4 1983009808
        %v8674 = vunpack.c.0.s8 %v8673
        %v8675 = vperm.slane %v8667, %v8674
        %v8676 = vrot.slane %v8671, 4
        %v8677 = vsel %vm448, %v8676, %v8659
        %v8678 = vrot.slane %v8659, 4
        %v8679 = vsel %vm448, %v8671, %v8678
        %v8681 = vunpack.c.l.s4 1934713408
        %v8682 = vunpack.c.0.s8 %v8681
        %v8683 = vperm.slane %v8677, %v8682
        %v8685 = vunpack.c.l.s4 1934713408
        %v8686 = vunpack.c.0.s8 %v8685
        %v8687 = vperm.slane %v8679, %v8686
        %v8688 = vrot.slane %v8675, 4
        %v8689 = vsel %vm448, %v8688, %v8663
        %v8690 = vrot.slane %v8663, 4
        %v8691 = vsel %vm448, %v8675, %v8690
        %v8693 = vunpack.c.l.s4 1934713408
        %v8694 = vunpack.c.0.s8 %v8693
        %v8695 = vperm.slane %v8689, %v8694
        %v8697 = vunpack.c.l.s4 1934713408
        %v8698 = vunpack.c.0.s8 %v8697
        %v8699 = vperm.slane %v8691, %v8698
        %v8700 = vrot.slane %v8683, 4
        %v8701 = vsel %vm448, 0.0, %v8700
        %v8702 = vrot.slane %v8687, 4
        %v8703 = vsel %vm448, 0.0, %v8702
        %v8704 = vrot.slane %v8695, 4
        %v8705 = vsel %vm448, 0.0, %v8704
        %v8706 = vrot.slane %v8699, 4
        %v8707 = vsel %vm448, 0.0, %v8706
        %v8708 = vrot.slane %v8639, 4
        %v8709 = vsel %vm448, %v8708, %v8631
        %v8710 = vrot.slane %v8631, 4
        %v8711 = vsel %vm448, %v8639, %v8710
        %v8713 = vunpack.c.l.s4 1983009808
        %v8714 = vunpack.c.0.s8 %v8713
        %v8715 = vperm.slane %v8709, %v8714
        %v8717 = vunpack.c.l.s4 1983009808
        %v8718 = vunpack.c.0.s8 %v8717
        %v8719 = vperm.slane %v8711, %v8718
        %v8720 = vrot.slane %v8643, 4
        %v8721 = vsel %vm448, %v8720, %v8635
        %v8722 = vrot.slane %v8635, 4
        %v8723 = vsel %vm448, %v8643, %v8722
        %v8725 = vunpack.c.l.s4 1983009808
        %v8726 = vunpack.c.0.s8 %v8725
        %v8727 = vperm.slane %v8721, %v8726
        %v8729 = vunpack.c.l.s4 1983009808
        %v8730 = vunpack.c.0.s8 %v8729
        %v8731 = vperm.slane %v8723, %v8730
        %v8732 = vrot.slane %v8727, 4
        %v8733 = vsel %vm448, %v8732, %v8715
        %v8734 = vrot.slane %v8715, 4
        %v8735 = vsel %vm448, %v8727, %v8734
        %v8737 = vunpack.c.l.s4 1934713408
        %v8738 = vunpack.c.0.s8 %v8737
        %v8739 = vperm.slane %v8733, %v8738
        %v8741 = vunpack.c.l.s4 1934713408
        %v8742 = vunpack.c.0.s8 %v8741
        %v8743 = vperm.slane %v8735, %v8742
        %v8744 = vrot.slane %v8731, 4
        %v8745 = vsel %vm448, %v8744, %v8719
        %v8746 = vrot.slane %v8719, 4
        %v8747 = vsel %vm448, %v8731, %v8746
        %v8749 = vunpack.c.l.s4 1934713408
        %v8750 = vunpack.c.0.s8 %v8749
        %v8751 = vperm.slane %v8745, %v8750
        %v8753 = vunpack.c.l.s4 1934713408
        %v8754 = vunpack.c.0.s8 %v8753
        %v8755 = vperm.slane %v8747, %v8754
        %v8756 = vrot.slane %v8739, 4
        %v8757 = vsel %vm448, 0.0, %v8756
        %v8758 = vrot.slane %v8743, 4
        %v8759 = vsel %vm448, 0.0, %v8758
        %v8760 = vrot.slane %v8751, 4
        %v8761 = vsel %vm448, 0.0, %v8760
        %v8762 = vrot.slane %v8755, 4
        %v8763 = vsel %vm448, 0.0, %v8762
        %8765 = vrot.lane.b32.xlu0 %v8701, 16
        %v8766 = vpop.permute.xlu0 %8765
        %8769 = vrot.lane.b32.xlu0 %v8687, 32
        %v8770 = vpop.permute.xlu0 %8769
        %8773 = vrot.lane.b32.xlu0 %v8703, 48
        %v8774 = vpop.permute.xlu0 %8773
        %8777 = vrot.lane.b32.xlu0 %v8695, 64
        %v8778 = vpop.permute.xlu0 %8777
        %8781 = vrot.lane.b32.xlu0 %v8705, 80
        %v8782 = vpop.permute.xlu0 %8781
        %8785 = vrot.lane.b32.xlu0 %v8699, 96
        %v8786 = vpop.permute.xlu0 %8785
        %8789 = vrot.lane.b32.xlu0 %v8707, 112
        %v8790 = vpop.permute.xlu0 %8789
        %8793 = vrot.lane.b32.xlu0 %v8757, 16
        %v8794 = vpop.permute.xlu0 %8793
        %8797 = vrot.lane.b32.xlu0 %v8743, 32
        %v8798 = vpop.permute.xlu0 %8797
        %8801 = vrot.lane.b32.xlu0 %v8759, 48
        %v8802 = vpop.permute.xlu0 %8801
        %8805 = vrot.lane.b32.xlu0 %v8751, 64
        %v8806 = vpop.permute.xlu0 %8805
        %8809 = vrot.lane.b32.xlu0 %v8761, 80
        %v8810 = vpop.permute.xlu0 %8809
        %8813 = vrot.lane.b32.xlu0 %v8755, 96
        %v8814 = vpop.permute.xlu0 %8813
        %8817 = vrot.lane.b32.xlu0 %v8763, 112
        %v8818 = vpop.permute.xlu0 %8817
        %v8820 = vsel %vm616, %v8683, %v8766
        %v8821 = vsel %vm618, %v8820, %v8770
        %v8822 = vsel %vm620, %v8821, %v8774
        %v8823 = vsel %vm622, %v8822, %v8778
        %v8824 = vsel %vm624, %v8823, %v8782
        %v8825 = vsel %vm626, %v8824, %v8786
        %v8826 = vsel %vm628, %v8825, %v8790
        %v8827 = vsel %vm616, %v8739, %v8794
        %v8828 = vsel %vm618, %v8827, %v8798
        %v8829 = vsel %vm620, %v8828, %v8802
        %v8830 = vsel %vm622, %v8829, %v8806
        %v8831 = vsel %vm624, %v8830, %v8810
        %v8832 = vsel %vm626, %v8831, %v8814
        %v8833 = vsel %vm628, %v8832, %v8818
        %8834 = vrot.lane.b32.xlu0 %v8420, 126
        %v8835 = vpop.permute.xlu0 %8834
        %8836 = vrot.lane.b32.xlu0 %v8422, 126
        %v8837 = vpop.permute.xlu0 %8836
        %8838 = vrot.lane.b32.xlu0 %v8425, 126
        %v8839 = vpop.permute.xlu0 %8838
        %8840 = vrot.lane.b32.xlu0 %v8427, 126
        %v8841 = vpop.permute.xlu0 %8840
        %8842 = vrot.lane.b32.xlu0 %v8430, 126
        %v8843 = vpop.permute.xlu0 %8842
        %8844 = vrot.lane.b32.xlu0 %v8432, 126
        %v8845 = vpop.permute.xlu0 %8844
        %8846 = vrot.lane.b32.xlu0 %v8435, 126
        %v8847 = vpop.permute.xlu0 %8846
        %8848 = vrot.lane.b32.xlu0 %v8437, 126
        %v8849 = vpop.permute.xlu0 %8848
        %v8858 = vrot.slane %v8843, 4
        %v8859 = vsel %vm448, %v8858, %v8835
        %v8860 = vrot.slane %v8835, 4
        %v8861 = vsel %vm448, %v8843, %v8860
        %v8863 = vunpack.c.l.s4 1983009808
        %v8864 = vunpack.c.0.s8 %v8863
        %v8865 = vperm.slane %v8859, %v8864
        %v8867 = vunpack.c.l.s4 1983009808
        %v8868 = vunpack.c.0.s8 %v8867
        %v8869 = vperm.slane %v8861, %v8868
        %v8870 = vrot.slane %v8847, 4
        %v8871 = vsel %vm448, %v8870, %v8839
        %v8872 = vrot.slane %v8839, 4
        %v8873 = vsel %vm448, %v8847, %v8872
        %v8875 = vunpack.c.l.s4 1983009808
        %v8876 = vunpack.c.0.s8 %v8875
        %v8877 = vperm.slane %v8871, %v8876
        %v8879 = vunpack.c.l.s4 1983009808
        %v8880 = vunpack.c.0.s8 %v8879
        %v8881 = vperm.slane %v8873, %v8880
        %v8882 = vrot.slane %v8877, 4
        %v8883 = vsel %vm448, %v8882, %v8865
        %v8884 = vrot.slane %v8865, 4
        %v8885 = vsel %vm448, %v8877, %v8884
        %v8887 = vunpack.c.l.s4 1934713408
        %v8888 = vunpack.c.0.s8 %v8887
        %v8889 = vperm.slane %v8883, %v8888
        %v8891 = vunpack.c.l.s4 1934713408
        %v8892 = vunpack.c.0.s8 %v8891
        %v8893 = vperm.slane %v8885, %v8892
        %v8894 = vrot.slane %v8881, 4
        %v8895 = vsel %vm448, %v8894, %v8869
        %v8896 = vrot.slane %v8869, 4
        %v8897 = vsel %vm448, %v8881, %v8896
        %v8899 = vunpack.c.l.s4 1934713408
        %v8900 = vunpack.c.0.s8 %v8899
        %v8901 = vperm.slane %v8895, %v8900
        %v8903 = vunpack.c.l.s4 1934713408
        %v8904 = vunpack.c.0.s8 %v8903
        %v8905 = vperm.slane %v8897, %v8904
        %v8906 = vrot.slane %v8889, 4
        %v8907 = vsel %vm448, 0.0, %v8906
        %v8908 = vrot.slane %v8893, 4
        %v8909 = vsel %vm448, 0.0, %v8908
        %v8910 = vrot.slane %v8901, 4
        %v8911 = vsel %vm448, 0.0, %v8910
        %v8912 = vrot.slane %v8905, 4
        %v8913 = vsel %vm448, 0.0, %v8912
        %v8914 = vrot.slane %v8845, 4
        %v8915 = vsel %vm448, %v8914, %v8837
        %v8916 = vrot.slane %v8837, 4
        %v8917 = vsel %vm448, %v8845, %v8916
        %v8919 = vunpack.c.l.s4 1983009808
        %v8920 = vunpack.c.0.s8 %v8919
        %v8921 = vperm.slane %v8915, %v8920
        %v8923 = vunpack.c.l.s4 1983009808
        %v8924 = vunpack.c.0.s8 %v8923
        %v8925 = vperm.slane %v8917, %v8924
        %v8926 = vrot.slane %v8849, 4
        %v8927 = vsel %vm448, %v8926, %v8841
        %v8928 = vrot.slane %v8841, 4
        %v8929 = vsel %vm448, %v8849, %v8928
        %v8931 = vunpack.c.l.s4 1983009808
        %v8932 = vunpack.c.0.s8 %v8931
        %v8933 = vperm.slane %v8927, %v8932
        %v8935 = vunpack.c.l.s4 1983009808
        %v8936 = vunpack.c.0.s8 %v8935
        %v8937 = vperm.slane %v8929, %v8936
        %v8938 = vrot.slane %v8933, 4
        %v8939 = vsel %vm448, %v8938, %v8921
        %v8940 = vrot.slane %v8921, 4
        %v8941 = vsel %vm448, %v8933, %v8940
        %v8943 = vunpack.c.l.s4 1934713408
        %v8944 = vunpack.c.0.s8 %v8943
        %v8945 = vperm.slane %v8939, %v8944
        %v8947 = vunpack.c.l.s4 1934713408
        %v8948 = vunpack.c.0.s8 %v8947
        %v8949 = vperm.slane %v8941, %v8948
        %v8950 = vrot.slane %v8937, 4
        %v8951 = vsel %vm448, %v8950, %v8925
        %v8952 = vrot.slane %v8925, 4
        %v8953 = vsel %vm448, %v8937, %v8952
        %v8955 = vunpack.c.l.s4 1934713408
        %v8956 = vunpack.c.0.s8 %v8955
        %v8957 = vperm.slane %v8951, %v8956
        %v8959 = vunpack.c.l.s4 1934713408
        %v8960 = vunpack.c.0.s8 %v8959
        %v8961 = vperm.slane %v8953, %v8960
        %v8962 = vrot.slane %v8945, 4
        %v8963 = vsel %vm448, 0.0, %v8962
        %v8964 = vrot.slane %v8949, 4
        %v8965 = vsel %vm448, 0.0, %v8964
        %v8966 = vrot.slane %v8957, 4
        %v8967 = vsel %vm448, 0.0, %v8966
        %v8968 = vrot.slane %v8961, 4
        %v8969 = vsel %vm448, 0.0, %v8968
        %8971 = vrot.lane.b32.xlu0 %v8907, 16
        %v8972 = vpop.permute.xlu0 %8971
        %8975 = vrot.lane.b32.xlu0 %v8893, 32
        %v8976 = vpop.permute.xlu0 %8975
        %8979 = vrot.lane.b32.xlu0 %v8909, 48
        %v8980 = vpop.permute.xlu0 %8979
        %8983 = vrot.lane.b32.xlu0 %v8901, 64
        %v8984 = vpop.permute.xlu0 %8983
        %8987 = vrot.lane.b32.xlu0 %v8911, 80
        %v8988 = vpop.permute.xlu0 %8987
        %8991 = vrot.lane.b32.xlu0 %v8905, 96
        %v8992 = vpop.permute.xlu0 %8991
        %8995 = vrot.lane.b32.xlu0 %v8913, 112
        %v8996 = vpop.permute.xlu0 %8995
        %8999 = vrot.lane.b32.xlu0 %v8963, 16
        %v9000 = vpop.permute.xlu0 %8999
        %9003 = vrot.lane.b32.xlu0 %v8949, 32
        %v9004 = vpop.permute.xlu0 %9003
        %9007 = vrot.lane.b32.xlu0 %v8965, 48
        %v9008 = vpop.permute.xlu0 %9007
        %9011 = vrot.lane.b32.xlu0 %v8957, 64
        %v9012 = vpop.permute.xlu0 %9011
        %9015 = vrot.lane.b32.xlu0 %v8967, 80
        %v9016 = vpop.permute.xlu0 %9015
        %9019 = vrot.lane.b32.xlu0 %v8961, 96
        %v9020 = vpop.permute.xlu0 %9019
        %9023 = vrot.lane.b32.xlu0 %v8969, 112
        %v9024 = vpop.permute.xlu0 %9023
        %v9026 = vsel %vm616, %v8889, %v8972
        %v9027 = vsel %vm618, %v9026, %v8976
        %v9028 = vsel %vm620, %v9027, %v8980
        %v9029 = vsel %vm622, %v9028, %v8984
        %v9030 = vsel %vm624, %v9029, %v8988
        %v9031 = vsel %vm626, %v9030, %v8992
        %v9032 = vsel %vm628, %v9031, %v8996
        %v9033 = vsel %vm616, %v8945, %v9000
        %v9034 = vsel %vm618, %v9033, %v9004
        %v9035 = vsel %vm620, %v9034, %v9008
        %v9036 = vsel %vm622, %v9035, %v9012
        %v9037 = vsel %vm624, %v9036, %v9016
        %v9038 = vsel %vm626, %v9037, %v9020
        %v9039 = vsel %vm628, %v9038, %v9024
        %v9042 = vrot.slane %v7578, 4
        %v9043 = vrot.slane %v7585, 4
        %v9048 = vrot.slane %v7998, 4
        %v9049 = vrot.slane %v8005, 4
        %v9054 = vrot.slane %v8410, 4
        %v9055 = vrot.slane %v8417, 4
        %v9060 = vrot.slane %v8826, 4
        %v9061 = vrot.slane %v8833, 4
        %v9064 = vsel %vm2580, %v7364, %v9042
        %v9065 = vsel %vm2580, %v7371, %v9043
        %v9066 = vsel %vm2580, %v7784, %v9048
        %v9067 = vsel %vm2580, %v7791, %v9049
        %v9068 = vsel %vm2580, %v8204, %v9054
        %v9069 = vsel %vm2580, %v8211, %v9055
        %v9070 = vsel %vm2580, %v8620, %v9060
        %v9071 = vsel %vm2580, %v8627, %v9061
        %v9072 = vld [vmem:[%s7] sm:$0xf]
        %v9073 = vld [vmem:[%s8] sm:$0xf]
        %9075 = vset.pattern.permute.xlu0 0
        %9076 = vperm.xlu0 %9075, %v9073
        %v9077 = vpop.permute.xlu0 %9076
        %v9080 = vsel %vm2596, %v9072, 0
        %v9083 = vsel %vm2580, %v9032, 0
        %v9086 = vsel %vm2580, %v9039, 0
        %9088 = vmatpush.msra.mxu0 0.0
        %9089 = vmatpush.msra.mxu0 0.0
        %9090 = vmatpush.msra.mxu0 0.0
        %9091 = vmatpush.msra.mxu0 0.0
        %9092 = vmatpush.msra.mxu0 0.0
        %9093 = vmatpush.msra.mxu0 0.0
        %9094 = vmatpush.msra.mxu0 0.0
        %9095 = vmatpush.msra.mxu0 0.0
        %9096 = vmatpush.msra.mxu0 0.0
        %9097 = vmatpush.msra.mxu0 0.0
        %9098 = vmatpush.msra.mxu0 0.0
        %9099 = vmatpush.msra.mxu0 %v9083
        %9100 = vmatpush.msra.mxu0 %v9070
        %9101 = vmatpush.msra.mxu0 %v9068
        %9102 = vmatpush.msra.mxu0 %v9066
        %9103 = vmatpush.msra.mxu0 %v9064
        %9104 = vmatmul.f32.gmra.mxu0 %v9080
        %v9105 = vpop.f32.mrf.mxu0
        %v9106 = vadd.f32 %v9077, %v9105
        %9107 = vdwg.mxu0
        %9108 = vmatpush.msra.mxu0 0.0
        %9109 = vmatpush.msra.mxu0 0.0
        %9110 = vmatpush.msra.mxu0 0.0
        %9111 = vmatpush.msra.mxu0 0.0
        %9112 = vmatpush.msra.mxu0 0.0
        %9113 = vmatpush.msra.mxu0 0.0
        %9114 = vmatpush.msra.mxu0 0.0
        %9115 = vmatpush.msra.mxu0 0.0
        %9116 = vmatpush.msra.mxu0 0.0
        %9117 = vmatpush.msra.mxu0 0.0
        %9118 = vmatpush.msra.mxu0 0.0
        %9119 = vmatpush.msra.mxu0 %v9086
        %9120 = vmatpush.msra.mxu0 %v9071
        %9121 = vmatpush.msra.mxu0 %v9069
        %9122 = vmatpush.msra.mxu0 %v9067
        %9123 = vmatpush.msra.mxu0 %v9065
        %9124 = vmatmul.f32.gmra.mxu0 %v9080
        %v9125 = vpop.f32.mrf.mxu0
        %v9126 = vadd.f32 %v9077, %v9125
        %9127 = vdwg.mxu0
        %v9128 = vadd.f32 %v9106, %v4808
        %v9129 = vadd.f32 %v9126, %v4809
        %v9130 = vmax.f32 %v9128, 0.0
        %v9131 = vmax.f32 %v9129, 0.0
        %v9132 = vld [vmem:[%s9] sm:$0xf]
        %v9133 = vld [vmem:[%s10] sm:$0xf]
        %9135 = vset.pattern.permute.xlu0 0
        %9136 = vperm.xlu0 %9135, %v9133
        %v9137 = vpop.permute.xlu0 %9136
        %vm9139 = vcmask 31744
        %v9141 = vsel %vm9139, %v9132, 0
        %v9144 = vsel %vm2580, %v9130, 0
        %v9147 = vsel %vm2580, %v9131, 0
        %9149 = vmatpush.msra.mxu0 0.0
        %9150 = vmatpush.msra.mxu0 0.0
        %9151 = vmatpush.msra.mxu0 0.0
        %9152 = vmatpush.msra.mxu0 0.0
        %9153 = vmatpush.msra.mxu0 0.0
        %9154 = vmatpush.msra.mxu0 0.0
        %9155 = vmatpush.msra.mxu0 0.0
        %9156 = vmatpush.msra.mxu0 0.0
        %9157 = vmatpush.msra.mxu0 0.0
        %9158 = vmatpush.msra.mxu0 0.0
        %9159 = vmatpush.msra.mxu0 0.0
        %9160 = vmatpush.msra.mxu0 0.0
        %9161 = vmatpush.msra.mxu0 0.0
        %9162 = vmatpush.msra.mxu0 0.0
        %9163 = vmatpush.msra.mxu0 0.0
        %9164 = vmatpush.msra.mxu0 %v9144
        %9165 = vmatmul.f32.gmra.mxu0 %v9141
        %v9166 = vpop.f32.mrf.mxu0
        %v9167 = vadd.f32 %v9137, %v9166
        %9168 = vdwg.mxu0
        %9169 = vmatpush.msra.mxu0 0.0
        %9170 = vmatpush.msra.mxu0 0.0
        %9171 = vmatpush.msra.mxu0 0.0
        %9172 = vmatpush.msra.mxu0 0.0
        %9173 = vmatpush.msra.mxu0 0.0
        %9174 = vmatpush.msra.mxu0 0.0
        %9175 = vmatpush.msra.mxu0 0.0
        %9176 = vmatpush.msra.mxu0 0.0
        %9177 = vmatpush.msra.mxu0 0.0
        %9178 = vmatpush.msra.mxu0 0.0
        %9179 = vmatpush.msra.mxu0 0.0
        %9180 = vmatpush.msra.mxu0 0.0
        %9181 = vmatpush.msra.mxu0 0.0
        %9182 = vmatpush.msra.mxu0 0.0
        %9183 = vmatpush.msra.mxu0 0.0
        %9184 = vmatpush.msra.mxu0 %v9147
        %9185 = vmatmul.f32.gmra.mxu0 %v9141
        %v9186 = vpop.f32.mrf.mxu0
        %v9187 = vadd.f32 %v9137, %v9186
        %9188 = vdwg.mxu0
        %v9189 = vmax.f32 %v9167, 0.0
        %v9190 = vmax.f32 %v9187, 0.0
        %v9191 = vld [vmem:[%s11] sm:$0xf]
        %v9192 = vld [vmem:[%s12] sm:$0xf]
        %9194 = vset.pattern.permute.xlu0 0
        %9195 = vperm.xlu0 %9194, %v9192
        %v9196 = vpop.permute.xlu0 %9195
        %v9199 = vsel %vm9139, %v9191, 0
        %v9202 = vsel %vm2580, %v9189, 0
        %v9205 = vsel %vm2580, %v9190, 0
        %9207 = vmatpush.msra.mxu0 0.0
        %9208 = vmatpush.msra.mxu0 0.0
        %9209 = vmatpush.msra.mxu0 0.0
        %9210 = vmatpush.msra.mxu0 0.0
        %9211 = vmatpush.msra.mxu0 0.0
        %9212 = vmatpush.msra.mxu0 0.0
        %9213 = vmatpush.msra.mxu0 0.0
        %9214 = vmatpush.msra.mxu0 0.0
        %9215 = vmatpush.msra.mxu0 0.0
        %9216 = vmatpush.msra.mxu0 0.0
        %9217 = vmatpush.msra.mxu0 0.0
        %9218 = vmatpush.msra.mxu0 0.0
        %9219 = vmatpush.msra.mxu0 0.0
        %9220 = vmatpush.msra.mxu0 0.0
        %9221 = vmatpush.msra.mxu0 0.0
        %9222 = vmatpush.msra.mxu0 %v9202
        %9223 = vmatmul.f32.gmra.mxu0 %v9199
        %v9224 = vpop.f32.mrf.mxu0
        %v9225 = vadd.f32 %v9196, %v9224
        %9226 = vdwg.mxu0
        %9227 = vmatpush.msra.mxu0 0.0
        %9228 = vmatpush.msra.mxu0 0.0
        %9229 = vmatpush.msra.mxu0 0.0
        %9230 = vmatpush.msra.mxu0 0.0
        %9231 = vmatpush.msra.mxu0 0.0
        %9232 = vmatpush.msra.mxu0 0.0
        %9233 = vmatpush.msra.mxu0 0.0
        %9234 = vmatpush.msra.mxu0 0.0
        %9235 = vmatpush.msra.mxu0 0.0
        %9236 = vmatpush.msra.mxu0 0.0
        %9237 = vmatpush.msra.mxu0 0.0
        %9238 = vmatpush.msra.mxu0 0.0
        %9239 = vmatpush.msra.mxu0 0.0
        %9240 = vmatpush.msra.mxu0 0.0
        %9241 = vmatpush.msra.mxu0 0.0
        %9242 = vmatpush.msra.mxu0 %v9205
        %9243 = vmatmul.f32.gmra.mxu0 %v9199
        %v9244 = vpop.f32.mrf.mxu0
        %v9245 = vadd.f32 %v9196, %v9244
        %9246 = vdwg.mxu0
        %v9247 = vadd.f32 %v9225, %v9130
        %v9248 = vadd.f32 %v9245, %v9131
        %v9249 = vmax.f32 %v9247, 0.0
        %v9250 = vmax.f32 %v9248, 0.0
        %9252 = vrot.lane.b32.xlu0 %v9249, 112
        %v9253 = vpop.permute.xlu0 %9252
        %9255 = vrot.lane.b32.xlu0 %v9249, 96
        %v9256 = vpop.permute.xlu0 %9255
        %9258 = vrot.lane.b32.xlu0 %v9249, 80
        %v9259 = vpop.permute.xlu0 %9258
        %9261 = vrot.lane.b32.xlu0 %v9249, 64
        %v9262 = vpop.permute.xlu0 %9261
        %9264 = vrot.lane.b32.xlu0 %v9249, 48
        %v9265 = vpop.permute.xlu0 %9264
        %9267 = vrot.lane.b32.xlu0 %v9249, 32
        %v9268 = vpop.permute.xlu0 %9267
        %9270 = vrot.lane.b32.xlu0 %v9249, 16
        %v9271 = vpop.permute.xlu0 %9270
        %9274 = vrot.lane.b32.xlu0 %v9250, 112
        %v9275 = vpop.permute.xlu0 %9274
        %9277 = vrot.lane.b32.xlu0 %v9250, 96
        %v9278 = vpop.permute.xlu0 %9277
        %9280 = vrot.lane.b32.xlu0 %v9250, 80
        %v9281 = vpop.permute.xlu0 %9280
        %9283 = vrot.lane.b32.xlu0 %v9250, 64
        %v9284 = vpop.permute.xlu0 %9283
        %9286 = vrot.lane.b32.xlu0 %v9250, 48
        %v9287 = vpop.permute.xlu0 %9286
        %9289 = vrot.lane.b32.xlu0 %v9250, 32
        %v9290 = vpop.permute.xlu0 %9289
        %9292 = vrot.lane.b32.xlu0 %v9250, 16
        %v9293 = vpop.permute.xlu0 %9292
        %v9295 = vrot.slane %v9256, 4
        %v9296 = vsel %vm448, %v9295, %v9249
        %v9298 = vunpack.c.l.s4 1983009808
        %v9299 = vunpack.c.0.s8 %v9298
        %v9300 = vperm.slane %v9296, %v9299
        %v9301 = vrot.slane %v9259, 4
        %v9302 = vsel %vm448, %v9301, %v9253
        %v9304 = vunpack.c.l.s4 1983009808
        %v9305 = vunpack.c.0.s8 %v9304
        %v9306 = vperm.slane %v9302, %v9305
        %v9307 = vrot.slane %v9268, 4
        %v9308 = vsel %vm448, %v9307, %v9262
        %v9310 = vunpack.c.l.s4 1983009808
        %v9311 = vunpack.c.0.s8 %v9310
        %v9312 = vperm.slane %v9308, %v9311
        %v9313 = vrot.slane %v9271, 4
        %v9314 = vsel %vm448, %v9313, %v9265
        %v9316 = vunpack.c.l.s4 1983009808
        %v9317 = vunpack.c.0.s8 %v9316
        %v9318 = vperm.slane %v9314, %v9317
        %v9319 = vrot.slane %v9306, 4
        %v9320 = vsel %vm448, %v9319, %v9300
        %v9321 = vrot.slane %v9300, 4
        %v9322 = vsel %vm448, %v9306, %v9321
        %v9324 = vunpack.c.l.s4 1934713408
        %v9325 = vunpack.c.0.s8 %v9324
        %v9326 = vperm.slane %v9320, %v9325
        %v9328 = vunpack.c.l.s4 1934713408
        %v9329 = vunpack.c.0.s8 %v9328
        %v9330 = vperm.slane %v9322, %v9329
        %v9331 = vrot.slane %v9318, 4
        %v9332 = vsel %vm448, %v9331, %v9312
        %v9333 = vrot.slane %v9312, 4
        %v9334 = vsel %vm448, %v9318, %v9333
        %v9336 = vunpack.c.l.s4 1934713408
        %v9337 = vunpack.c.0.s8 %v9336
        %v9338 = vperm.slane %v9332, %v9337
        %v9340 = vunpack.c.l.s4 1934713408
        %v9341 = vunpack.c.0.s8 %v9340
        %v9342 = vperm.slane %v9334, %v9341
        %v9343 = vrot.slane %v9338, 4
        %v9344 = vsel %vm448, %v9343, %v9326
        %v9345 = vrot.slane %v9326, 4
        %v9346 = vsel %vm448, %v9338, %v9345
        %v9347 = vrot.slane %v9342, 4
        %v9348 = vsel %vm448, %v9347, %v9330
        %v9349 = vrot.slane %v9330, 4
        %v9350 = vsel %vm448, %v9342, %v9349
        %v9351 = vrot.slane %v9278, 4
        %v9352 = vsel %vm448, %v9351, %v9250
        %v9354 = vunpack.c.l.s4 1983009808
        %v9355 = vunpack.c.0.s8 %v9354
        %v9356 = vperm.slane %v9352, %v9355
        %v9357 = vrot.slane %v9281, 4
        %v9358 = vsel %vm448, %v9357, %v9275
        %v9360 = vunpack.c.l.s4 1983009808
        %v9361 = vunpack.c.0.s8 %v9360
        %v9362 = vperm.slane %v9358, %v9361
        %v9363 = vrot.slane %v9290, 4
        %v9364 = vsel %vm448, %v9363, %v9284
        %v9366 = vunpack.c.l.s4 1983009808
        %v9367 = vunpack.c.0.s8 %v9366
        %v9368 = vperm.slane %v9364, %v9367
        %v9369 = vrot.slane %v9293, 4
        %v9370 = vsel %vm448, %v9369, %v9287
        %v9372 = vunpack.c.l.s4 1983009808
        %v9373 = vunpack.c.0.s8 %v9372
        %v9374 = vperm.slane %v9370, %v9373
        %v9375 = vrot.slane %v9362, 4
        %v9376 = vsel %vm448, %v9375, %v9356
        %v9377 = vrot.slane %v9356, 4
        %v9378 = vsel %vm448, %v9362, %v9377
        %v9380 = vunpack.c.l.s4 1934713408
        %v9381 = vunpack.c.0.s8 %v9380
        %v9382 = vperm.slane %v9376, %v9381
        %v9384 = vunpack.c.l.s4 1934713408
        %v9385 = vunpack.c.0.s8 %v9384
        %v9386 = vperm.slane %v9378, %v9385
        %v9387 = vrot.slane %v9374, 4
        %v9388 = vsel %vm448, %v9387, %v9368
        %v9389 = vrot.slane %v9368, 4
        %v9390 = vsel %vm448, %v9374, %v9389
        %v9392 = vunpack.c.l.s4 1934713408
        %v9393 = vunpack.c.0.s8 %v9392
        %v9394 = vperm.slane %v9388, %v9393
        %v9396 = vunpack.c.l.s4 1934713408
        %v9397 = vunpack.c.0.s8 %v9396
        %v9398 = vperm.slane %v9390, %v9397
        %v9399 = vrot.slane %v9394, 4
        %v9400 = vsel %vm448, %v9399, %v9382
        %v9401 = vrot.slane %v9382, 4
        %v9402 = vsel %vm448, %v9394, %v9401
        %v9403 = vrot.slane %v9398, 4
        %v9404 = vsel %vm448, %v9403, %v9386
        %v9405 = vrot.slane %v9386, 4
        %v9406 = vsel %vm448, %v9398, %v9405
        %9407 = vst.msk [vmem:[%s433] sm:$0xff] %vm616, %v9344
        %9408 = vst.msk [vmem:[%s433 + $0x8] sm:$0xff] %vm616, %v9400
        %9409 = vst.msk [vmem:[%s433 + $0x10] sm:$0xff] %vm616, %v9346
        %9410 = vst.msk [vmem:[%s433 + $0x18] sm:$0xff] %vm616, %v9402
        %9411 = vst.msk [vmem:[%s433 + $0x20] sm:$0xff] %vm616, %v9348
        %9412 = vst.msk [vmem:[%s433 + $0x28] sm:$0xff] %vm616, %v9404
        %9413 = vst.msk [vmem:[%s433 + $0x30] sm:$0xff] %vm616, %v9350
        %9414 = vst.msk [vmem:[%s433 + $0x38] sm:$0xff] %vm616, %v9406
        %s9415 = sand.u32 %s313, 1
        %s9416 = scalar_lea.sflag [#allocation4], %s9415
        %s9417 = sand.u32 %s313, 1
        %s9418 = smul.addr %s9417, 64
        %s9419 = scalar_lea.vmem [#allocation3], %s9418
        // Predicated region
        $region73: #{res_head_apply.1} parent=71 // pred_check
          %p9420 = pneg %p323
        $region74: #{res_head_apply.1} parent=71 // pred_check_branch
          %9422 = sbr.rel (%p9420) target = $region76
        $region75: #{res_head_apply.1} parent=71 // pred_region
          %9424 = vsyncadd %s9416, 0
          %s9425 = smul.addr %s27, 8
          %s9426 = smul.addr %s9425, 8
          %s9427 = scalar_lea.hbm %s13, %s9426
          %s9428 = sshll.u32 %s9419, 4
          %s9429 = int_to_ptr.vmem [resolvable:$true] %s9428
          %s9430 = sshll.u32 %s9427, 4
          %s9431 = int_to_ptr.hbm [resolvable:$true] %s9430
          %9436 = dma.vmem_to_hbm [thread:$0]  %s9429, 1024, %s9431, %s9416, 128, 128, 8
        $region76: #{res_head_apply.1} parent=71 // pred_fallthru
          _
      $region72: #{res_head_apply.1} parent=5 // pred_fallthru
        _
      %p9437 = scmp.le.s32.totalorder 2, %s22
      // Predicated region
      $region77: #{res_head_apply.1} parent=5 // pred_check
        %p9438 = pneg %p9437
      $region78: #{res_head_apply.1} parent=5 // pred_check_branch
        %9440 = sbr.rel (%p9438) target = $region80
      $region79: #{res_head_apply.1} parent=5 // pred_region
        %s9441 = ssub.s32 %s22, 2
        // Predicated region
        $region81: #{res_head_apply.1} parent=79 // pred_check
          %p9442 = pneg %p329
        $region82: #{res_head_apply.1} parent=79 // pred_check_branch
          %9444 = sbr.rel (%p9442) target = $region84
        $region83: #{res_head_apply.1} parent=79 // pred_region
          %s9445 = sand.u32 %s314, 1
          %s9446 = scalar_lea.sflag [#allocation4], %s9445
          %s9447 = sand.u32 %s314, 1
          %s9448 = smul.addr %s9447, 64
          %s9449 = scalar_lea.vmem [#allocation3], %s9448
          %9451 = dma.done %s9446, 1024
        $region84: #{res_head_apply.1} parent=79 // pred_fallthru
          _
      $region80: #{res_head_apply.1} parent=5 // pred_fallthru
        _
    $region6: #{res_head_apply.1} parent=1 // loop_footer
      %s26 = sadd.s32 1, %s22
    $region7: #{res_head_apply.1} parent=1 // loop_footer_branch
      %21 = sbr.rel target = $region3
    $region8: #{res_head_apply.1} parent=1 // loop_exit
      _
    %9452 = vsyncpa [#allocation4], 1
    %s9453 = scalar_lea.sflag [#allocation4], 1
    %9454 = vsyncpa %s9453, 1

</llo_original>
